<compile_context>
chip_gen: v5e
topology: v5e:2x2
jax: 0.10.0
libtpu: 0.0.40
codegen_flags: <defaults>
</compile_context>

<pallas_src>
import functools

import jax
import jax.numpy as jnp
from jax.experimental import pallas as pl
from jax.experimental.pallas import tpu as pltpu

EPS = 1e-5
FIRST_OUTPUT_CHANNEL = 14
INPUT_CHANNELS = 2
# (Cin, Cout) of the four Bn_Cov2d_Relu layers; Cin grows via the dense concat.
DENSE_CFG = [(INPUT_CHANNELS, FIRST_OUTPUT_CHANNEL), (16, 16), (32, 16), (48, 64)]
CIN_MAX = DENSE_CFG[-1][0]      # 48 channels in the final concat buffer
COUT_FINAL = DENSE_CFG[-1][1]   # 64 real output channels
COUT_PAD = 128                  # lane-dense padded output width


# ----------------------------------------------------------------------------
# The fused kernel: one grid step == one batch sample, whole DenseBlock.
# ----------------------------------------------------------------------------
def _dense_block_kernel(x_ref, w1_ref, b1_ref, w2_ref, b2_ref, w3_ref, b3_ref,
                        w4_ref, b4_ref, out_ref, pad_ref, *, H, W):
    """pad_ref: (1, H+2, W+2, 48) f32 VMEM scratch.

    The 1-pixel border is kept zero (Conv2d zero 'same' padding, applied AFTER
    BatchNorm); the interior holds the raw (pre-BN) channel concat
    [x | a2 | a3 | a4] for the dense connectivity.
    """
    HW = H * W
    bf16 = jnp.bfloat16

    # Zero ONLY the 1-pixel border; the interior is fully overwritten below
    # before every read (removes the bulk of the init stores).
    zrow = jnp.zeros((1, 1, W + 2, CIN_MAX), jnp.float32)
    zcol = jnp.zeros((1, H + 2, 1, CIN_MAX), jnp.float32)
    pad_ref[:, 0:1, :, :] = zrow
    pad_ref[:, H + 1:H + 2, :, :] = zrow
    pad_ref[:, :, 0:1, :] = zcol
    pad_ref[:, :, W + 1:W + 2, :] = zcol

    def write_channels(act, c0, c1):
        # Append a layer output into the persistent concat buffer (interior
        # only, lane slice [c0, c1)) -- replaces any XLA pad/concat glue.
        pad_ref[:, 1:1 + H, 1:1 + W, c0:c1] = act

    def bn_conv_relu(cin, w_ref_l, beta_ref_l):
        cout = beta_ref_l.shape[-1]
        # One bf16 cast of the padded concat block per layer (MXU operand
        # dtype); all tap slices below are register slices of this value.
        pb = pad_ref[:, :, :, 0:cin].astype(bf16)           # (1, H+2, W+2, cin)
        # W shift once per kw (3 sublane-axis slices), reused across kh.
        wsh = [pb[:, :, dw:dw + W, :] for dw in range(3)]
        # Per-tap accumulated dots (K = cin): no lane-axis im2col concat.
        acc = beta_ref_l[...].reshape(HW, cout)             # f32 folded BN shift + bias
        for dh in range(3):
            for dw in range(3):
                tap = wsh[dw][:, dh:dh + H, :, :].reshape(HW, cin)
                acc = acc + jnp.dot(tap, w_ref_l[dh * 3 + dw],
                                    preferred_element_type=jnp.float32)
        return jnp.maximum(acc, 0.0).reshape(1, H, W, cout)  # ReLU

    write_channels(x_ref[...], 0, 2)                         # x          -> [0, 2)
    a2 = bn_conv_relu(2, w1_ref, b1_ref)
    write_channels(a2, 2, 16)                                # cat(x,a2)  -> [0, 16)
    a3 = bn_conv_relu(16, w2_ref, b2_ref)
    write_channels(a3, 16, 32)                               # + a3       -> [0, 32)
    a4 = bn_conv_relu(32, w3_ref, b3_ref)
    write_channels(a4, 32, 48)                               # + a4       -> [0, 48)
    a5 = bn_conv_relu(48, w4_ref, b4_ref)                    # (1,H,W,128); cols 64.. are 0
    out_ref[...] = a5.astype(out_ref.dtype)                  # lane-dense HBM store


def dense_block_pallas(x_nhwc, w9s, betas):
    N, H, W, cin0 = x_nhwc.shape
    assert cin0 == INPUT_CHANNELS
    f32 = jnp.float32

    args = [x_nhwc.astype(f32)]
    in_specs = [pl.BlockSpec((1, H, W, INPUT_CHANNELS), lambda i: (i, 0, 0, 0))]
    for w9, bt in zip(w9s, betas):
        args += [w9, bt]
        in_specs += [pl.BlockSpec(w9.shape, lambda i: (0, 0, 0)),
                     pl.BlockSpec(bt.shape, lambda i: (0, 0, 0, 0))]

    # ~36 MFLOP / <0.5 MiB: the kernel is overhead/VPU-bound, not MXU-bound.
    flops = 2 * N * H * W * 9 * sum(ci * co for ci, co in DENSE_CFG)
    bytes_accessed = int(x_nhwc.size * 4 + N * H * W * COUT_PAD * 4
                         + sum(w.size * 2 + b.size * 4 for w, b in zip(w9s, betas)))

    kernel = functools.partial(_dense_block_kernel, H=H, W=W)
    out = pl.pallas_call(
        kernel,
        out_shape=jax.ShapeDtypeStruct((N, H, W, COUT_PAD), f32),
        grid=(N,),                      # per-sample grid: pipelined, v7x 2-core
        in_specs=in_specs,
        out_specs=pl.BlockSpec((1, H, W, COUT_PAD), lambda i: (i, 0, 0, 0)),
        scratch_shapes=[pltpu.VMEM((1, H + 2, W + 2, CIN_MAX), f32)],
        compiler_params=pltpu.CompilerParams(
            dimension_semantics=("parallel",),
            vmem_limit_bytes=32 * 1024 * 1024),
        cost_estimate=pl.CostEstimate(flops=flops, transcendentals=0,
                                      bytes_accessed=bytes_accessed),
    )(*args)
    return out[..., :COUT_FINAL]        # drop the zero lane-padding columns


# ----------------------------------------------------------------------------
# Deterministic synthetic parameters (no checkpoint).
# ----------------------------------------------------------------------------
def init_bn(key, c):
    k1, k2, k3, k4 = jax.random.split(key, 4)
    return dict(
        gamma=1.0 + 0.1 * jax.random.normal(k1, (c,), jnp.float32),
        beta=0.1 * jax.random.normal(k2, (c,), jnp.float32),
        mean=0.1 * jax.random.normal(k3, (c,), jnp.float32),
        var=1.0 + 0.1 * jnp.abs(jax.random.normal(k4, (c,), jnp.float32)),
    )


def init_conv(key, kh, kw, cin, cout):
    k1, k2 = jax.random.split(key)
    w = jax.random.normal(k1, (kh, kw, cin, cout), jnp.float32) / jnp.sqrt(kh * kw * cin)
    b = 0.01 * jax.random.normal(k2, (cout,), jnp.float32)
    return dict(w=w, b=b)


def init_params(key):
    keys = jax.random.split(key, 2 * len(DENSE_CFG))
    layers = []
    for i, (cin, cout) in enumerate(DENSE_CFG):
        layers.append(dict(bn=init_bn(keys[2 * i], cin),
                           conv=init_conv(keys[2 * i + 1], 3, 3, cin, cout)))
    return layers


# ----------------------------------------------------------------------------
# Trace-time folding of BN (inference mode) + conv bias.
#   conv(pad(s*u + t)) + b = conv_{w*s}(pad(u)) + beta(h, w, cout)
# where beta counts only the 3x3 taps that land INSIDE the image (pad-after-BN).
# Weight layout: (9, Cin, Cout) in (kh, kw) tap order, bf16, optionally
# zero-padded along Cout for a lane-dense output.
# ----------------------------------------------------------------------------
def fold_layer(layer, H, W, cout_pad=None):
    bn, conv = layer["bn"], layer["conv"]
    w, b_conv = conv["w"], conv["b"]                       # (3,3,Cin,Cout), (Cout,)
    s = bn["gamma"] / jnp.sqrt(bn["var"] + EPS)            # (Cin,)
    t = bn["beta"] - bn["mean"] * s                        # (Cin,)
    cin, cout = w.shape[2], w.shape[3]

    # BN scale folded into the weights; (9, Cin, Cout) tap-major layout.
    w9 = (w * s[None, None, :, None]).reshape(9, cin, cout)

    # Per-tap BN-shift contribution, summed only over taps that fall in-bounds.
    q = jnp.einsum("hwic,i->hwc", w, t)                    # (3, 3, Cout)
    k = jnp.arange(3)
    rv = ((jnp.arange(H)[:, None] + k[None, :] - 1 >= 0) &
          (jnp.arange(H)[:, None] + k[None, :] - 1 < H)).astype(jnp.float32)   # (H,3)
    cv = ((jnp.arange(W)[:, None] + k[None, :] - 1 >= 0) &
          (jnp.arange(W)[:, None] + k[None, :] - 1 < W)).astype(jnp.float32)   # (W,3)
    beta = jnp.einsum("hi,wj,ijc->hwc", rv, cv, q) + b_conv                    # (H,W,Cout)

    if cout_pad is not None and cout_pad > cout:
        w9 = jnp.pad(w9, ((0, 0), (0, 0), (0, cout_pad - cout)))
        beta = jnp.pad(beta, ((0, 0), (0, 0), (0, cout_pad - cout)))
    return w9.astype(jnp.bfloat16), beta[None].astype(jnp.float32)


# ----------------------------------------------------------------------------
# Forward: DenseBlock.forward(x1, x2) -> x5  (64 channels)
# ----------------------------------------------------------------------------
def dense_block_forward(params, x1_nchw, x2_nchw):
    # NCHW -> NHWC (channels on the 128-lane axis inside the kernel).
    x1 = jnp.transpose(x1_nchw, (0, 2, 3, 1))
    x2 = jnp.transpose(x2_nchw, (0, 2, 3, 1))
    x = jnp.concatenate([x1, x2], axis=-1)                 # (N, H, W, 2)
    _, H, W, _ = x.shape

    w9s, betas = [], []
    for li, layer in enumerate(params):
        pad_to = COUT_PAD if li == len(params) - 1 else None
        w9, bt = fold_layer(layer, H, W, cout_pad=pad_to)
        w9s.append(w9)
        betas.append(bt)

    out = dense_block_pallas(x, w9s, betas)                # (N, H, W, 64)
    return jnp.transpose(out, (0, 3, 1, 2))                # back to NCHW


if __name__ == "__main__":
    key = jax.random.PRNGKey(0)
    kp, k1, k2 = jax.random.split(key, 3)
    params = init_params(kp)
    # DenseBlock.forward(x1, x2): two 1-channel NCHW images; cat(dim=1) -> 2 channels.
    x1 = jax.random.normal(k1, (2, 1, 16, 16), jnp.float32)
    x2 = jax.random.normal(k2, (2, 1, 16, 16), jnp.float32)

    out = jax.jit(dense_block_forward)(params, x1, x2)
    jax.block_until_ready(out)
    assert out.shape == (2, COUT_FINAL, 16, 16), out.shape
    assert bool(jnp.all(jnp.isfinite(out)))
    print("KERNEL_OK")
</pallas_src>

<mosaic_0001>
module attributes {stable_mosaic.version = 11 : i64} {
  func.func @_dense_block_kernel(%arg0: i32, %arg1: memref<1x16x16x2xf32, #tpu.memory_space<vmem>>, %arg2: memref<9x2x14xbf16, #tpu.memory_space<vmem>>, %arg3: memref<1x16x16x14xf32, #tpu.memory_space<vmem>>, %arg4: memref<9x16x16xbf16, #tpu.memory_space<vmem>>, %arg5: memref<1x16x16x16xf32, #tpu.memory_space<vmem>>, %arg6: memref<9x32x16xbf16, #tpu.memory_space<vmem>>, %arg7: memref<1x16x16x16xf32, #tpu.memory_space<vmem>>, %arg8: memref<9x48x128xbf16, #tpu.memory_space<vmem>>, %arg9: memref<1x16x16x128xf32, #tpu.memory_space<vmem>>, %arg10: memref<1x16x16x128xf32, #tpu.memory_space<vmem>>, %arg11: memref<1x18x18x48xf32, #tpu.memory_space<vmem>>) attributes {dimension_semantics = [#tpu.dimension_semantics<parallel>], iteration_bounds = array<i64: 2>, scalar_prefetch = 0 : i64, scratch_operands = 1 : i64, tpu.core_type = #tpu.core_type<tc>, window_params = [{transform_indices = @transform_0, window_bounds = array<i64: 1, 16, 16, 2>}, {pipeline_mode = #tpu.pipeline_mode<synchronous>, transform_indices = @transform_1, window_bounds = array<i64: 9, 2, 14>}, {pipeline_mode = #tpu.pipeline_mode<synchronous>, transform_indices = @transform_2, window_bounds = array<i64: 1, 16, 16, 14>}, {pipeline_mode = #tpu.pipeline_mode<synchronous>, transform_indices = @transform_3, window_bounds = array<i64: 9, 16, 16>}, {pipeline_mode = #tpu.pipeline_mode<synchronous>, transform_indices = @transform_4, window_bounds = array<i64: 1, 16, 16, 16>}, {pipeline_mode = #tpu.pipeline_mode<synchronous>, transform_indices = @transform_5, window_bounds = array<i64: 9, 32, 16>}, {pipeline_mode = #tpu.pipeline_mode<synchronous>, transform_indices = @transform_6, window_bounds = array<i64: 1, 16, 16, 16>}, {pipeline_mode = #tpu.pipeline_mode<synchronous>, transform_indices = @transform_7, window_bounds = array<i64: 9, 48, 128>}, {pipeline_mode = #tpu.pipeline_mode<synchronous>, transform_indices = @transform_8, window_bounds = array<i64: 1, 16, 16, 128>}, {transform_indices = @transform_9, window_bounds = array<i64: 1, 16, 16, 128>}]} {
    %cst = arith.constant 0.000000e+00 : f32
    %0 = vector.broadcast %cst : f32 to vector<1x1x18x48xf32>
    %cst_0 = arith.constant 0.000000e+00 : f32
    %1 = vector.broadcast %cst_0 : f32 to vector<1x18x1x48xf32>
    %c0 = arith.constant 0 : index
    %c0_1 = arith.constant 0 : index
    %c0_2 = arith.constant 0 : index
    %c0_3 = arith.constant 0 : index
    %2 = vector.load %arg11[%c0, %c0_1, %c0_2, %c0_3] : memref<1x18x18x48xf32, #tpu.memory_space<vmem>>, vector<1x1x18x48xf32>
    tpu.vector_store %arg11[%c0, %c0_1, %c0_2, %c0_3], %0 {strides = array<i32>} : memref<1x18x18x48xf32, #tpu.memory_space<vmem>>, vector<1x1x18x48xf32>,
    %c0_4 = arith.constant 0 : index
    %c17 = arith.constant 17 : index
    %c0_5 = arith.constant 0 : index
    %c0_6 = arith.constant 0 : index
    %3 = vector.load %arg11[%c0_4, %c17, %c0_5, %c0_6] : memref<1x18x18x48xf32, #tpu.memory_space<vmem>>, vector<1x1x18x48xf32>
    tpu.vector_store %arg11[%c0_4, %c17, %c0_5, %c0_6], %0 {strides = array<i32>} : memref<1x18x18x48xf32, #tpu.memory_space<vmem>>, vector<1x1x18x48xf32>,
    %c0_7 = arith.constant 0 : index
    %c0_8 = arith.constant 0 : index
    %c0_9 = arith.constant 0 : index
    %c0_10 = arith.constant 0 : index
    %4 = vector.load %arg11[%c0_7, %c0_8, %c0_9, %c0_10] : memref<1x18x18x48xf32, #tpu.memory_space<vmem>>, vector<1x18x1x48xf32>
    tpu.vector_store %arg11[%c0_7, %c0_8, %c0_9, %c0_10], %1 {strides = array<i32>} : memref<1x18x18x48xf32, #tpu.memory_space<vmem>>, vector<1x18x1x48xf32>,
    %c0_11 = arith.constant 0 : index
    %c0_12 = arith.constant 0 : index
    %c17_13 = arith.constant 17 : index
    %c0_14 = arith.constant 0 : index
    %5 = vector.load %arg11[%c0_11, %c0_12, %c17_13, %c0_14] : memref<1x18x18x48xf32, #tpu.memory_space<vmem>>, vector<1x18x1x48xf32>
    tpu.vector_store %arg11[%c0_11, %c0_12, %c17_13, %c0_14], %1 {strides = array<i32>} : memref<1x18x18x48xf32, #tpu.memory_space<vmem>>, vector<1x18x1x48xf32>,
    %c0_15 = arith.constant 0 : index
    %c0_16 = arith.constant 0 : index
    %c0_17 = arith.constant 0 : index
    %c0_18 = arith.constant 0 : index
    %6 = vector.load %arg1[%c0_15, %c0_16, %c0_17, %c0_18] : memref<1x16x16x2xf32, #tpu.memory_space<vmem>>, vector<1x16x16x2xf32>
    %c0_19 = arith.constant 0 : index
    %c1 = arith.constant 1 : index
    %c1_20 = arith.constant 1 : index
    %c0_21 = arith.constant 0 : index
    %7 = vector.load %arg11[%c0_19, %c1, %c1_20, %c0_21] : memref<1x18x18x48xf32, #tpu.memory_space<vmem>>, vector<1x16x16x2xf32>
    tpu.vector_store %arg11[%c0_19, %c1, %c1_20, %c0_21], %6 {strides = array<i32>} : memref<1x18x18x48xf32, #tpu.memory_space<vmem>>, vector<1x16x16x2xf32>,
    %c0_22 = arith.constant 0 : index
    %c0_23 = arith.constant 0 : index
    %c0_24 = arith.constant 0 : index
    %c0_25 = arith.constant 0 : index
    %8 = vector.load %arg11[%c0_22, %c0_23, %c0_24, %c0_25] : memref<1x18x18x48xf32, #tpu.memory_space<vmem>>, vector<1x18x18x2xf32>
    %9 = arith.truncf %8 : vector<1x18x18x2xf32> to vector<1x18x18x2xbf16>
    %10 = vector.extract_strided_slice %9 {offsets = [0, 0, 0, 0], sizes = [1, 18, 16, 2], strides = [1, 1, 1, 1]} : vector<1x18x18x2xbf16> to vector<1x18x16x2xbf16>
    %11 = vector.extract_strided_slice %9 {offsets = [0, 0, 1, 0], sizes = [1, 18, 16, 2], strides = [1, 1, 1, 1]} : vector<1x18x18x2xbf16> to vector<1x18x16x2xbf16>
    %12 = vector.extract_strided_slice %9 {offsets = [0, 0, 2, 0], sizes = [1, 18, 16, 2], strides = [1, 1, 1, 1]} : vector<1x18x18x2xbf16> to vector<1x18x16x2xbf16>
    %c0_26 = arith.constant 0 : index
    %c0_27 = arith.constant 0 : index
    %c0_28 = arith.constant 0 : index
    %c0_29 = arith.constant 0 : index
    %13 = vector.load %arg3[%c0_26, %c0_27, %c0_28, %c0_29] : memref<1x16x16x14xf32, #tpu.memory_space<vmem>>, vector<1x16x16x14xf32>
    %14 = vector.shape_cast %13 : vector<1x16x16x14xf32> to vector<256x14xf32>
    %15 = vector.extract_strided_slice %10 {offsets = [0, 0, 0, 0], sizes = [1, 16, 16, 2], strides = [1, 1, 1, 1]} : vector<1x18x16x2xbf16> to vector<1x16x16x2xbf16>
    %16 = vector.shape_cast %15 : vector<1x16x16x2xbf16> to vector<256x2xbf16>
    %c0_30 = arith.constant 0 : index
    %c0_31 = arith.constant 0 : index
    %c0_32 = arith.constant 0 : index
    %17 = vector.load %arg2[%c0_30, %c0_31, %c0_32] : memref<9x2x14xbf16, #tpu.memory_space<vmem>>, vector<1x2x14xbf16>
    %18 = vector.shape_cast %17 : vector<1x2x14xbf16> to vector<2x14xbf16>
    %cst_33 = arith.constant dense<0.000000e+00> : vector<256x14xf32>
    %19 = tpu.matmul %16, %18, %cst_33 {dimension_numbers = #tpu.dot_dimension_numbers<[1], [0], [0], [1], [0, 0, 1, 1], [], []>} : vector<256x2xbf16>, vector<2x14xbf16>, vector<256x14xf32> -> vector<256x14xf32>
    %20 = arith.addf %14, %19 : vector<256x14xf32>
    %21 = vector.extract_strided_slice %11 {offsets = [0, 0, 0, 0], sizes = [1, 16, 16, 2], strides = [1, 1, 1, 1]} : vector<1x18x16x2xbf16> to vector<1x16x16x2xbf16>
    %22 = vector.shape_cast %21 : vector<1x16x16x2xbf16> to vector<256x2xbf16>
    %c1_34 = arith.constant 1 : index
    %c0_35 = arith.constant 0 : index
    %c0_36 = arith.constant 0 : index
    %23 = vector.load %arg2[%c1_34, %c0_35, %c0_36] : memref<9x2x14xbf16, #tpu.memory_space<vmem>>, vector<1x2x14xbf16>
    %24 = vector.shape_cast %23 : vector<1x2x14xbf16> to vector<2x14xbf16>
    %cst_37 = arith.constant dense<0.000000e+00> : vector<256x14xf32>
    %25 = tpu.matmul %22, %24, %cst_37 {dimension_numbers = #tpu.dot_dimension_numbers<[1], [0], [0], [1], [0, 0, 1, 1], [], []>} : vector<256x2xbf16>, vector<2x14xbf16>, vector<256x14xf32> -> vector<256x14xf32>
    %26 = arith.addf %20, %25 : vector<256x14xf32>
    %27 = vector.extract_strided_slice %12 {offsets = [0, 0, 0, 0], sizes = [1, 16, 16, 2], strides = [1, 1, 1, 1]} : vector<1x18x16x2xbf16> to vector<1x16x16x2xbf16>
    %28 = vector.shape_cast %27 : vector<1x16x16x2xbf16> to vector<256x2xbf16>
    %c2 = arith.constant 2 : index
    %c0_38 = arith.constant 0 : index
    %c0_39 = arith.constant 0 : index
    %29 = vector.load %arg2[%c2, %c0_38, %c0_39] : memref<9x2x14xbf16, #tpu.memory_space<vmem>>, vector<1x2x14xbf16>
    %30 = vector.shape_cast %29 : vector<1x2x14xbf16> to vector<2x14xbf16>
    %cst_40 = arith.constant dense<0.000000e+00> : vector<256x14xf32>
    %31 = tpu.matmul %28, %30, %cst_40 {dimension_numbers = #tpu.dot_dimension_numbers<[1], [0], [0], [1], [0, 0, 1, 1], [], []>} : vector<256x2xbf16>, vector<2x14xbf16>, vector<256x14xf32> -> vector<256x14xf32>
    %32 = arith.addf %26, %31 : vector<256x14xf32>
    %33 = vector.extract_strided_slice %10 {offsets = [0, 1, 0, 0], sizes = [1, 16, 16, 2], strides = [1, 1, 1, 1]} : vector<1x18x16x2xbf16> to vector<1x16x16x2xbf16>
    %34 = vector.shape_cast %33 : vector<1x16x16x2xbf16> to vector<256x2xbf16>
    %c3 = arith.constant 3 : index
    %c0_41 = arith.constant 0 : index
    %c0_42 = arith.constant 0 : index
    %35 = vector.load %arg2[%c3, %c0_41, %c0_42] : memref<9x2x14xbf16, #tpu.memory_space<vmem>>, vector<1x2x14xbf16>
    %36 = vector.shape_cast %35 : vector<1x2x14xbf16> to vector<2x14xbf16>
    %cst_43 = arith.constant dense<0.000000e+00> : vector<256x14xf32>
    %37 = tpu.matmul %34, %36, %cst_43 {dimension_numbers = #tpu.dot_dimension_numbers<[1], [0], [0], [1], [0, 0, 1, 1], [], []>} : vector<256x2xbf16>, vector<2x14xbf16>, vector<256x14xf32> -> vector<256x14xf32>
    %38 = arith.addf %32, %37 : vector<256x14xf32>
    %39 = vector.extract_strided_slice %11 {offsets = [0, 1, 0, 0], sizes = [1, 16, 16, 2], strides = [1, 1, 1, 1]} : vector<1x18x16x2xbf16> to vector<1x16x16x2xbf16>
    %40 = vector.shape_cast %39 : vector<1x16x16x2xbf16> to vector<256x2xbf16>
    %c4 = arith.constant 4 : index
    %c0_44 = arith.constant 0 : index
    %c0_45 = arith.constant 0 : index
    %41 = vector.load %arg2[%c4, %c0_44, %c0_45] : memref<9x2x14xbf16, #tpu.memory_space<vmem>>, vector<1x2x14xbf16>
    %42 = vector.shape_cast %41 : vector<1x2x14xbf16> to vector<2x14xbf16>
    %cst_46 = arith.constant dense<0.000000e+00> : vector<256x14xf32>
    %43 = tpu.matmul %40, %42, %cst_46 {dimension_numbers = #tpu.dot_dimension_numbers<[1], [0], [0], [1], [0, 0, 1, 1], [], []>} : vector<256x2xbf16>, vector<2x14xbf16>, vector<256x14xf32> -> vector<256x14xf32>
    %44 = arith.addf %38, %43 : vector<256x14xf32>
    %45 = vector.extract_strided_slice %12 {offsets = [0, 1, 0, 0], sizes = [1, 16, 16, 2], strides = [1, 1, 1, 1]} : vector<1x18x16x2xbf16> to vector<1x16x16x2xbf16>
    %46 = vector.shape_cast %45 : vector<1x16x16x2xbf16> to vector<256x2xbf16>
    %c5 = arith.constant 5 : index
    %c0_47 = arith.constant 0 : index
    %c0_48 = arith.constant 0 : index
    %47 = vector.load %arg2[%c5, %c0_47, %c0_48] : memref<9x2x14xbf16, #tpu.memory_space<vmem>>, vector<1x2x14xbf16>
    %48 = vector.shape_cast %47 : vector<1x2x14xbf16> to vector<2x14xbf16>
    %cst_49 = arith.constant dense<0.000000e+00> : vector<256x14xf32>
    %49 = tpu.matmul %46, %48, %cst_49 {dimension_numbers = #tpu.dot_dimension_numbers<[1], [0], [0], [1], [0, 0, 1, 1], [], []>} : vector<256x2xbf16>, vector<2x14xbf16>, vector<256x14xf32> -> vector<256x14xf32>
    %50 = arith.addf %44, %49 : vector<256x14xf32>
    %51 = vector.extract_strided_slice %10 {offsets = [0, 2, 0, 0], sizes = [1, 16, 16, 2], strides = [1, 1, 1, 1]} : vector<1x18x16x2xbf16> to vector<1x16x16x2xbf16>
    %52 = vector.shape_cast %51 : vector<1x16x16x2xbf16> to vector<256x2xbf16>
    %c6 = arith.constant 6 : index
    %c0_50 = arith.constant 0 : index
    %c0_51 = arith.constant 0 : index
    %53 = vector.load %arg2[%c6, %c0_50, %c0_51] : memref<9x2x14xbf16, #tpu.memory_space<vmem>>, vector<1x2x14xbf16>
    %54 = vector.shape_cast %53 : vector<1x2x14xbf16> to vector<2x14xbf16>
    %cst_52 = arith.constant dense<0.000000e+00> : vector<256x14xf32>
    %55 = tpu.matmul %52, %54, %cst_52 {dimension_numbers = #tpu.dot_dimension_numbers<[1], [0], [0], [1], [0, 0, 1, 1], [], []>} : vector<256x2xbf16>, vector<2x14xbf16>, vector<256x14xf32> -> vector<256x14xf32>
    %56 = arith.addf %50, %55 : vector<256x14xf32>
    %57 = vector.extract_strided_slice %11 {offsets = [0, 2, 0, 0], sizes = [1, 16, 16, 2], strides = [1, 1, 1, 1]} : vector<1x18x16x2xbf16> to vector<1x16x16x2xbf16>
    %58 = vector.shape_cast %57 : vector<1x16x16x2xbf16> to vector<256x2xbf16>
    %c7 = arith.constant 7 : index
    %c0_53 = arith.constant 0 : index
    %c0_54 = arith.constant 0 : index
    %59 = vector.load %arg2[%c7, %c0_53, %c0_54] : memref<9x2x14xbf16, #tpu.memory_space<vmem>>, vector<1x2x14xbf16>
    %60 = vector.shape_cast %59 : vector<1x2x14xbf16> to vector<2x14xbf16>
    %cst_55 = arith.constant dense<0.000000e+00> : vector<256x14xf32>
    %61 = tpu.matmul %58, %60, %cst_55 {dimension_numbers = #tpu.dot_dimension_numbers<[1], [0], [0], [1], [0, 0, 1, 1], [], []>} : vector<256x2xbf16>, vector<2x14xbf16>, vector<256x14xf32> -> vector<256x14xf32>
    %62 = arith.addf %56, %61 : vector<256x14xf32>
    %63 = vector.extract_strided_slice %12 {offsets = [0, 2, 0, 0], sizes = [1, 16, 16, 2], strides = [1, 1, 1, 1]} : vector<1x18x16x2xbf16> to vector<1x16x16x2xbf16>
    %64 = vector.shape_cast %63 : vector<1x16x16x2xbf16> to vector<256x2xbf16>
    %c8 = arith.constant 8 : index
    %c0_56 = arith.constant 0 : index
    %c0_57 = arith.constant 0 : index
    %65 = vector.load %arg2[%c8, %c0_56, %c0_57] : memref<9x2x14xbf16, #tpu.memory_space<vmem>>, vector<1x2x14xbf16>
    %66 = vector.shape_cast %65 : vector<1x2x14xbf16> to vector<2x14xbf16>
    %cst_58 = arith.constant dense<0.000000e+00> : vector<256x14xf32>
    %67 = tpu.matmul %64, %66, %cst_58 {dimension_numbers = #tpu.dot_dimension_numbers<[1], [0], [0], [1], [0, 0, 1, 1], [], []>} : vector<256x2xbf16>, vector<2x14xbf16>, vector<256x14xf32> -> vector<256x14xf32>
    %68 = arith.addf %62, %67 : vector<256x14xf32>
    %cst_59 = arith.constant 0.000000e+00 : f32
    %69 = vector.broadcast %cst_59 : f32 to vector<256x14xf32>
    %70 = arith.maximumf %68, %69 : vector<256x14xf32>
    %71 = vector.shape_cast %70 : vector<256x14xf32> to vector<1x16x16x14xf32>
    %c0_60 = arith.constant 0 : index
    %c1_61 = arith.constant 1 : index
    %c1_62 = arith.constant 1 : index
    %c2_63 = arith.constant 2 : index
    %72 = vector.load %arg11[%c0_60, %c1_61, %c1_62, %c2_63] : memref<1x18x18x48xf32, #tpu.memory_space<vmem>>, vector<1x16x16x14xf32>
    tpu.vector_store %arg11[%c0_60, %c1_61, %c1_62, %c2_63], %71 {strides = array<i32>} : memref<1x18x18x48xf32, #tpu.memory_space<vmem>>, vector<1x16x16x14xf32>,
    %c0_64 = arith.constant 0 : index
    %c0_65 = arith.constant 0 : index
    %c0_66 = arith.constant 0 : index
    %c0_67 = arith.constant 0 : index
    %73 = vector.load %arg11[%c0_64, %c0_65, %c0_66, %c0_67] : memref<1x18x18x48xf32, #tpu.memory_space<vmem>>, vector<1x18x18x16xf32>
    %74 = arith.truncf %73 : vector<1x18x18x16xf32> to vector<1x18x18x16xbf16>
    %75 = vector.extract_strided_slice %74 {offsets = [0, 0, 0, 0], sizes = [1, 18, 16, 16], strides = [1, 1, 1, 1]} : vector<1x18x18x16xbf16> to vector<1x18x16x16xbf16>
    %76 = vector.extract_strided_slice %74 {offsets = [0, 0, 1, 0], sizes = [1, 18, 16, 16], strides = [1, 1, 1, 1]} : vector<1x18x18x16xbf16> to vector<1x18x16x16xbf16>
    %77 = vector.extract_strided_slice %74 {offsets = [0, 0, 2, 0], sizes = [1, 18, 16, 16], strides = [1, 1, 1, 1]} : vector<1x18x18x16xbf16> to vector<1x18x16x16xbf16>
    %c0_68 = arith.constant 0 : index
    %c0_69 = arith.constant 0 : index
    %c0_70 = arith.constant 0 : index
    %c0_71 = arith.constant 0 : index
    %78 = vector.load %arg5[%c0_68, %c0_69, %c0_70, %c0_71] : memref<1x16x16x16xf32, #tpu.memory_space<vmem>>, vector<1x16x16x16xf32>
    %79 = vector.shape_cast %78 : vector<1x16x16x16xf32> to vector<256x16xf32>
    %80 = vector.extract_strided_slice %75 {offsets = [0, 0, 0, 0], sizes = [1, 16, 16, 16], strides = [1, 1, 1, 1]} : vector<1x18x16x16xbf16> to vector<1x16x16x16xbf16>
    %81 = vector.shape_cast %80 : vector<1x16x16x16xbf16> to vector<256x16xbf16>
    %c0_72 = arith.constant 0 : index
    %c0_73 = arith.constant 0 : index
    %c0_74 = arith.constant 0 : index
    %82 = vector.load %arg4[%c0_72, %c0_73, %c0_74] : memref<9x16x16xbf16, #tpu.memory_space<vmem>>, vector<1x16x16xbf16>
    %83 = vector.shape_cast %82 : vector<1x16x16xbf16> to vector<16x16xbf16>
    %cst_75 = arith.constant dense<0.000000e+00> : vector<256x16xf32>
    %84 = tpu.matmul %81, %83, %cst_75 {dimension_numbers = #tpu.dot_dimension_numbers<[1], [0], [0], [1], [0, 0, 1, 1], [], []>} : vector<256x16xbf16>, vector<16x16xbf16>, vector<256x16xf32> -> vector<256x16xf32>
    %85 = arith.addf %79, %84 : vector<256x16xf32>
    %86 = vector.extract_strided_slice %76 {offsets = [0, 0, 0, 0], sizes = [1, 16, 16, 16], strides = [1, 1, 1, 1]} : vector<1x18x16x16xbf16> to vector<1x16x16x16xbf16>
    %87 = vector.shape_cast %86 : vector<1x16x16x16xbf16> to vector<256x16xbf16>
    %c1_76 = arith.constant 1 : index
    %c0_77 = arith.constant 0 : index
    %c0_78 = arith.constant 0 : index
    %88 = vector.load %arg4[%c1_76, %c0_77, %c0_78] : memref<9x16x16xbf16, #tpu.memory_space<vmem>>, vector<1x16x16xbf16>
    %89 = vector.shape_cast %88 : vector<1x16x16xbf16> to vector<16x16xbf16>
    %cst_79 = arith.constant dense<0.000000e+00> : vector<256x16xf32>
    %90 = tpu.matmul %87, %89, %cst_79 {dimension_numbers = #tpu.dot_dimension_numbers<[1], [0], [0], [1], [0, 0, 1, 1], [], []>} : vector<256x16xbf16>, vector<16x16xbf16>, vector<256x16xf32> -> vector<256x16xf32>
    %91 = arith.addf %85, %90 : vector<256x16xf32>
    %92 = vector.extract_strided_slice %77 {offsets = [0, 0, 0, 0], sizes = [1, 16, 16, 16], strides = [1, 1, 1, 1]} : vector<1x18x16x16xbf16> to vector<1x16x16x16xbf16>
    %93 = vector.shape_cast %92 : vector<1x16x16x16xbf16> to vector<256x16xbf16>
    %c2_80 = arith.constant 2 : index
    %c0_81 = arith.constant 0 : index
    %c0_82 = arith.constant 0 : index
    %94 = vector.load %arg4[%c2_80, %c0_81, %c0_82] : memref<9x16x16xbf16, #tpu.memory_space<vmem>>, vector<1x16x16xbf16>
    %95 = vector.shape_cast %94 : vector<1x16x16xbf16> to vector<16x16xbf16>
    %cst_83 = arith.constant dense<0.000000e+00> : vector<256x16xf32>
    %96 = tpu.matmul %93, %95, %cst_83 {dimension_numbers = #tpu.dot_dimension_numbers<[1], [0], [0], [1], [0, 0, 1, 1], [], []>} : vector<256x16xbf16>, vector<16x16xbf16>, vector<256x16xf32> -> vector<256x16xf32>
    %97 = arith.addf %91, %96 : vector<256x16xf32>
    %98 = vector.extract_strided_slice %75 {offsets = [0, 1, 0, 0], sizes = [1, 16, 16, 16], strides = [1, 1, 1, 1]} : vector<1x18x16x16xbf16> to vector<1x16x16x16xbf16>
    %99 = vector.shape_cast %98 : vector<1x16x16x16xbf16> to vector<256x16xbf16>
    %c3_84 = arith.constant 3 : index
    %c0_85 = arith.constant 0 : index
    %c0_86 = arith.constant 0 : index
    %100 = vector.load %arg4[%c3_84, %c0_85, %c0_86] : memref<9x16x16xbf16, #tpu.memory_space<vmem>>, vector<1x16x16xbf16>
    %101 = vector.shape_cast %100 : vector<1x16x16xbf16> to vector<16x16xbf16>
    %cst_87 = arith.constant dense<0.000000e+00> : vector<256x16xf32>
    %102 = tpu.matmul %99, %101, %cst_87 {dimension_numbers = #tpu.dot_dimension_numbers<[1], [0], [0], [1], [0, 0, 1, 1], [], []>} : vector<256x16xbf16>, vector<16x16xbf16>, vector<256x16xf32> -> vector<256x16xf32>
    %103 = arith.addf %97, %102 : vector<256x16xf32>
    %104 = vector.extract_strided_slice %76 {offsets = [0, 1, 0, 0], sizes = [1, 16, 16, 16], strides = [1, 1, 1, 1]} : vector<1x18x16x16xbf16> to vector<1x16x16x16xbf16>
    %105 = vector.shape_cast %104 : vector<1x16x16x16xbf16> to vector<256x16xbf16>
    %c4_88 = arith.constant 4 : index
    %c0_89 = arith.constant 0 : index
    %c0_90 = arith.constant 0 : index
    %106 = vector.load %arg4[%c4_88, %c0_89, %c0_90] : memref<9x16x16xbf16, #tpu.memory_space<vmem>>, vector<1x16x16xbf16>
    %107 = vector.shape_cast %106 : vector<1x16x16xbf16> to vector<16x16xbf16>
    %cst_91 = arith.constant dense<0.000000e+00> : vector<256x16xf32>
    %108 = tpu.matmul %105, %107, %cst_91 {dimension_numbers = #tpu.dot_dimension_numbers<[1], [0], [0], [1], [0, 0, 1, 1], [], []>} : vector<256x16xbf16>, vector<16x16xbf16>, vector<256x16xf32> -> vector<256x16xf32>
    %109 = arith.addf %103, %108 : vector<256x16xf32>
    %110 = vector.extract_strided_slice %77 {offsets = [0, 1, 0, 0], sizes = [1, 16, 16, 16], strides = [1, 1, 1, 1]} : vector<1x18x16x16xbf16> to vector<1x16x16x16xbf16>
    %111 = vector.shape_cast %110 : vector<1x16x16x16xbf16> to vector<256x16xbf16>
    %c5_92 = arith.constant 5 : index
    %c0_93 = arith.constant 0 : index
    %c0_94 = arith.constant 0 : index
    %112 = vector.load %arg4[%c5_92, %c0_93, %c0_94] : memref<9x16x16xbf16, #tpu.memory_space<vmem>>, vector<1x16x16xbf16>
    %113 = vector.shape_cast %112 : vector<1x16x16xbf16> to vector<16x16xbf16>
    %cst_95 = arith.constant dense<0.000000e+00> : vector<256x16xf32>
    %114 = tpu.matmul %111, %113, %cst_95 {dimension_numbers = #tpu.dot_dimension_numbers<[1], [0], [0], [1], [0, 0, 1, 1], [], []>} : vector<256x16xbf16>, vector<16x16xbf16>, vector<256x16xf32> -> vector<256x16xf32>
    %115 = arith.addf %109, %114 : vector<256x16xf32>
    %116 = vector.extract_strided_slice %75 {offsets = [0, 2, 0, 0], sizes = [1, 16, 16, 16], strides = [1, 1, 1, 1]} : vector<1x18x16x16xbf16> to vector<1x16x16x16xbf16>
    %117 = vector.shape_cast %116 : vector<1x16x16x16xbf16> to vector<256x16xbf16>
    %c6_96 = arith.constant 6 : index
    %c0_97 = arith.constant 0 : index
    %c0_98 = arith.constant 0 : index
    %118 = vector.load %arg4[%c6_96, %c0_97, %c0_98] : memref<9x16x16xbf16, #tpu.memory_space<vmem>>, vector<1x16x16xbf16>
    %119 = vector.shape_cast %118 : vector<1x16x16xbf16> to vector<16x16xbf16>
    %cst_99 = arith.constant dense<0.000000e+00> : vector<256x16xf32>
    %120 = tpu.matmul %117, %119, %cst_99 {dimension_numbers = #tpu.dot_dimension_numbers<[1], [0], [0], [1], [0, 0, 1, 1], [], []>} : vector<256x16xbf16>, vector<16x16xbf16>, vector<256x16xf32> -> vector<256x16xf32>
    %121 = arith.addf %115, %120 : vector<256x16xf32>
    %122 = vector.extract_strided_slice %76 {offsets = [0, 2, 0, 0], sizes = [1, 16, 16, 16], strides = [1, 1, 1, 1]} : vector<1x18x16x16xbf16> to vector<1x16x16x16xbf16>
    %123 = vector.shape_cast %122 : vector<1x16x16x16xbf16> to vector<256x16xbf16>
    %c7_100 = arith.constant 7 : index
    %c0_101 = arith.constant 0 : index
    %c0_102 = arith.constant 0 : index
    %124 = vector.load %arg4[%c7_100, %c0_101, %c0_102] : memref<9x16x16xbf16, #tpu.memory_space<vmem>>, vector<1x16x16xbf16>
    %125 = vector.shape_cast %124 : vector<1x16x16xbf16> to vector<16x16xbf16>
    %cst_103 = arith.constant dense<0.000000e+00> : vector<256x16xf32>
    %126 = tpu.matmul %123, %125, %cst_103 {dimension_numbers = #tpu.dot_dimension_numbers<[1], [0], [0], [1], [0, 0, 1, 1], [], []>} : vector<256x16xbf16>, vector<16x16xbf16>, vector<256x16xf32> -> vector<256x16xf32>
    %127 = arith.addf %121, %126 : vector<256x16xf32>
    %128 = vector.extract_strided_slice %77 {offsets = [0, 2, 0, 0], sizes = [1, 16, 16, 16], strides = [1, 1, 1, 1]} : vector<1x18x16x16xbf16> to vector<1x16x16x16xbf16>
    %129 = vector.shape_cast %128 : vector<1x16x16x16xbf16> to vector<256x16xbf16>
    %c8_104 = arith.constant 8 : index
    %c0_105 = arith.constant 0 : index
    %c0_106 = arith.constant 0 : index
    %130 = vector.load %arg4[%c8_104, %c0_105, %c0_106] : memref<9x16x16xbf16, #tpu.memory_space<vmem>>, vector<1x16x16xbf16>
    %131 = vector.shape_cast %130 : vector<1x16x16xbf16> to vector<16x16xbf16>
    %cst_107 = arith.constant dense<0.000000e+00> : vector<256x16xf32>
    %132 = tpu.matmul %129, %131, %cst_107 {dimension_numbers = #tpu.dot_dimension_numbers<[1], [0], [0], [1], [0, 0, 1, 1], [], []>} : vector<256x16xbf16>, vector<16x16xbf16>, vector<256x16xf32> -> vector<256x16xf32>
    %133 = arith.addf %127, %132 : vector<256x16xf32>
    %cst_108 = arith.constant 0.000000e+00 : f32
    %134 = vector.broadcast %cst_108 : f32 to vector<256x16xf32>
    %135 = arith.maximumf %133, %134 : vector<256x16xf32>
    %136 = vector.shape_cast %135 : vector<256x16xf32> to vector<1x16x16x16xf32>
    %c0_109 = arith.constant 0 : index
    %c1_110 = arith.constant 1 : index
    %c1_111 = arith.constant 1 : index
    %c16 = arith.constant 16 : index
    %137 = vector.load %arg11[%c0_109, %c1_110, %c1_111, %c16] : memref<1x18x18x48xf32, #tpu.memory_space<vmem>>, vector<1x16x16x16xf32>
    tpu.vector_store %arg11[%c0_109, %c1_110, %c1_111, %c16], %136 {strides = array<i32>} : memref<1x18x18x48xf32, #tpu.memory_space<vmem>>, vector<1x16x16x16xf32>,
    %c0_112 = arith.constant 0 : index
    %c0_113 = arith.constant 0 : index
    %c0_114 = arith.constant 0 : index
    %c0_115 = arith.constant 0 : index
    %138 = vector.load %arg11[%c0_112, %c0_113, %c0_114, %c0_115] : memref<1x18x18x48xf32, #tpu.memory_space<vmem>>, vector<1x18x18x32xf32>
    %139 = arith.truncf %138 : vector<1x18x18x32xf32> to vector<1x18x18x32xbf16>
    %140 = vector.extract_strided_slice %139 {offsets = [0, 0, 0, 0], sizes = [1, 18, 16, 32], strides = [1, 1, 1, 1]} : vector<1x18x18x32xbf16> to vector<1x18x16x32xbf16>
    %141 = vector.extract_strided_slice %139 {offsets = [0, 0, 1, 0], sizes = [1, 18, 16, 32], strides = [1, 1, 1, 1]} : vector<1x18x18x32xbf16> to vector<1x18x16x32xbf16>
    %142 = vector.extract_strided_slice %139 {offsets = [0, 0, 2, 0], sizes = [1, 18, 16, 32], strides = [1, 1, 1, 1]} : vector<1x18x18x32xbf16> to vector<1x18x16x32xbf16>
    %c0_116 = arith.constant 0 : index
    %c0_117 = arith.constant 0 : index
    %c0_118 = arith.constant 0 : index
    %c0_119 = arith.constant 0 : index
    %143 = vector.load %arg7[%c0_116, %c0_117, %c0_118, %c0_119] : memref<1x16x16x16xf32, #tpu.memory_space<vmem>>, vector<1x16x16x16xf32>
    %144 = vector.shape_cast %143 : vector<1x16x16x16xf32> to vector<256x16xf32>
    %145 = vector.extract_strided_slice %140 {offsets = [0, 0, 0, 0], sizes = [1, 16, 16, 32], strides = [1, 1, 1, 1]} : vector<1x18x16x32xbf16> to vector<1x16x16x32xbf16>
    %146 = vector.shape_cast %145 : vector<1x16x16x32xbf16> to vector<256x32xbf16>
    %c0_120 = arith.constant 0 : index
    %c0_121 = arith.constant 0 : index
    %c0_122 = arith.constant 0 : index
    %147 = vector.load %arg6[%c0_120, %c0_121, %c0_122] : memref<9x32x16xbf16, #tpu.memory_space<vmem>>, vector<1x32x16xbf16>
    %148 = vector.shape_cast %147 : vector<1x32x16xbf16> to vector<32x16xbf16>
    %cst_123 = arith.constant dense<0.000000e+00> : vector<256x16xf32>
    %149 = tpu.matmul %146, %148, %cst_123 {dimension_numbers = #tpu.dot_dimension_numbers<[1], [0], [0], [1], [0, 0, 1, 1], [], []>} : vector<256x32xbf16>, vector<32x16xbf16>, vector<256x16xf32> -> vector<256x16xf32>
    %150 = arith.addf %144, %149 : vector<256x16xf32>
    %151 = vector.extract_strided_slice %141 {offsets = [0, 0, 0, 0], sizes = [1, 16, 16, 32], strides = [1, 1, 1, 1]} : vector<1x18x16x32xbf16> to vector<1x16x16x32xbf16>
    %152 = vector.shape_cast %151 : vector<1x16x16x32xbf16> to vector<256x32xbf16>
    %c1_124 = arith.constant 1 : index
    %c0_125 = arith.constant 0 : index
    %c0_126 = arith.constant 0 : index
    %153 = vector.load %arg6[%c1_124, %c0_125, %c0_126] : memref<9x32x16xbf16, #tpu.memory_space<vmem>>, vector<1x32x16xbf16>
    %154 = vector.shape_cast %153 : vector<1x32x16xbf16> to vector<32x16xbf16>
    %cst_127 = arith.constant dense<0.000000e+00> : vector<256x16xf32>
    %155 = tpu.matmul %152, %154, %cst_127 {dimension_numbers = #tpu.dot_dimension_numbers<[1], [0], [0], [1], [0, 0, 1, 1], [], []>} : vector<256x32xbf16>, vector<32x16xbf16>, vector<256x16xf32> -> vector<256x16xf32>
    %156 = arith.addf %150, %155 : vector<256x16xf32>
    %157 = vector.extract_strided_slice %142 {offsets = [0, 0, 0, 0], sizes = [1, 16, 16, 32], strides = [1, 1, 1, 1]} : vector<1x18x16x32xbf16> to vector<1x16x16x32xbf16>
    %158 = vector.shape_cast %157 : vector<1x16x16x32xbf16> to vector<256x32xbf16>
    %c2_128 = arith.constant 2 : index
    %c0_129 = arith.constant 0 : index
    %c0_130 = arith.constant 0 : index
    %159 = vector.load %arg6[%c2_128, %c0_129, %c0_130] : memref<9x32x16xbf16, #tpu.memory_space<vmem>>, vector<1x32x16xbf16>
    %160 = vector.shape_cast %159 : vector<1x32x16xbf16> to vector<32x16xbf16>
    %cst_131 = arith.constant dense<0.000000e+00> : vector<256x16xf32>
    %161 = tpu.matmul %158, %160, %cst_131 {dimension_numbers = #tpu.dot_dimension_numbers<[1], [0], [0], [1], [0, 0, 1, 1], [], []>} : vector<256x32xbf16>, vector<32x16xbf16>, vector<256x16xf32> -> vector<256x16xf32>
    %162 = arith.addf %156, %161 : vector<256x16xf32>
    %163 = vector.extract_strided_slice %140 {offsets = [0, 1, 0, 0], sizes = [1, 16, 16, 32], strides = [1, 1, 1, 1]} : vector<1x18x16x32xbf16> to vector<1x16x16x32xbf16>
    %164 = vector.shape_cast %163 : vector<1x16x16x32xbf16> to vector<256x32xbf16>
    %c3_132 = arith.constant 3 : index
    %c0_133 = arith.constant 0 : index
    %c0_134 = arith.constant 0 : index
    %165 = vector.load %arg6[%c3_132, %c0_133, %c0_134] : memref<9x32x16xbf16, #tpu.memory_space<vmem>>, vector<1x32x16xbf16>
    %166 = vector.shape_cast %165 : vector<1x32x16xbf16> to vector<32x16xbf16>
    %cst_135 = arith.constant dense<0.000000e+00> : vector<256x16xf32>
    %167 = tpu.matmul %164, %166, %cst_135 {dimension_numbers = #tpu.dot_dimension_numbers<[1], [0], [0], [1], [0, 0, 1, 1], [], []>} : vector<256x32xbf16>, vector<32x16xbf16>, vector<256x16xf32> -> vector<256x16xf32>
    %168 = arith.addf %162, %167 : vector<256x16xf32>
    %169 = vector.extract_strided_slice %141 {offsets = [0, 1, 0, 0], sizes = [1, 16, 16, 32], strides = [1, 1, 1, 1]} : vector<1x18x16x32xbf16> to vector<1x16x16x32xbf16>
    %170 = vector.shape_cast %169 : vector<1x16x16x32xbf16> to vector<256x32xbf16>
    %c4_136 = arith.constant 4 : index
    %c0_137 = arith.constant 0 : index
    %c0_138 = arith.constant 0 : index
    %171 = vector.load %arg6[%c4_136, %c0_137, %c0_138] : memref<9x32x16xbf16, #tpu.memory_space<vmem>>, vector<1x32x16xbf16>
    %172 = vector.shape_cast %171 : vector<1x32x16xbf16> to vector<32x16xbf16>
    %cst_139 = arith.constant dense<0.000000e+00> : vector<256x16xf32>
    %173 = tpu.matmul %170, %172, %cst_139 {dimension_numbers = #tpu.dot_dimension_numbers<[1], [0], [0], [1], [0, 0, 1, 1], [], []>} : vector<256x32xbf16>, vector<32x16xbf16>, vector<256x16xf32> -> vector<256x16xf32>
    %174 = arith.addf %168, %173 : vector<256x16xf32>
    %175 = vector.extract_strided_slice %142 {offsets = [0, 1, 0, 0], sizes = [1, 16, 16, 32], strides = [1, 1, 1, 1]} : vector<1x18x16x32xbf16> to vector<1x16x16x32xbf16>
    %176 = vector.shape_cast %175 : vector<1x16x16x32xbf16> to vector<256x32xbf16>
    %c5_140 = arith.constant 5 : index
    %c0_141 = arith.constant 0 : index
    %c0_142 = arith.constant 0 : index
    %177 = vector.load %arg6[%c5_140, %c0_141, %c0_142] : memref<9x32x16xbf16, #tpu.memory_space<vmem>>, vector<1x32x16xbf16>
    %178 = vector.shape_cast %177 : vector<1x32x16xbf16> to vector<32x16xbf16>
    %cst_143 = arith.constant dense<0.000000e+00> : vector<256x16xf32>
    %179 = tpu.matmul %176, %178, %cst_143 {dimension_numbers = #tpu.dot_dimension_numbers<[1], [0], [0], [1], [0, 0, 1, 1], [], []>} : vector<256x32xbf16>, vector<32x16xbf16>, vector<256x16xf32> -> vector<256x16xf32>
    %180 = arith.addf %174, %179 : vector<256x16xf32>
    %181 = vector.extract_strided_slice %140 {offsets = [0, 2, 0, 0], sizes = [1, 16, 16, 32], strides = [1, 1, 1, 1]} : vector<1x18x16x32xbf16> to vector<1x16x16x32xbf16>
    %182 = vector.shape_cast %181 : vector<1x16x16x32xbf16> to vector<256x32xbf16>
    %c6_144 = arith.constant 6 : index
    %c0_145 = arith.constant 0 : index
    %c0_146 = arith.constant 0 : index
    %183 = vector.load %arg6[%c6_144, %c0_145, %c0_146] : memref<9x32x16xbf16, #tpu.memory_space<vmem>>, vector<1x32x16xbf16>
    %184 = vector.shape_cast %183 : vector<1x32x16xbf16> to vector<32x16xbf16>
    %cst_147 = arith.constant dense<0.000000e+00> : vector<256x16xf32>
    %185 = tpu.matmul %182, %184, %cst_147 {dimension_numbers = #tpu.dot_dimension_numbers<[1], [0], [0], [1], [0, 0, 1, 1], [], []>} : vector<256x32xbf16>, vector<32x16xbf16>, vector<256x16xf32> -> vector<256x16xf32>
    %186 = arith.addf %180, %185 : vector<256x16xf32>
    %187 = vector.extract_strided_slice %141 {offsets = [0, 2, 0, 0], sizes = [1, 16, 16, 32], strides = [1, 1, 1, 1]} : vector<1x18x16x32xbf16> to vector<1x16x16x32xbf16>
    %188 = vector.shape_cast %187 : vector<1x16x16x32xbf16> to vector<256x32xbf16>
    %c7_148 = arith.constant 7 : index
    %c0_149 = arith.constant 0 : index
    %c0_150 = arith.constant 0 : index
    %189 = vector.load %arg6[%c7_148, %c0_149, %c0_150] : memref<9x32x16xbf16, #tpu.memory_space<vmem>>, vector<1x32x16xbf16>
    %190 = vector.shape_cast %189 : vector<1x32x16xbf16> to vector<32x16xbf16>
    %cst_151 = arith.constant dense<0.000000e+00> : vector<256x16xf32>
    %191 = tpu.matmul %188, %190, %cst_151 {dimension_numbers = #tpu.dot_dimension_numbers<[1], [0], [0], [1], [0, 0, 1, 1], [], []>} : vector<256x32xbf16>, vector<32x16xbf16>, vector<256x16xf32> -> vector<256x16xf32>
    %192 = arith.addf %186, %191 : vector<256x16xf32>
    %193 = vector.extract_strided_slice %142 {offsets = [0, 2, 0, 0], sizes = [1, 16, 16, 32], strides = [1, 1, 1, 1]} : vector<1x18x16x32xbf16> to vector<1x16x16x32xbf16>
    %194 = vector.shape_cast %193 : vector<1x16x16x32xbf16> to vector<256x32xbf16>
    %c8_152 = arith.constant 8 : index
    %c0_153 = arith.constant 0 : index
    %c0_154 = arith.constant 0 : index
    %195 = vector.load %arg6[%c8_152, %c0_153, %c0_154] : memref<9x32x16xbf16, #tpu.memory_space<vmem>>, vector<1x32x16xbf16>
    %196 = vector.shape_cast %195 : vector<1x32x16xbf16> to vector<32x16xbf16>
    %cst_155 = arith.constant dense<0.000000e+00> : vector<256x16xf32>
    %197 = tpu.matmul %194, %196, %cst_155 {dimension_numbers = #tpu.dot_dimension_numbers<[1], [0], [0], [1], [0, 0, 1, 1], [], []>} : vector<256x32xbf16>, vector<32x16xbf16>, vector<256x16xf32> -> vector<256x16xf32>
    %198 = arith.addf %192, %197 : vector<256x16xf32>
    %cst_156 = arith.constant 0.000000e+00 : f32
    %199 = vector.broadcast %cst_156 : f32 to vector<256x16xf32>
    %200 = arith.maximumf %198, %199 : vector<256x16xf32>
    %201 = vector.shape_cast %200 : vector<256x16xf32> to vector<1x16x16x16xf32>
    %c0_157 = arith.constant 0 : index
    %c1_158 = arith.constant 1 : index
    %c1_159 = arith.constant 1 : index
    %c32 = arith.constant 32 : index
    %202 = vector.load %arg11[%c0_157, %c1_158, %c1_159, %c32] : memref<1x18x18x48xf32, #tpu.memory_space<vmem>>, vector<1x16x16x16xf32>
    tpu.vector_store %arg11[%c0_157, %c1_158, %c1_159, %c32], %201 {strides = array<i32>} : memref<1x18x18x48xf32, #tpu.memory_space<vmem>>, vector<1x16x16x16xf32>,
    %c0_160 = arith.constant 0 : index
    %c0_161 = arith.constant 0 : index
    %c0_162 = arith.constant 0 : index
    %c0_163 = arith.constant 0 : index
    %203 = vector.load %arg11[%c0_160, %c0_161, %c0_162, %c0_163] : memref<1x18x18x48xf32, #tpu.memory_space<vmem>>, vector<1x18x18x48xf32>
    %204 = arith.truncf %203 : vector<1x18x18x48xf32> to vector<1x18x18x48xbf16>
    %205 = vector.extract_strided_slice %204 {offsets = [0, 0, 0, 0], sizes = [1, 18, 16, 48], strides = [1, 1, 1, 1]} : vector<1x18x18x48xbf16> to vector<1x18x16x48xbf16>
    %206 = vector.extract_strided_slice %204 {offsets = [0, 0, 1, 0], sizes = [1, 18, 16, 48], strides = [1, 1, 1, 1]} : vector<1x18x18x48xbf16> to vector<1x18x16x48xbf16>
    %207 = vector.extract_strided_slice %204 {offsets = [0, 0, 2, 0], sizes = [1, 18, 16, 48], strides = [1, 1, 1, 1]} : vector<1x18x18x48xbf16> to vector<1x18x16x48xbf16>
    %c0_164 = arith.constant 0 : index
    %c0_165 = arith.constant 0 : index
    %c0_166 = arith.constant 0 : index
    %c0_167 = arith.constant 0 : index
    %208 = vector.load %arg9[%c0_164, %c0_165, %c0_166, %c0_167] : memref<1x16x16x128xf32, #tpu.memory_space<vmem>>, vector<1x16x16x128xf32>
    %209 = vector.shape_cast %208 : vector<1x16x16x128xf32> to vector<256x128xf32>
    %210 = vector.extract_strided_slice %205 {offsets = [0, 0, 0, 0], sizes = [1, 16, 16, 48], strides = [1, 1, 1, 1]} : vector<1x18x16x48xbf16> to vector<1x16x16x48xbf16>
    %211 = vector.shape_cast %210 : vector<1x16x16x48xbf16> to vector<256x48xbf16>
    %c0_168 = arith.constant 0 : index
    %c0_169 = arith.constant 0 : index
    %c0_170 = arith.constant 0 : index
    %212 = vector.load %arg8[%c0_168, %c0_169, %c0_170] : memref<9x48x128xbf16, #tpu.memory_space<vmem>>, vector<1x48x128xbf16>
    %213 = vector.shape_cast %212 : vector<1x48x128xbf16> to vector<48x128xbf16>
    %cst_171 = arith.constant dense<0.000000e+00> : vector<256x128xf32>
    %214 = tpu.matmul %211, %213, %cst_171 {dimension_numbers = #tpu.dot_dimension_numbers<[1], [0], [0], [1], [0, 0, 1, 1], [], []>} : vector<256x48xbf16>, vector<48x128xbf16>, vector<256x128xf32> -> vector<256x128xf32>
    %215 = arith.addf %209, %214 : vector<256x128xf32>
    %216 = vector.extract_strided_slice %206 {offsets = [0, 0, 0, 0], sizes = [1, 16, 16, 48], strides = [1, 1, 1, 1]} : vector<1x18x16x48xbf16> to vector<1x16x16x48xbf16>
    %217 = vector.shape_cast %216 : vector<1x16x16x48xbf16> to vector<256x48xbf16>
    %c1_172 = arith.constant 1 : index
    %c0_173 = arith.constant 0 : index
    %c0_174 = arith.constant 0 : index
    %218 = vector.load %arg8[%c1_172, %c0_173, %c0_174] : memref<9x48x128xbf16, #tpu.memory_space<vmem>>, vector<1x48x128xbf16>
    %219 = vector.shape_cast %218 : vector<1x48x128xbf16> to vector<48x128xbf16>
    %cst_175 = arith.constant dense<0.000000e+00> : vector<256x128xf32>
    %220 = tpu.matmul %217, %219, %cst_175 {dimension_numbers = #tpu.dot_dimension_numbers<[1], [0], [0], [1], [0, 0, 1, 1], [], []>} : vector<256x48xbf16>, vector<48x128xbf16>, vector<256x128xf32> -> vector<256x128xf32>
    %221 = arith.addf %215, %220 : vector<256x128xf32>
    %222 = vector.extract_strided_slice %207 {offsets = [0, 0, 0, 0], sizes = [1, 16, 16, 48], strides = [1, 1, 1, 1]} : vector<1x18x16x48xbf16> to vector<1x16x16x48xbf16>
    %223 = vector.shape_cast %222 : vector<1x16x16x48xbf16> to vector<256x48xbf16>
    %c2_176 = arith.constant 2 : index
    %c0_177 = arith.constant 0 : index
    %c0_178 = arith.constant 0 : index
    %224 = vector.load %arg8[%c2_176, %c0_177, %c0_178] : memref<9x48x128xbf16, #tpu.memory_space<vmem>>, vector<1x48x128xbf16>
    %225 = vector.shape_cast %224 : vector<1x48x128xbf16> to vector<48x128xbf16>
    %cst_179 = arith.constant dense<0.000000e+00> : vector<256x128xf32>
    %226 = tpu.matmul %223, %225, %cst_179 {dimension_numbers = #tpu.dot_dimension_numbers<[1], [0], [0], [1], [0, 0, 1, 1], [], []>} : vector<256x48xbf16>, vector<48x128xbf16>, vector<256x128xf32> -> vector<256x128xf32>
    %227 = arith.addf %221, %226 : vector<256x128xf32>
    %228 = vector.extract_strided_slice %205 {offsets = [0, 1, 0, 0], sizes = [1, 16, 16, 48], strides = [1, 1, 1, 1]} : vector<1x18x16x48xbf16> to vector<1x16x16x48xbf16>
    %229 = vector.shape_cast %228 : vector<1x16x16x48xbf16> to vector<256x48xbf16>
    %c3_180 = arith.constant 3 : index
    %c0_181 = arith.constant 0 : index
    %c0_182 = arith.constant 0 : index
    %230 = vector.load %arg8[%c3_180, %c0_181, %c0_182] : memref<9x48x128xbf16, #tpu.memory_space<vmem>>, vector<1x48x128xbf16>
    %231 = vector.shape_cast %230 : vector<1x48x128xbf16> to vector<48x128xbf16>
    %cst_183 = arith.constant dense<0.000000e+00> : vector<256x128xf32>
    %232 = tpu.matmul %229, %231, %cst_183 {dimension_numbers = #tpu.dot_dimension_numbers<[1], [0], [0], [1], [0, 0, 1, 1], [], []>} : vector<256x48xbf16>, vector<48x128xbf16>, vector<256x128xf32> -> vector<256x128xf32>
    %233 = arith.addf %227, %232 : vector<256x128xf32>
    %234 = vector.extract_strided_slice %206 {offsets = [0, 1, 0, 0], sizes = [1, 16, 16, 48], strides = [1, 1, 1, 1]} : vector<1x18x16x48xbf16> to vector<1x16x16x48xbf16>
    %235 = vector.shape_cast %234 : vector<1x16x16x48xbf16> to vector<256x48xbf16>
    %c4_184 = arith.constant 4 : index
    %c0_185 = arith.constant 0 : index
    %c0_186 = arith.constant 0 : index
    %236 = vector.load %arg8[%c4_184, %c0_185, %c0_186] : memref<9x48x128xbf16, #tpu.memory_space<vmem>>, vector<1x48x128xbf16>
    %237 = vector.shape_cast %236 : vector<1x48x128xbf16> to vector<48x128xbf16>
    %cst_187 = arith.constant dense<0.000000e+00> : vector<256x128xf32>
    %238 = tpu.matmul %235, %237, %cst_187 {dimension_numbers = #tpu.dot_dimension_numbers<[1], [0], [0], [1], [0, 0, 1, 1], [], []>} : vector<256x48xbf16>, vector<48x128xbf16>, vector<256x128xf32> -> vector<256x128xf32>
    %239 = arith.addf %233, %238 : vector<256x128xf32>
    %240 = vector.extract_strided_slice %207 {offsets = [0, 1, 0, 0], sizes = [1, 16, 16, 48], strides = [1, 1, 1, 1]} : vector<1x18x16x48xbf16> to vector<1x16x16x48xbf16>
    %241 = vector.shape_cast %240 : vector<1x16x16x48xbf16> to vector<256x48xbf16>
    %c5_188 = arith.constant 5 : index
    %c0_189 = arith.constant 0 : index
    %c0_190 = arith.constant 0 : index
    %242 = vector.load %arg8[%c5_188, %c0_189, %c0_190] : memref<9x48x128xbf16, #tpu.memory_space<vmem>>, vector<1x48x128xbf16>
    %243 = vector.shape_cast %242 : vector<1x48x128xbf16> to vector<48x128xbf16>
    %cst_191 = arith.constant dense<0.000000e+00> : vector<256x128xf32>
    %244 = tpu.matmul %241, %243, %cst_191 {dimension_numbers = #tpu.dot_dimension_numbers<[1], [0], [0], [1], [0, 0, 1, 1], [], []>} : vector<256x48xbf16>, vector<48x128xbf16>, vector<256x128xf32> -> vector<256x128xf32>
    %245 = arith.addf %239, %244 : vector<256x128xf32>
    %246 = vector.extract_strided_slice %205 {offsets = [0, 2, 0, 0], sizes = [1, 16, 16, 48], strides = [1, 1, 1, 1]} : vector<1x18x16x48xbf16> to vector<1x16x16x48xbf16>
    %247 = vector.shape_cast %246 : vector<1x16x16x48xbf16> to vector<256x48xbf16>
    %c6_192 = arith.constant 6 : index
    %c0_193 = arith.constant 0 : index
    %c0_194 = arith.constant 0 : index
    %248 = vector.load %arg8[%c6_192, %c0_193, %c0_194] : memref<9x48x128xbf16, #tpu.memory_space<vmem>>, vector<1x48x128xbf16>
    %249 = vector.shape_cast %248 : vector<1x48x128xbf16> to vector<48x128xbf16>
    %cst_195 = arith.constant dense<0.000000e+00> : vector<256x128xf32>
    %250 = tpu.matmul %247, %249, %cst_195 {dimension_numbers = #tpu.dot_dimension_numbers<[1], [0], [0], [1], [0, 0, 1, 1], [], []>} : vector<256x48xbf16>, vector<48x128xbf16>, vector<256x128xf32> -> vector<256x128xf32>
    %251 = arith.addf %245, %250 : vector<256x128xf32>
    %252 = vector.extract_strided_slice %206 {offsets = [0, 2, 0, 0], sizes = [1, 16, 16, 48], strides = [1, 1, 1, 1]} : vector<1x18x16x48xbf16> to vector<1x16x16x48xbf16>
    %253 = vector.shape_cast %252 : vector<1x16x16x48xbf16> to vector<256x48xbf16>
    %c7_196 = arith.constant 7 : index
    %c0_197 = arith.constant 0 : index
    %c0_198 = arith.constant 0 : index
    %254 = vector.load %arg8[%c7_196, %c0_197, %c0_198] : memref<9x48x128xbf16, #tpu.memory_space<vmem>>, vector<1x48x128xbf16>
    %255 = vector.shape_cast %254 : vector<1x48x128xbf16> to vector<48x128xbf16>
    %cst_199 = arith.constant dense<0.000000e+00> : vector<256x128xf32>
    %256 = tpu.matmul %253, %255, %cst_199 {dimension_numbers = #tpu.dot_dimension_numbers<[1], [0], [0], [1], [0, 0, 1, 1], [], []>} : vector<256x48xbf16>, vector<48x128xbf16>, vector<256x128xf32> -> vector<256x128xf32>
    %257 = arith.addf %251, %256 : vector<256x128xf32>
    %258 = vector.extract_strided_slice %207 {offsets = [0, 2, 0, 0], sizes = [1, 16, 16, 48], strides = [1, 1, 1, 1]} : vector<1x18x16x48xbf16> to vector<1x16x16x48xbf16>
    %259 = vector.shape_cast %258 : vector<1x16x16x48xbf16> to vector<256x48xbf16>
    %c8_200 = arith.constant 8 : index
    %c0_201 = arith.constant 0 : index
    %c0_202 = arith.constant 0 : index
    %260 = vector.load %arg8[%c8_200, %c0_201, %c0_202] : memref<9x48x128xbf16, #tpu.memory_space<vmem>>, vector<1x48x128xbf16>
    %261 = vector.shape_cast %260 : vector<1x48x128xbf16> to vector<48x128xbf16>
    %cst_203 = arith.constant dense<0.000000e+00> : vector<256x128xf32>
    %262 = tpu.matmul %259, %261, %cst_203 {dimension_numbers = #tpu.dot_dimension_numbers<[1], [0], [0], [1], [0, 0, 1, 1], [], []>} : vector<256x48xbf16>, vector<48x128xbf16>, vector<256x128xf32> -> vector<256x128xf32>
    %263 = arith.addf %257, %262 : vector<256x128xf32>
    %cst_204 = arith.constant 0.000000e+00 : f32
    %264 = vector.broadcast %cst_204 : f32 to vector<256x128xf32>
    %265 = arith.maximumf %263, %264 : vector<256x128xf32>
    %266 = vector.shape_cast %265 : vector<256x128xf32> to vector<1x16x16x128xf32>
    %c0_205 = arith.constant 0 : index
    %c0_206 = arith.constant 0 : index
    %c0_207 = arith.constant 0 : index
    %c0_208 = arith.constant 0 : index
    %267 = vector.load %arg10[%c0_205, %c0_206, %c0_207, %c0_208] : memref<1x16x16x128xf32, #tpu.memory_space<vmem>>, vector<1x16x16x128xf32>
    tpu.vector_store %arg10[%c0_205, %c0_206, %c0_207, %c0_208], %266 {strides = array<i32>} : memref<1x16x16x128xf32, #tpu.memory_space<vmem>>, vector<1x16x16x128xf32>,
    return
  }
  func.func @transform_0(%arg0: i32) -> (i32, i32, i32, i32) {
    %c0_i32 = arith.constant 0 : i32
    %c0_i32_0 = arith.constant 0 : i32
    %c0_i32_1 = arith.constant 0 : i32
    %c0_i32_2 = arith.constant 0 : i32
    return %arg0, %c0_i32, %c0_i32_0, %c0_i32_1 : i32, i32, i32, i32
  }
  func.func @transform_1(%arg0: i32) -> (i32, i32, i32) {
    %c0_i32 = arith.constant 0 : i32
    %c0_i32_0 = arith.constant 0 : i32
    %c0_i32_1 = arith.constant 0 : i32
    %c0_i32_2 = arith.constant 0 : i32
    return %c0_i32, %c0_i32_0, %c0_i32_1 : i32, i32, i32
  }
  func.func @transform_2(%arg0: i32) -> (i32, i32, i32, i32) {
    %c0_i32 = arith.constant 0 : i32
    %c0_i32_0 = arith.constant 0 : i32
    %c0_i32_1 = arith.constant 0 : i32
    %c0_i32_2 = arith.constant 0 : i32
    %c0_i32_3 = arith.constant 0 : i32
    return %c0_i32, %c0_i32_0, %c0_i32_1, %c0_i32_2 : i32, i32, i32, i32
  }
  func.func @transform_3(%arg0: i32) -> (i32, i32, i32) {
    %c0_i32 = arith.constant 0 : i32
    %c0_i32_0 = arith.constant 0 : i32
    %c0_i32_1 = arith.constant 0 : i32
    %c0_i32_2 = arith.constant 0 : i32
    return %c0_i32, %c0_i32_0, %c0_i32_1 : i32, i32, i32
  }
  func.func @transform_4(%arg0: i32) -> (i32, i32, i32, i32) {
    %c0_i32 = arith.constant 0 : i32
    %c0_i32_0 = arith.constant 0 : i32
    %c0_i32_1 = arith.constant 0 : i32
    %c0_i32_2 = arith.constant 0 : i32
    %c0_i32_3 = arith.constant 0 : i32
    return %c0_i32, %c0_i32_0, %c0_i32_1, %c0_i32_2 : i32, i32, i32, i32
  }
  func.func @transform_5(%arg0: i32) -> (i32, i32, i32) {
    %c0_i32 = arith.constant 0 : i32
    %c0_i32_0 = arith.constant 0 : i32
    %c0_i32_1 = arith.constant 0 : i32
    %c0_i32_2 = arith.constant 0 : i32
    return %c0_i32, %c0_i32_0, %c0_i32_1 : i32, i32, i32
  }
  func.func @transform_6(%arg0: i32) -> (i32, i32, i32, i32) {
    %c0_i32 = arith.constant 0 : i32
    %c0_i32_0 = arith.constant 0 : i32
    %c0_i32_1 = arith.constant 0 : i32
    %c0_i32_2 = arith.constant 0 : i32
    %c0_i32_3 = arith.constant 0 : i32
    return %c0_i32, %c0_i32_0, %c0_i32_1, %c0_i32_2 : i32, i32, i32, i32
  }
  func.func @transform_7(%arg0: i32) -> (i32, i32, i32) {
    %c0_i32 = arith.constant 0 : i32
    %c0_i32_0 = arith.constant 0 : i32
    %c0_i32_1 = arith.constant 0 : i32
    %c0_i32_2 = arith.constant 0 : i32
    return %c0_i32, %c0_i32_0, %c0_i32_1 : i32, i32, i32
  }
  func.func @transform_8(%arg0: i32) -> (i32, i32, i32, i32) {
    %c0_i32 = arith.constant 0 : i32
    %c0_i32_0 = arith.constant 0 : i32
    %c0_i32_1 = arith.constant 0 : i32
    %c0_i32_2 = arith.constant 0 : i32
    %c0_i32_3 = arith.constant 0 : i32
    return %c0_i32, %c0_i32_0, %c0_i32_1, %c0_i32_2 : i32, i32, i32, i32
  }
  func.func @transform_9(%arg0: i32) -> (i32, i32, i32, i32) {
    %c0_i32 = arith.constant 0 : i32
    %c0_i32_0 = arith.constant 0 : i32
    %c0_i32_1 = arith.constant 0 : i32
    %c0_i32_2 = arith.constant 0 : i32
    return %arg0, %c0_i32, %c0_i32_0, %c0_i32_1 : i32, i32, i32, i32
  }
}

</mosaic_0001>

<llo_original>
// kernel: dense_block_forward.1
$region0: #{dense_block_forward.1}
  #allocation0 [shape = 'u32[]', space=smem, size = 0x4, offset = 0x4, fixed_abs, tag = 'smem constant byte address 0x4 - core index']
  #allocation1 [shape = 'u32[72,128]{1,0:T(1,128)}', space=vmem, size = 0x9000, scoped, tag = 'internal scratch']
  #allocation2 [shape = 'f32[1,18,18,48]{3,2,1,0:T(8,128)}', space=vmem, size = 0x36000, scoped, tag = 'scratch operand']
  %s0 = inlined_call_operand.vmem [shape: f32[2,16,16,2], index: 0, kind: input, shape index: {}]
  %s1 = inlined_call_operand.vmem [shape: bf16[9,2,14], index: 1, kind: input, shape index: {}]
  %s2 = inlined_call_operand.vmem [shape: f32[1,16,16,14], index: 2, kind: input, shape index: {}]
  %s3 = inlined_call_operand.vmem [shape: bf16[9,16,16], index: 3, kind: input, shape index: {}]
  %s4 = inlined_call_operand.vmem [shape: f32[1,16,16,16], index: 4, kind: input, shape index: {}]
  %s5 = inlined_call_operand.vmem [shape: bf16[9,32,16], index: 5, kind: input, shape index: {}]
  %s6 = inlined_call_operand.vmem [shape: f32[1,16,16,16], index: 6, kind: input, shape index: {}]
  %s7 = inlined_call_operand.vmem [shape: bf16[9,48,128], index: 7, kind: input, shape index: {}]
  %s8 = inlined_call_operand.vmem [shape: f32[1,16,16,128], index: 8, kind: input, shape index: {}]
  %s9 = inlined_call_operand.vmem [shape: f32[2,16,16,128], index: 9, kind: output, shape index: {}]
  %s10 = sld [smem:[#allocation0]]
  $region69: #{dense_block_forward.1} parent=0
    _
  %s12 = ssub.s32 1, %s10
  %s13 = scalar_select 0, %s12, %s10
  loop: start=0, step=1, limit=4
  $region2: #{dense_block_forward.1} parent=0 // loop_pre_header
    _
  $region3: #{dense_block_forward.1} parent=0 // loop_header
    %s15 = sphi 0, %s19
    %p16 = scmp.ge.s32.totalorder %s15, 4
    %s25 = sphi 0, %s27
    %s28 = sphi 0, %s25
    %s29 = sphi 0, %s28
    %s45 = sphi 0, %s29
    %s49 = sphi 0, %s49
    %s51 = sphi 0, %s49
    %s52 = sphi 0, %s51
    %s66 = sphi 0, %s52
    %s70 = sphi 0, %s70
    %s72 = sphi 0, %s70
    %s73 = sphi 0, %s72
    %s87 = sphi 0, %s73
    %s91 = sphi 0, %s91
    %s93 = sphi 0, %s91
    %s94 = sphi 0, %s93
    %s108 = sphi 0, %s94
    %s112 = sphi 0, %s112
    %s114 = sphi 0, %s112
    %s115 = sphi 0, %s114
    %s129 = sphi 0, %s115
    %s133 = sphi 0, %s133
    %s135 = sphi 0, %s133
    %s136 = sphi 0, %s135
    %s150 = sphi 0, %s136
    %s154 = sphi 0, %s154
    %s156 = sphi 0, %s154
    %s157 = sphi 0, %s156
    %s171 = sphi 0, %s157
    %s175 = sphi 0, %s175
    %s177 = sphi 0, %s175
    %s178 = sphi 0, %s177
    %s192 = sphi 0, %s178
    %s196 = sphi 0, %s196
    %s198 = sphi 0, %s196
    %s199 = sphi 0, %s198
    %s213 = sphi 0, %s199
    %s219 = sphi 0, %s221
    %s222 = sphi 0, %s219
    %s223 = sphi 0, %s222
    %s239 = sphi 0, %s223
  $region4: #{dense_block_forward.1} parent=0 // loop_header_branch
    %18 = sbr.rel (%p16) target = $region8
  $region5: #{dense_block_forward.1} parent=0 // loop_body
    %s20 = ssub.s32 %s15, 1
    %s21 = ssub.s32 %s15, 2
    %s22 = sadd.s32 %s15, 1
    %s23 = ssub.s32 %s15, %s22
    %p24 = scmp.eq.s32.totalorder %s23, 0
    %s26 = sadd.s32 %s25, 1
    %s27 = scalar_select %p24, %s25, %s26
    %p30 = pneg %p24
    %p31 = scmp.eq.s32.totalorder %s15, 1
    %p32 = por %p30, %p31
    %p33 = scmp.ne.s32.totalorder %s25, %s28
    %p34 = scmp.eq.s32.totalorder %s15, 0
    %p35 = por %p33, %p34
    %p36 = scmp.ne.s32.totalorder %s25, %s28
    %p37 = scmp.eq.s32.totalorder %s20, 1
    %p38 = por %p36, %p37
    %p39 = scmp.ne.s32.totalorder %s28, %s29
    %p40 = scmp.eq.s32.totalorder %s20, 0
    %p41 = por %p39, %p40
    %p42 = scmp.ne.s32.totalorder %s28, %s29
    %p43 = scmp.eq.s32.totalorder %s21, 1
    %p44 = por %p42, %p43
    %p46 = scmp.ne.s32.totalorder %s29, %s45
    %p47 = scmp.eq.s32.totalorder %s21, 0
    %p48 = por %p46, %p47
    %s50 = sadd.s32 %s49, 1
    %p53 = scmp.eq.s32.totalorder %s15, 1
    %p54 = scmp.ne.s32.totalorder %s49, %s51
    %p55 = scmp.eq.s32.totalorder %s15, 0
    %p56 = por %p54, %p55
    %p57 = scmp.ne.s32.totalorder %s49, %s51
    %p58 = scmp.eq.s32.totalorder %s20, 1
    %p59 = por %p57, %p58
    %p60 = scmp.ne.s32.totalorder %s51, %s52
    %p61 = scmp.eq.s32.totalorder %s20, 0
    %p62 = por %p60, %p61
    %p63 = scmp.ne.s32.totalorder %s51, %s52
    %p64 = scmp.eq.s32.totalorder %s21, 1
    %p65 = por %p63, %p64
    %p67 = scmp.ne.s32.totalorder %s52, %s66
    %p68 = scmp.eq.s32.totalorder %s21, 0
    %p69 = por %p67, %p68
    %s71 = sadd.s32 %s70, 1
    %p74 = scmp.eq.s32.totalorder %s15, 1
    %p75 = scmp.ne.s32.totalorder %s70, %s72
    %p76 = scmp.eq.s32.totalorder %s15, 0
    %p77 = por %p75, %p76
    %p78 = scmp.ne.s32.totalorder %s70, %s72
    %p79 = scmp.eq.s32.totalorder %s20, 1
    %p80 = por %p78, %p79
    %p81 = scmp.ne.s32.totalorder %s72, %s73
    %p82 = scmp.eq.s32.totalorder %s20, 0
    %p83 = por %p81, %p82
    %p84 = scmp.ne.s32.totalorder %s72, %s73
    %p85 = scmp.eq.s32.totalorder %s21, 1
    %p86 = por %p84, %p85
    %p88 = scmp.ne.s32.totalorder %s73, %s87
    %p89 = scmp.eq.s32.totalorder %s21, 0
    %p90 = por %p88, %p89
    %s92 = sadd.s32 %s91, 1
    %p95 = scmp.eq.s32.totalorder %s15, 1
    %p96 = scmp.ne.s32.totalorder %s91, %s93
    %p97 = scmp.eq.s32.totalorder %s15, 0
    %p98 = por %p96, %p97
    %p99 = scmp.ne.s32.totalorder %s91, %s93
    %p100 = scmp.eq.s32.totalorder %s20, 1
    %p101 = por %p99, %p100
    %p102 = scmp.ne.s32.totalorder %s93, %s94
    %p103 = scmp.eq.s32.totalorder %s20, 0
    %p104 = por %p102, %p103
    %p105 = scmp.ne.s32.totalorder %s93, %s94
    %p106 = scmp.eq.s32.totalorder %s21, 1
    %p107 = por %p105, %p106
    %p109 = scmp.ne.s32.totalorder %s94, %s108
    %p110 = scmp.eq.s32.totalorder %s21, 0
    %p111 = por %p109, %p110
    %s113 = sadd.s32 %s112, 1
    %p116 = scmp.eq.s32.totalorder %s15, 1
    %p117 = scmp.ne.s32.totalorder %s112, %s114
    %p118 = scmp.eq.s32.totalorder %s15, 0
    %p119 = por %p117, %p118
    %p120 = scmp.ne.s32.totalorder %s112, %s114
    %p121 = scmp.eq.s32.totalorder %s20, 1
    %p122 = por %p120, %p121
    %p123 = scmp.ne.s32.totalorder %s114, %s115
    %p124 = scmp.eq.s32.totalorder %s20, 0
    %p125 = por %p123, %p124
    %p126 = scmp.ne.s32.totalorder %s114, %s115
    %p127 = scmp.eq.s32.totalorder %s21, 1
    %p128 = por %p126, %p127
    %p130 = scmp.ne.s32.totalorder %s115, %s129
    %p131 = scmp.eq.s32.totalorder %s21, 0
    %p132 = por %p130, %p131
    %s134 = sadd.s32 %s133, 1
    %p137 = scmp.eq.s32.totalorder %s15, 1
    %p138 = scmp.ne.s32.totalorder %s133, %s135
    %p139 = scmp.eq.s32.totalorder %s15, 0
    %p140 = por %p138, %p139
    %p141 = scmp.ne.s32.totalorder %s133, %s135
    %p142 = scmp.eq.s32.totalorder %s20, 1
    %p143 = por %p141, %p142
    %p144 = scmp.ne.s32.totalorder %s135, %s136
    %p145 = scmp.eq.s32.totalorder %s20, 0
    %p146 = por %p144, %p145
    %p147 = scmp.ne.s32.totalorder %s135, %s136
    %p148 = scmp.eq.s32.totalorder %s21, 1
    %p149 = por %p147, %p148
    %p151 = scmp.ne.s32.totalorder %s136, %s150
    %p152 = scmp.eq.s32.totalorder %s21, 0
    %p153 = por %p151, %p152
    %s155 = sadd.s32 %s154, 1
    %p158 = scmp.eq.s32.totalorder %s15, 1
    %p159 = scmp.ne.s32.totalorder %s154, %s156
    %p160 = scmp.eq.s32.totalorder %s15, 0
    %p161 = por %p159, %p160
    %p162 = scmp.ne.s32.totalorder %s154, %s156
    %p163 = scmp.eq.s32.totalorder %s20, 1
    %p164 = por %p162, %p163
    %p165 = scmp.ne.s32.totalorder %s156, %s157
    %p166 = scmp.eq.s32.totalorder %s20, 0
    %p167 = por %p165, %p166
    %p168 = scmp.ne.s32.totalorder %s156, %s157
    %p169 = scmp.eq.s32.totalorder %s21, 1
    %p170 = por %p168, %p169
    %p172 = scmp.ne.s32.totalorder %s157, %s171
    %p173 = scmp.eq.s32.totalorder %s21, 0
    %p174 = por %p172, %p173
    %s176 = sadd.s32 %s175, 1
    %p179 = scmp.eq.s32.totalorder %s15, 1
    %p180 = scmp.ne.s32.totalorder %s175, %s177
    %p181 = scmp.eq.s32.totalorder %s15, 0
    %p182 = por %p180, %p181
    %p183 = scmp.ne.s32.totalorder %s175, %s177
    %p184 = scmp.eq.s32.totalorder %s20, 1
    %p185 = por %p183, %p184
    %p186 = scmp.ne.s32.totalorder %s177, %s178
    %p187 = scmp.eq.s32.totalorder %s20, 0
    %p188 = por %p186, %p187
    %p189 = scmp.ne.s32.totalorder %s177, %s178
    %p190 = scmp.eq.s32.totalorder %s21, 1
    %p191 = por %p189, %p190
    %p193 = scmp.ne.s32.totalorder %s178, %s192
    %p194 = scmp.eq.s32.totalorder %s21, 0
    %p195 = por %p193, %p194
    %s197 = sadd.s32 %s196, 1
    %p200 = scmp.eq.s32.totalorder %s15, 1
    %p201 = scmp.ne.s32.totalorder %s196, %s198
    %p202 = scmp.eq.s32.totalorder %s15, 0
    %p203 = por %p201, %p202
    %p204 = scmp.ne.s32.totalorder %s196, %s198
    %p205 = scmp.eq.s32.totalorder %s20, 1
    %p206 = por %p204, %p205
    %p207 = scmp.ne.s32.totalorder %s198, %s199
    %p208 = scmp.eq.s32.totalorder %s20, 0
    %p209 = por %p207, %p208
    %p210 = scmp.ne.s32.totalorder %s198, %s199
    %p211 = scmp.eq.s32.totalorder %s21, 1
    %p212 = por %p210, %p211
    %p214 = scmp.ne.s32.totalorder %s199, %s213
    %p215 = scmp.eq.s32.totalorder %s21, 0
    %p216 = por %p214, %p215
    %s217 = ssub.s32 %s15, %s22
    %p218 = scmp.eq.s32.totalorder %s217, 0
    %s220 = sadd.s32 %s219, 1
    %s221 = scalar_select %p218, %s219, %s220
    %p224 = pneg %p218
    %p225 = scmp.eq.s32.totalorder %s15, 1
    %p226 = por %p224, %p225
    %p227 = scmp.ne.s32.totalorder %s219, %s222
    %p228 = scmp.eq.s32.totalorder %s15, 0
    %p229 = por %p227, %p228
    %p230 = scmp.ne.s32.totalorder %s219, %s222
    %p231 = scmp.eq.s32.totalorder %s20, 1
    %p232 = por %p230, %p231
    %p233 = scmp.ne.s32.totalorder %s222, %s223
    %p234 = scmp.eq.s32.totalorder %s20, 0
    %p235 = por %p233, %p234
    %p236 = scmp.ne.s32.totalorder %s222, %s223
    %p237 = scmp.eq.s32.totalorder %s21, 1
    %p238 = por %p236, %p237
    %p240 = scmp.ne.s32.totalorder %s223, %s239
    %p241 = scmp.eq.s32.totalorder %s21, 0
    %p242 = por %p240, %p241
    %p243 = scmp.le.s32.totalorder 1, %s15
    %p244 = scmp.lt.s32.totalorder %s15, 3
    %p245 = pnand %p243, %p244
    %p246 = pneg %p245
    // Predicated region
    $region9: #{dense_block_forward.1} parent=5 // pred_check
      _
    $region10: #{dense_block_forward.1} parent=5 // pred_check_branch
      %248 = sbr.rel (%p245) target = $region12
    $region11: #{dense_block_forward.1} parent=5 // pred_region
      %s249 = ssub.s32 %s15, 1
      // Predicated region
      $region13: #{dense_block_forward.1} parent=11 // pred_check
        %p250 = pneg %p62
      $region14: #{dense_block_forward.1} parent=11 // pred_check_branch
        %252 = sbr.rel (%p250) target = $region16
      $region15: #{dense_block_forward.1} parent=11 // pred_region
        _
      $region16: #{dense_block_forward.1} parent=11 // pred_fallthru
        _
      // Predicated region
      $region17: #{dense_block_forward.1} parent=11 // pred_check
        %p253 = pneg %p83
      $region18: #{dense_block_forward.1} parent=11 // pred_check_branch
        %255 = sbr.rel (%p253) target = $region20
      $region19: #{dense_block_forward.1} parent=11 // pred_region
        _
      $region20: #{dense_block_forward.1} parent=11 // pred_fallthru
        _
      // Predicated region
      $region21: #{dense_block_forward.1} parent=11 // pred_check
        %p256 = pneg %p104
      $region22: #{dense_block_forward.1} parent=11 // pred_check_branch
        %258 = sbr.rel (%p256) target = $region24
      $region23: #{dense_block_forward.1} parent=11 // pred_region
        _
      $region24: #{dense_block_forward.1} parent=11 // pred_fallthru
        _
      // Predicated region
      $region25: #{dense_block_forward.1} parent=11 // pred_check
        %p259 = pneg %p125
      $region26: #{dense_block_forward.1} parent=11 // pred_check_branch
        %261 = sbr.rel (%p259) target = $region28
      $region27: #{dense_block_forward.1} parent=11 // pred_region
        _
      $region28: #{dense_block_forward.1} parent=11 // pred_fallthru
        _
      // Predicated region
      $region29: #{dense_block_forward.1} parent=11 // pred_check
        %p262 = pneg %p146
      $region30: #{dense_block_forward.1} parent=11 // pred_check_branch
        %264 = sbr.rel (%p262) target = $region32
      $region31: #{dense_block_forward.1} parent=11 // pred_region
        _
      $region32: #{dense_block_forward.1} parent=11 // pred_fallthru
        _
      // Predicated region
      $region33: #{dense_block_forward.1} parent=11 // pred_check
        %p265 = pneg %p167
      $region34: #{dense_block_forward.1} parent=11 // pred_check_branch
        %267 = sbr.rel (%p265) target = $region36
      $region35: #{dense_block_forward.1} parent=11 // pred_region
        _
      $region36: #{dense_block_forward.1} parent=11 // pred_fallthru
        _
      // Predicated region
      $region37: #{dense_block_forward.1} parent=11 // pred_check
        %p268 = pneg %p188
      $region38: #{dense_block_forward.1} parent=11 // pred_check_branch
        %270 = sbr.rel (%p268) target = $region40
      $region39: #{dense_block_forward.1} parent=11 // pred_region
        _
      $region40: #{dense_block_forward.1} parent=11 // pred_fallthru
        _
      // Predicated region
      $region41: #{dense_block_forward.1} parent=11 // pred_check
        %p271 = pneg %p209
      $region42: #{dense_block_forward.1} parent=11 // pred_check_branch
        %273 = sbr.rel (%p271) target = $region44
      $region43: #{dense_block_forward.1} parent=11 // pred_region
        _
      $region44: #{dense_block_forward.1} parent=11 // pred_fallthru
        _
    $region12: #{dense_block_forward.1} parent=5 // pred_fallthru
      _
    %p274 = scmp.lt.s32.totalorder %s15, 2
    // Predicated region
    $region45: #{dense_block_forward.1} parent=5 // pred_check
      %p275 = pneg %p274
    $region46: #{dense_block_forward.1} parent=5 // pred_check_branch
      %277 = sbr.rel (%p275) target = $region48
    $region47: #{dense_block_forward.1} parent=5 // pred_region
      // Predicated region
      $region49: #{dense_block_forward.1} parent=47 // pred_check
        %p278 = pneg %p35
      $region50: #{dense_block_forward.1} parent=47 // pred_check_branch
        %280 = sbr.rel (%p278) target = $region52
      $region51: #{dense_block_forward.1} parent=47 // pred_region
        %p281 = scmp.lt.s32.totalorder %s15, 1
        %s282 = scalar_select %p281, %s15, 1
        %s283 = smul.addr %s282, 32
        %s284 = smul.addr %s283, 8
        %s285 = scalar_lea.vmem %s0, %s284
      $region52: #{dense_block_forward.1} parent=47 // pred_fallthru
        _
    $region48: #{dense_block_forward.1} parent=5 // pred_fallthru
      _
    %p286 = scmp.le.s32.totalorder 1, %s15
    %p287 = scmp.lt.s32.totalorder %s15, 3
    %p288 = pnand %p286, %p287
    %p289 = pneg %p288
    // Predicated region
    $region53: #{dense_block_forward.1} parent=5 // pred_check
      _
    $region54: #{dense_block_forward.1} parent=5 // pred_check_branch
      %291 = sbr.rel (%p288) target = $region56
    $region55: #{dense_block_forward.1} parent=5 // pred_region
      %s292 = ssub.s32 %s15, 1
      %p293 = scmp.lt.s32.totalorder %s20, 1
      %s294 = scalar_select %p293, %s20, 1
      %s295 = smul.addr %s294, 32
      %s296 = smul.addr %s295, 8
      %s297 = scalar_lea.vmem %s0, %s296
      %p298 = pneg %p41
      %p299 = pneg %p38
      %p300 = pneg %p62
      %p301 = pneg %p59
      %p302 = pneg %p83
      %p303 = pneg %p80
      %p304 = pneg %p104
      %p305 = pneg %p101
      %p306 = pneg %p125
      %p307 = pneg %p122
      %p308 = pneg %p146
      %p309 = pneg %p143
      %p310 = pneg %p167
      %p311 = pneg %p164
      %p312 = pneg %p188
      %p313 = pneg %p185
      %p314 = pneg %p209
      %p315 = pneg %p206
      %p316 = pneg %p235
      %p317 = pneg %p232
      %p318 = scmp.lt.s32.totalorder %s20, 1
      %s319 = scalar_select %p318, %s20, 1
      %s320 = smul.addr %s319, 32
      %s321 = smul.addr %s320, 8
      %s322 = scalar_lea.vmem %s9, %s321
      %p323 = scmp.lt.s32.totalorder %s20, 1
      %s324 = scalar_select %p323, %s20, 1
      %s325 = smul.addr %s324, 32
      %s326 = smul.addr %s325, 8
      %s327 = scalar_lea.vmem %s0, %s326
      %p328 = scmp.lt.s32.totalorder %s20, 1
      %s329 = scalar_select %p328, %s20, 1
      %s330 = smul.addr %s329, 32
      %s331 = smul.addr %s330, 8
      %s332 = scalar_lea.vmem %s9, %s331
      %vm334 = vcmask 392192
      %335 = vst.msk [vmem:[#allocation2] sm:$0xff] %vm334, 0.0
      %336 = vst.msk [vmem:[#allocation2 + $0x8] sm:$0xff] %vm334, 0.0
      %vm337 = vcmask 386048
      %338 = vst.msk [vmem:[#allocation2 + $0x10] sm:$0x3] %vm337, 0.0
      %s339 = scalar_lea.vmem [#allocation2], 408
      %340 = vst.msk [vmem:[%s339] sm:$0xff] %vm334, 0.0
      %341 = vst.msk [vmem:[%s339 + $0x8] sm:$0xff] %vm334, 0.0
      %342 = vst.msk [vmem:[%s339 + $0x10] sm:$0x3] %vm337, 0.0
      %vm343 = vcmask 385024
      %344 = vst.msk [vmem:[#allocation2] sm:$0x1] %vm343, 0.0
      %345 = vst.msk [vmem:[#allocation2 + $0x18] sm:$0x1] %vm343, 0.0
      %346 = vst.msk [vmem:[#allocation2 + $0x30] sm:$0x1] %vm343, 0.0
      %347 = vst.msk [vmem:[#allocation2 + $0x48] sm:$0x1] %vm343, 0.0
      %348 = vst.msk [vmem:[#allocation2 + $0x60] sm:$0x1] %vm343, 0.0
      %349 = vst.msk [vmem:[#allocation2 + $0x78] sm:$0x1] %vm343, 0.0
      %350 = vst.msk [vmem:[#allocation2 + $0x90] sm:$0x1] %vm343, 0.0
      %351 = vst.msk [vmem:[#allocation2 + $0xa8] sm:$0x1] %vm343, 0.0
      %352 = vst.msk [vmem:[#allocation2 + $0xc0] sm:$0x1] %vm343, 0.0
      %353 = vst.msk [vmem:[#allocation2 + $0xd8] sm:$0x1] %vm343, 0.0
      %354 = vst.msk [vmem:[#allocation2 + $0xf0] sm:$0x1] %vm343, 0.0
      %355 = vst.msk [vmem:[#allocation2 + $0x108] sm:$0x1] %vm343, 0.0
      %356 = vst.msk [vmem:[#allocation2 + $0x120] sm:$0x1] %vm343, 0.0
      %357 = vst.msk [vmem:[#allocation2 + $0x138] sm:$0x1] %vm343, 0.0
      %358 = vst.msk [vmem:[#allocation2 + $0x150] sm:$0x1] %vm343, 0.0
      %359 = vst.msk [vmem:[#allocation2 + $0x168] sm:$0x1] %vm343, 0.0
      %360 = vst.msk [vmem:[#allocation2 + $0x180] sm:$0x1] %vm343, 0.0
      %361 = vst.msk [vmem:[#allocation2 + $0x198] sm:$0x1] %vm343, 0.0
      %362 = vst.msk [vmem:[#allocation2 + $0x11] sm:$0x1] %vm343, 0.0
      %363 = vst.msk [vmem:[#allocation2 + $0x29] sm:$0x1] %vm343, 0.0
      %364 = vst.msk [vmem:[#allocation2 + $0x41] sm:$0x1] %vm343, 0.0
      %365 = vst.msk [vmem:[#allocation2 + $0x59] sm:$0x1] %vm343, 0.0
      %366 = vst.msk [vmem:[#allocation2 + $0x71] sm:$0x1] %vm343, 0.0
      %367 = vst.msk [vmem:[#allocation2 + $0x89] sm:$0x1] %vm343, 0.0
      %368 = vst.msk [vmem:[#allocation2 + $0xa1] sm:$0x1] %vm343, 0.0
      %369 = vst.msk [vmem:[#allocation2 + $0xb9] sm:$0x1] %vm343, 0.0
      %370 = vst.msk [vmem:[#allocation2 + $0xd1] sm:$0x1] %vm343, 0.0
      %371 = vst.msk [vmem:[#allocation2 + $0xe9] sm:$0x1] %vm343, 0.0
      %372 = vst.msk [vmem:[#allocation2 + $0x101] sm:$0x1] %vm343, 0.0
      %373 = vst.msk [vmem:[#allocation2 + $0x119] sm:$0x1] %vm343, 0.0
      %374 = vst.msk [vmem:[#allocation2 + $0x131] sm:$0x1] %vm343, 0.0
      %375 = vst.msk [vmem:[#allocation2 + $0x149] sm:$0x1] %vm343, 0.0
      %376 = vst.msk [vmem:[#allocation2 + $0x161] sm:$0x1] %vm343, 0.0
      %377 = vst.msk [vmem:[#allocation2 + $0x179] sm:$0x1] %vm343, 0.0
      %378 = vst.msk [vmem:[#allocation2 + $0x191] sm:$0x1] %vm343, 0.0
      %379 = vst.msk [vmem:[#allocation2 + $0x1a9] sm:$0x1] %vm343, 0.0
      %v380 = vld [vmem:[%s327] sm:$0xff]
      %v381 = vld [vmem:[%s327 + $0x8] sm:$0xff]
      %v382 = vld [vmem:[%s327 + $0x10] sm:$0xff]
      %v383 = vld [vmem:[%s327 + $0x18] sm:$0xff]
      %v384 = vld [vmem:[%s327 + $0x20] sm:$0xff]
      %v385 = vld [vmem:[%s327 + $0x28] sm:$0xff]
      %v386 = vld [vmem:[%s327 + $0x30] sm:$0xff]
      %v387 = vld [vmem:[%s327 + $0x38] sm:$0xff]
      %v388 = vld [vmem:[%s327 + $0x40] sm:$0xff]
      %v389 = vld [vmem:[%s327 + $0x48] sm:$0xff]
      %v390 = vld [vmem:[%s327 + $0x50] sm:$0xff]
      %v391 = vld [vmem:[%s327 + $0x58] sm:$0xff]
      %v392 = vld [vmem:[%s327 + $0x60] sm:$0xff]
      %v393 = vld [vmem:[%s327 + $0x68] sm:$0xff]
      %v394 = vld [vmem:[%s327 + $0x70] sm:$0xff]
      %v395 = vld [vmem:[%s327 + $0x78] sm:$0xff]
      %v396 = vld [vmem:[%s327 + $0x80] sm:$0xff]
      %v397 = vld [vmem:[%s327 + $0x88] sm:$0xff]
      %v398 = vld [vmem:[%s327 + $0x90] sm:$0xff]
      %v399 = vld [vmem:[%s327 + $0x98] sm:$0xff]
      %v400 = vld [vmem:[%s327 + $0xa0] sm:$0xff]
      %v401 = vld [vmem:[%s327 + $0xa8] sm:$0xff]
      %v402 = vld [vmem:[%s327 + $0xb0] sm:$0xff]
      %v403 = vld [vmem:[%s327 + $0xb8] sm:$0xff]
      %v404 = vld [vmem:[%s327 + $0xc0] sm:$0xff]
      %v405 = vld [vmem:[%s327 + $0xc8] sm:$0xff]
      %v406 = vld [vmem:[%s327 + $0xd0] sm:$0xff]
      %v407 = vld [vmem:[%s327 + $0xd8] sm:$0xff]
      %v408 = vld [vmem:[%s327 + $0xe0] sm:$0xff]
      %v409 = vld [vmem:[%s327 + $0xe8] sm:$0xff]
      %v410 = vld [vmem:[%s327 + $0xf0] sm:$0xff]
      %v411 = vld [vmem:[%s327 + $0xf8] sm:$0xff]
      %s412 = scalar_lea.vmem [#allocation2], 24
      %vm413 = vcmask 15360
      %414 = vst.msk [vmem:[%s412 + $0x1] sm:$0xff] %vm413, %v380
      %415 = vst.msk [vmem:[%s412 + $0x9] sm:$0xff] %vm413, %v381
      %416 = vst.msk [vmem:[%s412 + $0x19] sm:$0xff] %vm413, %v382
      %417 = vst.msk [vmem:[%s412 + $0x21] sm:$0xff] %vm413, %v383
      %418 = vst.msk [vmem:[%s412 + $0x31] sm:$0xff] %vm413, %v384
      %419 = vst.msk [vmem:[%s412 + $0x39] sm:$0xff] %vm413, %v385
      %420 = vst.msk [vmem:[%s412 + $0x49] sm:$0xff] %vm413, %v386
      %421 = vst.msk [vmem:[%s412 + $0x51] sm:$0xff] %vm413, %v387
      %422 = vst.msk [vmem:[%s412 + $0x61] sm:$0xff] %vm413, %v388
      %423 = vst.msk [vmem:[%s412 + $0x69] sm:$0xff] %vm413, %v389
      %424 = vst.msk [vmem:[%s412 + $0x79] sm:$0xff] %vm413, %v390
      %425 = vst.msk [vmem:[%s412 + $0x81] sm:$0xff] %vm413, %v391
      %426 = vst.msk [vmem:[%s412 + $0x91] sm:$0xff] %vm413, %v392
      %427 = vst.msk [vmem:[%s412 + $0x99] sm:$0xff] %vm413, %v393
      %428 = vst.msk [vmem:[%s412 + $0xa9] sm:$0xff] %vm413, %v394
      %429 = vst.msk [vmem:[%s412 + $0xb1] sm:$0xff] %vm413, %v395
      %430 = vst.msk [vmem:[%s412 + $0xc1] sm:$0xff] %vm413, %v396
      %431 = vst.msk [vmem:[%s412 + $0xc9] sm:$0xff] %vm413, %v397
      %432 = vst.msk [vmem:[%s412 + $0xd9] sm:$0xff] %vm413, %v398
      %433 = vst.msk [vmem:[%s412 + $0xe1] sm:$0xff] %vm413, %v399
      %434 = vst.msk [vmem:[%s412 + $0xf1] sm:$0xff] %vm413, %v400
      %435 = vst.msk [vmem:[%s412 + $0xf9] sm:$0xff] %vm413, %v401
      %436 = vst.msk [vmem:[%s412 + $0x109] sm:$0xff] %vm413, %v402
      %437 = vst.msk [vmem:[%s412 + $0x111] sm:$0xff] %vm413, %v403
      %438 = vst.msk [vmem:[%s412 + $0x121] sm:$0xff] %vm413, %v404
      %439 = vst.msk [vmem:[%s412 + $0x129] sm:$0xff] %vm413, %v405
      %440 = vst.msk [vmem:[%s412 + $0x139] sm:$0xff] %vm413, %v406
      %441 = vst.msk [vmem:[%s412 + $0x141] sm:$0xff] %vm413, %v407
      %442 = vst.msk [vmem:[%s412 + $0x151] sm:$0xff] %vm413, %v408
      %443 = vst.msk [vmem:[%s412 + $0x159] sm:$0xff] %vm413, %v409
      %444 = vst.msk [vmem:[%s412 + $0x169] sm:$0xff] %vm413, %v410
      %445 = vst.msk [vmem:[%s412 + $0x171] sm:$0xff] %vm413, %v411
      %v446 = vld [vmem:[#allocation2] sm:$0xff]
      %v447 = vld [vmem:[#allocation2 + $0x8] sm:$0xff]
      %v448 = vld [vmem:[#allocation2 + $0x10] sm:$0x3]
      %v449 = vld [vmem:[#allocation2 + $0x18] sm:$0xff]
      %v450 = vld [vmem:[#allocation2 + $0x20] sm:$0xff]
      %v451 = vld [vmem:[#allocation2 + $0x28] sm:$0x3]
      %v452 = vld [vmem:[#allocation2 + $0x30] sm:$0xff]
      %v453 = vld [vmem:[#allocation2 + $0x38] sm:$0xff]
      %v454 = vld [vmem:[#allocation2 + $0x40] sm:$0x3]
      %v455 = vld [vmem:[#allocation2 + $0x48] sm:$0xff]
      %v456 = vld [vmem:[#allocation2 + $0x50] sm:$0xff]
      %v457 = vld [vmem:[#allocation2 + $0x58] sm:$0x3]
      %v458 = vld [vmem:[#allocation2 + $0x60] sm:$0xff]
      %v459 = vld [vmem:[#allocation2 + $0x68] sm:$0xff]
      %v460 = vld [vmem:[#allocation2 + $0x70] sm:$0x3]
      %v461 = vld [vmem:[#allocation2 + $0x78] sm:$0xff]
      %v462 = vld [vmem:[#allocation2 + $0x80] sm:$0xff]
      %v463 = vld [vmem:[#allocation2 + $0x88] sm:$0x3]
      %v464 = vld [vmem:[#allocation2 + $0x90] sm:$0xff]
      %v465 = vld [vmem:[#allocation2 + $0x98] sm:$0xff]
      %v466 = vld [vmem:[#allocation2 + $0xa0] sm:$0x3]
      %v467 = vld [vmem:[#allocation2 + $0xa8] sm:$0xff]
      %v468 = vld [vmem:[#allocation2 + $0xb0] sm:$0xff]
      %v469 = vld [vmem:[#allocation2 + $0xb8] sm:$0x3]
      %v470 = vld [vmem:[#allocation2 + $0xc0] sm:$0xff]
      %v471 = vld [vmem:[#allocation2 + $0xc8] sm:$0xff]
      %v472 = vld [vmem:[#allocation2 + $0xd0] sm:$0x3]
      %v473 = vld [vmem:[#allocation2 + $0xd8] sm:$0xff]
      %v474 = vld [vmem:[#allocation2 + $0xe0] sm:$0xff]
      %v475 = vld [vmem:[#allocation2 + $0xe8] sm:$0x3]
      %v476 = vld [vmem:[#allocation2 + $0xf0] sm:$0xff]
      %v477 = vld [vmem:[#allocation2 + $0xf8] sm:$0xff]
      %v478 = vld [vmem:[#allocation2 + $0x100] sm:$0x3]
      %v479 = vld [vmem:[#allocation2 + $0x108] sm:$0xff]
      %v480 = vld [vmem:[#allocation2 + $0x110] sm:$0xff]
      %v481 = vld [vmem:[#allocation2 + $0x118] sm:$0x3]
      %v482 = vld [vmem:[#allocation2 + $0x120] sm:$0xff]
      %v483 = vld [vmem:[#allocation2 + $0x128] sm:$0xff]
      %v484 = vld [vmem:[#allocation2 + $0x130] sm:$0x3]
      %v485 = vld [vmem:[#allocation2 + $0x138] sm:$0xff]
      %v486 = vld [vmem:[#allocation2 + $0x140] sm:$0xff]
      %v487 = vld [vmem:[#allocation2 + $0x148] sm:$0x3]
      %v488 = vld [vmem:[#allocation2 + $0x150] sm:$0xff]
      %v489 = vld [vmem:[#allocation2 + $0x158] sm:$0xff]
      %v490 = vld [vmem:[#allocation2 + $0x160] sm:$0x3]
      %v491 = vld [vmem:[#allocation2 + $0x168] sm:$0xff]
      %v492 = vld [vmem:[#allocation2 + $0x170] sm:$0xff]
      %v493 = vld [vmem:[#allocation2 + $0x178] sm:$0x3]
      %v494 = vld [vmem:[#allocation2 + $0x180] sm:$0xff]
      %v495 = vld [vmem:[#allocation2 + $0x188] sm:$0xff]
      %v496 = vld [vmem:[#allocation2 + $0x190] sm:$0x3]
      %v497 = vld [vmem:[#allocation2 + $0x198] sm:$0xff]
      %v498 = vld [vmem:[#allocation2 + $0x1a0] sm:$0xff]
      %v499 = vld [vmem:[#allocation2 + $0x1a8] sm:$0x3]
      %v500 = vpack.c.bf16 %v446, %v446
      %v501 = vpack.c.bf16 %v447, %v447
      %v502 = vpack.c.bf16 %v448, %v448
      %v503 = vpack.c.bf16 %v449, %v449
      %v504 = vpack.c.bf16 %v450, %v450
      %v505 = vpack.c.bf16 %v451, %v451
      %v506 = vpack.c.bf16 %v452, %v452
      %v507 = vpack.c.bf16 %v453, %v453
      %v508 = vpack.c.bf16 %v454, %v454
      %v509 = vpack.c.bf16 %v455, %v455
      %v510 = vpack.c.bf16 %v456, %v456
      %v511 = vpack.c.bf16 %v457, %v457
      %v512 = vpack.c.bf16 %v458, %v458
      %v513 = vpack.c.bf16 %v459, %v459
      %v514 = vpack.c.bf16 %v460, %v460
      %v515 = vpack.c.bf16 %v461, %v461
      %v516 = vpack.c.bf16 %v462, %v462
      %v517 = vpack.c.bf16 %v463, %v463
      %v518 = vpack.c.bf16 %v464, %v464
      %v519 = vpack.c.bf16 %v465, %v465
      %v520 = vpack.c.bf16 %v466, %v466
      %v521 = vpack.c.bf16 %v467, %v467
      %v522 = vpack.c.bf16 %v468, %v468
      %v523 = vpack.c.bf16 %v469, %v469
      %v524 = vpack.c.bf16 %v470, %v470
      %v525 = vpack.c.bf16 %v471, %v471
      %v526 = vpack.c.bf16 %v472, %v472
      %v527 = vpack.c.bf16 %v473, %v473
      %v528 = vpack.c.bf16 %v474, %v474
      %v529 = vpack.c.bf16 %v475, %v475
      %v530 = vpack.c.bf16 %v476, %v476
      %v531 = vpack.c.bf16 %v477, %v477
      %v532 = vpack.c.bf16 %v478, %v478
      %v533 = vpack.c.bf16 %v479, %v479
      %v534 = vpack.c.bf16 %v480, %v480
      %v535 = vpack.c.bf16 %v481, %v481
      %v536 = vpack.c.bf16 %v482, %v482
      %v537 = vpack.c.bf16 %v483, %v483
      %v538 = vpack.c.bf16 %v484, %v484
      %v539 = vpack.c.bf16 %v485, %v485
      %v540 = vpack.c.bf16 %v486, %v486
      %v541 = vpack.c.bf16 %v487, %v487
      %v542 = vpack.c.bf16 %v488, %v488
      %v543 = vpack.c.bf16 %v489, %v489
      %v544 = vpack.c.bf16 %v490, %v490
      %v545 = vpack.c.bf16 %v491, %v491
      %v546 = vpack.c.bf16 %v492, %v492
      %v547 = vpack.c.bf16 %v493, %v493
      %v548 = vpack.c.bf16 %v494, %v494
      %v549 = vpack.c.bf16 %v495, %v495
      %v550 = vpack.c.bf16 %v496, %v496
      %v551 = vpack.c.bf16 %v497, %v497
      %v552 = vpack.c.bf16 %v498, %v498
      %v553 = vpack.c.bf16 %v499, %v499
      %v554 = vld [vmem:[%s2] sm:$0xff]
      %v555 = vld [vmem:[%s2 + $0x8] sm:$0xff]
      %v556 = vld [vmem:[%s2 + $0x10] sm:$0xff]
      %v557 = vld [vmem:[%s2 + $0x18] sm:$0xff]
      %v558 = vld [vmem:[%s2 + $0x20] sm:$0xff]
      %v559 = vld [vmem:[%s2 + $0x28] sm:$0xff]
      %v560 = vld [vmem:[%s2 + $0x30] sm:$0xff]
      %v561 = vld [vmem:[%s2 + $0x38] sm:$0xff]
      %v562 = vld [vmem:[%s2 + $0x40] sm:$0xff]
      %v563 = vld [vmem:[%s2 + $0x48] sm:$0xff]
      %v564 = vld [vmem:[%s2 + $0x50] sm:$0xff]
      %v565 = vld [vmem:[%s2 + $0x58] sm:$0xff]
      %v566 = vld [vmem:[%s2 + $0x60] sm:$0xff]
      %v567 = vld [vmem:[%s2 + $0x68] sm:$0xff]
      %v568 = vld [vmem:[%s2 + $0x70] sm:$0xff]
      %v569 = vld [vmem:[%s2 + $0x78] sm:$0xff]
      %v570 = vld [vmem:[%s2 + $0x80] sm:$0xff]
      %v571 = vld [vmem:[%s2 + $0x88] sm:$0xff]
      %v572 = vld [vmem:[%s2 + $0x90] sm:$0xff]
      %v573 = vld [vmem:[%s2 + $0x98] sm:$0xff]
      %v574 = vld [vmem:[%s2 + $0xa0] sm:$0xff]
      %v575 = vld [vmem:[%s2 + $0xa8] sm:$0xff]
      %v576 = vld [vmem:[%s2 + $0xb0] sm:$0xff]
      %v577 = vld [vmem:[%s2 + $0xb8] sm:$0xff]
      %v578 = vld [vmem:[%s2 + $0xc0] sm:$0xff]
      %v579 = vld [vmem:[%s2 + $0xc8] sm:$0xff]
      %v580 = vld [vmem:[%s2 + $0xd0] sm:$0xff]
      %v581 = vld [vmem:[%s2 + $0xd8] sm:$0xff]
      %v582 = vld [vmem:[%s2 + $0xe0] sm:$0xff]
      %v583 = vld [vmem:[%s2 + $0xe8] sm:$0xff]
      %v584 = vld [vmem:[%s2 + $0xf0] sm:$0xff]
      %v585 = vld [vmem:[%s2 + $0xf8] sm:$0xff]
      %v586 = vld [vmem:[%s1] sm:$0x1]
      %v619 = vunpack.c.l.b16 %v500
      %v620 = vunpack.c.l.b16 %v501
      %v621 = vunpack.c.l.b16 %v503
      %v622 = vunpack.c.l.b16 %v504
      %v623 = vunpack.c.l.b16 %v506
      %v624 = vunpack.c.l.b16 %v507
      %v625 = vunpack.c.l.b16 %v509
      %v626 = vunpack.c.l.b16 %v510
      %v627 = vunpack.c.l.b16 %v512
      %v628 = vunpack.c.l.b16 %v513
      %v629 = vunpack.c.l.b16 %v515
      %v630 = vunpack.c.l.b16 %v516
      %v631 = vunpack.c.l.b16 %v518
      %v632 = vunpack.c.l.b16 %v519
      %v633 = vunpack.c.l.b16 %v521
      %v634 = vunpack.c.l.b16 %v522
      %v635 = vunpack.c.l.b16 %v524
      %v636 = vunpack.c.l.b16 %v525
      %v637 = vunpack.c.l.b16 %v527
      %v638 = vunpack.c.l.b16 %v528
      %v639 = vunpack.c.l.b16 %v530
      %v640 = vunpack.c.l.b16 %v531
      %v641 = vunpack.c.l.b16 %v533
      %v642 = vunpack.c.l.b16 %v534
      %v643 = vunpack.c.l.b16 %v536
      %v644 = vunpack.c.l.b16 %v537
      %v645 = vunpack.c.l.b16 %v539
      %v646 = vunpack.c.l.b16 %v540
      %v647 = vunpack.c.l.b16 %v542
      %v648 = vunpack.c.l.b16 %v543
      %v649 = vunpack.c.l.b16 %v545
      %v650 = vunpack.c.l.b16 %v546
      %v651 = vpack.c.b16 %v620, %v619
      %v652 = vpack.c.b16 %v622, %v621
      %v653 = vpack.c.b16 %v624, %v623
      %v654 = vpack.c.b16 %v626, %v625
      %v655 = vpack.c.b16 %v628, %v627
      %v656 = vpack.c.b16 %v630, %v629
      %v657 = vpack.c.b16 %v632, %v631
      %v658 = vpack.c.b16 %v634, %v633
      %v659 = vpack.c.b16 %v636, %v635
      %v660 = vpack.c.b16 %v638, %v637
      %v661 = vpack.c.b16 %v640, %v639
      %v662 = vpack.c.b16 %v642, %v641
      %v663 = vpack.c.b16 %v644, %v643
      %v664 = vpack.c.b16 %v646, %v645
      %v665 = vpack.c.b16 %v648, %v647
      %v666 = vpack.c.b16 %v650, %v649
      %v668 = vsel %vm413, %v651, 0
      %v671 = vsel %vm413, %v652, 0
      %v674 = vsel %vm413, %v653, 0
      %v677 = vsel %vm413, %v654, 0
      %v680 = vsel %vm413, %v655, 0
      %v683 = vsel %vm413, %v656, 0
      %v686 = vsel %vm413, %v657, 0
      %v689 = vsel %vm413, %v658, 0
      %v692 = vsel %vm413, %v659, 0
      %v695 = vsel %vm413, %v660, 0
      %v698 = vsel %vm413, %v661, 0
      %v701 = vsel %vm413, %v662, 0
      %v704 = vsel %vm413, %v663, 0
      %v707 = vsel %vm413, %v664, 0
      %v710 = vsel %vm413, %v665, 0
      %v713 = vsel %vm413, %v666, 0
      %vm715 = vcmask 1040384
      %v717 = vsel %vm715, %v586, 0
      %719 = vmatpush.bf16.msra.mxu0 0
      %720 = vmatpush.bf16.msra.mxu0 0
      %721 = vmatpush.bf16.msra.mxu0 0
      %722 = vmatpush.bf16.msra.mxu0 0
      %723 = vmatpush.bf16.msra.mxu0 0
      %724 = vmatpush.bf16.msra.mxu0 0
      %725 = vmatpush.bf16.msra.mxu0 0
      %726 = vmatpush.bf16.msra.mxu0 %v717
      %727 = vmatmul.bf16.gmra.mxu0 %v668
      %v728 = vpop.f32.mrf.mxu0
      %v729 = vadd.f32 0.0, %v728
      %v730 = vpop.f32.mrf.mxu0
      %v731 = vadd.f32 0.0, %v730
      %732 = vmatmul.bf16.gmra.mxu0 %v671
      %v733 = vpop.f32.mrf.mxu0
      %v734 = vadd.f32 0.0, %v733
      %v735 = vpop.f32.mrf.mxu0
      %v736 = vadd.f32 0.0, %v735
      %737 = vmatmul.bf16.gmra.mxu0 %v674
      %v738 = vpop.f32.mrf.mxu0
      %v739 = vadd.f32 0.0, %v738
      %v740 = vpop.f32.mrf.mxu0
      %v741 = vadd.f32 0.0, %v740
      %742 = vmatmul.bf16.gmra.mxu0 %v677
      %v743 = vpop.f32.mrf.mxu0
      %v744 = vadd.f32 0.0, %v743
      %v745 = vpop.f32.mrf.mxu0
      %v746 = vadd.f32 0.0, %v745
      %747 = vmatmul.bf16.gmra.mxu0 %v680
      %v748 = vpop.f32.mrf.mxu0
      %v749 = vadd.f32 0.0, %v748
      %v750 = vpop.f32.mrf.mxu0
      %v751 = vadd.f32 0.0, %v750
      %752 = vmatmul.bf16.gmra.mxu0 %v683
      %v753 = vpop.f32.mrf.mxu0
      %v754 = vadd.f32 0.0, %v753
      %v755 = vpop.f32.mrf.mxu0
      %v756 = vadd.f32 0.0, %v755
      %757 = vmatmul.bf16.gmra.mxu0 %v686
      %v758 = vpop.f32.mrf.mxu0
      %v759 = vadd.f32 0.0, %v758
      %v760 = vpop.f32.mrf.mxu0
      %v761 = vadd.f32 0.0, %v760
      %762 = vmatmul.bf16.gmra.mxu0 %v689
      %v763 = vpop.f32.mrf.mxu0
      %v764 = vadd.f32 0.0, %v763
      %v765 = vpop.f32.mrf.mxu0
      %v766 = vadd.f32 0.0, %v765
      %767 = vmatmul.bf16.gmra.mxu0 %v692
      %v768 = vpop.f32.mrf.mxu0
      %v769 = vadd.f32 0.0, %v768
      %v770 = vpop.f32.mrf.mxu0
      %v771 = vadd.f32 0.0, %v770
      %772 = vmatmul.bf16.gmra.mxu0 %v695
      %v773 = vpop.f32.mrf.mxu0
      %v774 = vadd.f32 0.0, %v773
      %v775 = vpop.f32.mrf.mxu0
      %v776 = vadd.f32 0.0, %v775
      %777 = vmatmul.bf16.gmra.mxu0 %v698
      %v778 = vpop.f32.mrf.mxu0
      %v779 = vadd.f32 0.0, %v778
      %v780 = vpop.f32.mrf.mxu0
      %v781 = vadd.f32 0.0, %v780
      %782 = vmatmul.bf16.gmra.mxu0 %v701
      %v783 = vpop.f32.mrf.mxu0
      %v784 = vadd.f32 0.0, %v783
      %v785 = vpop.f32.mrf.mxu0
      %v786 = vadd.f32 0.0, %v785
      %787 = vmatmul.bf16.gmra.mxu0 %v704
      %v788 = vpop.f32.mrf.mxu0
      %v789 = vadd.f32 0.0, %v788
      %v790 = vpop.f32.mrf.mxu0
      %v791 = vadd.f32 0.0, %v790
      %792 = vmatmul.bf16.gmra.mxu0 %v707
      %v793 = vpop.f32.mrf.mxu0
      %v794 = vadd.f32 0.0, %v793
      %v795 = vpop.f32.mrf.mxu0
      %v796 = vadd.f32 0.0, %v795
      %797 = vmatmul.bf16.gmra.mxu0 %v710
      %v798 = vpop.f32.mrf.mxu0
      %v799 = vadd.f32 0.0, %v798
      %v800 = vpop.f32.mrf.mxu0
      %v801 = vadd.f32 0.0, %v800
      %802 = vmatmul.bf16.gmra.mxu0 %v713
      %v803 = vpop.f32.mrf.mxu0
      %v804 = vadd.f32 0.0, %v803
      %v805 = vpop.f32.mrf.mxu0
      %v806 = vadd.f32 0.0, %v805
      %807 = vdwg.mxu0
      %v808 = vadd.f32 %v554, %v729
      %v809 = vadd.f32 %v555, %v731
      %v810 = vadd.f32 %v556, %v734
      %v811 = vadd.f32 %v557, %v736
      %v812 = vadd.f32 %v558, %v739
      %v813 = vadd.f32 %v559, %v741
      %v814 = vadd.f32 %v560, %v744
      %v815 = vadd.f32 %v561, %v746
      %v816 = vadd.f32 %v562, %v749
      %v817 = vadd.f32 %v563, %v751
      %v818 = vadd.f32 %v564, %v754
      %v819 = vadd.f32 %v565, %v756
      %v820 = vadd.f32 %v566, %v759
      %v821 = vadd.f32 %v567, %v761
      %v822 = vadd.f32 %v568, %v764
      %v823 = vadd.f32 %v569, %v766
      %v824 = vadd.f32 %v570, %v769
      %v825 = vadd.f32 %v571, %v771
      %v826 = vadd.f32 %v572, %v774
      %v827 = vadd.f32 %v573, %v776
      %v828 = vadd.f32 %v574, %v779
      %v829 = vadd.f32 %v575, %v781
      %v830 = vadd.f32 %v576, %v784
      %v831 = vadd.f32 %v577, %v786
      %v832 = vadd.f32 %v578, %v789
      %v833 = vadd.f32 %v579, %v791
      %v834 = vadd.f32 %v580, %v794
      %v835 = vadd.f32 %v581, %v796
      %v836 = vadd.f32 %v582, %v799
      %v837 = vadd.f32 %v583, %v801
      %v838 = vadd.f32 %v584, %v804
      %v839 = vadd.f32 %v585, %v806
      %vm840 = vsmask.f32 3328
      %vm841 = vsmask.f32 7440
      %vm842 = vmor %vm840, %vm841
      %v844 = vshrl.u32 %v500, 16
      %v846 = vrot.slane %v844, 4
      %v847 = vshll.u32 %v500, 16
      %v849 = vrot.slane %v847, 5
      %v850 = vor.u32 %v846, %v849
      %v851 = vrot.slane %v850, 4
      %v853 = vshll.u32 %v501, 16
      %v855 = vrot.slane %v853, 5
      %v856 = vsel %vm842, %v851, %v855
      %v857 = vshrl.u32 %v501, 16
      %v859 = vrot.slane %v857, 4
      %v860 = vor.u32 %v859, %v855
      %v861 = vrot.slane %v860, 4
      %v863 = vshll.u32 %v502, 16
      %v865 = vrot.slane %v863, 5
      %v866 = vsel %vm842, %v861, %v865
      %v868 = vshrl.u32 %v503, 16
      %v870 = vrot.slane %v868, 4
      %v871 = vshll.u32 %v503, 16
      %v873 = vrot.slane %v871, 5
      %v874 = vor.u32 %v870, %v873
      %v875 = vrot.slane %v874, 4
      %v877 = vshll.u32 %v504, 16
      %v879 = vrot.slane %v877, 5
      %v880 = vsel %vm842, %v875, %v879
      %v881 = vshrl.u32 %v504, 16
      %v883 = vrot.slane %v881, 4
      %v884 = vor.u32 %v883, %v879
      %v885 = vrot.slane %v884, 4
      %v887 = vshll.u32 %v505, 16
      %v889 = vrot.slane %v887, 5
      %v890 = vsel %vm842, %v885, %v889
      %v892 = vshrl.u32 %v506, 16
      %v894 = vrot.slane %v892, 4
      %v895 = vshll.u32 %v506, 16
      %v897 = vrot.slane %v895, 5
      %v898 = vor.u32 %v894, %v897
      %v899 = vrot.slane %v898, 4
      %v901 = vshll.u32 %v507, 16
      %v903 = vrot.slane %v901, 5
      %v904 = vsel %vm842, %v899, %v903
      %v905 = vshrl.u32 %v507, 16
      %v907 = vrot.slane %v905, 4
      %v908 = vor.u32 %v907, %v903
      %v909 = vrot.slane %v908, 4
      %v911 = vshll.u32 %v508, 16
      %v913 = vrot.slane %v911, 5
      %v914 = vsel %vm842, %v909, %v913
      %v916 = vshrl.u32 %v509, 16
      %v918 = vrot.slane %v916, 4
      %v919 = vshll.u32 %v509, 16
      %v921 = vrot.slane %v919, 5
      %v922 = vor.u32 %v918, %v921
      %v923 = vrot.slane %v922, 4
      %v925 = vshll.u32 %v510, 16
      %v927 = vrot.slane %v925, 5
      %v928 = vsel %vm842, %v923, %v927
      %v929 = vshrl.u32 %v510, 16
      %v931 = vrot.slane %v929, 4
      %v932 = vor.u32 %v931, %v927
      %v933 = vrot.slane %v932, 4
      %v935 = vshll.u32 %v511, 16
      %v937 = vrot.slane %v935, 5
      %v938 = vsel %vm842, %v933, %v937
      %v940 = vshrl.u32 %v512, 16
      %v942 = vrot.slane %v940, 4
      %v943 = vshll.u32 %v512, 16
      %v945 = vrot.slane %v943, 5
      %v946 = vor.u32 %v942, %v945
      %v947 = vrot.slane %v946, 4
      %v949 = vshll.u32 %v513, 16
      %v951 = vrot.slane %v949, 5
      %v952 = vsel %vm842, %v947, %v951
      %v953 = vshrl.u32 %v513, 16
      %v955 = vrot.slane %v953, 4
      %v956 = vor.u32 %v955, %v951
      %v957 = vrot.slane %v956, 4
      %v959 = vshll.u32 %v514, 16
      %v961 = vrot.slane %v959, 5
      %v962 = vsel %vm842, %v957, %v961
      %v964 = vshrl.u32 %v515, 16
      %v966 = vrot.slane %v964, 4
      %v967 = vshll.u32 %v515, 16
      %v969 = vrot.slane %v967, 5
      %v970 = vor.u32 %v966, %v969
      %v971 = vrot.slane %v970, 4
      %v973 = vshll.u32 %v516, 16
      %v975 = vrot.slane %v973, 5
      %v976 = vsel %vm842, %v971, %v975
      %v977 = vshrl.u32 %v516, 16
      %v979 = vrot.slane %v977, 4
      %v980 = vor.u32 %v979, %v975
      %v981 = vrot.slane %v980, 4
      %v983 = vshll.u32 %v517, 16
      %v985 = vrot.slane %v983, 5
      %v986 = vsel %vm842, %v981, %v985
      %v988 = vshrl.u32 %v518, 16
      %v990 = vrot.slane %v988, 4
      %v991 = vshll.u32 %v518, 16
      %v993 = vrot.slane %v991, 5
      %v994 = vor.u32 %v990, %v993
      %v995 = vrot.slane %v994, 4
      %v997 = vshll.u32 %v519, 16
      %v999 = vrot.slane %v997, 5
      %v1000 = vsel %vm842, %v995, %v999
      %v1001 = vshrl.u32 %v519, 16
      %v1003 = vrot.slane %v1001, 4
      %v1004 = vor.u32 %v1003, %v999
      %v1005 = vrot.slane %v1004, 4
      %v1007 = vshll.u32 %v520, 16
      %v1009 = vrot.slane %v1007, 5
      %v1010 = vsel %vm842, %v1005, %v1009
      %v1012 = vshrl.u32 %v521, 16
      %v1014 = vrot.slane %v1012, 4
      %v1015 = vshll.u32 %v521, 16
      %v1017 = vrot.slane %v1015, 5
      %v1018 = vor.u32 %v1014, %v1017
      %v1019 = vrot.slane %v1018, 4
      %v1021 = vshll.u32 %v522, 16
      %v1023 = vrot.slane %v1021, 5
      %v1024 = vsel %vm842, %v1019, %v1023
      %v1025 = vshrl.u32 %v522, 16
      %v1027 = vrot.slane %v1025, 4
      %v1028 = vor.u32 %v1027, %v1023
      %v1029 = vrot.slane %v1028, 4
      %v1031 = vshll.u32 %v523, 16
      %v1033 = vrot.slane %v1031, 5
      %v1034 = vsel %vm842, %v1029, %v1033
      %v1036 = vshrl.u32 %v524, 16
      %v1038 = vrot.slane %v1036, 4
      %v1039 = vshll.u32 %v524, 16
      %v1041 = vrot.slane %v1039, 5
      %v1042 = vor.u32 %v1038, %v1041
      %v1043 = vrot.slane %v1042, 4
      %v1045 = vshll.u32 %v525, 16
      %v1047 = vrot.slane %v1045, 5
      %v1048 = vsel %vm842, %v1043, %v1047
      %v1049 = vshrl.u32 %v525, 16
      %v1051 = vrot.slane %v1049, 4
      %v1052 = vor.u32 %v1051, %v1047
      %v1053 = vrot.slane %v1052, 4
      %v1055 = vshll.u32 %v526, 16
      %v1057 = vrot.slane %v1055, 5
      %v1058 = vsel %vm842, %v1053, %v1057
      %v1060 = vshrl.u32 %v527, 16
      %v1062 = vrot.slane %v1060, 4
      %v1063 = vshll.u32 %v527, 16
      %v1065 = vrot.slane %v1063, 5
      %v1066 = vor.u32 %v1062, %v1065
      %v1067 = vrot.slane %v1066, 4
      %v1069 = vshll.u32 %v528, 16
      %v1071 = vrot.slane %v1069, 5
      %v1072 = vsel %vm842, %v1067, %v1071
      %v1073 = vshrl.u32 %v528, 16
      %v1075 = vrot.slane %v1073, 4
      %v1076 = vor.u32 %v1075, %v1071
      %v1077 = vrot.slane %v1076, 4
      %v1079 = vshll.u32 %v529, 16
      %v1081 = vrot.slane %v1079, 5
      %v1082 = vsel %vm842, %v1077, %v1081
      %v1084 = vshrl.u32 %v530, 16
      %v1086 = vrot.slane %v1084, 4
      %v1087 = vshll.u32 %v530, 16
      %v1089 = vrot.slane %v1087, 5
      %v1090 = vor.u32 %v1086, %v1089
      %v1091 = vrot.slane %v1090, 4
      %v1093 = vshll.u32 %v531, 16
      %v1095 = vrot.slane %v1093, 5
      %v1096 = vsel %vm842, %v1091, %v1095
      %v1097 = vshrl.u32 %v531, 16
      %v1099 = vrot.slane %v1097, 4
      %v1100 = vor.u32 %v1099, %v1095
      %v1101 = vrot.slane %v1100, 4
      %v1103 = vshll.u32 %v532, 16
      %v1105 = vrot.slane %v1103, 5
      %v1106 = vsel %vm842, %v1101, %v1105
      %v1108 = vshrl.u32 %v533, 16
      %v1110 = vrot.slane %v1108, 4
      %v1111 = vshll.u32 %v533, 16
      %v1113 = vrot.slane %v1111, 5
      %v1114 = vor.u32 %v1110, %v1113
      %v1115 = vrot.slane %v1114, 4
      %v1117 = vshll.u32 %v534, 16
      %v1119 = vrot.slane %v1117, 5
      %v1120 = vsel %vm842, %v1115, %v1119
      %v1121 = vshrl.u32 %v534, 16
      %v1123 = vrot.slane %v1121, 4
      %v1124 = vor.u32 %v1123, %v1119
      %v1125 = vrot.slane %v1124, 4
      %v1127 = vshll.u32 %v535, 16
      %v1129 = vrot.slane %v1127, 5
      %v1130 = vsel %vm842, %v1125, %v1129
      %v1132 = vshrl.u32 %v536, 16
      %v1134 = vrot.slane %v1132, 4
      %v1135 = vshll.u32 %v536, 16
      %v1137 = vrot.slane %v1135, 5
      %v1138 = vor.u32 %v1134, %v1137
      %v1139 = vrot.slane %v1138, 4
      %v1141 = vshll.u32 %v537, 16
      %v1143 = vrot.slane %v1141, 5
      %v1144 = vsel %vm842, %v1139, %v1143
      %v1145 = vshrl.u32 %v537, 16
      %v1147 = vrot.slane %v1145, 4
      %v1148 = vor.u32 %v1147, %v1143
      %v1149 = vrot.slane %v1148, 4
      %v1151 = vshll.u32 %v538, 16
      %v1153 = vrot.slane %v1151, 5
      %v1154 = vsel %vm842, %v1149, %v1153
      %v1156 = vshrl.u32 %v539, 16
      %v1158 = vrot.slane %v1156, 4
      %v1159 = vshll.u32 %v539, 16
      %v1161 = vrot.slane %v1159, 5
      %v1162 = vor.u32 %v1158, %v1161
      %v1163 = vrot.slane %v1162, 4
      %v1165 = vshll.u32 %v540, 16
      %v1167 = vrot.slane %v1165, 5
      %v1168 = vsel %vm842, %v1163, %v1167
      %v1169 = vshrl.u32 %v540, 16
      %v1171 = vrot.slane %v1169, 4
      %v1172 = vor.u32 %v1171, %v1167
      %v1173 = vrot.slane %v1172, 4
      %v1175 = vshll.u32 %v541, 16
      %v1177 = vrot.slane %v1175, 5
      %v1178 = vsel %vm842, %v1173, %v1177
      %v1180 = vshrl.u32 %v542, 16
      %v1182 = vrot.slane %v1180, 4
      %v1183 = vshll.u32 %v542, 16
      %v1185 = vrot.slane %v1183, 5
      %v1186 = vor.u32 %v1182, %v1185
      %v1187 = vrot.slane %v1186, 4
      %v1189 = vshll.u32 %v543, 16
      %v1191 = vrot.slane %v1189, 5
      %v1192 = vsel %vm842, %v1187, %v1191
      %v1193 = vshrl.u32 %v543, 16
      %v1195 = vrot.slane %v1193, 4
      %v1196 = vor.u32 %v1195, %v1191
      %v1197 = vrot.slane %v1196, 4
      %v1199 = vshll.u32 %v544, 16
      %v1201 = vrot.slane %v1199, 5
      %v1202 = vsel %vm842, %v1197, %v1201
      %v1204 = vshrl.u32 %v545, 16
      %v1206 = vrot.slane %v1204, 4
      %v1207 = vshll.u32 %v545, 16
      %v1209 = vrot.slane %v1207, 5
      %v1210 = vor.u32 %v1206, %v1209
      %v1211 = vrot.slane %v1210, 4
      %v1213 = vshll.u32 %v546, 16
      %v1215 = vrot.slane %v1213, 5
      %v1216 = vsel %vm842, %v1211, %v1215
      %v1217 = vshrl.u32 %v546, 16
      %v1219 = vrot.slane %v1217, 4
      %v1220 = vor.u32 %v1219, %v1215
      %v1221 = vrot.slane %v1220, 4
      %v1223 = vshll.u32 %v547, 16
      %v1225 = vrot.slane %v1223, 5
      %v1226 = vsel %vm842, %v1221, %v1225
      %s1227 = scalar_lea.vmem %s1, 1
      %v1228 = vld [vmem:[%s1227] sm:$0x1]
      %v1229 = vunpack.c.l.b16 %v856
      %v1230 = vunpack.c.l.b16 %v866
      %v1231 = vunpack.c.l.b16 %v880
      %v1232 = vunpack.c.l.b16 %v890
      %v1233 = vunpack.c.l.b16 %v904
      %v1234 = vunpack.c.l.b16 %v914
      %v1235 = vunpack.c.l.b16 %v928
      %v1236 = vunpack.c.l.b16 %v938
      %v1237 = vunpack.c.l.b16 %v952
      %v1238 = vunpack.c.l.b16 %v962
      %v1239 = vunpack.c.l.b16 %v976
      %v1240 = vunpack.c.l.b16 %v986
      %v1241 = vunpack.c.l.b16 %v1000
      %v1242 = vunpack.c.l.b16 %v1010
      %v1243 = vunpack.c.l.b16 %v1024
      %v1244 = vunpack.c.l.b16 %v1034
      %v1245 = vunpack.c.l.b16 %v1048
      %v1246 = vunpack.c.l.b16 %v1058
      %v1247 = vunpack.c.l.b16 %v1072
      %v1248 = vunpack.c.l.b16 %v1082
      %v1249 = vunpack.c.l.b16 %v1096
      %v1250 = vunpack.c.l.b16 %v1106
      %v1251 = vunpack.c.l.b16 %v1120
      %v1252 = vunpack.c.l.b16 %v1130
      %v1253 = vunpack.c.l.b16 %v1144
      %v1254 = vunpack.c.l.b16 %v1154
      %v1255 = vunpack.c.l.b16 %v1168
      %v1256 = vunpack.c.l.b16 %v1178
      %v1257 = vunpack.c.l.b16 %v1192
      %v1258 = vunpack.c.l.b16 %v1202
      %v1259 = vunpack.c.l.b16 %v1216
      %v1260 = vunpack.c.l.b16 %v1226
      %v1261 = vpack.c.b16 %v1230, %v1229
      %v1262 = vpack.c.b16 %v1232, %v1231
      %v1263 = vpack.c.b16 %v1234, %v1233
      %v1264 = vpack.c.b16 %v1236, %v1235
      %v1265 = vpack.c.b16 %v1238, %v1237
      %v1266 = vpack.c.b16 %v1240, %v1239
      %v1267 = vpack.c.b16 %v1242, %v1241
      %v1268 = vpack.c.b16 %v1244, %v1243
      %v1269 = vpack.c.b16 %v1246, %v1245
      %v1270 = vpack.c.b16 %v1248, %v1247
      %v1271 = vpack.c.b16 %v1250, %v1249
      %v1272 = vpack.c.b16 %v1252, %v1251
      %v1273 = vpack.c.b16 %v1254, %v1253
      %v1274 = vpack.c.b16 %v1256, %v1255
      %v1275 = vpack.c.b16 %v1258, %v1257
      %v1276 = vpack.c.b16 %v1260, %v1259
      %v1278 = vsel %vm413, %v1261, 0
      %v1281 = vsel %vm413, %v1262, 0
      %v1284 = vsel %vm413, %v1263, 0
      %v1287 = vsel %vm413, %v1264, 0
      %v1290 = vsel %vm413, %v1265, 0
      %v1293 = vsel %vm413, %v1266, 0
      %v1296 = vsel %vm413, %v1267, 0
      %v1299 = vsel %vm413, %v1268, 0
      %v1302 = vsel %vm413, %v1269, 0
      %v1305 = vsel %vm413, %v1270, 0
      %v1308 = vsel %vm413, %v1271, 0
      %v1311 = vsel %vm413, %v1272, 0
      %v1314 = vsel %vm413, %v1273, 0
      %v1317 = vsel %vm413, %v1274, 0
      %v1320 = vsel %vm413, %v1275, 0
      %v1323 = vsel %vm413, %v1276, 0
      %v1326 = vsel %vm715, %v1228, 0
      %1328 = vmatpush.bf16.msra.mxu0 0
      %1329 = vmatpush.bf16.msra.mxu0 0
      %1330 = vmatpush.bf16.msra.mxu0 0
      %1331 = vmatpush.bf16.msra.mxu0 0
      %1332 = vmatpush.bf16.msra.mxu0 0
      %1333 = vmatpush.bf16.msra.mxu0 0
      %1334 = vmatpush.bf16.msra.mxu0 0
      %1335 = vmatpush.bf16.msra.mxu0 %v1326
      %1336 = vmatmul.bf16.gmra.mxu0 %v1278
      %v1337 = vpop.f32.mrf.mxu0
      %v1338 = vadd.f32 0.0, %v1337
      %v1339 = vpop.f32.mrf.mxu0
      %v1340 = vadd.f32 0.0, %v1339
      %1341 = vmatmul.bf16.gmra.mxu0 %v1281
      %v1342 = vpop.f32.mrf.mxu0
      %v1343 = vadd.f32 0.0, %v1342
      %v1344 = vpop.f32.mrf.mxu0
      %v1345 = vadd.f32 0.0, %v1344
      %1346 = vmatmul.bf16.gmra.mxu0 %v1284
      %v1347 = vpop.f32.mrf.mxu0
      %v1348 = vadd.f32 0.0, %v1347
      %v1349 = vpop.f32.mrf.mxu0
      %v1350 = vadd.f32 0.0, %v1349
      %1351 = vmatmul.bf16.gmra.mxu0 %v1287
      %v1352 = vpop.f32.mrf.mxu0
      %v1353 = vadd.f32 0.0, %v1352
      %v1354 = vpop.f32.mrf.mxu0
      %v1355 = vadd.f32 0.0, %v1354
      %1356 = vmatmul.bf16.gmra.mxu0 %v1290
      %v1357 = vpop.f32.mrf.mxu0
      %v1358 = vadd.f32 0.0, %v1357
      %v1359 = vpop.f32.mrf.mxu0
      %v1360 = vadd.f32 0.0, %v1359
      %1361 = vmatmul.bf16.gmra.mxu0 %v1293
      %v1362 = vpop.f32.mrf.mxu0
      %v1363 = vadd.f32 0.0, %v1362
      %v1364 = vpop.f32.mrf.mxu0
      %v1365 = vadd.f32 0.0, %v1364
      %1366 = vmatmul.bf16.gmra.mxu0 %v1296
      %v1367 = vpop.f32.mrf.mxu0
      %v1368 = vadd.f32 0.0, %v1367
      %v1369 = vpop.f32.mrf.mxu0
      %v1370 = vadd.f32 0.0, %v1369
      %1371 = vmatmul.bf16.gmra.mxu0 %v1299
      %v1372 = vpop.f32.mrf.mxu0
      %v1373 = vadd.f32 0.0, %v1372
      %v1374 = vpop.f32.mrf.mxu0
      %v1375 = vadd.f32 0.0, %v1374
      %1376 = vmatmul.bf16.gmra.mxu0 %v1302
      %v1377 = vpop.f32.mrf.mxu0
      %v1378 = vadd.f32 0.0, %v1377
      %v1379 = vpop.f32.mrf.mxu0
      %v1380 = vadd.f32 0.0, %v1379
      %1381 = vmatmul.bf16.gmra.mxu0 %v1305
      %v1382 = vpop.f32.mrf.mxu0
      %v1383 = vadd.f32 0.0, %v1382
      %v1384 = vpop.f32.mrf.mxu0
      %v1385 = vadd.f32 0.0, %v1384
      %1386 = vmatmul.bf16.gmra.mxu0 %v1308
      %v1387 = vpop.f32.mrf.mxu0
      %v1388 = vadd.f32 0.0, %v1387
      %v1389 = vpop.f32.mrf.mxu0
      %v1390 = vadd.f32 0.0, %v1389
      %1391 = vmatmul.bf16.gmra.mxu0 %v1311
      %v1392 = vpop.f32.mrf.mxu0
      %v1393 = vadd.f32 0.0, %v1392
      %v1394 = vpop.f32.mrf.mxu0
      %v1395 = vadd.f32 0.0, %v1394
      %1396 = vmatmul.bf16.gmra.mxu0 %v1314
      %v1397 = vpop.f32.mrf.mxu0
      %v1398 = vadd.f32 0.0, %v1397
      %v1399 = vpop.f32.mrf.mxu0
      %v1400 = vadd.f32 0.0, %v1399
      %1401 = vmatmul.bf16.gmra.mxu0 %v1317
      %v1402 = vpop.f32.mrf.mxu0
      %v1403 = vadd.f32 0.0, %v1402
      %v1404 = vpop.f32.mrf.mxu0
      %v1405 = vadd.f32 0.0, %v1404
      %1406 = vmatmul.bf16.gmra.mxu0 %v1320
      %v1407 = vpop.f32.mrf.mxu0
      %v1408 = vadd.f32 0.0, %v1407
      %v1409 = vpop.f32.mrf.mxu0
      %v1410 = vadd.f32 0.0, %v1409
      %1411 = vmatmul.bf16.gmra.mxu0 %v1323
      %v1412 = vpop.f32.mrf.mxu0
      %v1413 = vadd.f32 0.0, %v1412
      %v1414 = vpop.f32.mrf.mxu0
      %v1415 = vadd.f32 0.0, %v1414
      %1416 = vdwg.mxu0
      %v1417 = vadd.f32 %v808, %v1338
      %v1418 = vadd.f32 %v809, %v1340
      %v1419 = vadd.f32 %v810, %v1343
      %v1420 = vadd.f32 %v811, %v1345
      %v1421 = vadd.f32 %v812, %v1348
      %v1422 = vadd.f32 %v813, %v1350
      %v1423 = vadd.f32 %v814, %v1353
      %v1424 = vadd.f32 %v815, %v1355
      %v1425 = vadd.f32 %v816, %v1358
      %v1426 = vadd.f32 %v817, %v1360
      %v1427 = vadd.f32 %v818, %v1363
      %v1428 = vadd.f32 %v819, %v1365
      %v1429 = vadd.f32 %v820, %v1368
      %v1430 = vadd.f32 %v821, %v1370
      %v1431 = vadd.f32 %v822, %v1373
      %v1432 = vadd.f32 %v823, %v1375
      %v1433 = vadd.f32 %v824, %v1378
      %v1434 = vadd.f32 %v825, %v1380
      %v1435 = vadd.f32 %v826, %v1383
      %v1436 = vadd.f32 %v827, %v1385
      %v1437 = vadd.f32 %v828, %v1388
      %v1438 = vadd.f32 %v829, %v1390
      %v1439 = vadd.f32 %v830, %v1393
      %v1440 = vadd.f32 %v831, %v1395
      %v1441 = vadd.f32 %v832, %v1398
      %v1442 = vadd.f32 %v833, %v1400
      %v1443 = vadd.f32 %v834, %v1403
      %v1444 = vadd.f32 %v835, %v1405
      %v1445 = vadd.f32 %v836, %v1408
      %v1446 = vadd.f32 %v837, %v1410
      %v1447 = vadd.f32 %v838, %v1413
      %v1448 = vadd.f32 %v839, %v1415
      %vm1465 = vcmask 1042432
      %vm1466 = vcmask 1046532
      %vm1467 = vmor %vm1465, %vm1466
      %v1468 = vrot.slane %v500, 5
      %v1469 = vrot.slane %v1468, 4
      %v1470 = vrot.slane %v501, 5
      %v1471 = vsel %vm1467, %v1469, %v1470
      %v1472 = vrot.slane %v1470, 4
      %v1473 = vrot.slane %v502, 5
      %v1474 = vsel %vm1467, %v1472, %v1473
      %v1475 = vrot.slane %v503, 5
      %v1476 = vrot.slane %v1475, 4
      %v1477 = vrot.slane %v504, 5
      %v1478 = vsel %vm1467, %v1476, %v1477
      %v1479 = vrot.slane %v1477, 4
      %v1480 = vrot.slane %v505, 5
      %v1481 = vsel %vm1467, %v1479, %v1480
      %v1482 = vrot.slane %v506, 5
      %v1483 = vrot.slane %v1482, 4
      %v1484 = vrot.slane %v507, 5
      %v1485 = vsel %vm1467, %v1483, %v1484
      %v1486 = vrot.slane %v1484, 4
      %v1487 = vrot.slane %v508, 5
      %v1488 = vsel %vm1467, %v1486, %v1487
      %v1489 = vrot.slane %v509, 5
      %v1490 = vrot.slane %v1489, 4
      %v1491 = vrot.slane %v510, 5
      %v1492 = vsel %vm1467, %v1490, %v1491
      %v1493 = vrot.slane %v1491, 4
      %v1494 = vrot.slane %v511, 5
      %v1495 = vsel %vm1467, %v1493, %v1494
      %v1496 = vrot.slane %v512, 5
      %v1497 = vrot.slane %v1496, 4
      %v1498 = vrot.slane %v513, 5
      %v1499 = vsel %vm1467, %v1497, %v1498
      %v1500 = vrot.slane %v1498, 4
      %v1501 = vrot.slane %v514, 5
      %v1502 = vsel %vm1467, %v1500, %v1501
      %v1503 = vrot.slane %v515, 5
      %v1504 = vrot.slane %v1503, 4
      %v1505 = vrot.slane %v516, 5
      %v1506 = vsel %vm1467, %v1504, %v1505
      %v1507 = vrot.slane %v1505, 4
      %v1508 = vrot.slane %v517, 5
      %v1509 = vsel %vm1467, %v1507, %v1508
      %v1510 = vrot.slane %v518, 5
      %v1511 = vrot.slane %v1510, 4
      %v1512 = vrot.slane %v519, 5
      %v1513 = vsel %vm1467, %v1511, %v1512
      %v1514 = vrot.slane %v1512, 4
      %v1515 = vrot.slane %v520, 5
      %v1516 = vsel %vm1467, %v1514, %v1515
      %v1517 = vrot.slane %v521, 5
      %v1518 = vrot.slane %v1517, 4
      %v1519 = vrot.slane %v522, 5
      %v1520 = vsel %vm1467, %v1518, %v1519
      %v1521 = vrot.slane %v1519, 4
      %v1522 = vrot.slane %v523, 5
      %v1523 = vsel %vm1467, %v1521, %v1522
      %v1524 = vrot.slane %v524, 5
      %v1525 = vrot.slane %v1524, 4
      %v1526 = vrot.slane %v525, 5
      %v1527 = vsel %vm1467, %v1525, %v1526
      %v1528 = vrot.slane %v1526, 4
      %v1529 = vrot.slane %v526, 5
      %v1530 = vsel %vm1467, %v1528, %v1529
      %v1531 = vrot.slane %v527, 5
      %v1532 = vrot.slane %v1531, 4
      %v1533 = vrot.slane %v528, 5
      %v1534 = vsel %vm1467, %v1532, %v1533
      %v1535 = vrot.slane %v1533, 4
      %v1536 = vrot.slane %v529, 5
      %v1537 = vsel %vm1467, %v1535, %v1536
      %v1538 = vrot.slane %v530, 5
      %v1539 = vrot.slane %v1538, 4
      %v1540 = vrot.slane %v531, 5
      %v1541 = vsel %vm1467, %v1539, %v1540
      %v1542 = vrot.slane %v1540, 4
      %v1543 = vrot.slane %v532, 5
      %v1544 = vsel %vm1467, %v1542, %v1543
      %v1545 = vrot.slane %v533, 5
      %v1546 = vrot.slane %v1545, 4
      %v1547 = vrot.slane %v534, 5
      %v1548 = vsel %vm1467, %v1546, %v1547
      %v1549 = vrot.slane %v1547, 4
      %v1550 = vrot.slane %v535, 5
      %v1551 = vsel %vm1467, %v1549, %v1550
      %v1552 = vrot.slane %v536, 5
      %v1553 = vrot.slane %v1552, 4
      %v1554 = vrot.slane %v537, 5
      %v1555 = vsel %vm1467, %v1553, %v1554
      %v1556 = vrot.slane %v1554, 4
      %v1557 = vrot.slane %v538, 5
      %v1558 = vsel %vm1467, %v1556, %v1557
      %v1559 = vrot.slane %v539, 5
      %v1560 = vrot.slane %v1559, 4
      %v1561 = vrot.slane %v540, 5
      %v1562 = vsel %vm1467, %v1560, %v1561
      %v1563 = vrot.slane %v1561, 4
      %v1564 = vrot.slane %v541, 5
      %v1565 = vsel %vm1467, %v1563, %v1564
      %v1566 = vrot.slane %v542, 5
      %v1567 = vrot.slane %v1566, 4
      %v1568 = vrot.slane %v543, 5
      %v1569 = vsel %vm1467, %v1567, %v1568
      %v1570 = vrot.slane %v1568, 4
      %v1571 = vrot.slane %v544, 5
      %v1572 = vsel %vm1467, %v1570, %v1571
      %v1573 = vrot.slane %v545, 5
      %v1574 = vrot.slane %v1573, 4
      %v1575 = vrot.slane %v546, 5
      %v1576 = vsel %vm1467, %v1574, %v1575
      %v1577 = vrot.slane %v1575, 4
      %v1578 = vrot.slane %v547, 5
      %v1579 = vsel %vm1467, %v1577, %v1578
      %s1580 = scalar_lea.vmem %s1, 2
      %v1581 = vld [vmem:[%s1580] sm:$0x1]
      %v1582 = vunpack.c.l.b16 %v1471
      %v1583 = vunpack.c.l.b16 %v1474
      %v1584 = vunpack.c.l.b16 %v1478
      %v1585 = vunpack.c.l.b16 %v1481
      %v1586 = vunpack.c.l.b16 %v1485
      %v1587 = vunpack.c.l.b16 %v1488
      %v1588 = vunpack.c.l.b16 %v1492
      %v1589 = vunpack.c.l.b16 %v1495
      %v1590 = vunpack.c.l.b16 %v1499
      %v1591 = vunpack.c.l.b16 %v1502
      %v1592 = vunpack.c.l.b16 %v1506
      %v1593 = vunpack.c.l.b16 %v1509
      %v1594 = vunpack.c.l.b16 %v1513
      %v1595 = vunpack.c.l.b16 %v1516
      %v1596 = vunpack.c.l.b16 %v1520
      %v1597 = vunpack.c.l.b16 %v1523
      %v1598 = vunpack.c.l.b16 %v1527
      %v1599 = vunpack.c.l.b16 %v1530
      %v1600 = vunpack.c.l.b16 %v1534
      %v1601 = vunpack.c.l.b16 %v1537
      %v1602 = vunpack.c.l.b16 %v1541
      %v1603 = vunpack.c.l.b16 %v1544
      %v1604 = vunpack.c.l.b16 %v1548
      %v1605 = vunpack.c.l.b16 %v1551
      %v1606 = vunpack.c.l.b16 %v1555
      %v1607 = vunpack.c.l.b16 %v1558
      %v1608 = vunpack.c.l.b16 %v1562
      %v1609 = vunpack.c.l.b16 %v1565
      %v1610 = vunpack.c.l.b16 %v1569
      %v1611 = vunpack.c.l.b16 %v1572
      %v1612 = vunpack.c.l.b16 %v1576
      %v1613 = vunpack.c.l.b16 %v1579
      %v1614 = vpack.c.b16 %v1583, %v1582
      %v1615 = vpack.c.b16 %v1585, %v1584
      %v1616 = vpack.c.b16 %v1587, %v1586
      %v1617 = vpack.c.b16 %v1589, %v1588
      %v1618 = vpack.c.b16 %v1591, %v1590
      %v1619 = vpack.c.b16 %v1593, %v1592
      %v1620 = vpack.c.b16 %v1595, %v1594
      %v1621 = vpack.c.b16 %v1597, %v1596
      %v1622 = vpack.c.b16 %v1599, %v1598
      %v1623 = vpack.c.b16 %v1601, %v1600
      %v1624 = vpack.c.b16 %v1603, %v1602
      %v1625 = vpack.c.b16 %v1605, %v1604
      %v1626 = vpack.c.b16 %v1607, %v1606
      %v1627 = vpack.c.b16 %v1609, %v1608
      %v1628 = vpack.c.b16 %v1611, %v1610
      %v1629 = vpack.c.b16 %v1613, %v1612
      %v1631 = vsel %vm413, %v1614, 0
      %v1634 = vsel %vm413, %v1615, 0
      %v1637 = vsel %vm413, %v1616, 0
      %v1640 = vsel %vm413, %v1617, 0
      %v1643 = vsel %vm413, %v1618, 0
      %v1646 = vsel %vm413, %v1619, 0
      %v1649 = vsel %vm413, %v1620, 0
      %v1652 = vsel %vm413, %v1621, 0
      %v1655 = vsel %vm413, %v1622, 0
      %v1658 = vsel %vm413, %v1623, 0
      %v1661 = vsel %vm413, %v1624, 0
      %v1664 = vsel %vm413, %v1625, 0
      %v1667 = vsel %vm413, %v1626, 0
      %v1670 = vsel %vm413, %v1627, 0
      %v1673 = vsel %vm413, %v1628, 0
      %v1676 = vsel %vm413, %v1629, 0
      %v1679 = vsel %vm715, %v1581, 0
      %1681 = vmatpush.bf16.msra.mxu0 0
      %1682 = vmatpush.bf16.msra.mxu0 0
      %1683 = vmatpush.bf16.msra.mxu0 0
      %1684 = vmatpush.bf16.msra.mxu0 0
      %1685 = vmatpush.bf16.msra.mxu0 0
      %1686 = vmatpush.bf16.msra.mxu0 0
      %1687 = vmatpush.bf16.msra.mxu0 0
      %1688 = vmatpush.bf16.msra.mxu0 %v1679
      %1689 = vmatmul.bf16.gmra.mxu0 %v1631
      %v1690 = vpop.f32.mrf.mxu0
      %v1691 = vadd.f32 0.0, %v1690
      %v1692 = vpop.f32.mrf.mxu0
      %v1693 = vadd.f32 0.0, %v1692
      %1694 = vmatmul.bf16.gmra.mxu0 %v1634
      %v1695 = vpop.f32.mrf.mxu0
      %v1696 = vadd.f32 0.0, %v1695
      %v1697 = vpop.f32.mrf.mxu0
      %v1698 = vadd.f32 0.0, %v1697
      %1699 = vmatmul.bf16.gmra.mxu0 %v1637
      %v1700 = vpop.f32.mrf.mxu0
      %v1701 = vadd.f32 0.0, %v1700
      %v1702 = vpop.f32.mrf.mxu0
      %v1703 = vadd.f32 0.0, %v1702
      %1704 = vmatmul.bf16.gmra.mxu0 %v1640
      %v1705 = vpop.f32.mrf.mxu0
      %v1706 = vadd.f32 0.0, %v1705
      %v1707 = vpop.f32.mrf.mxu0
      %v1708 = vadd.f32 0.0, %v1707
      %1709 = vmatmul.bf16.gmra.mxu0 %v1643
      %v1710 = vpop.f32.mrf.mxu0
      %v1711 = vadd.f32 0.0, %v1710
      %v1712 = vpop.f32.mrf.mxu0
      %v1713 = vadd.f32 0.0, %v1712
      %1714 = vmatmul.bf16.gmra.mxu0 %v1646
      %v1715 = vpop.f32.mrf.mxu0
      %v1716 = vadd.f32 0.0, %v1715
      %v1717 = vpop.f32.mrf.mxu0
      %v1718 = vadd.f32 0.0, %v1717
      %1719 = vmatmul.bf16.gmra.mxu0 %v1649
      %v1720 = vpop.f32.mrf.mxu0
      %v1721 = vadd.f32 0.0, %v1720
      %v1722 = vpop.f32.mrf.mxu0
      %v1723 = vadd.f32 0.0, %v1722
      %1724 = vmatmul.bf16.gmra.mxu0 %v1652
      %v1725 = vpop.f32.mrf.mxu0
      %v1726 = vadd.f32 0.0, %v1725
      %v1727 = vpop.f32.mrf.mxu0
      %v1728 = vadd.f32 0.0, %v1727
      %1729 = vmatmul.bf16.gmra.mxu0 %v1655
      %v1730 = vpop.f32.mrf.mxu0
      %v1731 = vadd.f32 0.0, %v1730
      %v1732 = vpop.f32.mrf.mxu0
      %v1733 = vadd.f32 0.0, %v1732
      %1734 = vmatmul.bf16.gmra.mxu0 %v1658
      %v1735 = vpop.f32.mrf.mxu0
      %v1736 = vadd.f32 0.0, %v1735
      %v1737 = vpop.f32.mrf.mxu0
      %v1738 = vadd.f32 0.0, %v1737
      %1739 = vmatmul.bf16.gmra.mxu0 %v1661
      %v1740 = vpop.f32.mrf.mxu0
      %v1741 = vadd.f32 0.0, %v1740
      %v1742 = vpop.f32.mrf.mxu0
      %v1743 = vadd.f32 0.0, %v1742
      %1744 = vmatmul.bf16.gmra.mxu0 %v1664
      %v1745 = vpop.f32.mrf.mxu0
      %v1746 = vadd.f32 0.0, %v1745
      %v1747 = vpop.f32.mrf.mxu0
      %v1748 = vadd.f32 0.0, %v1747
      %1749 = vmatmul.bf16.gmra.mxu0 %v1667
      %v1750 = vpop.f32.mrf.mxu0
      %v1751 = vadd.f32 0.0, %v1750
      %v1752 = vpop.f32.mrf.mxu0
      %v1753 = vadd.f32 0.0, %v1752
      %1754 = vmatmul.bf16.gmra.mxu0 %v1670
      %v1755 = vpop.f32.mrf.mxu0
      %v1756 = vadd.f32 0.0, %v1755
      %v1757 = vpop.f32.mrf.mxu0
      %v1758 = vadd.f32 0.0, %v1757
      %1759 = vmatmul.bf16.gmra.mxu0 %v1673
      %v1760 = vpop.f32.mrf.mxu0
      %v1761 = vadd.f32 0.0, %v1760
      %v1762 = vpop.f32.mrf.mxu0
      %v1763 = vadd.f32 0.0, %v1762
      %1764 = vmatmul.bf16.gmra.mxu0 %v1676
      %v1765 = vpop.f32.mrf.mxu0
      %v1766 = vadd.f32 0.0, %v1765
      %v1767 = vpop.f32.mrf.mxu0
      %v1768 = vadd.f32 0.0, %v1767
      %1769 = vdwg.mxu0
      %v1770 = vadd.f32 %v1417, %v1691
      %v1771 = vadd.f32 %v1418, %v1693
      %v1772 = vadd.f32 %v1419, %v1696
      %v1773 = vadd.f32 %v1420, %v1698
      %v1774 = vadd.f32 %v1421, %v1701
      %v1775 = vadd.f32 %v1422, %v1703
      %v1776 = vadd.f32 %v1423, %v1706
      %v1777 = vadd.f32 %v1424, %v1708
      %v1778 = vadd.f32 %v1425, %v1711
      %v1779 = vadd.f32 %v1426, %v1713
      %v1780 = vadd.f32 %v1427, %v1716
      %v1781 = vadd.f32 %v1428, %v1718
      %v1782 = vadd.f32 %v1429, %v1721
      %v1783 = vadd.f32 %v1430, %v1723
      %v1784 = vadd.f32 %v1431, %v1726
      %v1785 = vadd.f32 %v1432, %v1728
      %v1786 = vadd.f32 %v1433, %v1731
      %v1787 = vadd.f32 %v1434, %v1733
      %v1788 = vadd.f32 %v1435, %v1736
      %v1789 = vadd.f32 %v1436, %v1738
      %v1790 = vadd.f32 %v1437, %v1741
      %v1791 = vadd.f32 %v1438, %v1743
      %v1792 = vadd.f32 %v1439, %v1746
      %v1793 = vadd.f32 %v1440, %v1748
      %v1794 = vadd.f32 %v1441, %v1751
      %v1795 = vadd.f32 %v1442, %v1753
      %v1796 = vadd.f32 %v1443, %v1756
      %v1797 = vadd.f32 %v1444, %v1758
      %v1798 = vadd.f32 %v1445, %v1761
      %v1799 = vadd.f32 %v1446, %v1763
      %v1800 = vadd.f32 %v1447, %v1766
      %v1801 = vadd.f32 %v1448, %v1768
      %s1802 = scalar_lea.vmem %s1, 3
      %v1803 = vld [vmem:[%s1802] sm:$0x1]
      %v1806 = vunpack.c.l.b16 %v548
      %v1807 = vunpack.c.l.b16 %v549
      %v1808 = vpack.c.b16 %v1807, %v1806
      %v1810 = vsel %vm413, %v1808, 0
      %v1813 = vsel %vm715, %v1803, 0
      %1815 = vmatpush.bf16.msra.mxu0 0
      %1816 = vmatpush.bf16.msra.mxu0 0
      %1817 = vmatpush.bf16.msra.mxu0 0
      %1818 = vmatpush.bf16.msra.mxu0 0
      %1819 = vmatpush.bf16.msra.mxu0 0
      %1820 = vmatpush.bf16.msra.mxu0 0
      %1821 = vmatpush.bf16.msra.mxu0 0
      %1822 = vmatpush.bf16.msra.mxu0 %v1813
      %1823 = vmatmul.bf16.gmra.mxu0 %v671
      %v1824 = vpop.f32.mrf.mxu0
      %v1825 = vadd.f32 0.0, %v1824
      %v1826 = vpop.f32.mrf.mxu0
      %v1827 = vadd.f32 0.0, %v1826
      %1828 = vmatmul.bf16.gmra.mxu0 %v674
      %v1829 = vpop.f32.mrf.mxu0
      %v1830 = vadd.f32 0.0, %v1829
      %v1831 = vpop.f32.mrf.mxu0
      %v1832 = vadd.f32 0.0, %v1831
      %1833 = vmatmul.bf16.gmra.mxu0 %v677
      %v1834 = vpop.f32.mrf.mxu0
      %v1835 = vadd.f32 0.0, %v1834
      %v1836 = vpop.f32.mrf.mxu0
      %v1837 = vadd.f32 0.0, %v1836
      %1838 = vmatmul.bf16.gmra.mxu0 %v680
      %v1839 = vpop.f32.mrf.mxu0
      %v1840 = vadd.f32 0.0, %v1839
      %v1841 = vpop.f32.mrf.mxu0
      %v1842 = vadd.f32 0.0, %v1841
      %1843 = vmatmul.bf16.gmra.mxu0 %v683
      %v1844 = vpop.f32.mrf.mxu0
      %v1845 = vadd.f32 0.0, %v1844
      %v1846 = vpop.f32.mrf.mxu0
      %v1847 = vadd.f32 0.0, %v1846
      %1848 = vmatmul.bf16.gmra.mxu0 %v686
      %v1849 = vpop.f32.mrf.mxu0
      %v1850 = vadd.f32 0.0, %v1849
      %v1851 = vpop.f32.mrf.mxu0
      %v1852 = vadd.f32 0.0, %v1851
      %1853 = vmatmul.bf16.gmra.mxu0 %v689
      %v1854 = vpop.f32.mrf.mxu0
      %v1855 = vadd.f32 0.0, %v1854
      %v1856 = vpop.f32.mrf.mxu0
      %v1857 = vadd.f32 0.0, %v1856
      %1858 = vmatmul.bf16.gmra.mxu0 %v692
      %v1859 = vpop.f32.mrf.mxu0
      %v1860 = vadd.f32 0.0, %v1859
      %v1861 = vpop.f32.mrf.mxu0
      %v1862 = vadd.f32 0.0, %v1861
      %1863 = vmatmul.bf16.gmra.mxu0 %v695
      %v1864 = vpop.f32.mrf.mxu0
      %v1865 = vadd.f32 0.0, %v1864
      %v1866 = vpop.f32.mrf.mxu0
      %v1867 = vadd.f32 0.0, %v1866
      %1868 = vmatmul.bf16.gmra.mxu0 %v698
      %v1869 = vpop.f32.mrf.mxu0
      %v1870 = vadd.f32 0.0, %v1869
      %v1871 = vpop.f32.mrf.mxu0
      %v1872 = vadd.f32 0.0, %v1871
      %1873 = vmatmul.bf16.gmra.mxu0 %v701
      %v1874 = vpop.f32.mrf.mxu0
      %v1875 = vadd.f32 0.0, %v1874
      %v1876 = vpop.f32.mrf.mxu0
      %v1877 = vadd.f32 0.0, %v1876
      %1878 = vmatmul.bf16.gmra.mxu0 %v704
      %v1879 = vpop.f32.mrf.mxu0
      %v1880 = vadd.f32 0.0, %v1879
      %v1881 = vpop.f32.mrf.mxu0
      %v1882 = vadd.f32 0.0, %v1881
      %1883 = vmatmul.bf16.gmra.mxu0 %v707
      %v1884 = vpop.f32.mrf.mxu0
      %v1885 = vadd.f32 0.0, %v1884
      %v1886 = vpop.f32.mrf.mxu0
      %v1887 = vadd.f32 0.0, %v1886
      %1888 = vmatmul.bf16.gmra.mxu0 %v710
      %v1889 = vpop.f32.mrf.mxu0
      %v1890 = vadd.f32 0.0, %v1889
      %v1891 = vpop.f32.mrf.mxu0
      %v1892 = vadd.f32 0.0, %v1891
      %1893 = vmatmul.bf16.gmra.mxu0 %v713
      %v1894 = vpop.f32.mrf.mxu0
      %v1895 = vadd.f32 0.0, %v1894
      %v1896 = vpop.f32.mrf.mxu0
      %v1897 = vadd.f32 0.0, %v1896
      %1898 = vmatmul.bf16.gmra.mxu0 %v1810
      %v1899 = vpop.f32.mrf.mxu0
      %v1900 = vadd.f32 0.0, %v1899
      %v1901 = vpop.f32.mrf.mxu0
      %v1902 = vadd.f32 0.0, %v1901
      %1903 = vdwg.mxu0
      %v1904 = vadd.f32 %v1770, %v1825
      %v1905 = vadd.f32 %v1771, %v1827
      %v1906 = vadd.f32 %v1772, %v1830
      %v1907 = vadd.f32 %v1773, %v1832
      %v1908 = vadd.f32 %v1774, %v1835
      %v1909 = vadd.f32 %v1775, %v1837
      %v1910 = vadd.f32 %v1776, %v1840
      %v1911 = vadd.f32 %v1777, %v1842
      %v1912 = vadd.f32 %v1778, %v1845
      %v1913 = vadd.f32 %v1779, %v1847
      %v1914 = vadd.f32 %v1780, %v1850
      %v1915 = vadd.f32 %v1781, %v1852
      %v1916 = vadd.f32 %v1782, %v1855
      %v1917 = vadd.f32 %v1783, %v1857
      %v1918 = vadd.f32 %v1784, %v1860
      %v1919 = vadd.f32 %v1785, %v1862
      %v1920 = vadd.f32 %v1786, %v1865
      %v1921 = vadd.f32 %v1787, %v1867
      %v1922 = vadd.f32 %v1788, %v1870
      %v1923 = vadd.f32 %v1789, %v1872
      %v1924 = vadd.f32 %v1790, %v1875
      %v1925 = vadd.f32 %v1791, %v1877
      %v1926 = vadd.f32 %v1792, %v1880
      %v1927 = vadd.f32 %v1793, %v1882
      %v1928 = vadd.f32 %v1794, %v1885
      %v1929 = vadd.f32 %v1795, %v1887
      %v1930 = vadd.f32 %v1796, %v1890
      %v1931 = vadd.f32 %v1797, %v1892
      %v1932 = vadd.f32 %v1798, %v1895
      %v1933 = vadd.f32 %v1799, %v1897
      %v1934 = vadd.f32 %v1800, %v1900
      %v1935 = vadd.f32 %v1801, %v1902
      %v1937 = vshrl.u32 %v548, 16
      %v1939 = vrot.slane %v1937, 4
      %v1940 = vshll.u32 %v548, 16
      %v1942 = vrot.slane %v1940, 5
      %v1943 = vor.u32 %v1939, %v1942
      %v1944 = vrot.slane %v1943, 4
      %v1946 = vshll.u32 %v549, 16
      %v1948 = vrot.slane %v1946, 5
      %v1949 = vsel %vm842, %v1944, %v1948
      %v1950 = vshrl.u32 %v549, 16
      %v1952 = vrot.slane %v1950, 4
      %v1953 = vor.u32 %v1952, %v1948
      %v1954 = vrot.slane %v1953, 4
      %v1956 = vshll.u32 %v550, 16
      %v1958 = vrot.slane %v1956, 5
      %v1959 = vsel %vm842, %v1954, %v1958
      %s1960 = scalar_lea.vmem %s1, 4
      %v1961 = vld [vmem:[%s1960] sm:$0x1]
      %v1962 = vunpack.c.l.b16 %v1949
      %v1963 = vunpack.c.l.b16 %v1959
      %v1964 = vpack.c.b16 %v1963, %v1962
      %v1966 = vsel %vm413, %v1964, 0
      %v1969 = vsel %vm715, %v1961, 0
      %1971 = vmatpush.bf16.msra.mxu0 0
      %1972 = vmatpush.bf16.msra.mxu0 0
      %1973 = vmatpush.bf16.msra.mxu0 0
      %1974 = vmatpush.bf16.msra.mxu0 0
      %1975 = vmatpush.bf16.msra.mxu0 0
      %1976 = vmatpush.bf16.msra.mxu0 0
      %1977 = vmatpush.bf16.msra.mxu0 0
      %1978 = vmatpush.bf16.msra.mxu0 %v1969
      %1979 = vmatmul.bf16.gmra.mxu0 %v1281
      %v1980 = vpop.f32.mrf.mxu0
      %v1981 = vadd.f32 0.0, %v1980
      %v1982 = vpop.f32.mrf.mxu0
      %v1983 = vadd.f32 0.0, %v1982
      %1984 = vmatmul.bf16.gmra.mxu0 %v1284
      %v1985 = vpop.f32.mrf.mxu0
      %v1986 = vadd.f32 0.0, %v1985
      %v1987 = vpop.f32.mrf.mxu0
      %v1988 = vadd.f32 0.0, %v1987
      %1989 = vmatmul.bf16.gmra.mxu0 %v1287
      %v1990 = vpop.f32.mrf.mxu0
      %v1991 = vadd.f32 0.0, %v1990
      %v1992 = vpop.f32.mrf.mxu0
      %v1993 = vadd.f32 0.0, %v1992
      %1994 = vmatmul.bf16.gmra.mxu0 %v1290
      %v1995 = vpop.f32.mrf.mxu0
      %v1996 = vadd.f32 0.0, %v1995
      %v1997 = vpop.f32.mrf.mxu0
      %v1998 = vadd.f32 0.0, %v1997
      %1999 = vmatmul.bf16.gmra.mxu0 %v1293
      %v2000 = vpop.f32.mrf.mxu0
      %v2001 = vadd.f32 0.0, %v2000
      %v2002 = vpop.f32.mrf.mxu0
      %v2003 = vadd.f32 0.0, %v2002
      %2004 = vmatmul.bf16.gmra.mxu0 %v1296
      %v2005 = vpop.f32.mrf.mxu0
      %v2006 = vadd.f32 0.0, %v2005
      %v2007 = vpop.f32.mrf.mxu0
      %v2008 = vadd.f32 0.0, %v2007
      %2009 = vmatmul.bf16.gmra.mxu0 %v1299
      %v2010 = vpop.f32.mrf.mxu0
      %v2011 = vadd.f32 0.0, %v2010
      %v2012 = vpop.f32.mrf.mxu0
      %v2013 = vadd.f32 0.0, %v2012
      %2014 = vmatmul.bf16.gmra.mxu0 %v1302
      %v2015 = vpop.f32.mrf.mxu0
      %v2016 = vadd.f32 0.0, %v2015
      %v2017 = vpop.f32.mrf.mxu0
      %v2018 = vadd.f32 0.0, %v2017
      %2019 = vmatmul.bf16.gmra.mxu0 %v1305
      %v2020 = vpop.f32.mrf.mxu0
      %v2021 = vadd.f32 0.0, %v2020
      %v2022 = vpop.f32.mrf.mxu0
      %v2023 = vadd.f32 0.0, %v2022
      %2024 = vmatmul.bf16.gmra.mxu0 %v1308
      %v2025 = vpop.f32.mrf.mxu0
      %v2026 = vadd.f32 0.0, %v2025
      %v2027 = vpop.f32.mrf.mxu0
      %v2028 = vadd.f32 0.0, %v2027
      %2029 = vmatmul.bf16.gmra.mxu0 %v1311
      %v2030 = vpop.f32.mrf.mxu0
      %v2031 = vadd.f32 0.0, %v2030
      %v2032 = vpop.f32.mrf.mxu0
      %v2033 = vadd.f32 0.0, %v2032
      %2034 = vmatmul.bf16.gmra.mxu0 %v1314
      %v2035 = vpop.f32.mrf.mxu0
      %v2036 = vadd.f32 0.0, %v2035
      %v2037 = vpop.f32.mrf.mxu0
      %v2038 = vadd.f32 0.0, %v2037
      %2039 = vmatmul.bf16.gmra.mxu0 %v1317
      %v2040 = vpop.f32.mrf.mxu0
      %v2041 = vadd.f32 0.0, %v2040
      %v2042 = vpop.f32.mrf.mxu0
      %v2043 = vadd.f32 0.0, %v2042
      %2044 = vmatmul.bf16.gmra.mxu0 %v1320
      %v2045 = vpop.f32.mrf.mxu0
      %v2046 = vadd.f32 0.0, %v2045
      %v2047 = vpop.f32.mrf.mxu0
      %v2048 = vadd.f32 0.0, %v2047
      %2049 = vmatmul.bf16.gmra.mxu0 %v1323
      %v2050 = vpop.f32.mrf.mxu0
      %v2051 = vadd.f32 0.0, %v2050
      %v2052 = vpop.f32.mrf.mxu0
      %v2053 = vadd.f32 0.0, %v2052
      %2054 = vmatmul.bf16.gmra.mxu0 %v1966
      %v2055 = vpop.f32.mrf.mxu0
      %v2056 = vadd.f32 0.0, %v2055
      %v2057 = vpop.f32.mrf.mxu0
      %v2058 = vadd.f32 0.0, %v2057
      %2059 = vdwg.mxu0
      %v2060 = vadd.f32 %v1904, %v1981
      %v2061 = vadd.f32 %v1905, %v1983
      %v2062 = vadd.f32 %v1906, %v1986
      %v2063 = vadd.f32 %v1907, %v1988
      %v2064 = vadd.f32 %v1908, %v1991
      %v2065 = vadd.f32 %v1909, %v1993
      %v2066 = vadd.f32 %v1910, %v1996
      %v2067 = vadd.f32 %v1911, %v1998
      %v2068 = vadd.f32 %v1912, %v2001
      %v2069 = vadd.f32 %v1913, %v2003
      %v2070 = vadd.f32 %v1914, %v2006
      %v2071 = vadd.f32 %v1915, %v2008
      %v2072 = vadd.f32 %v1916, %v2011
      %v2073 = vadd.f32 %v1917, %v2013
      %v2074 = vadd.f32 %v1918, %v2016
      %v2075 = vadd.f32 %v1919, %v2018
      %v2076 = vadd.f32 %v1920, %v2021
      %v2077 = vadd.f32 %v1921, %v2023
      %v2078 = vadd.f32 %v1922, %v2026
      %v2079 = vadd.f32 %v1923, %v2028
      %v2080 = vadd.f32 %v1924, %v2031
      %v2081 = vadd.f32 %v1925, %v2033
      %v2082 = vadd.f32 %v1926, %v2036
      %v2083 = vadd.f32 %v1927, %v2038
      %v2084 = vadd.f32 %v1928, %v2041
      %v2085 = vadd.f32 %v1929, %v2043
      %v2086 = vadd.f32 %v1930, %v2046
      %v2087 = vadd.f32 %v1931, %v2048
      %v2088 = vadd.f32 %v1932, %v2051
      %v2089 = vadd.f32 %v1933, %v2053
      %v2090 = vadd.f32 %v1934, %v2056
      %v2091 = vadd.f32 %v1935, %v2058
      %v2093 = vrot.slane %v548, 5
      %v2094 = vrot.slane %v2093, 4
      %v2095 = vrot.slane %v549, 5
      %v2096 = vsel %vm1467, %v2094, %v2095
      %v2097 = vrot.slane %v2095, 4
      %v2098 = vrot.slane %v550, 5
      %v2099 = vsel %vm1467, %v2097, %v2098
      %s2100 = scalar_lea.vmem %s1, 5
      %v2101 = vld [vmem:[%s2100] sm:$0x1]
      %v2102 = vunpack.c.l.b16 %v2096
      %v2103 = vunpack.c.l.b16 %v2099
      %v2104 = vpack.c.b16 %v2103, %v2102
      %v2106 = vsel %vm413, %v2104, 0
      %v2109 = vsel %vm715, %v2101, 0
      %2111 = vmatpush.bf16.msra.mxu0 0
      %2112 = vmatpush.bf16.msra.mxu0 0
      %2113 = vmatpush.bf16.msra.mxu0 0
      %2114 = vmatpush.bf16.msra.mxu0 0
      %2115 = vmatpush.bf16.msra.mxu0 0
      %2116 = vmatpush.bf16.msra.mxu0 0
      %2117 = vmatpush.bf16.msra.mxu0 0
      %2118 = vmatpush.bf16.msra.mxu0 %v2109
      %2119 = vmatmul.bf16.gmra.mxu0 %v1634
      %v2120 = vpop.f32.mrf.mxu0
      %v2121 = vadd.f32 0.0, %v2120
      %v2122 = vpop.f32.mrf.mxu0
      %v2123 = vadd.f32 0.0, %v2122
      %2124 = vmatmul.bf16.gmra.mxu0 %v1637
      %v2125 = vpop.f32.mrf.mxu0
      %v2126 = vadd.f32 0.0, %v2125
      %v2127 = vpop.f32.mrf.mxu0
      %v2128 = vadd.f32 0.0, %v2127
      %2129 = vmatmul.bf16.gmra.mxu0 %v1640
      %v2130 = vpop.f32.mrf.mxu0
      %v2131 = vadd.f32 0.0, %v2130
      %v2132 = vpop.f32.mrf.mxu0
      %v2133 = vadd.f32 0.0, %v2132
      %2134 = vmatmul.bf16.gmra.mxu0 %v1643
      %v2135 = vpop.f32.mrf.mxu0
      %v2136 = vadd.f32 0.0, %v2135
      %v2137 = vpop.f32.mrf.mxu0
      %v2138 = vadd.f32 0.0, %v2137
      %2139 = vmatmul.bf16.gmra.mxu0 %v1646
      %v2140 = vpop.f32.mrf.mxu0
      %v2141 = vadd.f32 0.0, %v2140
      %v2142 = vpop.f32.mrf.mxu0
      %v2143 = vadd.f32 0.0, %v2142
      %2144 = vmatmul.bf16.gmra.mxu0 %v1649
      %v2145 = vpop.f32.mrf.mxu0
      %v2146 = vadd.f32 0.0, %v2145
      %v2147 = vpop.f32.mrf.mxu0
      %v2148 = vadd.f32 0.0, %v2147
      %2149 = vmatmul.bf16.gmra.mxu0 %v1652
      %v2150 = vpop.f32.mrf.mxu0
      %v2151 = vadd.f32 0.0, %v2150
      %v2152 = vpop.f32.mrf.mxu0
      %v2153 = vadd.f32 0.0, %v2152
      %2154 = vmatmul.bf16.gmra.mxu0 %v1655
      %v2155 = vpop.f32.mrf.mxu0
      %v2156 = vadd.f32 0.0, %v2155
      %v2157 = vpop.f32.mrf.mxu0
      %v2158 = vadd.f32 0.0, %v2157
      %2159 = vmatmul.bf16.gmra.mxu0 %v1658
      %v2160 = vpop.f32.mrf.mxu0
      %v2161 = vadd.f32 0.0, %v2160
      %v2162 = vpop.f32.mrf.mxu0
      %v2163 = vadd.f32 0.0, %v2162
      %2164 = vmatmul.bf16.gmra.mxu0 %v1661
      %v2165 = vpop.f32.mrf.mxu0
      %v2166 = vadd.f32 0.0, %v2165
      %v2167 = vpop.f32.mrf.mxu0
      %v2168 = vadd.f32 0.0, %v2167
      %2169 = vmatmul.bf16.gmra.mxu0 %v1664
      %v2170 = vpop.f32.mrf.mxu0
      %v2171 = vadd.f32 0.0, %v2170
      %v2172 = vpop.f32.mrf.mxu0
      %v2173 = vadd.f32 0.0, %v2172
      %2174 = vmatmul.bf16.gmra.mxu0 %v1667
      %v2175 = vpop.f32.mrf.mxu0
      %v2176 = vadd.f32 0.0, %v2175
      %v2177 = vpop.f32.mrf.mxu0
      %v2178 = vadd.f32 0.0, %v2177
      %2179 = vmatmul.bf16.gmra.mxu0 %v1670
      %v2180 = vpop.f32.mrf.mxu0
      %v2181 = vadd.f32 0.0, %v2180
      %v2182 = vpop.f32.mrf.mxu0
      %v2183 = vadd.f32 0.0, %v2182
      %2184 = vmatmul.bf16.gmra.mxu0 %v1673
      %v2185 = vpop.f32.mrf.mxu0
      %v2186 = vadd.f32 0.0, %v2185
      %v2187 = vpop.f32.mrf.mxu0
      %v2188 = vadd.f32 0.0, %v2187
      %2189 = vmatmul.bf16.gmra.mxu0 %v1676
      %v2190 = vpop.f32.mrf.mxu0
      %v2191 = vadd.f32 0.0, %v2190
      %v2192 = vpop.f32.mrf.mxu0
      %v2193 = vadd.f32 0.0, %v2192
      %2194 = vmatmul.bf16.gmra.mxu0 %v2106
      %v2195 = vpop.f32.mrf.mxu0
      %v2196 = vadd.f32 0.0, %v2195
      %v2197 = vpop.f32.mrf.mxu0
      %v2198 = vadd.f32 0.0, %v2197
      %2199 = vdwg.mxu0
      %v2200 = vadd.f32 %v2060, %v2121
      %v2201 = vadd.f32 %v2061, %v2123
      %v2202 = vadd.f32 %v2062, %v2126
      %v2203 = vadd.f32 %v2063, %v2128
      %v2204 = vadd.f32 %v2064, %v2131
      %v2205 = vadd.f32 %v2065, %v2133
      %v2206 = vadd.f32 %v2066, %v2136
      %v2207 = vadd.f32 %v2067, %v2138
      %v2208 = vadd.f32 %v2068, %v2141
      %v2209 = vadd.f32 %v2069, %v2143
      %v2210 = vadd.f32 %v2070, %v2146
      %v2211 = vadd.f32 %v2071, %v2148
      %v2212 = vadd.f32 %v2072, %v2151
      %v2213 = vadd.f32 %v2073, %v2153
      %v2214 = vadd.f32 %v2074, %v2156
      %v2215 = vadd.f32 %v2075, %v2158
      %v2216 = vadd.f32 %v2076, %v2161
      %v2217 = vadd.f32 %v2077, %v2163
      %v2218 = vadd.f32 %v2078, %v2166
      %v2219 = vadd.f32 %v2079, %v2168
      %v2220 = vadd.f32 %v2080, %v2171
      %v2221 = vadd.f32 %v2081, %v2173
      %v2222 = vadd.f32 %v2082, %v2176
      %v2223 = vadd.f32 %v2083, %v2178
      %v2224 = vadd.f32 %v2084, %v2181
      %v2225 = vadd.f32 %v2085, %v2183
      %v2226 = vadd.f32 %v2086, %v2186
      %v2227 = vadd.f32 %v2087, %v2188
      %v2228 = vadd.f32 %v2088, %v2191
      %v2229 = vadd.f32 %v2089, %v2193
      %v2230 = vadd.f32 %v2090, %v2196
      %v2231 = vadd.f32 %v2091, %v2198
      %s2232 = scalar_lea.vmem %s1, 6
      %v2233 = vld [vmem:[%s2232] sm:$0x1]
      %v2236 = vunpack.c.l.b16 %v551
      %v2237 = vunpack.c.l.b16 %v552
      %v2238 = vpack.c.b16 %v2237, %v2236
      %v2240 = vsel %vm413, %v2238, 0
      %v2243 = vsel %vm715, %v2233, 0
      %2245 = vmatpush.bf16.msra.mxu0 0
      %2246 = vmatpush.bf16.msra.mxu0 0
      %2247 = vmatpush.bf16.msra.mxu0 0
      %2248 = vmatpush.bf16.msra.mxu0 0
      %2249 = vmatpush.bf16.msra.mxu0 0
      %2250 = vmatpush.bf16.msra.mxu0 0
      %2251 = vmatpush.bf16.msra.mxu0 0
      %2252 = vmatpush.bf16.msra.mxu0 %v2243
      %2253 = vmatmul.bf16.gmra.mxu0 %v674
      %v2254 = vpop.f32.mrf.mxu0
      %v2255 = vadd.f32 0.0, %v2254
      %v2256 = vpop.f32.mrf.mxu0
      %v2257 = vadd.f32 0.0, %v2256
      %2258 = vmatmul.bf16.gmra.mxu0 %v677
      %v2259 = vpop.f32.mrf.mxu0
      %v2260 = vadd.f32 0.0, %v2259
      %v2261 = vpop.f32.mrf.mxu0
      %v2262 = vadd.f32 0.0, %v2261
      %2263 = vmatmul.bf16.gmra.mxu0 %v680
      %v2264 = vpop.f32.mrf.mxu0
      %v2265 = vadd.f32 0.0, %v2264
      %v2266 = vpop.f32.mrf.mxu0
      %v2267 = vadd.f32 0.0, %v2266
      %2268 = vmatmul.bf16.gmra.mxu0 %v683
      %v2269 = vpop.f32.mrf.mxu0
      %v2270 = vadd.f32 0.0, %v2269
      %v2271 = vpop.f32.mrf.mxu0
      %v2272 = vadd.f32 0.0, %v2271
      %2273 = vmatmul.bf16.gmra.mxu0 %v686
      %v2274 = vpop.f32.mrf.mxu0
      %v2275 = vadd.f32 0.0, %v2274
      %v2276 = vpop.f32.mrf.mxu0
      %v2277 = vadd.f32 0.0, %v2276
      %2278 = vmatmul.bf16.gmra.mxu0 %v689
      %v2279 = vpop.f32.mrf.mxu0
      %v2280 = vadd.f32 0.0, %v2279
      %v2281 = vpop.f32.mrf.mxu0
      %v2282 = vadd.f32 0.0, %v2281
      %2283 = vmatmul.bf16.gmra.mxu0 %v692
      %v2284 = vpop.f32.mrf.mxu0
      %v2285 = vadd.f32 0.0, %v2284
      %v2286 = vpop.f32.mrf.mxu0
      %v2287 = vadd.f32 0.0, %v2286
      %2288 = vmatmul.bf16.gmra.mxu0 %v695
      %v2289 = vpop.f32.mrf.mxu0
      %v2290 = vadd.f32 0.0, %v2289
      %v2291 = vpop.f32.mrf.mxu0
      %v2292 = vadd.f32 0.0, %v2291
      %2293 = vmatmul.bf16.gmra.mxu0 %v698
      %v2294 = vpop.f32.mrf.mxu0
      %v2295 = vadd.f32 0.0, %v2294
      %v2296 = vpop.f32.mrf.mxu0
      %v2297 = vadd.f32 0.0, %v2296
      %2298 = vmatmul.bf16.gmra.mxu0 %v701
      %v2299 = vpop.f32.mrf.mxu0
      %v2300 = vadd.f32 0.0, %v2299
      %v2301 = vpop.f32.mrf.mxu0
      %v2302 = vadd.f32 0.0, %v2301
      %2303 = vmatmul.bf16.gmra.mxu0 %v704
      %v2304 = vpop.f32.mrf.mxu0
      %v2305 = vadd.f32 0.0, %v2304
      %v2306 = vpop.f32.mrf.mxu0
      %v2307 = vadd.f32 0.0, %v2306
      %2308 = vmatmul.bf16.gmra.mxu0 %v707
      %v2309 = vpop.f32.mrf.mxu0
      %v2310 = vadd.f32 0.0, %v2309
      %v2311 = vpop.f32.mrf.mxu0
      %v2312 = vadd.f32 0.0, %v2311
      %2313 = vmatmul.bf16.gmra.mxu0 %v710
      %v2314 = vpop.f32.mrf.mxu0
      %v2315 = vadd.f32 0.0, %v2314
      %v2316 = vpop.f32.mrf.mxu0
      %v2317 = vadd.f32 0.0, %v2316
      %2318 = vmatmul.bf16.gmra.mxu0 %v713
      %v2319 = vpop.f32.mrf.mxu0
      %v2320 = vadd.f32 0.0, %v2319
      %v2321 = vpop.f32.mrf.mxu0
      %v2322 = vadd.f32 0.0, %v2321
      %2323 = vmatmul.bf16.gmra.mxu0 %v1810
      %v2324 = vpop.f32.mrf.mxu0
      %v2325 = vadd.f32 0.0, %v2324
      %v2326 = vpop.f32.mrf.mxu0
      %v2327 = vadd.f32 0.0, %v2326
      %2328 = vmatmul.bf16.gmra.mxu0 %v2240
      %v2329 = vpop.f32.mrf.mxu0
      %v2330 = vadd.f32 0.0, %v2329
      %v2331 = vpop.f32.mrf.mxu0
      %v2332 = vadd.f32 0.0, %v2331
      %2333 = vdwg.mxu0
      %v2334 = vadd.f32 %v2200, %v2255
      %v2335 = vadd.f32 %v2201, %v2257
      %v2336 = vadd.f32 %v2202, %v2260
      %v2337 = vadd.f32 %v2203, %v2262
      %v2338 = vadd.f32 %v2204, %v2265
      %v2339 = vadd.f32 %v2205, %v2267
      %v2340 = vadd.f32 %v2206, %v2270
      %v2341 = vadd.f32 %v2207, %v2272
      %v2342 = vadd.f32 %v2208, %v2275
      %v2343 = vadd.f32 %v2209, %v2277
      %v2344 = vadd.f32 %v2210, %v2280
      %v2345 = vadd.f32 %v2211, %v2282
      %v2346 = vadd.f32 %v2212, %v2285
      %v2347 = vadd.f32 %v2213, %v2287
      %v2348 = vadd.f32 %v2214, %v2290
      %v2349 = vadd.f32 %v2215, %v2292
      %v2350 = vadd.f32 %v2216, %v2295
      %v2351 = vadd.f32 %v2217, %v2297
      %v2352 = vadd.f32 %v2218, %v2300
      %v2353 = vadd.f32 %v2219, %v2302
      %v2354 = vadd.f32 %v2220, %v2305
      %v2355 = vadd.f32 %v2221, %v2307
      %v2356 = vadd.f32 %v2222, %v2310
      %v2357 = vadd.f32 %v2223, %v2312
      %v2358 = vadd.f32 %v2224, %v2315
      %v2359 = vadd.f32 %v2225, %v2317
      %v2360 = vadd.f32 %v2226, %v2320
      %v2361 = vadd.f32 %v2227, %v2322
      %v2362 = vadd.f32 %v2228, %v2325
      %v2363 = vadd.f32 %v2229, %v2327
      %v2364 = vadd.f32 %v2230, %v2330
      %v2365 = vadd.f32 %v2231, %v2332
      %v2367 = vshrl.u32 %v551, 16
      %v2369 = vrot.slane %v2367, 4
      %v2370 = vshll.u32 %v551, 16
      %v2372 = vrot.slane %v2370, 5
      %v2373 = vor.u32 %v2369, %v2372
      %v2374 = vrot.slane %v2373, 4
      %v2376 = vshll.u32 %v552, 16
      %v2378 = vrot.slane %v2376, 5
      %v2379 = vsel %vm842, %v2374, %v2378
      %v2380 = vshrl.u32 %v552, 16
      %v2382 = vrot.slane %v2380, 4
      %v2383 = vor.u32 %v2382, %v2378
      %v2384 = vrot.slane %v2383, 4
      %v2386 = vshll.u32 %v553, 16
      %v2388 = vrot.slane %v2386, 5
      %v2389 = vsel %vm842, %v2384, %v2388
      %s2390 = scalar_lea.vmem %s1, 7
      %v2391 = vld [vmem:[%s2390] sm:$0x1]
      %v2392 = vunpack.c.l.b16 %v2379
      %v2393 = vunpack.c.l.b16 %v2389
      %v2394 = vpack.c.b16 %v2393, %v2392
      %v2396 = vsel %vm413, %v2394, 0
      %v2399 = vsel %vm715, %v2391, 0
      %2401 = vmatpush.bf16.msra.mxu0 0
      %2402 = vmatpush.bf16.msra.mxu0 0
      %2403 = vmatpush.bf16.msra.mxu0 0
      %2404 = vmatpush.bf16.msra.mxu0 0
      %2405 = vmatpush.bf16.msra.mxu0 0
      %2406 = vmatpush.bf16.msra.mxu0 0
      %2407 = vmatpush.bf16.msra.mxu0 0
      %2408 = vmatpush.bf16.msra.mxu0 %v2399
      %2409 = vmatmul.bf16.gmra.mxu0 %v1284
      %v2410 = vpop.f32.mrf.mxu0
      %v2411 = vadd.f32 0.0, %v2410
      %v2412 = vpop.f32.mrf.mxu0
      %v2413 = vadd.f32 0.0, %v2412
      %2414 = vmatmul.bf16.gmra.mxu0 %v1287
      %v2415 = vpop.f32.mrf.mxu0
      %v2416 = vadd.f32 0.0, %v2415
      %v2417 = vpop.f32.mrf.mxu0
      %v2418 = vadd.f32 0.0, %v2417
      %2419 = vmatmul.bf16.gmra.mxu0 %v1290
      %v2420 = vpop.f32.mrf.mxu0
      %v2421 = vadd.f32 0.0, %v2420
      %v2422 = vpop.f32.mrf.mxu0
      %v2423 = vadd.f32 0.0, %v2422
      %2424 = vmatmul.bf16.gmra.mxu0 %v1293
      %v2425 = vpop.f32.mrf.mxu0
      %v2426 = vadd.f32 0.0, %v2425
      %v2427 = vpop.f32.mrf.mxu0
      %v2428 = vadd.f32 0.0, %v2427
      %2429 = vmatmul.bf16.gmra.mxu0 %v1296
      %v2430 = vpop.f32.mrf.mxu0
      %v2431 = vadd.f32 0.0, %v2430
      %v2432 = vpop.f32.mrf.mxu0
      %v2433 = vadd.f32 0.0, %v2432
      %2434 = vmatmul.bf16.gmra.mxu0 %v1299
      %v2435 = vpop.f32.mrf.mxu0
      %v2436 = vadd.f32 0.0, %v2435
      %v2437 = vpop.f32.mrf.mxu0
      %v2438 = vadd.f32 0.0, %v2437
      %2439 = vmatmul.bf16.gmra.mxu0 %v1302
      %v2440 = vpop.f32.mrf.mxu0
      %v2441 = vadd.f32 0.0, %v2440
      %v2442 = vpop.f32.mrf.mxu0
      %v2443 = vadd.f32 0.0, %v2442
      %2444 = vmatmul.bf16.gmra.mxu0 %v1305
      %v2445 = vpop.f32.mrf.mxu0
      %v2446 = vadd.f32 0.0, %v2445
      %v2447 = vpop.f32.mrf.mxu0
      %v2448 = vadd.f32 0.0, %v2447
      %2449 = vmatmul.bf16.gmra.mxu0 %v1308
      %v2450 = vpop.f32.mrf.mxu0
      %v2451 = vadd.f32 0.0, %v2450
      %v2452 = vpop.f32.mrf.mxu0
      %v2453 = vadd.f32 0.0, %v2452
      %2454 = vmatmul.bf16.gmra.mxu0 %v1311
      %v2455 = vpop.f32.mrf.mxu0
      %v2456 = vadd.f32 0.0, %v2455
      %v2457 = vpop.f32.mrf.mxu0
      %v2458 = vadd.f32 0.0, %v2457
      %2459 = vmatmul.bf16.gmra.mxu0 %v1314
      %v2460 = vpop.f32.mrf.mxu0
      %v2461 = vadd.f32 0.0, %v2460
      %v2462 = vpop.f32.mrf.mxu0
      %v2463 = vadd.f32 0.0, %v2462
      %2464 = vmatmul.bf16.gmra.mxu0 %v1317
      %v2465 = vpop.f32.mrf.mxu0
      %v2466 = vadd.f32 0.0, %v2465
      %v2467 = vpop.f32.mrf.mxu0
      %v2468 = vadd.f32 0.0, %v2467
      %2469 = vmatmul.bf16.gmra.mxu0 %v1320
      %v2470 = vpop.f32.mrf.mxu0
      %v2471 = vadd.f32 0.0, %v2470
      %v2472 = vpop.f32.mrf.mxu0
      %v2473 = vadd.f32 0.0, %v2472
      %2474 = vmatmul.bf16.gmra.mxu0 %v1323
      %v2475 = vpop.f32.mrf.mxu0
      %v2476 = vadd.f32 0.0, %v2475
      %v2477 = vpop.f32.mrf.mxu0
      %v2478 = vadd.f32 0.0, %v2477
      %2479 = vmatmul.bf16.gmra.mxu0 %v1966
      %v2480 = vpop.f32.mrf.mxu0
      %v2481 = vadd.f32 0.0, %v2480
      %v2482 = vpop.f32.mrf.mxu0
      %v2483 = vadd.f32 0.0, %v2482
      %2484 = vmatmul.bf16.gmra.mxu0 %v2396
      %v2485 = vpop.f32.mrf.mxu0
      %v2486 = vadd.f32 0.0, %v2485
      %v2487 = vpop.f32.mrf.mxu0
      %v2488 = vadd.f32 0.0, %v2487
      %2489 = vdwg.mxu0
      %v2490 = vadd.f32 %v2334, %v2411
      %v2491 = vadd.f32 %v2335, %v2413
      %v2492 = vadd.f32 %v2336, %v2416
      %v2493 = vadd.f32 %v2337, %v2418
      %v2494 = vadd.f32 %v2338, %v2421
      %v2495 = vadd.f32 %v2339, %v2423
      %v2496 = vadd.f32 %v2340, %v2426
      %v2497 = vadd.f32 %v2341, %v2428
      %v2498 = vadd.f32 %v2342, %v2431
      %v2499 = vadd.f32 %v2343, %v2433
      %v2500 = vadd.f32 %v2344, %v2436
      %v2501 = vadd.f32 %v2345, %v2438
      %v2502 = vadd.f32 %v2346, %v2441
      %v2503 = vadd.f32 %v2347, %v2443
      %v2504 = vadd.f32 %v2348, %v2446
      %v2505 = vadd.f32 %v2349, %v2448
      %v2506 = vadd.f32 %v2350, %v2451
      %v2507 = vadd.f32 %v2351, %v2453
      %v2508 = vadd.f32 %v2352, %v2456
      %v2509 = vadd.f32 %v2353, %v2458
      %v2510 = vadd.f32 %v2354, %v2461
      %v2511 = vadd.f32 %v2355, %v2463
      %v2512 = vadd.f32 %v2356, %v2466
      %v2513 = vadd.f32 %v2357, %v2468
      %v2514 = vadd.f32 %v2358, %v2471
      %v2515 = vadd.f32 %v2359, %v2473
      %v2516 = vadd.f32 %v2360, %v2476
      %v2517 = vadd.f32 %v2361, %v2478
      %v2518 = vadd.f32 %v2362, %v2481
      %v2519 = vadd.f32 %v2363, %v2483
      %v2520 = vadd.f32 %v2364, %v2486
      %v2521 = vadd.f32 %v2365, %v2488
      %v2523 = vrot.slane %v551, 5
      %v2524 = vrot.slane %v2523, 4
      %v2525 = vrot.slane %v552, 5
      %v2526 = vsel %vm1467, %v2524, %v2525
      %v2527 = vrot.slane %v2525, 4
      %v2528 = vrot.slane %v553, 5
      %v2529 = vsel %vm1467, %v2527, %v2528
      %s2530 = scalar_lea.vmem %s1, 8
      %v2531 = vld [vmem:[%s2530] sm:$0x1]
      %v2532 = vunpack.c.l.b16 %v2526
      %v2533 = vunpack.c.l.b16 %v2529
      %v2534 = vpack.c.b16 %v2533, %v2532
      %v2536 = vsel %vm413, %v2534, 0
      %v2539 = vsel %vm715, %v2531, 0
      %2541 = vmatpush.bf16.msra.mxu0 0
      %2542 = vmatpush.bf16.msra.mxu0 0
      %2543 = vmatpush.bf16.msra.mxu0 0
      %2544 = vmatpush.bf16.msra.mxu0 0
      %2545 = vmatpush.bf16.msra.mxu0 0
      %2546 = vmatpush.bf16.msra.mxu0 0
      %2547 = vmatpush.bf16.msra.mxu0 0
      %2548 = vmatpush.bf16.msra.mxu0 %v2539
      %2549 = vmatmul.bf16.gmra.mxu0 %v1637
      %v2550 = vpop.f32.mrf.mxu0
      %v2551 = vadd.f32 0.0, %v2550
      %v2552 = vpop.f32.mrf.mxu0
      %v2553 = vadd.f32 0.0, %v2552
      %2554 = vmatmul.bf16.gmra.mxu0 %v1640
      %v2555 = vpop.f32.mrf.mxu0
      %v2556 = vadd.f32 0.0, %v2555
      %v2557 = vpop.f32.mrf.mxu0
      %v2558 = vadd.f32 0.0, %v2557
      %2559 = vmatmul.bf16.gmra.mxu0 %v1643
      %v2560 = vpop.f32.mrf.mxu0
      %v2561 = vadd.f32 0.0, %v2560
      %v2562 = vpop.f32.mrf.mxu0
      %v2563 = vadd.f32 0.0, %v2562
      %2564 = vmatmul.bf16.gmra.mxu0 %v1646
      %v2565 = vpop.f32.mrf.mxu0
      %v2566 = vadd.f32 0.0, %v2565
      %v2567 = vpop.f32.mrf.mxu0
      %v2568 = vadd.f32 0.0, %v2567
      %2569 = vmatmul.bf16.gmra.mxu0 %v1649
      %v2570 = vpop.f32.mrf.mxu0
      %v2571 = vadd.f32 0.0, %v2570
      %v2572 = vpop.f32.mrf.mxu0
      %v2573 = vadd.f32 0.0, %v2572
      %2574 = vmatmul.bf16.gmra.mxu0 %v1652
      %v2575 = vpop.f32.mrf.mxu0
      %v2576 = vadd.f32 0.0, %v2575
      %v2577 = vpop.f32.mrf.mxu0
      %v2578 = vadd.f32 0.0, %v2577
      %2579 = vmatmul.bf16.gmra.mxu0 %v1655
      %v2580 = vpop.f32.mrf.mxu0
      %v2581 = vadd.f32 0.0, %v2580
      %v2582 = vpop.f32.mrf.mxu0
      %v2583 = vadd.f32 0.0, %v2582
      %2584 = vmatmul.bf16.gmra.mxu0 %v1658
      %v2585 = vpop.f32.mrf.mxu0
      %v2586 = vadd.f32 0.0, %v2585
      %v2587 = vpop.f32.mrf.mxu0
      %v2588 = vadd.f32 0.0, %v2587
      %2589 = vmatmul.bf16.gmra.mxu0 %v1661
      %v2590 = vpop.f32.mrf.mxu0
      %v2591 = vadd.f32 0.0, %v2590
      %v2592 = vpop.f32.mrf.mxu0
      %v2593 = vadd.f32 0.0, %v2592
      %2594 = vmatmul.bf16.gmra.mxu0 %v1664
      %v2595 = vpop.f32.mrf.mxu0
      %v2596 = vadd.f32 0.0, %v2595
      %v2597 = vpop.f32.mrf.mxu0
      %v2598 = vadd.f32 0.0, %v2597
      %2599 = vmatmul.bf16.gmra.mxu0 %v1667
      %v2600 = vpop.f32.mrf.mxu0
      %v2601 = vadd.f32 0.0, %v2600
      %v2602 = vpop.f32.mrf.mxu0
      %v2603 = vadd.f32 0.0, %v2602
      %2604 = vmatmul.bf16.gmra.mxu0 %v1670
      %v2605 = vpop.f32.mrf.mxu0
      %v2606 = vadd.f32 0.0, %v2605
      %v2607 = vpop.f32.mrf.mxu0
      %v2608 = vadd.f32 0.0, %v2607
      %2609 = vmatmul.bf16.gmra.mxu0 %v1673
      %v2610 = vpop.f32.mrf.mxu0
      %v2611 = vadd.f32 0.0, %v2610
      %v2612 = vpop.f32.mrf.mxu0
      %v2613 = vadd.f32 0.0, %v2612
      %2614 = vmatmul.bf16.gmra.mxu0 %v1676
      %v2615 = vpop.f32.mrf.mxu0
      %v2616 = vadd.f32 0.0, %v2615
      %v2617 = vpop.f32.mrf.mxu0
      %v2618 = vadd.f32 0.0, %v2617
      %2619 = vmatmul.bf16.gmra.mxu0 %v2106
      %v2620 = vpop.f32.mrf.mxu0
      %v2621 = vadd.f32 0.0, %v2620
      %v2622 = vpop.f32.mrf.mxu0
      %v2623 = vadd.f32 0.0, %v2622
      %2624 = vmatmul.bf16.gmra.mxu0 %v2536
      %v2625 = vpop.f32.mrf.mxu0
      %v2626 = vadd.f32 0.0, %v2625
      %v2627 = vpop.f32.mrf.mxu0
      %v2628 = vadd.f32 0.0, %v2627
      %2629 = vdwg.mxu0
      %v2630 = vadd.f32 %v2490, %v2551
      %v2631 = vadd.f32 %v2491, %v2553
      %v2632 = vadd.f32 %v2492, %v2556
      %v2633 = vadd.f32 %v2493, %v2558
      %v2634 = vadd.f32 %v2494, %v2561
      %v2635 = vadd.f32 %v2495, %v2563
      %v2636 = vadd.f32 %v2496, %v2566
      %v2637 = vadd.f32 %v2497, %v2568
      %v2638 = vadd.f32 %v2498, %v2571
      %v2639 = vadd.f32 %v2499, %v2573
      %v2640 = vadd.f32 %v2500, %v2576
      %v2641 = vadd.f32 %v2501, %v2578
      %v2642 = vadd.f32 %v2502, %v2581
      %v2643 = vadd.f32 %v2503, %v2583
      %v2644 = vadd.f32 %v2504, %v2586
      %v2645 = vadd.f32 %v2505, %v2588
      %v2646 = vadd.f32 %v2506, %v2591
      %v2647 = vadd.f32 %v2507, %v2593
      %v2648 = vadd.f32 %v2508, %v2596
      %v2649 = vadd.f32 %v2509, %v2598
      %v2650 = vadd.f32 %v2510, %v2601
      %v2651 = vadd.f32 %v2511, %v2603
      %v2652 = vadd.f32 %v2512, %v2606
      %v2653 = vadd.f32 %v2513, %v2608
      %v2654 = vadd.f32 %v2514, %v2611
      %v2655 = vadd.f32 %v2515, %v2613
      %v2656 = vadd.f32 %v2516, %v2616
      %v2657 = vadd.f32 %v2517, %v2618
      %v2658 = vadd.f32 %v2518, %v2621
      %v2659 = vadd.f32 %v2519, %v2623
      %v2660 = vadd.f32 %v2520, %v2626
      %v2661 = vadd.f32 %v2521, %v2628
      %v2662 = vmax.f32 %v2630, 0.0
      %v2663 = vmax.f32 %v2631, 0.0
      %v2664 = vmax.f32 %v2632, 0.0
      %v2665 = vmax.f32 %v2633, 0.0
      %v2666 = vmax.f32 %v2634, 0.0
      %v2667 = vmax.f32 %v2635, 0.0
      %v2668 = vmax.f32 %v2636, 0.0
      %v2669 = vmax.f32 %v2637, 0.0
      %v2670 = vmax.f32 %v2638, 0.0
      %v2671 = vmax.f32 %v2639, 0.0
      %v2672 = vmax.f32 %v2640, 0.0
      %v2673 = vmax.f32 %v2641, 0.0
      %v2674 = vmax.f32 %v2642, 0.0
      %v2675 = vmax.f32 %v2643, 0.0
      %v2676 = vmax.f32 %v2644, 0.0
      %v2677 = vmax.f32 %v2645, 0.0
      %v2678 = vmax.f32 %v2646, 0.0
      %v2679 = vmax.f32 %v2647, 0.0
      %v2680 = vmax.f32 %v2648, 0.0
      %v2681 = vmax.f32 %v2649, 0.0
      %v2682 = vmax.f32 %v2650, 0.0
      %v2683 = vmax.f32 %v2651, 0.0
      %v2684 = vmax.f32 %v2652, 0.0
      %v2685 = vmax.f32 %v2653, 0.0
      %v2686 = vmax.f32 %v2654, 0.0
      %v2687 = vmax.f32 %v2655, 0.0
      %v2688 = vmax.f32 %v2656, 0.0
      %v2689 = vmax.f32 %v2657, 0.0
      %v2690 = vmax.f32 %v2658, 0.0
      %v2691 = vmax.f32 %v2659, 0.0
      %v2692 = vmax.f32 %v2660, 0.0
      %v2693 = vmax.f32 %v2661, 0.0
      %2726 = vrot.lane.b32.xlu0 %v2662, 2
      %v2727 = vpop.permute.xlu0 %2726
      %2728 = vrot.lane.b32.xlu0 %v2663, 2
      %v2729 = vpop.permute.xlu0 %2728
      %2730 = vrot.lane.b32.xlu0 %v2664, 2
      %v2731 = vpop.permute.xlu0 %2730
      %2732 = vrot.lane.b32.xlu0 %v2665, 2
      %v2733 = vpop.permute.xlu0 %2732
      %2734 = vrot.lane.b32.xlu0 %v2666, 2
      %v2735 = vpop.permute.xlu0 %2734
      %2736 = vrot.lane.b32.xlu0 %v2667, 2
      %v2737 = vpop.permute.xlu0 %2736
      %2738 = vrot.lane.b32.xlu0 %v2668, 2
      %v2739 = vpop.permute.xlu0 %2738
      %2740 = vrot.lane.b32.xlu0 %v2669, 2
      %v2741 = vpop.permute.xlu0 %2740
      %2742 = vrot.lane.b32.xlu0 %v2670, 2
      %v2743 = vpop.permute.xlu0 %2742
      %2744 = vrot.lane.b32.xlu0 %v2671, 2
      %v2745 = vpop.permute.xlu0 %2744
      %2746 = vrot.lane.b32.xlu0 %v2672, 2
      %v2747 = vpop.permute.xlu0 %2746
      %2748 = vrot.lane.b32.xlu0 %v2673, 2
      %v2749 = vpop.permute.xlu0 %2748
      %2750 = vrot.lane.b32.xlu0 %v2674, 2
      %v2751 = vpop.permute.xlu0 %2750
      %2752 = vrot.lane.b32.xlu0 %v2675, 2
      %v2753 = vpop.permute.xlu0 %2752
      %2754 = vrot.lane.b32.xlu0 %v2676, 2
      %v2755 = vpop.permute.xlu0 %2754
      %2756 = vrot.lane.b32.xlu0 %v2677, 2
      %v2757 = vpop.permute.xlu0 %2756
      %2758 = vrot.lane.b32.xlu0 %v2678, 2
      %v2759 = vpop.permute.xlu0 %2758
      %2760 = vrot.lane.b32.xlu0 %v2679, 2
      %v2761 = vpop.permute.xlu0 %2760
      %2762 = vrot.lane.b32.xlu0 %v2680, 2
      %v2763 = vpop.permute.xlu0 %2762
      %2764 = vrot.lane.b32.xlu0 %v2681, 2
      %v2765 = vpop.permute.xlu0 %2764
      %2766 = vrot.lane.b32.xlu0 %v2682, 2
      %v2767 = vpop.permute.xlu0 %2766
      %2768 = vrot.lane.b32.xlu0 %v2683, 2
      %v2769 = vpop.permute.xlu0 %2768
      %2770 = vrot.lane.b32.xlu0 %v2684, 2
      %v2771 = vpop.permute.xlu0 %2770
      %2772 = vrot.lane.b32.xlu0 %v2685, 2
      %v2773 = vpop.permute.xlu0 %2772
      %2774 = vrot.lane.b32.xlu0 %v2686, 2
      %v2775 = vpop.permute.xlu0 %2774
      %2776 = vrot.lane.b32.xlu0 %v2687, 2
      %v2777 = vpop.permute.xlu0 %2776
      %2778 = vrot.lane.b32.xlu0 %v2688, 2
      %v2779 = vpop.permute.xlu0 %2778
      %2780 = vrot.lane.b32.xlu0 %v2689, 2
      %v2781 = vpop.permute.xlu0 %2780
      %2782 = vrot.lane.b32.xlu0 %v2690, 2
      %v2783 = vpop.permute.xlu0 %2782
      %2784 = vrot.lane.b32.xlu0 %v2691, 2
      %v2785 = vpop.permute.xlu0 %2784
      %2786 = vrot.lane.b32.xlu0 %v2692, 2
      %v2787 = vpop.permute.xlu0 %2786
      %2788 = vrot.lane.b32.xlu0 %v2693, 2
      %v2789 = vpop.permute.xlu0 %2788
      %vm2822 = vcmask 130064
      %2823 = vst.msk [vmem:[%s412 + $0x1] sm:$0xff] %vm2822, %v2727
      %2824 = vst.msk [vmem:[%s412 + $0x9] sm:$0xff] %vm2822, %v2729
      %2825 = vst.msk [vmem:[%s412 + $0x19] sm:$0xff] %vm2822, %v2731
      %2826 = vst.msk [vmem:[%s412 + $0x21] sm:$0xff] %vm2822, %v2733
      %2827 = vst.msk [vmem:[%s412 + $0x31] sm:$0xff] %vm2822, %v2735
      %2828 = vst.msk [vmem:[%s412 + $0x39] sm:$0xff] %vm2822, %v2737
      %2829 = vst.msk [vmem:[%s412 + $0x49] sm:$0xff] %vm2822, %v2739
      %2830 = vst.msk [vmem:[%s412 + $0x51] sm:$0xff] %vm2822, %v2741
      %2831 = vst.msk [vmem:[%s412 + $0x61] sm:$0xff] %vm2822, %v2743
      %2832 = vst.msk [vmem:[%s412 + $0x69] sm:$0xff] %vm2822, %v2745
      %2833 = vst.msk [vmem:[%s412 + $0x79] sm:$0xff] %vm2822, %v2747
      %2834 = vst.msk [vmem:[%s412 + $0x81] sm:$0xff] %vm2822, %v2749
      %2835 = vst.msk [vmem:[%s412 + $0x91] sm:$0xff] %vm2822, %v2751
      %2836 = vst.msk [vmem:[%s412 + $0x99] sm:$0xff] %vm2822, %v2753
      %2837 = vst.msk [vmem:[%s412 + $0xa9] sm:$0xff] %vm2822, %v2755
      %2838 = vst.msk [vmem:[%s412 + $0xb1] sm:$0xff] %vm2822, %v2757
      %2839 = vst.msk [vmem:[%s412 + $0xc1] sm:$0xff] %vm2822, %v2759
      %2840 = vst.msk [vmem:[%s412 + $0xc9] sm:$0xff] %vm2822, %v2761
      %2841 = vst.msk [vmem:[%s412 + $0xd9] sm:$0xff] %vm2822, %v2763
      %2842 = vst.msk [vmem:[%s412 + $0xe1] sm:$0xff] %vm2822, %v2765
      %2843 = vst.msk [vmem:[%s412 + $0xf1] sm:$0xff] %vm2822, %v2767
      %2844 = vst.msk [vmem:[%s412 + $0xf9] sm:$0xff] %vm2822, %v2769
      %2845 = vst.msk [vmem:[%s412 + $0x109] sm:$0xff] %vm2822, %v2771
      %2846 = vst.msk [vmem:[%s412 + $0x111] sm:$0xff] %vm2822, %v2773
      %2847 = vst.msk [vmem:[%s412 + $0x121] sm:$0xff] %vm2822, %v2775
      %2848 = vst.msk [vmem:[%s412 + $0x129] sm:$0xff] %vm2822, %v2777
      %2849 = vst.msk [vmem:[%s412 + $0x139] sm:$0xff] %vm2822, %v2779
      %2850 = vst.msk [vmem:[%s412 + $0x141] sm:$0xff] %vm2822, %v2781
      %2851 = vst.msk [vmem:[%s412 + $0x151] sm:$0xff] %vm2822, %v2783
      %2852 = vst.msk [vmem:[%s412 + $0x159] sm:$0xff] %vm2822, %v2785
      %2853 = vst.msk [vmem:[%s412 + $0x169] sm:$0xff] %vm2822, %v2787
      %2854 = vst.msk [vmem:[%s412 + $0x171] sm:$0xff] %vm2822, %v2789
      %v2855 = vld [vmem:[#allocation2] sm:$0xff]
      %v2856 = vld [vmem:[#allocation2 + $0x8] sm:$0xff]
      %v2857 = vld [vmem:[#allocation2 + $0x10] sm:$0x3]
      %v2858 = vld [vmem:[#allocation2 + $0x18] sm:$0xff]
      %v2859 = vld [vmem:[#allocation2 + $0x20] sm:$0xff]
      %v2860 = vld [vmem:[#allocation2 + $0x28] sm:$0x3]
      %v2861 = vld [vmem:[#allocation2 + $0x30] sm:$0xff]
      %v2862 = vld [vmem:[#allocation2 + $0x38] sm:$0xff]
      %v2863 = vld [vmem:[#allocation2 + $0x40] sm:$0x3]
      %v2864 = vld [vmem:[#allocation2 + $0x48] sm:$0xff]
      %v2865 = vld [vmem:[#allocation2 + $0x50] sm:$0xff]
      %v2866 = vld [vmem:[#allocation2 + $0x58] sm:$0x3]
      %v2867 = vld [vmem:[#allocation2 + $0x60] sm:$0xff]
      %v2868 = vld [vmem:[#allocation2 + $0x68] sm:$0xff]
      %v2869 = vld [vmem:[#allocation2 + $0x70] sm:$0x3]
      %v2870 = vld [vmem:[#allocation2 + $0x78] sm:$0xff]
      %v2871 = vld [vmem:[#allocation2 + $0x80] sm:$0xff]
      %v2872 = vld [vmem:[#allocation2 + $0x88] sm:$0x3]
      %v2873 = vld [vmem:[#allocation2 + $0x90] sm:$0xff]
      %v2874 = vld [vmem:[#allocation2 + $0x98] sm:$0xff]
      %v2875 = vld [vmem:[#allocation2 + $0xa0] sm:$0x3]
      %v2876 = vld [vmem:[#allocation2 + $0xa8] sm:$0xff]
      %v2877 = vld [vmem:[#allocation2 + $0xb0] sm:$0xff]
      %v2878 = vld [vmem:[#allocation2 + $0xb8] sm:$0x3]
      %v2879 = vld [vmem:[#allocation2 + $0xc0] sm:$0xff]
      %v2880 = vld [vmem:[#allocation2 + $0xc8] sm:$0xff]
      %v2881 = vld [vmem:[#allocation2 + $0xd0] sm:$0x3]
      %v2882 = vld [vmem:[#allocation2 + $0xd8] sm:$0xff]
      %v2883 = vld [vmem:[#allocation2 + $0xe0] sm:$0xff]
      %v2884 = vld [vmem:[#allocation2 + $0xe8] sm:$0x3]
      %v2885 = vld [vmem:[#allocation2 + $0xf0] sm:$0xff]
      %v2886 = vld [vmem:[#allocation2 + $0xf8] sm:$0xff]
      %v2887 = vld [vmem:[#allocation2 + $0x100] sm:$0x3]
      %v2888 = vld [vmem:[#allocation2 + $0x108] sm:$0xff]
      %v2889 = vld [vmem:[#allocation2 + $0x110] sm:$0xff]
      %v2890 = vld [vmem:[#allocation2 + $0x118] sm:$0x3]
      %v2891 = vld [vmem:[#allocation2 + $0x120] sm:$0xff]
      %v2892 = vld [vmem:[#allocation2 + $0x128] sm:$0xff]
      %v2893 = vld [vmem:[#allocation2 + $0x130] sm:$0x3]
      %v2894 = vld [vmem:[#allocation2 + $0x138] sm:$0xff]
      %v2895 = vld [vmem:[#allocation2 + $0x140] sm:$0xff]
      %v2896 = vld [vmem:[#allocation2 + $0x148] sm:$0x3]
      %v2897 = vld [vmem:[#allocation2 + $0x150] sm:$0xff]
      %v2898 = vld [vmem:[#allocation2 + $0x158] sm:$0xff]
      %v2899 = vld [vmem:[#allocation2 + $0x160] sm:$0x3]
      %v2900 = vld [vmem:[#allocation2 + $0x168] sm:$0xff]
      %v2901 = vld [vmem:[#allocation2 + $0x170] sm:$0xff]
      %v2902 = vld [vmem:[#allocation2 + $0x178] sm:$0x3]
      %v2903 = vld [vmem:[#allocation2 + $0x180] sm:$0xff]
      %v2904 = vld [vmem:[#allocation2 + $0x188] sm:$0xff]
      %v2905 = vld [vmem:[#allocation2 + $0x190] sm:$0x3]
      %v2906 = vld [vmem:[#allocation2 + $0x198] sm:$0xff]
      %v2907 = vld [vmem:[#allocation2 + $0x1a0] sm:$0xff]
      %v2908 = vld [vmem:[#allocation2 + $0x1a8] sm:$0x3]
      %v2909 = vpack.c.bf16 %v2855, %v2855
      %v2910 = vpack.c.bf16 %v2856, %v2856
      %v2911 = vpack.c.bf16 %v2857, %v2857
      %v2912 = vpack.c.bf16 %v2858, %v2858
      %v2913 = vpack.c.bf16 %v2859, %v2859
      %v2914 = vpack.c.bf16 %v2860, %v2860
      %v2915 = vpack.c.bf16 %v2861, %v2861
      %v2916 = vpack.c.bf16 %v2862, %v2862
      %v2917 = vpack.c.bf16 %v2863, %v2863
      %v2918 = vpack.c.bf16 %v2864, %v2864
      %v2919 = vpack.c.bf16 %v2865, %v2865
      %v2920 = vpack.c.bf16 %v2866, %v2866
      %v2921 = vpack.c.bf16 %v2867, %v2867
      %v2922 = vpack.c.bf16 %v2868, %v2868
      %v2923 = vpack.c.bf16 %v2869, %v2869
      %v2924 = vpack.c.bf16 %v2870, %v2870
      %v2925 = vpack.c.bf16 %v2871, %v2871
      %v2926 = vpack.c.bf16 %v2872, %v2872
      %v2927 = vpack.c.bf16 %v2873, %v2873
      %v2928 = vpack.c.bf16 %v2874, %v2874
      %v2929 = vpack.c.bf16 %v2875, %v2875
      %v2930 = vpack.c.bf16 %v2876, %v2876
      %v2931 = vpack.c.bf16 %v2877, %v2877
      %v2932 = vpack.c.bf16 %v2878, %v2878
      %v2933 = vpack.c.bf16 %v2879, %v2879
      %v2934 = vpack.c.bf16 %v2880, %v2880
      %v2935 = vpack.c.bf16 %v2881, %v2881
      %v2936 = vpack.c.bf16 %v2882, %v2882
      %v2937 = vpack.c.bf16 %v2883, %v2883
      %v2938 = vpack.c.bf16 %v2884, %v2884
      %v2939 = vpack.c.bf16 %v2885, %v2885
      %v2940 = vpack.c.bf16 %v2886, %v2886
      %v2941 = vpack.c.bf16 %v2887, %v2887
      %v2942 = vpack.c.bf16 %v2888, %v2888
      %v2943 = vpack.c.bf16 %v2889, %v2889
      %v2944 = vpack.c.bf16 %v2890, %v2890
      %v2945 = vpack.c.bf16 %v2891, %v2891
      %v2946 = vpack.c.bf16 %v2892, %v2892
      %v2947 = vpack.c.bf16 %v2893, %v2893
      %v2948 = vpack.c.bf16 %v2894, %v2894
      %v2949 = vpack.c.bf16 %v2895, %v2895
      %v2950 = vpack.c.bf16 %v2896, %v2896
      %v2951 = vpack.c.bf16 %v2897, %v2897
      %v2952 = vpack.c.bf16 %v2898, %v2898
      %v2953 = vpack.c.bf16 %v2899, %v2899
      %v2954 = vpack.c.bf16 %v2900, %v2900
      %v2955 = vpack.c.bf16 %v2901, %v2901
      %v2956 = vpack.c.bf16 %v2902, %v2902
      %v2957 = vpack.c.bf16 %v2903, %v2903
      %v2958 = vpack.c.bf16 %v2904, %v2904
      %v2959 = vpack.c.bf16 %v2905, %v2905
      %v2960 = vpack.c.bf16 %v2906, %v2906
      %v2961 = vpack.c.bf16 %v2907, %v2907
      %v2962 = vpack.c.bf16 %v2908, %v2908
      %v2963 = vld [vmem:[%s4] sm:$0xff]
      %v2964 = vld [vmem:[%s4 + $0x8] sm:$0xff]
      %v2965 = vld [vmem:[%s4 + $0x10] sm:$0xff]
      %v2966 = vld [vmem:[%s4 + $0x18] sm:$0xff]
      %v2967 = vld [vmem:[%s4 + $0x20] sm:$0xff]
      %v2968 = vld [vmem:[%s4 + $0x28] sm:$0xff]
      %v2969 = vld [vmem:[%s4 + $0x30] sm:$0xff]
      %v2970 = vld [vmem:[%s4 + $0x38] sm:$0xff]
      %v2971 = vld [vmem:[%s4 + $0x40] sm:$0xff]
      %v2972 = vld [vmem:[%s4 + $0x48] sm:$0xff]
      %v2973 = vld [vmem:[%s4 + $0x50] sm:$0xff]
      %v2974 = vld [vmem:[%s4 + $0x58] sm:$0xff]
      %v2975 = vld [vmem:[%s4 + $0x60] sm:$0xff]
      %v2976 = vld [vmem:[%s4 + $0x68] sm:$0xff]
      %v2977 = vld [vmem:[%s4 + $0x70] sm:$0xff]
      %v2978 = vld [vmem:[%s4 + $0x78] sm:$0xff]
      %v2979 = vld [vmem:[%s4 + $0x80] sm:$0xff]
      %v2980 = vld [vmem:[%s4 + $0x88] sm:$0xff]
      %v2981 = vld [vmem:[%s4 + $0x90] sm:$0xff]
      %v2982 = vld [vmem:[%s4 + $0x98] sm:$0xff]
      %v2983 = vld [vmem:[%s4 + $0xa0] sm:$0xff]
      %v2984 = vld [vmem:[%s4 + $0xa8] sm:$0xff]
      %v2985 = vld [vmem:[%s4 + $0xb0] sm:$0xff]
      %v2986 = vld [vmem:[%s4 + $0xb8] sm:$0xff]
      %v2987 = vld [vmem:[%s4 + $0xc0] sm:$0xff]
      %v2988 = vld [vmem:[%s4 + $0xc8] sm:$0xff]
      %v2989 = vld [vmem:[%s4 + $0xd0] sm:$0xff]
      %v2990 = vld [vmem:[%s4 + $0xd8] sm:$0xff]
      %v2991 = vld [vmem:[%s4 + $0xe0] sm:$0xff]
      %v2992 = vld [vmem:[%s4 + $0xe8] sm:$0xff]
      %v2993 = vld [vmem:[%s4 + $0xf0] sm:$0xff]
      %v2994 = vld [vmem:[%s4 + $0xf8] sm:$0xff]
      %v2995 = vld [vmem:[%s3] sm:$0xf]
      %v2996 = vld [vmem:[%s3 + $0x4] sm:$0xf]
      %v3029 = vunpack.c.l.b16 %v2909
      %v3030 = vunpack.c.l.b16 %v2910
      %v3031 = vunpack.c.l.b16 %v2912
      %v3032 = vunpack.c.l.b16 %v2913
      %v3033 = vunpack.c.l.b16 %v2915
      %v3034 = vunpack.c.l.b16 %v2916
      %v3035 = vunpack.c.l.b16 %v2918
      %v3036 = vunpack.c.l.b16 %v2919
      %v3037 = vunpack.c.l.b16 %v2921
      %v3038 = vunpack.c.l.b16 %v2922
      %v3039 = vunpack.c.l.b16 %v2924
      %v3040 = vunpack.c.l.b16 %v2925
      %v3041 = vunpack.c.l.b16 %v2927
      %v3042 = vunpack.c.l.b16 %v2928
      %v3043 = vunpack.c.l.b16 %v2930
      %v3044 = vunpack.c.l.b16 %v2931
      %v3045 = vunpack.c.l.b16 %v2933
      %v3046 = vunpack.c.l.b16 %v2934
      %v3047 = vunpack.c.l.b16 %v2936
      %v3048 = vunpack.c.l.b16 %v2937
      %v3049 = vunpack.c.l.b16 %v2939
      %v3050 = vunpack.c.l.b16 %v2940
      %v3051 = vunpack.c.l.b16 %v2942
      %v3052 = vunpack.c.l.b16 %v2943
      %v3053 = vunpack.c.l.b16 %v2945
      %v3054 = vunpack.c.l.b16 %v2946
      %v3055 = vunpack.c.l.b16 %v2948
      %v3056 = vunpack.c.l.b16 %v2949
      %v3057 = vunpack.c.l.b16 %v2951
      %v3058 = vunpack.c.l.b16 %v2952
      %v3059 = vunpack.c.l.b16 %v2954
      %v3060 = vunpack.c.l.b16 %v2955
      %v3061 = vpack.c.b16 %v3030, %v3029
      %v3062 = vpack.c.b16 %v3032, %v3031
      %v3063 = vpack.c.b16 %v3034, %v3033
      %v3064 = vpack.c.b16 %v3036, %v3035
      %v3065 = vpack.c.b16 %v3038, %v3037
      %v3066 = vpack.c.b16 %v3040, %v3039
      %v3067 = vpack.c.b16 %v3042, %v3041
      %v3068 = vpack.c.b16 %v3044, %v3043
      %v3069 = vpack.c.b16 %v3046, %v3045
      %v3070 = vpack.c.b16 %v3048, %v3047
      %v3071 = vpack.c.b16 %v3050, %v3049
      %v3072 = vpack.c.b16 %v3052, %v3051
      %v3073 = vpack.c.b16 %v3054, %v3053
      %v3074 = vpack.c.b16 %v3056, %v3055
      %v3075 = vpack.c.b16 %v3058, %v3057
      %v3076 = vpack.c.b16 %v3060, %v3059
      %v3079 = vunpack.c.l.b16 %v2995
      %v3080 = vunpack.c.l.b16 %v2996
      %v3081 = vpack.c.b16 %v3080, %v3079
      %vm3083 = vcmask 130048
      %v3085 = vsel %vm3083, %v3061, 0
      %v3088 = vsel %vm3083, %v3062, 0
      %v3091 = vsel %vm3083, %v3063, 0
      %v3094 = vsel %vm3083, %v3064, 0
      %v3097 = vsel %vm3083, %v3065, 0
      %v3100 = vsel %vm3083, %v3066, 0
      %v3103 = vsel %vm3083, %v3067, 0
      %v3106 = vsel %vm3083, %v3068, 0
      %v3109 = vsel %vm3083, %v3069, 0
      %v3112 = vsel %vm3083, %v3070, 0
      %v3115 = vsel %vm3083, %v3071, 0
      %v3118 = vsel %vm3083, %v3072, 0
      %v3121 = vsel %vm3083, %v3073, 0
      %v3124 = vsel %vm3083, %v3074, 0
      %v3127 = vsel %vm3083, %v3075, 0
      %v3130 = vsel %vm3083, %v3076, 0
      %3132 = vmatpush.bf16.msra.mxu0 0
      %3133 = vmatpush.bf16.msra.mxu0 0
      %3134 = vmatpush.bf16.msra.mxu0 0
      %3135 = vmatpush.bf16.msra.mxu0 0
      %3136 = vmatpush.bf16.msra.mxu0 0
      %3137 = vmatpush.bf16.msra.mxu0 0
      %3138 = vmatpush.bf16.msra.mxu0 0
      %3139 = vmatpush.bf16.msra.mxu0 %v3081
      %3140 = vmatmul.bf16.gmra.mxu0 %v3085
      %v3141 = vpop.f32.mrf.mxu0
      %v3142 = vadd.f32 0.0, %v3141
      %v3143 = vpop.f32.mrf.mxu0
      %v3144 = vadd.f32 0.0, %v3143
      %3145 = vmatmul.bf16.gmra.mxu0 %v3088
      %v3146 = vpop.f32.mrf.mxu0
      %v3147 = vadd.f32 0.0, %v3146
      %v3148 = vpop.f32.mrf.mxu0
      %v3149 = vadd.f32 0.0, %v3148
      %3150 = vmatmul.bf16.gmra.mxu0 %v3091
      %v3151 = vpop.f32.mrf.mxu0
      %v3152 = vadd.f32 0.0, %v3151
      %v3153 = vpop.f32.mrf.mxu0
      %v3154 = vadd.f32 0.0, %v3153
      %3155 = vmatmul.bf16.gmra.mxu0 %v3094
      %v3156 = vpop.f32.mrf.mxu0
      %v3157 = vadd.f32 0.0, %v3156
      %v3158 = vpop.f32.mrf.mxu0
      %v3159 = vadd.f32 0.0, %v3158
      %3160 = vmatmul.bf16.gmra.mxu0 %v3097
      %v3161 = vpop.f32.mrf.mxu0
      %v3162 = vadd.f32 0.0, %v3161
      %v3163 = vpop.f32.mrf.mxu0
      %v3164 = vadd.f32 0.0, %v3163
      %3165 = vmatmul.bf16.gmra.mxu0 %v3100
      %v3166 = vpop.f32.mrf.mxu0
      %v3167 = vadd.f32 0.0, %v3166
      %v3168 = vpop.f32.mrf.mxu0
      %v3169 = vadd.f32 0.0, %v3168
      %3170 = vmatmul.bf16.gmra.mxu0 %v3103
      %v3171 = vpop.f32.mrf.mxu0
      %v3172 = vadd.f32 0.0, %v3171
      %v3173 = vpop.f32.mrf.mxu0
      %v3174 = vadd.f32 0.0, %v3173
      %3175 = vmatmul.bf16.gmra.mxu0 %v3106
      %v3176 = vpop.f32.mrf.mxu0
      %v3177 = vadd.f32 0.0, %v3176
      %v3178 = vpop.f32.mrf.mxu0
      %v3179 = vadd.f32 0.0, %v3178
      %3180 = vmatmul.bf16.gmra.mxu0 %v3109
      %v3181 = vpop.f32.mrf.mxu0
      %v3182 = vadd.f32 0.0, %v3181
      %v3183 = vpop.f32.mrf.mxu0
      %v3184 = vadd.f32 0.0, %v3183
      %3185 = vmatmul.bf16.gmra.mxu0 %v3112
      %v3186 = vpop.f32.mrf.mxu0
      %v3187 = vadd.f32 0.0, %v3186
      %v3188 = vpop.f32.mrf.mxu0
      %v3189 = vadd.f32 0.0, %v3188
      %3190 = vmatmul.bf16.gmra.mxu0 %v3115
      %v3191 = vpop.f32.mrf.mxu0
      %v3192 = vadd.f32 0.0, %v3191
      %v3193 = vpop.f32.mrf.mxu0
      %v3194 = vadd.f32 0.0, %v3193
      %3195 = vmatmul.bf16.gmra.mxu0 %v3118
      %v3196 = vpop.f32.mrf.mxu0
      %v3197 = vadd.f32 0.0, %v3196
      %v3198 = vpop.f32.mrf.mxu0
      %v3199 = vadd.f32 0.0, %v3198
      %3200 = vmatmul.bf16.gmra.mxu0 %v3121
      %v3201 = vpop.f32.mrf.mxu0
      %v3202 = vadd.f32 0.0, %v3201
      %v3203 = vpop.f32.mrf.mxu0
      %v3204 = vadd.f32 0.0, %v3203
      %3205 = vmatmul.bf16.gmra.mxu0 %v3124
      %v3206 = vpop.f32.mrf.mxu0
      %v3207 = vadd.f32 0.0, %v3206
      %v3208 = vpop.f32.mrf.mxu0
      %v3209 = vadd.f32 0.0, %v3208
      %3210 = vmatmul.bf16.gmra.mxu0 %v3127
      %v3211 = vpop.f32.mrf.mxu0
      %v3212 = vadd.f32 0.0, %v3211
      %v3213 = vpop.f32.mrf.mxu0
      %v3214 = vadd.f32 0.0, %v3213
      %3215 = vmatmul.bf16.gmra.mxu0 %v3130
      %v3216 = vpop.f32.mrf.mxu0
      %v3217 = vadd.f32 0.0, %v3216
      %v3218 = vpop.f32.mrf.mxu0
      %v3219 = vadd.f32 0.0, %v3218
      %3220 = vdwg.mxu0
      %v3221 = vadd.f32 %v2963, %v3142
      %v3222 = vadd.f32 %v2964, %v3144
      %v3223 = vadd.f32 %v2965, %v3147
      %v3224 = vadd.f32 %v2966, %v3149
      %v3225 = vadd.f32 %v2967, %v3152
      %v3226 = vadd.f32 %v2968, %v3154
      %v3227 = vadd.f32 %v2969, %v3157
      %v3228 = vadd.f32 %v2970, %v3159
      %v3229 = vadd.f32 %v2971, %v3162
      %v3230 = vadd.f32 %v2972, %v3164
      %v3231 = vadd.f32 %v2973, %v3167
      %v3232 = vadd.f32 %v2974, %v3169
      %v3233 = vadd.f32 %v2975, %v3172
      %v3234 = vadd.f32 %v2976, %v3174
      %v3235 = vadd.f32 %v2977, %v3177
      %v3236 = vadd.f32 %v2978, %v3179
      %v3237 = vadd.f32 %v2979, %v3182
      %v3238 = vadd.f32 %v2980, %v3184
      %v3239 = vadd.f32 %v2981, %v3187
      %v3240 = vadd.f32 %v2982, %v3189
      %v3241 = vadd.f32 %v2983, %v3192
      %v3242 = vadd.f32 %v2984, %v3194
      %v3243 = vadd.f32 %v2985, %v3197
      %v3244 = vadd.f32 %v2986, %v3199
      %v3245 = vadd.f32 %v2987, %v3202
      %v3246 = vadd.f32 %v2988, %v3204
      %v3247 = vadd.f32 %v2989, %v3207
      %v3248 = vadd.f32 %v2990, %v3209
      %v3249 = vadd.f32 %v2991, %v3212
      %v3250 = vadd.f32 %v2992, %v3214
      %v3251 = vadd.f32 %v2993, %v3217
      %v3252 = vadd.f32 %v2994, %v3219
      %v3254 = vshrl.u32 %v2909, 16
      %v3256 = vrot.slane %v3254, 4
      %v3257 = vshll.u32 %v2909, 16
      %v3259 = vrot.slane %v3257, 5
      %v3260 = vor.u32 %v3256, %v3259
      %v3261 = vrot.slane %v3260, 4
      %v3263 = vshll.u32 %v2910, 16
      %v3265 = vrot.slane %v3263, 5
      %v3266 = vsel %vm842, %v3261, %v3265
      %v3267 = vshrl.u32 %v2910, 16
      %v3269 = vrot.slane %v3267, 4
      %v3270 = vor.u32 %v3269, %v3265
      %v3271 = vrot.slane %v3270, 4
      %v3273 = vshll.u32 %v2911, 16
      %v3275 = vrot.slane %v3273, 5
      %v3276 = vsel %vm842, %v3271, %v3275
      %v3278 = vshrl.u32 %v2912, 16
      %v3280 = vrot.slane %v3278, 4
      %v3281 = vshll.u32 %v2912, 16
      %v3283 = vrot.slane %v3281, 5
      %v3284 = vor.u32 %v3280, %v3283
      %v3285 = vrot.slane %v3284, 4
      %v3287 = vshll.u32 %v2913, 16
      %v3289 = vrot.slane %v3287, 5
      %v3290 = vsel %vm842, %v3285, %v3289
      %v3291 = vshrl.u32 %v2913, 16
      %v3293 = vrot.slane %v3291, 4
      %v3294 = vor.u32 %v3293, %v3289
      %v3295 = vrot.slane %v3294, 4
      %v3297 = vshll.u32 %v2914, 16
      %v3299 = vrot.slane %v3297, 5
      %v3300 = vsel %vm842, %v3295, %v3299
      %v3302 = vshrl.u32 %v2915, 16
      %v3304 = vrot.slane %v3302, 4
      %v3305 = vshll.u32 %v2915, 16
      %v3307 = vrot.slane %v3305, 5
      %v3308 = vor.u32 %v3304, %v3307
      %v3309 = vrot.slane %v3308, 4
      %v3311 = vshll.u32 %v2916, 16
      %v3313 = vrot.slane %v3311, 5
      %v3314 = vsel %vm842, %v3309, %v3313
      %v3315 = vshrl.u32 %v2916, 16
      %v3317 = vrot.slane %v3315, 4
      %v3318 = vor.u32 %v3317, %v3313
      %v3319 = vrot.slane %v3318, 4
      %v3321 = vshll.u32 %v2917, 16
      %v3323 = vrot.slane %v3321, 5
      %v3324 = vsel %vm842, %v3319, %v3323
      %v3326 = vshrl.u32 %v2918, 16
      %v3328 = vrot.slane %v3326, 4
      %v3329 = vshll.u32 %v2918, 16
      %v3331 = vrot.slane %v3329, 5
      %v3332 = vor.u32 %v3328, %v3331
      %v3333 = vrot.slane %v3332, 4
      %v3335 = vshll.u32 %v2919, 16
      %v3337 = vrot.slane %v3335, 5
      %v3338 = vsel %vm842, %v3333, %v3337
      %v3339 = vshrl.u32 %v2919, 16
      %v3341 = vrot.slane %v3339, 4
      %v3342 = vor.u32 %v3341, %v3337
      %v3343 = vrot.slane %v3342, 4
      %v3345 = vshll.u32 %v2920, 16
      %v3347 = vrot.slane %v3345, 5
      %v3348 = vsel %vm842, %v3343, %v3347
      %v3350 = vshrl.u32 %v2921, 16
      %v3352 = vrot.slane %v3350, 4
      %v3353 = vshll.u32 %v2921, 16
      %v3355 = vrot.slane %v3353, 5
      %v3356 = vor.u32 %v3352, %v3355
      %v3357 = vrot.slane %v3356, 4
      %v3359 = vshll.u32 %v2922, 16
      %v3361 = vrot.slane %v3359, 5
      %v3362 = vsel %vm842, %v3357, %v3361
      %v3363 = vshrl.u32 %v2922, 16
      %v3365 = vrot.slane %v3363, 4
      %v3366 = vor.u32 %v3365, %v3361
      %v3367 = vrot.slane %v3366, 4
      %v3369 = vshll.u32 %v2923, 16
      %v3371 = vrot.slane %v3369, 5
      %v3372 = vsel %vm842, %v3367, %v3371
      %v3374 = vshrl.u32 %v2924, 16
      %v3376 = vrot.slane %v3374, 4
      %v3377 = vshll.u32 %v2924, 16
      %v3379 = vrot.slane %v3377, 5
      %v3380 = vor.u32 %v3376, %v3379
      %v3381 = vrot.slane %v3380, 4
      %v3383 = vshll.u32 %v2925, 16
      %v3385 = vrot.slane %v3383, 5
      %v3386 = vsel %vm842, %v3381, %v3385
      %v3387 = vshrl.u32 %v2925, 16
      %v3389 = vrot.slane %v3387, 4
      %v3390 = vor.u32 %v3389, %v3385
      %v3391 = vrot.slane %v3390, 4
      %v3393 = vshll.u32 %v2926, 16
      %v3395 = vrot.slane %v3393, 5
      %v3396 = vsel %vm842, %v3391, %v3395
      %v3398 = vshrl.u32 %v2927, 16
      %v3400 = vrot.slane %v3398, 4
      %v3401 = vshll.u32 %v2927, 16
      %v3403 = vrot.slane %v3401, 5
      %v3404 = vor.u32 %v3400, %v3403
      %v3405 = vrot.slane %v3404, 4
      %v3407 = vshll.u32 %v2928, 16
      %v3409 = vrot.slane %v3407, 5
      %v3410 = vsel %vm842, %v3405, %v3409
      %v3411 = vshrl.u32 %v2928, 16
      %v3413 = vrot.slane %v3411, 4
      %v3414 = vor.u32 %v3413, %v3409
      %v3415 = vrot.slane %v3414, 4
      %v3417 = vshll.u32 %v2929, 16
      %v3419 = vrot.slane %v3417, 5
      %v3420 = vsel %vm842, %v3415, %v3419
      %v3422 = vshrl.u32 %v2930, 16
      %v3424 = vrot.slane %v3422, 4
      %v3425 = vshll.u32 %v2930, 16
      %v3427 = vrot.slane %v3425, 5
      %v3428 = vor.u32 %v3424, %v3427
      %v3429 = vrot.slane %v3428, 4
      %v3431 = vshll.u32 %v2931, 16
      %v3433 = vrot.slane %v3431, 5
      %v3434 = vsel %vm842, %v3429, %v3433
      %v3435 = vshrl.u32 %v2931, 16
      %v3437 = vrot.slane %v3435, 4
      %v3438 = vor.u32 %v3437, %v3433
      %v3439 = vrot.slane %v3438, 4
      %v3441 = vshll.u32 %v2932, 16
      %v3443 = vrot.slane %v3441, 5
      %v3444 = vsel %vm842, %v3439, %v3443
      %v3446 = vshrl.u32 %v2933, 16
      %v3448 = vrot.slane %v3446, 4
      %v3449 = vshll.u32 %v2933, 16
      %v3451 = vrot.slane %v3449, 5
      %v3452 = vor.u32 %v3448, %v3451
      %v3453 = vrot.slane %v3452, 4
      %v3455 = vshll.u32 %v2934, 16
      %v3457 = vrot.slane %v3455, 5
      %v3458 = vsel %vm842, %v3453, %v3457
      %v3459 = vshrl.u32 %v2934, 16
      %v3461 = vrot.slane %v3459, 4
      %v3462 = vor.u32 %v3461, %v3457
      %v3463 = vrot.slane %v3462, 4
      %v3465 = vshll.u32 %v2935, 16
      %v3467 = vrot.slane %v3465, 5
      %v3468 = vsel %vm842, %v3463, %v3467
      %v3470 = vshrl.u32 %v2936, 16
      %v3472 = vrot.slane %v3470, 4
      %v3473 = vshll.u32 %v2936, 16
      %v3475 = vrot.slane %v3473, 5
      %v3476 = vor.u32 %v3472, %v3475
      %v3477 = vrot.slane %v3476, 4
      %v3479 = vshll.u32 %v2937, 16
      %v3481 = vrot.slane %v3479, 5
      %v3482 = vsel %vm842, %v3477, %v3481
      %v3483 = vshrl.u32 %v2937, 16
      %v3485 = vrot.slane %v3483, 4
      %v3486 = vor.u32 %v3485, %v3481
      %v3487 = vrot.slane %v3486, 4
      %v3489 = vshll.u32 %v2938, 16
      %v3491 = vrot.slane %v3489, 5
      %v3492 = vsel %vm842, %v3487, %v3491
      %v3494 = vshrl.u32 %v2939, 16
      %v3496 = vrot.slane %v3494, 4
      %v3497 = vshll.u32 %v2939, 16
      %v3499 = vrot.slane %v3497, 5
      %v3500 = vor.u32 %v3496, %v3499
      %v3501 = vrot.slane %v3500, 4
      %v3503 = vshll.u32 %v2940, 16
      %v3505 = vrot.slane %v3503, 5
      %v3506 = vsel %vm842, %v3501, %v3505
      %v3507 = vshrl.u32 %v2940, 16
      %v3509 = vrot.slane %v3507, 4
      %v3510 = vor.u32 %v3509, %v3505
      %v3511 = vrot.slane %v3510, 4
      %v3513 = vshll.u32 %v2941, 16
      %v3515 = vrot.slane %v3513, 5
      %v3516 = vsel %vm842, %v3511, %v3515
      %v3518 = vshrl.u32 %v2942, 16
      %v3520 = vrot.slane %v3518, 4
      %v3521 = vshll.u32 %v2942, 16
      %v3523 = vrot.slane %v3521, 5
      %v3524 = vor.u32 %v3520, %v3523
      %v3525 = vrot.slane %v3524, 4
      %v3527 = vshll.u32 %v2943, 16
      %v3529 = vrot.slane %v3527, 5
      %v3530 = vsel %vm842, %v3525, %v3529
      %v3531 = vshrl.u32 %v2943, 16
      %v3533 = vrot.slane %v3531, 4
      %v3534 = vor.u32 %v3533, %v3529
      %v3535 = vrot.slane %v3534, 4
      %v3537 = vshll.u32 %v2944, 16
      %v3539 = vrot.slane %v3537, 5
      %v3540 = vsel %vm842, %v3535, %v3539
      %v3542 = vshrl.u32 %v2945, 16
      %v3544 = vrot.slane %v3542, 4
      %v3545 = vshll.u32 %v2945, 16
      %v3547 = vrot.slane %v3545, 5
      %v3548 = vor.u32 %v3544, %v3547
      %v3549 = vrot.slane %v3548, 4
      %v3551 = vshll.u32 %v2946, 16
      %v3553 = vrot.slane %v3551, 5
      %v3554 = vsel %vm842, %v3549, %v3553
      %v3555 = vshrl.u32 %v2946, 16
      %v3557 = vrot.slane %v3555, 4
      %v3558 = vor.u32 %v3557, %v3553
      %v3559 = vrot.slane %v3558, 4
      %v3561 = vshll.u32 %v2947, 16
      %v3563 = vrot.slane %v3561, 5
      %v3564 = vsel %vm842, %v3559, %v3563
      %v3566 = vshrl.u32 %v2948, 16
      %v3568 = vrot.slane %v3566, 4
      %v3569 = vshll.u32 %v2948, 16
      %v3571 = vrot.slane %v3569, 5
      %v3572 = vor.u32 %v3568, %v3571
      %v3573 = vrot.slane %v3572, 4
      %v3575 = vshll.u32 %v2949, 16
      %v3577 = vrot.slane %v3575, 5
      %v3578 = vsel %vm842, %v3573, %v3577
      %v3579 = vshrl.u32 %v2949, 16
      %v3581 = vrot.slane %v3579, 4
      %v3582 = vor.u32 %v3581, %v3577
      %v3583 = vrot.slane %v3582, 4
      %v3585 = vshll.u32 %v2950, 16
      %v3587 = vrot.slane %v3585, 5
      %v3588 = vsel %vm842, %v3583, %v3587
      %v3590 = vshrl.u32 %v2951, 16
      %v3592 = vrot.slane %v3590, 4
      %v3593 = vshll.u32 %v2951, 16
      %v3595 = vrot.slane %v3593, 5
      %v3596 = vor.u32 %v3592, %v3595
      %v3597 = vrot.slane %v3596, 4
      %v3599 = vshll.u32 %v2952, 16
      %v3601 = vrot.slane %v3599, 5
      %v3602 = vsel %vm842, %v3597, %v3601
      %v3603 = vshrl.u32 %v2952, 16
      %v3605 = vrot.slane %v3603, 4
      %v3606 = vor.u32 %v3605, %v3601
      %v3607 = vrot.slane %v3606, 4
      %v3609 = vshll.u32 %v2953, 16
      %v3611 = vrot.slane %v3609, 5
      %v3612 = vsel %vm842, %v3607, %v3611
      %v3614 = vshrl.u32 %v2954, 16
      %v3616 = vrot.slane %v3614, 4
      %v3617 = vshll.u32 %v2954, 16
      %v3619 = vrot.slane %v3617, 5
      %v3620 = vor.u32 %v3616, %v3619
      %v3621 = vrot.slane %v3620, 4
      %v3623 = vshll.u32 %v2955, 16
      %v3625 = vrot.slane %v3623, 5
      %v3626 = vsel %vm842, %v3621, %v3625
      %v3627 = vshrl.u32 %v2955, 16
      %v3629 = vrot.slane %v3627, 4
      %v3630 = vor.u32 %v3629, %v3625
      %v3631 = vrot.slane %v3630, 4
      %v3633 = vshll.u32 %v2956, 16
      %v3635 = vrot.slane %v3633, 5
      %v3636 = vsel %vm842, %v3631, %v3635
      %s3637 = scalar_lea.vmem %s3, 8
      %v3638 = vld [vmem:[%s3637] sm:$0xf]
      %v3639 = vld [vmem:[%s3637 + $0x4] sm:$0xf]
      %v3640 = vunpack.c.l.b16 %v3266
      %v3641 = vunpack.c.l.b16 %v3276
      %v3642 = vunpack.c.l.b16 %v3290
      %v3643 = vunpack.c.l.b16 %v3300
      %v3644 = vunpack.c.l.b16 %v3314
      %v3645 = vunpack.c.l.b16 %v3324
      %v3646 = vunpack.c.l.b16 %v3338
      %v3647 = vunpack.c.l.b16 %v3348
      %v3648 = vunpack.c.l.b16 %v3362
      %v3649 = vunpack.c.l.b16 %v3372
      %v3650 = vunpack.c.l.b16 %v3386
      %v3651 = vunpack.c.l.b16 %v3396
      %v3652 = vunpack.c.l.b16 %v3410
      %v3653 = vunpack.c.l.b16 %v3420
      %v3654 = vunpack.c.l.b16 %v3434
      %v3655 = vunpack.c.l.b16 %v3444
      %v3656 = vunpack.c.l.b16 %v3458
      %v3657 = vunpack.c.l.b16 %v3468
      %v3658 = vunpack.c.l.b16 %v3482
      %v3659 = vunpack.c.l.b16 %v3492
      %v3660 = vunpack.c.l.b16 %v3506
      %v3661 = vunpack.c.l.b16 %v3516
      %v3662 = vunpack.c.l.b16 %v3530
      %v3663 = vunpack.c.l.b16 %v3540
      %v3664 = vunpack.c.l.b16 %v3554
      %v3665 = vunpack.c.l.b16 %v3564
      %v3666 = vunpack.c.l.b16 %v3578
      %v3667 = vunpack.c.l.b16 %v3588
      %v3668 = vunpack.c.l.b16 %v3602
      %v3669 = vunpack.c.l.b16 %v3612
      %v3670 = vunpack.c.l.b16 %v3626
      %v3671 = vunpack.c.l.b16 %v3636
      %v3672 = vpack.c.b16 %v3641, %v3640
      %v3673 = vpack.c.b16 %v3643, %v3642
      %v3674 = vpack.c.b16 %v3645, %v3644
      %v3675 = vpack.c.b16 %v3647, %v3646
      %v3676 = vpack.c.b16 %v3649, %v3648
      %v3677 = vpack.c.b16 %v3651, %v3650
      %v3678 = vpack.c.b16 %v3653, %v3652
      %v3679 = vpack.c.b16 %v3655, %v3654
      %v3680 = vpack.c.b16 %v3657, %v3656
      %v3681 = vpack.c.b16 %v3659, %v3658
      %v3682 = vpack.c.b16 %v3661, %v3660
      %v3683 = vpack.c.b16 %v3663, %v3662
      %v3684 = vpack.c.b16 %v3665, %v3664
      %v3685 = vpack.c.b16 %v3667, %v3666
      %v3686 = vpack.c.b16 %v3669, %v3668
      %v3687 = vpack.c.b16 %v3671, %v3670
      %v3690 = vunpack.c.l.b16 %v3638
      %v3691 = vunpack.c.l.b16 %v3639
      %v3692 = vpack.c.b16 %v3691, %v3690
      %v3695 = vsel %vm3083, %v3672, 0
      %v3698 = vsel %vm3083, %v3673, 0
      %v3701 = vsel %vm3083, %v3674, 0
      %v3704 = vsel %vm3083, %v3675, 0
      %v3707 = vsel %vm3083, %v3676, 0
      %v3710 = vsel %vm3083, %v3677, 0
      %v3713 = vsel %vm3083, %v3678, 0
      %v3716 = vsel %vm3083, %v3679, 0
      %v3719 = vsel %vm3083, %v3680, 0
      %v3722 = vsel %vm3083, %v3681, 0
      %v3725 = vsel %vm3083, %v3682, 0
      %v3728 = vsel %vm3083, %v3683, 0
      %v3731 = vsel %vm3083, %v3684, 0
      %v3734 = vsel %vm3083, %v3685, 0
      %v3737 = vsel %vm3083, %v3686, 0
      %v3740 = vsel %vm3083, %v3687, 0
      %3742 = vmatpush.bf16.msra.mxu0 0
      %3743 = vmatpush.bf16.msra.mxu0 0
      %3744 = vmatpush.bf16.msra.mxu0 0
      %3745 = vmatpush.bf16.msra.mxu0 0
      %3746 = vmatpush.bf16.msra.mxu0 0
      %3747 = vmatpush.bf16.msra.mxu0 0
      %3748 = vmatpush.bf16.msra.mxu0 0
      %3749 = vmatpush.bf16.msra.mxu0 %v3692
      %3750 = vmatmul.bf16.gmra.mxu0 %v3695
      %v3751 = vpop.f32.mrf.mxu0
      %v3752 = vadd.f32 0.0, %v3751
      %v3753 = vpop.f32.mrf.mxu0
      %v3754 = vadd.f32 0.0, %v3753
      %3755 = vmatmul.bf16.gmra.mxu0 %v3698
      %v3756 = vpop.f32.mrf.mxu0
      %v3757 = vadd.f32 0.0, %v3756
      %v3758 = vpop.f32.mrf.mxu0
      %v3759 = vadd.f32 0.0, %v3758
      %3760 = vmatmul.bf16.gmra.mxu0 %v3701
      %v3761 = vpop.f32.mrf.mxu0
      %v3762 = vadd.f32 0.0, %v3761
      %v3763 = vpop.f32.mrf.mxu0
      %v3764 = vadd.f32 0.0, %v3763
      %3765 = vmatmul.bf16.gmra.mxu0 %v3704
      %v3766 = vpop.f32.mrf.mxu0
      %v3767 = vadd.f32 0.0, %v3766
      %v3768 = vpop.f32.mrf.mxu0
      %v3769 = vadd.f32 0.0, %v3768
      %3770 = vmatmul.bf16.gmra.mxu0 %v3707
      %v3771 = vpop.f32.mrf.mxu0
      %v3772 = vadd.f32 0.0, %v3771
      %v3773 = vpop.f32.mrf.mxu0
      %v3774 = vadd.f32 0.0, %v3773
      %3775 = vmatmul.bf16.gmra.mxu0 %v3710
      %v3776 = vpop.f32.mrf.mxu0
      %v3777 = vadd.f32 0.0, %v3776
      %v3778 = vpop.f32.mrf.mxu0
      %v3779 = vadd.f32 0.0, %v3778
      %3780 = vmatmul.bf16.gmra.mxu0 %v3713
      %v3781 = vpop.f32.mrf.mxu0
      %v3782 = vadd.f32 0.0, %v3781
      %v3783 = vpop.f32.mrf.mxu0
      %v3784 = vadd.f32 0.0, %v3783
      %3785 = vmatmul.bf16.gmra.mxu0 %v3716
      %v3786 = vpop.f32.mrf.mxu0
      %v3787 = vadd.f32 0.0, %v3786
      %v3788 = vpop.f32.mrf.mxu0
      %v3789 = vadd.f32 0.0, %v3788
      %3790 = vmatmul.bf16.gmra.mxu0 %v3719
      %v3791 = vpop.f32.mrf.mxu0
      %v3792 = vadd.f32 0.0, %v3791
      %v3793 = vpop.f32.mrf.mxu0
      %v3794 = vadd.f32 0.0, %v3793
      %3795 = vmatmul.bf16.gmra.mxu0 %v3722
      %v3796 = vpop.f32.mrf.mxu0
      %v3797 = vadd.f32 0.0, %v3796
      %v3798 = vpop.f32.mrf.mxu0
      %v3799 = vadd.f32 0.0, %v3798
      %3800 = vmatmul.bf16.gmra.mxu0 %v3725
      %v3801 = vpop.f32.mrf.mxu0
      %v3802 = vadd.f32 0.0, %v3801
      %v3803 = vpop.f32.mrf.mxu0
      %v3804 = vadd.f32 0.0, %v3803
      %3805 = vmatmul.bf16.gmra.mxu0 %v3728
      %v3806 = vpop.f32.mrf.mxu0
      %v3807 = vadd.f32 0.0, %v3806
      %v3808 = vpop.f32.mrf.mxu0
      %v3809 = vadd.f32 0.0, %v3808
      %3810 = vmatmul.bf16.gmra.mxu0 %v3731
      %v3811 = vpop.f32.mrf.mxu0
      %v3812 = vadd.f32 0.0, %v3811
      %v3813 = vpop.f32.mrf.mxu0
      %v3814 = vadd.f32 0.0, %v3813
      %3815 = vmatmul.bf16.gmra.mxu0 %v3734
      %v3816 = vpop.f32.mrf.mxu0
      %v3817 = vadd.f32 0.0, %v3816
      %v3818 = vpop.f32.mrf.mxu0
      %v3819 = vadd.f32 0.0, %v3818
      %3820 = vmatmul.bf16.gmra.mxu0 %v3737
      %v3821 = vpop.f32.mrf.mxu0
      %v3822 = vadd.f32 0.0, %v3821
      %v3823 = vpop.f32.mrf.mxu0
      %v3824 = vadd.f32 0.0, %v3823
      %3825 = vmatmul.bf16.gmra.mxu0 %v3740
      %v3826 = vpop.f32.mrf.mxu0
      %v3827 = vadd.f32 0.0, %v3826
      %v3828 = vpop.f32.mrf.mxu0
      %v3829 = vadd.f32 0.0, %v3828
      %3830 = vdwg.mxu0
      %v3831 = vadd.f32 %v3221, %v3752
      %v3832 = vadd.f32 %v3222, %v3754
      %v3833 = vadd.f32 %v3223, %v3757
      %v3834 = vadd.f32 %v3224, %v3759
      %v3835 = vadd.f32 %v3225, %v3762
      %v3836 = vadd.f32 %v3226, %v3764
      %v3837 = vadd.f32 %v3227, %v3767
      %v3838 = vadd.f32 %v3228, %v3769
      %v3839 = vadd.f32 %v3229, %v3772
      %v3840 = vadd.f32 %v3230, %v3774
      %v3841 = vadd.f32 %v3231, %v3777
      %v3842 = vadd.f32 %v3232, %v3779
      %v3843 = vadd.f32 %v3233, %v3782
      %v3844 = vadd.f32 %v3234, %v3784
      %v3845 = vadd.f32 %v3235, %v3787
      %v3846 = vadd.f32 %v3236, %v3789
      %v3847 = vadd.f32 %v3237, %v3792
      %v3848 = vadd.f32 %v3238, %v3794
      %v3849 = vadd.f32 %v3239, %v3797
      %v3850 = vadd.f32 %v3240, %v3799
      %v3851 = vadd.f32 %v3241, %v3802
      %v3852 = vadd.f32 %v3242, %v3804
      %v3853 = vadd.f32 %v3243, %v3807
      %v3854 = vadd.f32 %v3244, %v3809
      %v3855 = vadd.f32 %v3245, %v3812
      %v3856 = vadd.f32 %v3246, %v3814
      %v3857 = vadd.f32 %v3247, %v3817
      %v3858 = vadd.f32 %v3248, %v3819
      %v3859 = vadd.f32 %v3249, %v3822
      %v3860 = vadd.f32 %v3250, %v3824
      %v3861 = vadd.f32 %v3251, %v3827
      %v3862 = vadd.f32 %v3252, %v3829
      %v3879 = vrot.slane %v2909, 5
      %v3880 = vrot.slane %v3879, 4
      %v3881 = vrot.slane %v2910, 5
      %v3882 = vsel %vm1467, %v3880, %v3881
      %v3883 = vrot.slane %v3881, 4
      %v3884 = vrot.slane %v2911, 5
      %v3885 = vsel %vm1467, %v3883, %v3884
      %v3886 = vrot.slane %v2912, 5
      %v3887 = vrot.slane %v3886, 4
      %v3888 = vrot.slane %v2913, 5
      %v3889 = vsel %vm1467, %v3887, %v3888
      %v3890 = vrot.slane %v3888, 4
      %v3891 = vrot.slane %v2914, 5
      %v3892 = vsel %vm1467, %v3890, %v3891
      %v3893 = vrot.slane %v2915, 5
      %v3894 = vrot.slane %v3893, 4
      %v3895 = vrot.slane %v2916, 5
      %v3896 = vsel %vm1467, %v3894, %v3895
      %v3897 = vrot.slane %v3895, 4
      %v3898 = vrot.slane %v2917, 5
      %v3899 = vsel %vm1467, %v3897, %v3898
      %v3900 = vrot.slane %v2918, 5
      %v3901 = vrot.slane %v3900, 4
      %v3902 = vrot.slane %v2919, 5
      %v3903 = vsel %vm1467, %v3901, %v3902
      %v3904 = vrot.slane %v3902, 4
      %v3905 = vrot.slane %v2920, 5
      %v3906 = vsel %vm1467, %v3904, %v3905
      %v3907 = vrot.slane %v2921, 5
      %v3908 = vrot.slane %v3907, 4
      %v3909 = vrot.slane %v2922, 5
      %v3910 = vsel %vm1467, %v3908, %v3909
      %v3911 = vrot.slane %v3909, 4
      %v3912 = vrot.slane %v2923, 5
      %v3913 = vsel %vm1467, %v3911, %v3912
      %v3914 = vrot.slane %v2924, 5
      %v3915 = vrot.slane %v3914, 4
      %v3916 = vrot.slane %v2925, 5
      %v3917 = vsel %vm1467, %v3915, %v3916
      %v3918 = vrot.slane %v3916, 4
      %v3919 = vrot.slane %v2926, 5
      %v3920 = vsel %vm1467, %v3918, %v3919
      %v3921 = vrot.slane %v2927, 5
      %v3922 = vrot.slane %v3921, 4
      %v3923 = vrot.slane %v2928, 5
      %v3924 = vsel %vm1467, %v3922, %v3923
      %v3925 = vrot.slane %v3923, 4
      %v3926 = vrot.slane %v2929, 5
      %v3927 = vsel %vm1467, %v3925, %v3926
      %v3928 = vrot.slane %v2930, 5
      %v3929 = vrot.slane %v3928, 4
      %v3930 = vrot.slane %v2931, 5
      %v3931 = vsel %vm1467, %v3929, %v3930
      %v3932 = vrot.slane %v3930, 4
      %v3933 = vrot.slane %v2932, 5
      %v3934 = vsel %vm1467, %v3932, %v3933
      %v3935 = vrot.slane %v2933, 5
      %v3936 = vrot.slane %v3935, 4
      %v3937 = vrot.slane %v2934, 5
      %v3938 = vsel %vm1467, %v3936, %v3937
      %v3939 = vrot.slane %v3937, 4
      %v3940 = vrot.slane %v2935, 5
      %v3941 = vsel %vm1467, %v3939, %v3940
      %v3942 = vrot.slane %v2936, 5
      %v3943 = vrot.slane %v3942, 4
      %v3944 = vrot.slane %v2937, 5
      %v3945 = vsel %vm1467, %v3943, %v3944
      %v3946 = vrot.slane %v3944, 4
      %v3947 = vrot.slane %v2938, 5
      %v3948 = vsel %vm1467, %v3946, %v3947
      %v3949 = vrot.slane %v2939, 5
      %v3950 = vrot.slane %v3949, 4
      %v3951 = vrot.slane %v2940, 5
      %v3952 = vsel %vm1467, %v3950, %v3951
      %v3953 = vrot.slane %v3951, 4
      %v3954 = vrot.slane %v2941, 5
      %v3955 = vsel %vm1467, %v3953, %v3954
      %v3956 = vrot.slane %v2942, 5
      %v3957 = vrot.slane %v3956, 4
      %v3958 = vrot.slane %v2943, 5
      %v3959 = vsel %vm1467, %v3957, %v3958
      %v3960 = vrot.slane %v3958, 4
      %v3961 = vrot.slane %v2944, 5
      %v3962 = vsel %vm1467, %v3960, %v3961
      %v3963 = vrot.slane %v2945, 5
      %v3964 = vrot.slane %v3963, 4
      %v3965 = vrot.slane %v2946, 5
      %v3966 = vsel %vm1467, %v3964, %v3965
      %v3967 = vrot.slane %v3965, 4
      %v3968 = vrot.slane %v2947, 5
      %v3969 = vsel %vm1467, %v3967, %v3968
      %v3970 = vrot.slane %v2948, 5
      %v3971 = vrot.slane %v3970, 4
      %v3972 = vrot.slane %v2949, 5
      %v3973 = vsel %vm1467, %v3971, %v3972
      %v3974 = vrot.slane %v3972, 4
      %v3975 = vrot.slane %v2950, 5
      %v3976 = vsel %vm1467, %v3974, %v3975
      %v3977 = vrot.slane %v2951, 5
      %v3978 = vrot.slane %v3977, 4
      %v3979 = vrot.slane %v2952, 5
      %v3980 = vsel %vm1467, %v3978, %v3979
      %v3981 = vrot.slane %v3979, 4
      %v3982 = vrot.slane %v2953, 5
      %v3983 = vsel %vm1467, %v3981, %v3982
      %v3984 = vrot.slane %v2954, 5
      %v3985 = vrot.slane %v3984, 4
      %v3986 = vrot.slane %v2955, 5
      %v3987 = vsel %vm1467, %v3985, %v3986
      %v3988 = vrot.slane %v3986, 4
      %v3989 = vrot.slane %v2956, 5
      %v3990 = vsel %vm1467, %v3988, %v3989
      %s3991 = scalar_lea.vmem %s3, 16
      %v3992 = vld [vmem:[%s3991] sm:$0xf]
      %v3993 = vld [vmem:[%s3991 + $0x4] sm:$0xf]
      %v3994 = vunpack.c.l.b16 %v3882
      %v3995 = vunpack.c.l.b16 %v3885
      %v3996 = vunpack.c.l.b16 %v3889
      %v3997 = vunpack.c.l.b16 %v3892
      %v3998 = vunpack.c.l.b16 %v3896
      %v3999 = vunpack.c.l.b16 %v3899
      %v4000 = vunpack.c.l.b16 %v3903
      %v4001 = vunpack.c.l.b16 %v3906
      %v4002 = vunpack.c.l.b16 %v3910
      %v4003 = vunpack.c.l.b16 %v3913
      %v4004 = vunpack.c.l.b16 %v3917
      %v4005 = vunpack.c.l.b16 %v3920
      %v4006 = vunpack.c.l.b16 %v3924
      %v4007 = vunpack.c.l.b16 %v3927
      %v4008 = vunpack.c.l.b16 %v3931
      %v4009 = vunpack.c.l.b16 %v3934
      %v4010 = vunpack.c.l.b16 %v3938
      %v4011 = vunpack.c.l.b16 %v3941
      %v4012 = vunpack.c.l.b16 %v3945
      %v4013 = vunpack.c.l.b16 %v3948
      %v4014 = vunpack.c.l.b16 %v3952
      %v4015 = vunpack.c.l.b16 %v3955
      %v4016 = vunpack.c.l.b16 %v3959
      %v4017 = vunpack.c.l.b16 %v3962
      %v4018 = vunpack.c.l.b16 %v3966
      %v4019 = vunpack.c.l.b16 %v3969
      %v4020 = vunpack.c.l.b16 %v3973
      %v4021 = vunpack.c.l.b16 %v3976
      %v4022 = vunpack.c.l.b16 %v3980
      %v4023 = vunpack.c.l.b16 %v3983
      %v4024 = vunpack.c.l.b16 %v3987
      %v4025 = vunpack.c.l.b16 %v3990
      %v4026 = vpack.c.b16 %v3995, %v3994
      %v4027 = vpack.c.b16 %v3997, %v3996
      %v4028 = vpack.c.b16 %v3999, %v3998
      %v4029 = vpack.c.b16 %v4001, %v4000
      %v4030 = vpack.c.b16 %v4003, %v4002
      %v4031 = vpack.c.b16 %v4005, %v4004
      %v4032 = vpack.c.b16 %v4007, %v4006
      %v4033 = vpack.c.b16 %v4009, %v4008
      %v4034 = vpack.c.b16 %v4011, %v4010
      %v4035 = vpack.c.b16 %v4013, %v4012
      %v4036 = vpack.c.b16 %v4015, %v4014
      %v4037 = vpack.c.b16 %v4017, %v4016
      %v4038 = vpack.c.b16 %v4019, %v4018
      %v4039 = vpack.c.b16 %v4021, %v4020
      %v4040 = vpack.c.b16 %v4023, %v4022
      %v4041 = vpack.c.b16 %v4025, %v4024
      %v4044 = vunpack.c.l.b16 %v3992
      %v4045 = vunpack.c.l.b16 %v3993
      %v4046 = vpack.c.b16 %v4045, %v4044
      %v4049 = vsel %vm3083, %v4026, 0
      %v4052 = vsel %vm3083, %v4027, 0
      %v4055 = vsel %vm3083, %v4028, 0
      %v4058 = vsel %vm3083, %v4029, 0
      %v4061 = vsel %vm3083, %v4030, 0
      %v4064 = vsel %vm3083, %v4031, 0
      %v4067 = vsel %vm3083, %v4032, 0
      %v4070 = vsel %vm3083, %v4033, 0
      %v4073 = vsel %vm3083, %v4034, 0
      %v4076 = vsel %vm3083, %v4035, 0
      %v4079 = vsel %vm3083, %v4036, 0
      %v4082 = vsel %vm3083, %v4037, 0
      %v4085 = vsel %vm3083, %v4038, 0
      %v4088 = vsel %vm3083, %v4039, 0
      %v4091 = vsel %vm3083, %v4040, 0
      %v4094 = vsel %vm3083, %v4041, 0
      %4096 = vmatpush.bf16.msra.mxu0 0
      %4097 = vmatpush.bf16.msra.mxu0 0
      %4098 = vmatpush.bf16.msra.mxu0 0
      %4099 = vmatpush.bf16.msra.mxu0 0
      %4100 = vmatpush.bf16.msra.mxu0 0
      %4101 = vmatpush.bf16.msra.mxu0 0
      %4102 = vmatpush.bf16.msra.mxu0 0
      %4103 = vmatpush.bf16.msra.mxu0 %v4046
      %4104 = vmatmul.bf16.gmra.mxu0 %v4049
      %v4105 = vpop.f32.mrf.mxu0
      %v4106 = vadd.f32 0.0, %v4105
      %v4107 = vpop.f32.mrf.mxu0
      %v4108 = vadd.f32 0.0, %v4107
      %4109 = vmatmul.bf16.gmra.mxu0 %v4052
      %v4110 = vpop.f32.mrf.mxu0
      %v4111 = vadd.f32 0.0, %v4110
      %v4112 = vpop.f32.mrf.mxu0
      %v4113 = vadd.f32 0.0, %v4112
      %4114 = vmatmul.bf16.gmra.mxu0 %v4055
      %v4115 = vpop.f32.mrf.mxu0
      %v4116 = vadd.f32 0.0, %v4115
      %v4117 = vpop.f32.mrf.mxu0
      %v4118 = vadd.f32 0.0, %v4117
      %4119 = vmatmul.bf16.gmra.mxu0 %v4058
      %v4120 = vpop.f32.mrf.mxu0
      %v4121 = vadd.f32 0.0, %v4120
      %v4122 = vpop.f32.mrf.mxu0
      %v4123 = vadd.f32 0.0, %v4122
      %4124 = vmatmul.bf16.gmra.mxu0 %v4061
      %v4125 = vpop.f32.mrf.mxu0
      %v4126 = vadd.f32 0.0, %v4125
      %v4127 = vpop.f32.mrf.mxu0
      %v4128 = vadd.f32 0.0, %v4127
      %4129 = vmatmul.bf16.gmra.mxu0 %v4064
      %v4130 = vpop.f32.mrf.mxu0
      %v4131 = vadd.f32 0.0, %v4130
      %v4132 = vpop.f32.mrf.mxu0
      %v4133 = vadd.f32 0.0, %v4132
      %4134 = vmatmul.bf16.gmra.mxu0 %v4067
      %v4135 = vpop.f32.mrf.mxu0
      %v4136 = vadd.f32 0.0, %v4135
      %v4137 = vpop.f32.mrf.mxu0
      %v4138 = vadd.f32 0.0, %v4137
      %4139 = vmatmul.bf16.gmra.mxu0 %v4070
      %v4140 = vpop.f32.mrf.mxu0
      %v4141 = vadd.f32 0.0, %v4140
      %v4142 = vpop.f32.mrf.mxu0
      %v4143 = vadd.f32 0.0, %v4142
      %4144 = vmatmul.bf16.gmra.mxu0 %v4073
      %v4145 = vpop.f32.mrf.mxu0
      %v4146 = vadd.f32 0.0, %v4145
      %v4147 = vpop.f32.mrf.mxu0
      %v4148 = vadd.f32 0.0, %v4147
      %4149 = vmatmul.bf16.gmra.mxu0 %v4076
      %v4150 = vpop.f32.mrf.mxu0
      %v4151 = vadd.f32 0.0, %v4150
      %v4152 = vpop.f32.mrf.mxu0
      %v4153 = vadd.f32 0.0, %v4152
      %4154 = vmatmul.bf16.gmra.mxu0 %v4079
      %v4155 = vpop.f32.mrf.mxu0
      %v4156 = vadd.f32 0.0, %v4155
      %v4157 = vpop.f32.mrf.mxu0
      %v4158 = vadd.f32 0.0, %v4157
      %4159 = vmatmul.bf16.gmra.mxu0 %v4082
      %v4160 = vpop.f32.mrf.mxu0
      %v4161 = vadd.f32 0.0, %v4160
      %v4162 = vpop.f32.mrf.mxu0
      %v4163 = vadd.f32 0.0, %v4162
      %4164 = vmatmul.bf16.gmra.mxu0 %v4085
      %v4165 = vpop.f32.mrf.mxu0
      %v4166 = vadd.f32 0.0, %v4165
      %v4167 = vpop.f32.mrf.mxu0
      %v4168 = vadd.f32 0.0, %v4167
      %4169 = vmatmul.bf16.gmra.mxu0 %v4088
      %v4170 = vpop.f32.mrf.mxu0
      %v4171 = vadd.f32 0.0, %v4170
      %v4172 = vpop.f32.mrf.mxu0
      %v4173 = vadd.f32 0.0, %v4172
      %4174 = vmatmul.bf16.gmra.mxu0 %v4091
      %v4175 = vpop.f32.mrf.mxu0
      %v4176 = vadd.f32 0.0, %v4175
      %v4177 = vpop.f32.mrf.mxu0
      %v4178 = vadd.f32 0.0, %v4177
      %4179 = vmatmul.bf16.gmra.mxu0 %v4094
      %v4180 = vpop.f32.mrf.mxu0
      %v4181 = vadd.f32 0.0, %v4180
      %v4182 = vpop.f32.mrf.mxu0
      %v4183 = vadd.f32 0.0, %v4182
      %4184 = vdwg.mxu0
      %v4185 = vadd.f32 %v3831, %v4106
      %v4186 = vadd.f32 %v3832, %v4108
      %v4187 = vadd.f32 %v3833, %v4111
      %v4188 = vadd.f32 %v3834, %v4113
      %v4189 = vadd.f32 %v3835, %v4116
      %v4190 = vadd.f32 %v3836, %v4118
      %v4191 = vadd.f32 %v3837, %v4121
      %v4192 = vadd.f32 %v3838, %v4123
      %v4193 = vadd.f32 %v3839, %v4126
      %v4194 = vadd.f32 %v3840, %v4128
      %v4195 = vadd.f32 %v3841, %v4131
      %v4196 = vadd.f32 %v3842, %v4133
      %v4197 = vadd.f32 %v3843, %v4136
      %v4198 = vadd.f32 %v3844, %v4138
      %v4199 = vadd.f32 %v3845, %v4141
      %v4200 = vadd.f32 %v3846, %v4143
      %v4201 = vadd.f32 %v3847, %v4146
      %v4202 = vadd.f32 %v3848, %v4148
      %v4203 = vadd.f32 %v3849, %v4151
      %v4204 = vadd.f32 %v3850, %v4153
      %v4205 = vadd.f32 %v3851, %v4156
      %v4206 = vadd.f32 %v3852, %v4158
      %v4207 = vadd.f32 %v3853, %v4161
      %v4208 = vadd.f32 %v3854, %v4163
      %v4209 = vadd.f32 %v3855, %v4166
      %v4210 = vadd.f32 %v3856, %v4168
      %v4211 = vadd.f32 %v3857, %v4171
      %v4212 = vadd.f32 %v3858, %v4173
      %v4213 = vadd.f32 %v3859, %v4176
      %v4214 = vadd.f32 %v3860, %v4178
      %v4215 = vadd.f32 %v3861, %v4181
      %v4216 = vadd.f32 %v3862, %v4183
      %s4217 = scalar_lea.vmem %s3, 24
      %v4218 = vld [vmem:[%s4217] sm:$0xf]
      %v4219 = vld [vmem:[%s4217 + $0x4] sm:$0xf]
      %v4222 = vunpack.c.l.b16 %v2957
      %v4223 = vunpack.c.l.b16 %v2958
      %v4224 = vpack.c.b16 %v4223, %v4222
      %v4227 = vunpack.c.l.b16 %v4218
      %v4228 = vunpack.c.l.b16 %v4219
      %v4229 = vpack.c.b16 %v4228, %v4227
      %v4232 = vsel %vm3083, %v4224, 0
      %4234 = vmatpush.bf16.msra.mxu0 0
      %4235 = vmatpush.bf16.msra.mxu0 0
      %4236 = vmatpush.bf16.msra.mxu0 0
      %4237 = vmatpush.bf16.msra.mxu0 0
      %4238 = vmatpush.bf16.msra.mxu0 0
      %4239 = vmatpush.bf16.msra.mxu0 0
      %4240 = vmatpush.bf16.msra.mxu0 0
      %4241 = vmatpush.bf16.msra.mxu0 %v4229
      %4242 = vmatmul.bf16.gmra.mxu0 %v3088
      %v4243 = vpop.f32.mrf.mxu0
      %v4244 = vadd.f32 0.0, %v4243
      %v4245 = vpop.f32.mrf.mxu0
      %v4246 = vadd.f32 0.0, %v4245
      %4247 = vmatmul.bf16.gmra.mxu0 %v3091
      %v4248 = vpop.f32.mrf.mxu0
      %v4249 = vadd.f32 0.0, %v4248
      %v4250 = vpop.f32.mrf.mxu0
      %v4251 = vadd.f32 0.0, %v4250
      %4252 = vmatmul.bf16.gmra.mxu0 %v3094
      %v4253 = vpop.f32.mrf.mxu0
      %v4254 = vadd.f32 0.0, %v4253
      %v4255 = vpop.f32.mrf.mxu0
      %v4256 = vadd.f32 0.0, %v4255
      %4257 = vmatmul.bf16.gmra.mxu0 %v3097
      %v4258 = vpop.f32.mrf.mxu0
      %v4259 = vadd.f32 0.0, %v4258
      %v4260 = vpop.f32.mrf.mxu0
      %v4261 = vadd.f32 0.0, %v4260
      %4262 = vmatmul.bf16.gmra.mxu0 %v3100
      %v4263 = vpop.f32.mrf.mxu0
      %v4264 = vadd.f32 0.0, %v4263
      %v4265 = vpop.f32.mrf.mxu0
      %v4266 = vadd.f32 0.0, %v4265
      %4267 = vmatmul.bf16.gmra.mxu0 %v3103
      %v4268 = vpop.f32.mrf.mxu0
      %v4269 = vadd.f32 0.0, %v4268
      %v4270 = vpop.f32.mrf.mxu0
      %v4271 = vadd.f32 0.0, %v4270
      %4272 = vmatmul.bf16.gmra.mxu0 %v3106
      %v4273 = vpop.f32.mrf.mxu0
      %v4274 = vadd.f32 0.0, %v4273
      %v4275 = vpop.f32.mrf.mxu0
      %v4276 = vadd.f32 0.0, %v4275
      %4277 = vmatmul.bf16.gmra.mxu0 %v3109
      %v4278 = vpop.f32.mrf.mxu0
      %v4279 = vadd.f32 0.0, %v4278
      %v4280 = vpop.f32.mrf.mxu0
      %v4281 = vadd.f32 0.0, %v4280
      %4282 = vmatmul.bf16.gmra.mxu0 %v3112
      %v4283 = vpop.f32.mrf.mxu0
      %v4284 = vadd.f32 0.0, %v4283
      %v4285 = vpop.f32.mrf.mxu0
      %v4286 = vadd.f32 0.0, %v4285
      %4287 = vmatmul.bf16.gmra.mxu0 %v3115
      %v4288 = vpop.f32.mrf.mxu0
      %v4289 = vadd.f32 0.0, %v4288
      %v4290 = vpop.f32.mrf.mxu0
      %v4291 = vadd.f32 0.0, %v4290
      %4292 = vmatmul.bf16.gmra.mxu0 %v3118
      %v4293 = vpop.f32.mrf.mxu0
      %v4294 = vadd.f32 0.0, %v4293
      %v4295 = vpop.f32.mrf.mxu0
      %v4296 = vadd.f32 0.0, %v4295
      %4297 = vmatmul.bf16.gmra.mxu0 %v3121
      %v4298 = vpop.f32.mrf.mxu0
      %v4299 = vadd.f32 0.0, %v4298
      %v4300 = vpop.f32.mrf.mxu0
      %v4301 = vadd.f32 0.0, %v4300
      %4302 = vmatmul.bf16.gmra.mxu0 %v3124
      %v4303 = vpop.f32.mrf.mxu0
      %v4304 = vadd.f32 0.0, %v4303
      %v4305 = vpop.f32.mrf.mxu0
      %v4306 = vadd.f32 0.0, %v4305
      %4307 = vmatmul.bf16.gmra.mxu0 %v3127
      %v4308 = vpop.f32.mrf.mxu0
      %v4309 = vadd.f32 0.0, %v4308
      %v4310 = vpop.f32.mrf.mxu0
      %v4311 = vadd.f32 0.0, %v4310
      %4312 = vmatmul.bf16.gmra.mxu0 %v3130
      %v4313 = vpop.f32.mrf.mxu0
      %v4314 = vadd.f32 0.0, %v4313
      %v4315 = vpop.f32.mrf.mxu0
      %v4316 = vadd.f32 0.0, %v4315
      %4317 = vmatmul.bf16.gmra.mxu0 %v4232
      %v4318 = vpop.f32.mrf.mxu0
      %v4319 = vadd.f32 0.0, %v4318
      %v4320 = vpop.f32.mrf.mxu0
      %v4321 = vadd.f32 0.0, %v4320
      %4322 = vdwg.mxu0
      %v4323 = vadd.f32 %v4185, %v4244
      %v4324 = vadd.f32 %v4186, %v4246
      %v4325 = vadd.f32 %v4187, %v4249
      %v4326 = vadd.f32 %v4188, %v4251
      %v4327 = vadd.f32 %v4189, %v4254
      %v4328 = vadd.f32 %v4190, %v4256
      %v4329 = vadd.f32 %v4191, %v4259
      %v4330 = vadd.f32 %v4192, %v4261
      %v4331 = vadd.f32 %v4193, %v4264
      %v4332 = vadd.f32 %v4194, %v4266
      %v4333 = vadd.f32 %v4195, %v4269
      %v4334 = vadd.f32 %v4196, %v4271
      %v4335 = vadd.f32 %v4197, %v4274
      %v4336 = vadd.f32 %v4198, %v4276
      %v4337 = vadd.f32 %v4199, %v4279
      %v4338 = vadd.f32 %v4200, %v4281
      %v4339 = vadd.f32 %v4201, %v4284
      %v4340 = vadd.f32 %v4202, %v4286
      %v4341 = vadd.f32 %v4203, %v4289
      %v4342 = vadd.f32 %v4204, %v4291
      %v4343 = vadd.f32 %v4205, %v4294
      %v4344 = vadd.f32 %v4206, %v4296
      %v4345 = vadd.f32 %v4207, %v4299
      %v4346 = vadd.f32 %v4208, %v4301
      %v4347 = vadd.f32 %v4209, %v4304
      %v4348 = vadd.f32 %v4210, %v4306
      %v4349 = vadd.f32 %v4211, %v4309
      %v4350 = vadd.f32 %v4212, %v4311
      %v4351 = vadd.f32 %v4213, %v4314
      %v4352 = vadd.f32 %v4214, %v4316
      %v4353 = vadd.f32 %v4215, %v4319
      %v4354 = vadd.f32 %v4216, %v4321
      %v4356 = vshrl.u32 %v2957, 16
      %v4358 = vrot.slane %v4356, 4
      %v4359 = vshll.u32 %v2957, 16
      %v4361 = vrot.slane %v4359, 5
      %v4362 = vor.u32 %v4358, %v4361
      %v4363 = vrot.slane %v4362, 4
      %v4365 = vshll.u32 %v2958, 16
      %v4367 = vrot.slane %v4365, 5
      %v4368 = vsel %vm842, %v4363, %v4367
      %v4369 = vshrl.u32 %v2958, 16
      %v4371 = vrot.slane %v4369, 4
      %v4372 = vor.u32 %v4371, %v4367
      %v4373 = vrot.slane %v4372, 4
      %v4375 = vshll.u32 %v2959, 16
      %v4377 = vrot.slane %v4375, 5
      %v4378 = vsel %vm842, %v4373, %v4377
      %s4379 = scalar_lea.vmem %s3, 32
      %v4380 = vld [vmem:[%s4379] sm:$0xf]
      %v4381 = vld [vmem:[%s4379 + $0x4] sm:$0xf]
      %v4382 = vunpack.c.l.b16 %v4368
      %v4383 = vunpack.c.l.b16 %v4378
      %v4384 = vpack.c.b16 %v4383, %v4382
      %v4387 = vunpack.c.l.b16 %v4380
      %v4388 = vunpack.c.l.b16 %v4381
      %v4389 = vpack.c.b16 %v4388, %v4387
      %v4392 = vsel %vm3083, %v4384, 0
      %4394 = vmatpush.bf16.msra.mxu0 0
      %4395 = vmatpush.bf16.msra.mxu0 0
      %4396 = vmatpush.bf16.msra.mxu0 0
      %4397 = vmatpush.bf16.msra.mxu0 0
      %4398 = vmatpush.bf16.msra.mxu0 0
      %4399 = vmatpush.bf16.msra.mxu0 0
      %4400 = vmatpush.bf16.msra.mxu0 0
      %4401 = vmatpush.bf16.msra.mxu0 %v4389
      %4402 = vmatmul.bf16.gmra.mxu0 %v3698
      %v4403 = vpop.f32.mrf.mxu0
      %v4404 = vadd.f32 0.0, %v4403
      %v4405 = vpop.f32.mrf.mxu0
      %v4406 = vadd.f32 0.0, %v4405
      %4407 = vmatmul.bf16.gmra.mxu0 %v3701
      %v4408 = vpop.f32.mrf.mxu0
      %v4409 = vadd.f32 0.0, %v4408
      %v4410 = vpop.f32.mrf.mxu0
      %v4411 = vadd.f32 0.0, %v4410
      %4412 = vmatmul.bf16.gmra.mxu0 %v3704
      %v4413 = vpop.f32.mrf.mxu0
      %v4414 = vadd.f32 0.0, %v4413
      %v4415 = vpop.f32.mrf.mxu0
      %v4416 = vadd.f32 0.0, %v4415
      %4417 = vmatmul.bf16.gmra.mxu0 %v3707
      %v4418 = vpop.f32.mrf.mxu0
      %v4419 = vadd.f32 0.0, %v4418
      %v4420 = vpop.f32.mrf.mxu0
      %v4421 = vadd.f32 0.0, %v4420
      %4422 = vmatmul.bf16.gmra.mxu0 %v3710
      %v4423 = vpop.f32.mrf.mxu0
      %v4424 = vadd.f32 0.0, %v4423
      %v4425 = vpop.f32.mrf.mxu0
      %v4426 = vadd.f32 0.0, %v4425
      %4427 = vmatmul.bf16.gmra.mxu0 %v3713
      %v4428 = vpop.f32.mrf.mxu0
      %v4429 = vadd.f32 0.0, %v4428
      %v4430 = vpop.f32.mrf.mxu0
      %v4431 = vadd.f32 0.0, %v4430
      %4432 = vmatmul.bf16.gmra.mxu0 %v3716
      %v4433 = vpop.f32.mrf.mxu0
      %v4434 = vadd.f32 0.0, %v4433
      %v4435 = vpop.f32.mrf.mxu0
      %v4436 = vadd.f32 0.0, %v4435
      %4437 = vmatmul.bf16.gmra.mxu0 %v3719
      %v4438 = vpop.f32.mrf.mxu0
      %v4439 = vadd.f32 0.0, %v4438
      %v4440 = vpop.f32.mrf.mxu0
      %v4441 = vadd.f32 0.0, %v4440
      %4442 = vmatmul.bf16.gmra.mxu0 %v3722
      %v4443 = vpop.f32.mrf.mxu0
      %v4444 = vadd.f32 0.0, %v4443
      %v4445 = vpop.f32.mrf.mxu0
      %v4446 = vadd.f32 0.0, %v4445
      %4447 = vmatmul.bf16.gmra.mxu0 %v3725
      %v4448 = vpop.f32.mrf.mxu0
      %v4449 = vadd.f32 0.0, %v4448
      %v4450 = vpop.f32.mrf.mxu0
      %v4451 = vadd.f32 0.0, %v4450
      %4452 = vmatmul.bf16.gmra.mxu0 %v3728
      %v4453 = vpop.f32.mrf.mxu0
      %v4454 = vadd.f32 0.0, %v4453
      %v4455 = vpop.f32.mrf.mxu0
      %v4456 = vadd.f32 0.0, %v4455
      %4457 = vmatmul.bf16.gmra.mxu0 %v3731
      %v4458 = vpop.f32.mrf.mxu0
      %v4459 = vadd.f32 0.0, %v4458
      %v4460 = vpop.f32.mrf.mxu0
      %v4461 = vadd.f32 0.0, %v4460
      %4462 = vmatmul.bf16.gmra.mxu0 %v3734
      %v4463 = vpop.f32.mrf.mxu0
      %v4464 = vadd.f32 0.0, %v4463
      %v4465 = vpop.f32.mrf.mxu0
      %v4466 = vadd.f32 0.0, %v4465
      %4467 = vmatmul.bf16.gmra.mxu0 %v3737
      %v4468 = vpop.f32.mrf.mxu0
      %v4469 = vadd.f32 0.0, %v4468
      %v4470 = vpop.f32.mrf.mxu0
      %v4471 = vadd.f32 0.0, %v4470
      %4472 = vmatmul.bf16.gmra.mxu0 %v3740
      %v4473 = vpop.f32.mrf.mxu0
      %v4474 = vadd.f32 0.0, %v4473
      %v4475 = vpop.f32.mrf.mxu0
      %v4476 = vadd.f32 0.0, %v4475
      %4477 = vmatmul.bf16.gmra.mxu0 %v4392
      %v4478 = vpop.f32.mrf.mxu0
      %v4479 = vadd.f32 0.0, %v4478
      %v4480 = vpop.f32.mrf.mxu0
      %v4481 = vadd.f32 0.0, %v4480
      %4482 = vdwg.mxu0
      %v4483 = vadd.f32 %v4323, %v4404
      %v4484 = vadd.f32 %v4324, %v4406
      %v4485 = vadd.f32 %v4325, %v4409
      %v4486 = vadd.f32 %v4326, %v4411
      %v4487 = vadd.f32 %v4327, %v4414
      %v4488 = vadd.f32 %v4328, %v4416
      %v4489 = vadd.f32 %v4329, %v4419
      %v4490 = vadd.f32 %v4330, %v4421
      %v4491 = vadd.f32 %v4331, %v4424
      %v4492 = vadd.f32 %v4332, %v4426
      %v4493 = vadd.f32 %v4333, %v4429
      %v4494 = vadd.f32 %v4334, %v4431
      %v4495 = vadd.f32 %v4335, %v4434
      %v4496 = vadd.f32 %v4336, %v4436
      %v4497 = vadd.f32 %v4337, %v4439
      %v4498 = vadd.f32 %v4338, %v4441
      %v4499 = vadd.f32 %v4339, %v4444
      %v4500 = vadd.f32 %v4340, %v4446
      %v4501 = vadd.f32 %v4341, %v4449
      %v4502 = vadd.f32 %v4342, %v4451
      %v4503 = vadd.f32 %v4343, %v4454
      %v4504 = vadd.f32 %v4344, %v4456
      %v4505 = vadd.f32 %v4345, %v4459
      %v4506 = vadd.f32 %v4346, %v4461
      %v4507 = vadd.f32 %v4347, %v4464
      %v4508 = vadd.f32 %v4348, %v4466
      %v4509 = vadd.f32 %v4349, %v4469
      %v4510 = vadd.f32 %v4350, %v4471
      %v4511 = vadd.f32 %v4351, %v4474
      %v4512 = vadd.f32 %v4352, %v4476
      %v4513 = vadd.f32 %v4353, %v4479
      %v4514 = vadd.f32 %v4354, %v4481
      %v4516 = vrot.slane %v2957, 5
      %v4517 = vrot.slane %v4516, 4
      %v4518 = vrot.slane %v2958, 5
      %v4519 = vsel %vm1467, %v4517, %v4518
      %v4520 = vrot.slane %v4518, 4
      %v4521 = vrot.slane %v2959, 5
      %v4522 = vsel %vm1467, %v4520, %v4521
      %s4523 = scalar_lea.vmem %s3, 40
      %v4524 = vld [vmem:[%s4523] sm:$0xf]
      %v4525 = vld [vmem:[%s4523 + $0x4] sm:$0xf]
      %v4526 = vunpack.c.l.b16 %v4519
      %v4527 = vunpack.c.l.b16 %v4522
      %v4528 = vpack.c.b16 %v4527, %v4526
      %v4531 = vunpack.c.l.b16 %v4524
      %v4532 = vunpack.c.l.b16 %v4525
      %v4533 = vpack.c.b16 %v4532, %v4531
      %v4536 = vsel %vm3083, %v4528, 0
      %4538 = vmatpush.bf16.msra.mxu0 0
      %4539 = vmatpush.bf16.msra.mxu0 0
      %4540 = vmatpush.bf16.msra.mxu0 0
      %4541 = vmatpush.bf16.msra.mxu0 0
      %4542 = vmatpush.bf16.msra.mxu0 0
      %4543 = vmatpush.bf16.msra.mxu0 0
      %4544 = vmatpush.bf16.msra.mxu0 0
      %4545 = vmatpush.bf16.msra.mxu0 %v4533
      %4546 = vmatmul.bf16.gmra.mxu0 %v4052
      %v4547 = vpop.f32.mrf.mxu0
      %v4548 = vadd.f32 0.0, %v4547
      %v4549 = vpop.f32.mrf.mxu0
      %v4550 = vadd.f32 0.0, %v4549
      %4551 = vmatmul.bf16.gmra.mxu0 %v4055
      %v4552 = vpop.f32.mrf.mxu0
      %v4553 = vadd.f32 0.0, %v4552
      %v4554 = vpop.f32.mrf.mxu0
      %v4555 = vadd.f32 0.0, %v4554
      %4556 = vmatmul.bf16.gmra.mxu0 %v4058
      %v4557 = vpop.f32.mrf.mxu0
      %v4558 = vadd.f32 0.0, %v4557
      %v4559 = vpop.f32.mrf.mxu0
      %v4560 = vadd.f32 0.0, %v4559
      %4561 = vmatmul.bf16.gmra.mxu0 %v4061
      %v4562 = vpop.f32.mrf.mxu0
      %v4563 = vadd.f32 0.0, %v4562
      %v4564 = vpop.f32.mrf.mxu0
      %v4565 = vadd.f32 0.0, %v4564
      %4566 = vmatmul.bf16.gmra.mxu0 %v4064
      %v4567 = vpop.f32.mrf.mxu0
      %v4568 = vadd.f32 0.0, %v4567
      %v4569 = vpop.f32.mrf.mxu0
      %v4570 = vadd.f32 0.0, %v4569
      %4571 = vmatmul.bf16.gmra.mxu0 %v4067
      %v4572 = vpop.f32.mrf.mxu0
      %v4573 = vadd.f32 0.0, %v4572
      %v4574 = vpop.f32.mrf.mxu0
      %v4575 = vadd.f32 0.0, %v4574
      %4576 = vmatmul.bf16.gmra.mxu0 %v4070
      %v4577 = vpop.f32.mrf.mxu0
      %v4578 = vadd.f32 0.0, %v4577
      %v4579 = vpop.f32.mrf.mxu0
      %v4580 = vadd.f32 0.0, %v4579
      %4581 = vmatmul.bf16.gmra.mxu0 %v4073
      %v4582 = vpop.f32.mrf.mxu0
      %v4583 = vadd.f32 0.0, %v4582
      %v4584 = vpop.f32.mrf.mxu0
      %v4585 = vadd.f32 0.0, %v4584
      %4586 = vmatmul.bf16.gmra.mxu0 %v4076
      %v4587 = vpop.f32.mrf.mxu0
      %v4588 = vadd.f32 0.0, %v4587
      %v4589 = vpop.f32.mrf.mxu0
      %v4590 = vadd.f32 0.0, %v4589
      %4591 = vmatmul.bf16.gmra.mxu0 %v4079
      %v4592 = vpop.f32.mrf.mxu0
      %v4593 = vadd.f32 0.0, %v4592
      %v4594 = vpop.f32.mrf.mxu0
      %v4595 = vadd.f32 0.0, %v4594
      %4596 = vmatmul.bf16.gmra.mxu0 %v4082
      %v4597 = vpop.f32.mrf.mxu0
      %v4598 = vadd.f32 0.0, %v4597
      %v4599 = vpop.f32.mrf.mxu0
      %v4600 = vadd.f32 0.0, %v4599
      %4601 = vmatmul.bf16.gmra.mxu0 %v4085
      %v4602 = vpop.f32.mrf.mxu0
      %v4603 = vadd.f32 0.0, %v4602
      %v4604 = vpop.f32.mrf.mxu0
      %v4605 = vadd.f32 0.0, %v4604
      %4606 = vmatmul.bf16.gmra.mxu0 %v4088
      %v4607 = vpop.f32.mrf.mxu0
      %v4608 = vadd.f32 0.0, %v4607
      %v4609 = vpop.f32.mrf.mxu0
      %v4610 = vadd.f32 0.0, %v4609
      %4611 = vmatmul.bf16.gmra.mxu0 %v4091
      %v4612 = vpop.f32.mrf.mxu0
      %v4613 = vadd.f32 0.0, %v4612
      %v4614 = vpop.f32.mrf.mxu0
      %v4615 = vadd.f32 0.0, %v4614
      %4616 = vmatmul.bf16.gmra.mxu0 %v4094
      %v4617 = vpop.f32.mrf.mxu0
      %v4618 = vadd.f32 0.0, %v4617
      %v4619 = vpop.f32.mrf.mxu0
      %v4620 = vadd.f32 0.0, %v4619
      %4621 = vmatmul.bf16.gmra.mxu0 %v4536
      %v4622 = vpop.f32.mrf.mxu0
      %v4623 = vadd.f32 0.0, %v4622
      %v4624 = vpop.f32.mrf.mxu0
      %v4625 = vadd.f32 0.0, %v4624
      %4626 = vdwg.mxu0
      %v4627 = vadd.f32 %v4483, %v4548
      %v4628 = vadd.f32 %v4484, %v4550
      %v4629 = vadd.f32 %v4485, %v4553
      %v4630 = vadd.f32 %v4486, %v4555
      %v4631 = vadd.f32 %v4487, %v4558
      %v4632 = vadd.f32 %v4488, %v4560
      %v4633 = vadd.f32 %v4489, %v4563
      %v4634 = vadd.f32 %v4490, %v4565
      %v4635 = vadd.f32 %v4491, %v4568
      %v4636 = vadd.f32 %v4492, %v4570
      %v4637 = vadd.f32 %v4493, %v4573
      %v4638 = vadd.f32 %v4494, %v4575
      %v4639 = vadd.f32 %v4495, %v4578
      %v4640 = vadd.f32 %v4496, %v4580
      %v4641 = vadd.f32 %v4497, %v4583
      %v4642 = vadd.f32 %v4498, %v4585
      %v4643 = vadd.f32 %v4499, %v4588
      %v4644 = vadd.f32 %v4500, %v4590
      %v4645 = vadd.f32 %v4501, %v4593
      %v4646 = vadd.f32 %v4502, %v4595
      %v4647 = vadd.f32 %v4503, %v4598
      %v4648 = vadd.f32 %v4504, %v4600
      %v4649 = vadd.f32 %v4505, %v4603
      %v4650 = vadd.f32 %v4506, %v4605
      %v4651 = vadd.f32 %v4507, %v4608
      %v4652 = vadd.f32 %v4508, %v4610
      %v4653 = vadd.f32 %v4509, %v4613
      %v4654 = vadd.f32 %v4510, %v4615
      %v4655 = vadd.f32 %v4511, %v4618
      %v4656 = vadd.f32 %v4512, %v4620
      %v4657 = vadd.f32 %v4513, %v4623
      %v4658 = vadd.f32 %v4514, %v4625
      %s4659 = scalar_lea.vmem %s3, 48
      %v4660 = vld [vmem:[%s4659] sm:$0xf]
      %v4661 = vld [vmem:[%s4659 + $0x4] sm:$0xf]
      %v4664 = vunpack.c.l.b16 %v2960
      %v4665 = vunpack.c.l.b16 %v2961
      %v4666 = vpack.c.b16 %v4665, %v4664
      %v4669 = vunpack.c.l.b16 %v4660
      %v4670 = vunpack.c.l.b16 %v4661
      %v4671 = vpack.c.b16 %v4670, %v4669
      %v4674 = vsel %vm3083, %v4666, 0
      %4676 = vmatpush.bf16.msra.mxu0 0
      %4677 = vmatpush.bf16.msra.mxu0 0
      %4678 = vmatpush.bf16.msra.mxu0 0
      %4679 = vmatpush.bf16.msra.mxu0 0
      %4680 = vmatpush.bf16.msra.mxu0 0
      %4681 = vmatpush.bf16.msra.mxu0 0
      %4682 = vmatpush.bf16.msra.mxu0 0
      %4683 = vmatpush.bf16.msra.mxu0 %v4671
      %4684 = vmatmul.bf16.gmra.mxu0 %v3091
      %v4685 = vpop.f32.mrf.mxu0
      %v4686 = vadd.f32 0.0, %v4685
      %v4687 = vpop.f32.mrf.mxu0
      %v4688 = vadd.f32 0.0, %v4687
      %4689 = vmatmul.bf16.gmra.mxu0 %v3094
      %v4690 = vpop.f32.mrf.mxu0
      %v4691 = vadd.f32 0.0, %v4690
      %v4692 = vpop.f32.mrf.mxu0
      %v4693 = vadd.f32 0.0, %v4692
      %4694 = vmatmul.bf16.gmra.mxu0 %v3097
      %v4695 = vpop.f32.mrf.mxu0
      %v4696 = vadd.f32 0.0, %v4695
      %v4697 = vpop.f32.mrf.mxu0
      %v4698 = vadd.f32 0.0, %v4697
      %4699 = vmatmul.bf16.gmra.mxu0 %v3100
      %v4700 = vpop.f32.mrf.mxu0
      %v4701 = vadd.f32 0.0, %v4700
      %v4702 = vpop.f32.mrf.mxu0
      %v4703 = vadd.f32 0.0, %v4702
      %4704 = vmatmul.bf16.gmra.mxu0 %v3103
      %v4705 = vpop.f32.mrf.mxu0
      %v4706 = vadd.f32 0.0, %v4705
      %v4707 = vpop.f32.mrf.mxu0
      %v4708 = vadd.f32 0.0, %v4707
      %4709 = vmatmul.bf16.gmra.mxu0 %v3106
      %v4710 = vpop.f32.mrf.mxu0
      %v4711 = vadd.f32 0.0, %v4710
      %v4712 = vpop.f32.mrf.mxu0
      %v4713 = vadd.f32 0.0, %v4712
      %4714 = vmatmul.bf16.gmra.mxu0 %v3109
      %v4715 = vpop.f32.mrf.mxu0
      %v4716 = vadd.f32 0.0, %v4715
      %v4717 = vpop.f32.mrf.mxu0
      %v4718 = vadd.f32 0.0, %v4717
      %4719 = vmatmul.bf16.gmra.mxu0 %v3112
      %v4720 = vpop.f32.mrf.mxu0
      %v4721 = vadd.f32 0.0, %v4720
      %v4722 = vpop.f32.mrf.mxu0
      %v4723 = vadd.f32 0.0, %v4722
      %4724 = vmatmul.bf16.gmra.mxu0 %v3115
      %v4725 = vpop.f32.mrf.mxu0
      %v4726 = vadd.f32 0.0, %v4725
      %v4727 = vpop.f32.mrf.mxu0
      %v4728 = vadd.f32 0.0, %v4727
      %4729 = vmatmul.bf16.gmra.mxu0 %v3118
      %v4730 = vpop.f32.mrf.mxu0
      %v4731 = vadd.f32 0.0, %v4730
      %v4732 = vpop.f32.mrf.mxu0
      %v4733 = vadd.f32 0.0, %v4732
      %4734 = vmatmul.bf16.gmra.mxu0 %v3121
      %v4735 = vpop.f32.mrf.mxu0
      %v4736 = vadd.f32 0.0, %v4735
      %v4737 = vpop.f32.mrf.mxu0
      %v4738 = vadd.f32 0.0, %v4737
      %4739 = vmatmul.bf16.gmra.mxu0 %v3124
      %v4740 = vpop.f32.mrf.mxu0
      %v4741 = vadd.f32 0.0, %v4740
      %v4742 = vpop.f32.mrf.mxu0
      %v4743 = vadd.f32 0.0, %v4742
      %4744 = vmatmul.bf16.gmra.mxu0 %v3127
      %v4745 = vpop.f32.mrf.mxu0
      %v4746 = vadd.f32 0.0, %v4745
      %v4747 = vpop.f32.mrf.mxu0
      %v4748 = vadd.f32 0.0, %v4747
      %4749 = vmatmul.bf16.gmra.mxu0 %v3130
      %v4750 = vpop.f32.mrf.mxu0
      %v4751 = vadd.f32 0.0, %v4750
      %v4752 = vpop.f32.mrf.mxu0
      %v4753 = vadd.f32 0.0, %v4752
      %4754 = vmatmul.bf16.gmra.mxu0 %v4232
      %v4755 = vpop.f32.mrf.mxu0
      %v4756 = vadd.f32 0.0, %v4755
      %v4757 = vpop.f32.mrf.mxu0
      %v4758 = vadd.f32 0.0, %v4757
      %4759 = vmatmul.bf16.gmra.mxu0 %v4674
      %v4760 = vpop.f32.mrf.mxu0
      %v4761 = vadd.f32 0.0, %v4760
      %v4762 = vpop.f32.mrf.mxu0
      %v4763 = vadd.f32 0.0, %v4762
      %4764 = vdwg.mxu0
      %v4765 = vadd.f32 %v4627, %v4686
      %v4766 = vadd.f32 %v4628, %v4688
      %v4767 = vadd.f32 %v4629, %v4691
      %v4768 = vadd.f32 %v4630, %v4693
      %v4769 = vadd.f32 %v4631, %v4696
      %v4770 = vadd.f32 %v4632, %v4698
      %v4771 = vadd.f32 %v4633, %v4701
      %v4772 = vadd.f32 %v4634, %v4703
      %v4773 = vadd.f32 %v4635, %v4706
      %v4774 = vadd.f32 %v4636, %v4708
      %v4775 = vadd.f32 %v4637, %v4711
      %v4776 = vadd.f32 %v4638, %v4713
      %v4777 = vadd.f32 %v4639, %v4716
      %v4778 = vadd.f32 %v4640, %v4718
      %v4779 = vadd.f32 %v4641, %v4721
      %v4780 = vadd.f32 %v4642, %v4723
      %v4781 = vadd.f32 %v4643, %v4726
      %v4782 = vadd.f32 %v4644, %v4728
      %v4783 = vadd.f32 %v4645, %v4731
      %v4784 = vadd.f32 %v4646, %v4733
      %v4785 = vadd.f32 %v4647, %v4736
      %v4786 = vadd.f32 %v4648, %v4738
      %v4787 = vadd.f32 %v4649, %v4741
      %v4788 = vadd.f32 %v4650, %v4743
      %v4789 = vadd.f32 %v4651, %v4746
      %v4790 = vadd.f32 %v4652, %v4748
      %v4791 = vadd.f32 %v4653, %v4751
      %v4792 = vadd.f32 %v4654, %v4753
      %v4793 = vadd.f32 %v4655, %v4756
      %v4794 = vadd.f32 %v4656, %v4758
      %v4795 = vadd.f32 %v4657, %v4761
      %v4796 = vadd.f32 %v4658, %v4763
      %v4798 = vshrl.u32 %v2960, 16
      %v4800 = vrot.slane %v4798, 4
      %v4801 = vshll.u32 %v2960, 16
      %v4803 = vrot.slane %v4801, 5
      %v4804 = vor.u32 %v4800, %v4803
      %v4805 = vrot.slane %v4804, 4
      %v4807 = vshll.u32 %v2961, 16
      %v4809 = vrot.slane %v4807, 5
      %v4810 = vsel %vm842, %v4805, %v4809
      %v4811 = vshrl.u32 %v2961, 16
      %v4813 = vrot.slane %v4811, 4
      %v4814 = vor.u32 %v4813, %v4809
      %v4815 = vrot.slane %v4814, 4
      %v4817 = vshll.u32 %v2962, 16
      %v4819 = vrot.slane %v4817, 5
      %v4820 = vsel %vm842, %v4815, %v4819
      %s4821 = scalar_lea.vmem %s3, 56
      %v4822 = vld [vmem:[%s4821] sm:$0xf]
      %v4823 = vld [vmem:[%s4821 + $0x4] sm:$0xf]
      %v4824 = vunpack.c.l.b16 %v4810
      %v4825 = vunpack.c.l.b16 %v4820
      %v4826 = vpack.c.b16 %v4825, %v4824
      %v4829 = vunpack.c.l.b16 %v4822
      %v4830 = vunpack.c.l.b16 %v4823
      %v4831 = vpack.c.b16 %v4830, %v4829
      %v4834 = vsel %vm3083, %v4826, 0
      %4836 = vmatpush.bf16.msra.mxu0 0
      %4837 = vmatpush.bf16.msra.mxu0 0
      %4838 = vmatpush.bf16.msra.mxu0 0
      %4839 = vmatpush.bf16.msra.mxu0 0
      %4840 = vmatpush.bf16.msra.mxu0 0
      %4841 = vmatpush.bf16.msra.mxu0 0
      %4842 = vmatpush.bf16.msra.mxu0 0
      %4843 = vmatpush.bf16.msra.mxu0 %v4831
      %4844 = vmatmul.bf16.gmra.mxu0 %v3701
      %v4845 = vpop.f32.mrf.mxu0
      %v4846 = vadd.f32 0.0, %v4845
      %v4847 = vpop.f32.mrf.mxu0
      %v4848 = vadd.f32 0.0, %v4847
      %4849 = vmatmul.bf16.gmra.mxu0 %v3704
      %v4850 = vpop.f32.mrf.mxu0
      %v4851 = vadd.f32 0.0, %v4850
      %v4852 = vpop.f32.mrf.mxu0
      %v4853 = vadd.f32 0.0, %v4852
      %4854 = vmatmul.bf16.gmra.mxu0 %v3707
      %v4855 = vpop.f32.mrf.mxu0
      %v4856 = vadd.f32 0.0, %v4855
      %v4857 = vpop.f32.mrf.mxu0
      %v4858 = vadd.f32 0.0, %v4857
      %4859 = vmatmul.bf16.gmra.mxu0 %v3710
      %v4860 = vpop.f32.mrf.mxu0
      %v4861 = vadd.f32 0.0, %v4860
      %v4862 = vpop.f32.mrf.mxu0
      %v4863 = vadd.f32 0.0, %v4862
      %4864 = vmatmul.bf16.gmra.mxu0 %v3713
      %v4865 = vpop.f32.mrf.mxu0
      %v4866 = vadd.f32 0.0, %v4865
      %v4867 = vpop.f32.mrf.mxu0
      %v4868 = vadd.f32 0.0, %v4867
      %4869 = vmatmul.bf16.gmra.mxu0 %v3716
      %v4870 = vpop.f32.mrf.mxu0
      %v4871 = vadd.f32 0.0, %v4870
      %v4872 = vpop.f32.mrf.mxu0
      %v4873 = vadd.f32 0.0, %v4872
      %4874 = vmatmul.bf16.gmra.mxu0 %v3719
      %v4875 = vpop.f32.mrf.mxu0
      %v4876 = vadd.f32 0.0, %v4875
      %v4877 = vpop.f32.mrf.mxu0
      %v4878 = vadd.f32 0.0, %v4877
      %4879 = vmatmul.bf16.gmra.mxu0 %v3722
      %v4880 = vpop.f32.mrf.mxu0
      %v4881 = vadd.f32 0.0, %v4880
      %v4882 = vpop.f32.mrf.mxu0
      %v4883 = vadd.f32 0.0, %v4882
      %4884 = vmatmul.bf16.gmra.mxu0 %v3725
      %v4885 = vpop.f32.mrf.mxu0
      %v4886 = vadd.f32 0.0, %v4885
      %v4887 = vpop.f32.mrf.mxu0
      %v4888 = vadd.f32 0.0, %v4887
      %4889 = vmatmul.bf16.gmra.mxu0 %v3728
      %v4890 = vpop.f32.mrf.mxu0
      %v4891 = vadd.f32 0.0, %v4890
      %v4892 = vpop.f32.mrf.mxu0
      %v4893 = vadd.f32 0.0, %v4892
      %4894 = vmatmul.bf16.gmra.mxu0 %v3731
      %v4895 = vpop.f32.mrf.mxu0
      %v4896 = vadd.f32 0.0, %v4895
      %v4897 = vpop.f32.mrf.mxu0
      %v4898 = vadd.f32 0.0, %v4897
      %4899 = vmatmul.bf16.gmra.mxu0 %v3734
      %v4900 = vpop.f32.mrf.mxu0
      %v4901 = vadd.f32 0.0, %v4900
      %v4902 = vpop.f32.mrf.mxu0
      %v4903 = vadd.f32 0.0, %v4902
      %4904 = vmatmul.bf16.gmra.mxu0 %v3737
      %v4905 = vpop.f32.mrf.mxu0
      %v4906 = vadd.f32 0.0, %v4905
      %v4907 = vpop.f32.mrf.mxu0
      %v4908 = vadd.f32 0.0, %v4907
      %4909 = vmatmul.bf16.gmra.mxu0 %v3740
      %v4910 = vpop.f32.mrf.mxu0
      %v4911 = vadd.f32 0.0, %v4910
      %v4912 = vpop.f32.mrf.mxu0
      %v4913 = vadd.f32 0.0, %v4912
      %4914 = vmatmul.bf16.gmra.mxu0 %v4392
      %v4915 = vpop.f32.mrf.mxu0
      %v4916 = vadd.f32 0.0, %v4915
      %v4917 = vpop.f32.mrf.mxu0
      %v4918 = vadd.f32 0.0, %v4917
      %4919 = vmatmul.bf16.gmra.mxu0 %v4834
      %v4920 = vpop.f32.mrf.mxu0
      %v4921 = vadd.f32 0.0, %v4920
      %v4922 = vpop.f32.mrf.mxu0
      %v4923 = vadd.f32 0.0, %v4922
      %4924 = vdwg.mxu0
      %v4925 = vadd.f32 %v4765, %v4846
      %v4926 = vadd.f32 %v4766, %v4848
      %v4927 = vadd.f32 %v4767, %v4851
      %v4928 = vadd.f32 %v4768, %v4853
      %v4929 = vadd.f32 %v4769, %v4856
      %v4930 = vadd.f32 %v4770, %v4858
      %v4931 = vadd.f32 %v4771, %v4861
      %v4932 = vadd.f32 %v4772, %v4863
      %v4933 = vadd.f32 %v4773, %v4866
      %v4934 = vadd.f32 %v4774, %v4868
      %v4935 = vadd.f32 %v4775, %v4871
      %v4936 = vadd.f32 %v4776, %v4873
      %v4937 = vadd.f32 %v4777, %v4876
      %v4938 = vadd.f32 %v4778, %v4878
      %v4939 = vadd.f32 %v4779, %v4881
      %v4940 = vadd.f32 %v4780, %v4883
      %v4941 = vadd.f32 %v4781, %v4886
      %v4942 = vadd.f32 %v4782, %v4888
      %v4943 = vadd.f32 %v4783, %v4891
      %v4944 = vadd.f32 %v4784, %v4893
      %v4945 = vadd.f32 %v4785, %v4896
      %v4946 = vadd.f32 %v4786, %v4898
      %v4947 = vadd.f32 %v4787, %v4901
      %v4948 = vadd.f32 %v4788, %v4903
      %v4949 = vadd.f32 %v4789, %v4906
      %v4950 = vadd.f32 %v4790, %v4908
      %v4951 = vadd.f32 %v4791, %v4911
      %v4952 = vadd.f32 %v4792, %v4913
      %v4953 = vadd.f32 %v4793, %v4916
      %v4954 = vadd.f32 %v4794, %v4918
      %v4955 = vadd.f32 %v4795, %v4921
      %v4956 = vadd.f32 %v4796, %v4923
      %v4958 = vrot.slane %v2960, 5
      %v4959 = vrot.slane %v4958, 4
      %v4960 = vrot.slane %v2961, 5
      %v4961 = vsel %vm1467, %v4959, %v4960
      %v4962 = vrot.slane %v4960, 4
      %v4963 = vrot.slane %v2962, 5
      %v4964 = vsel %vm1467, %v4962, %v4963
      %s4965 = scalar_lea.vmem %s3, 64
      %v4966 = vld [vmem:[%s4965] sm:$0xf]
      %v4967 = vld [vmem:[%s4965 + $0x4] sm:$0xf]
      %v4968 = vunpack.c.l.b16 %v4961
      %v4969 = vunpack.c.l.b16 %v4964
      %v4970 = vpack.c.b16 %v4969, %v4968
      %v4973 = vunpack.c.l.b16 %v4966
      %v4974 = vunpack.c.l.b16 %v4967
      %v4975 = vpack.c.b16 %v4974, %v4973
      %v4978 = vsel %vm3083, %v4970, 0
      %4980 = vmatpush.bf16.msra.mxu0 0
      %4981 = vmatpush.bf16.msra.mxu0 0
      %4982 = vmatpush.bf16.msra.mxu0 0
      %4983 = vmatpush.bf16.msra.mxu0 0
      %4984 = vmatpush.bf16.msra.mxu0 0
      %4985 = vmatpush.bf16.msra.mxu0 0
      %4986 = vmatpush.bf16.msra.mxu0 0
      %4987 = vmatpush.bf16.msra.mxu0 %v4975
      %4988 = vmatmul.bf16.gmra.mxu0 %v4055
      %v4989 = vpop.f32.mrf.mxu0
      %v4990 = vadd.f32 0.0, %v4989
      %v4991 = vpop.f32.mrf.mxu0
      %v4992 = vadd.f32 0.0, %v4991
      %4993 = vmatmul.bf16.gmra.mxu0 %v4058
      %v4994 = vpop.f32.mrf.mxu0
      %v4995 = vadd.f32 0.0, %v4994
      %v4996 = vpop.f32.mrf.mxu0
      %v4997 = vadd.f32 0.0, %v4996
      %4998 = vmatmul.bf16.gmra.mxu0 %v4061
      %v4999 = vpop.f32.mrf.mxu0
      %v5000 = vadd.f32 0.0, %v4999
      %v5001 = vpop.f32.mrf.mxu0
      %v5002 = vadd.f32 0.0, %v5001
      %5003 = vmatmul.bf16.gmra.mxu0 %v4064
      %v5004 = vpop.f32.mrf.mxu0
      %v5005 = vadd.f32 0.0, %v5004
      %v5006 = vpop.f32.mrf.mxu0
      %v5007 = vadd.f32 0.0, %v5006
      %5008 = vmatmul.bf16.gmra.mxu0 %v4067
      %v5009 = vpop.f32.mrf.mxu0
      %v5010 = vadd.f32 0.0, %v5009
      %v5011 = vpop.f32.mrf.mxu0
      %v5012 = vadd.f32 0.0, %v5011
      %5013 = vmatmul.bf16.gmra.mxu0 %v4070
      %v5014 = vpop.f32.mrf.mxu0
      %v5015 = vadd.f32 0.0, %v5014
      %v5016 = vpop.f32.mrf.mxu0
      %v5017 = vadd.f32 0.0, %v5016
      %5018 = vmatmul.bf16.gmra.mxu0 %v4073
      %v5019 = vpop.f32.mrf.mxu0
      %v5020 = vadd.f32 0.0, %v5019
      %v5021 = vpop.f32.mrf.mxu0
      %v5022 = vadd.f32 0.0, %v5021
      %5023 = vmatmul.bf16.gmra.mxu0 %v4076
      %v5024 = vpop.f32.mrf.mxu0
      %v5025 = vadd.f32 0.0, %v5024
      %v5026 = vpop.f32.mrf.mxu0
      %v5027 = vadd.f32 0.0, %v5026
      %5028 = vmatmul.bf16.gmra.mxu0 %v4079
      %v5029 = vpop.f32.mrf.mxu0
      %v5030 = vadd.f32 0.0, %v5029
      %v5031 = vpop.f32.mrf.mxu0
      %v5032 = vadd.f32 0.0, %v5031
      %5033 = vmatmul.bf16.gmra.mxu0 %v4082
      %v5034 = vpop.f32.mrf.mxu0
      %v5035 = vadd.f32 0.0, %v5034
      %v5036 = vpop.f32.mrf.mxu0
      %v5037 = vadd.f32 0.0, %v5036
      %5038 = vmatmul.bf16.gmra.mxu0 %v4085
      %v5039 = vpop.f32.mrf.mxu0
      %v5040 = vadd.f32 0.0, %v5039
      %v5041 = vpop.f32.mrf.mxu0
      %v5042 = vadd.f32 0.0, %v5041
      %5043 = vmatmul.bf16.gmra.mxu0 %v4088
      %v5044 = vpop.f32.mrf.mxu0
      %v5045 = vadd.f32 0.0, %v5044
      %v5046 = vpop.f32.mrf.mxu0
      %v5047 = vadd.f32 0.0, %v5046
      %5048 = vmatmul.bf16.gmra.mxu0 %v4091
      %v5049 = vpop.f32.mrf.mxu0
      %v5050 = vadd.f32 0.0, %v5049
      %v5051 = vpop.f32.mrf.mxu0
      %v5052 = vadd.f32 0.0, %v5051
      %5053 = vmatmul.bf16.gmra.mxu0 %v4094
      %v5054 = vpop.f32.mrf.mxu0
      %v5055 = vadd.f32 0.0, %v5054
      %v5056 = vpop.f32.mrf.mxu0
      %v5057 = vadd.f32 0.0, %v5056
      %5058 = vmatmul.bf16.gmra.mxu0 %v4536
      %v5059 = vpop.f32.mrf.mxu0
      %v5060 = vadd.f32 0.0, %v5059
      %v5061 = vpop.f32.mrf.mxu0
      %v5062 = vadd.f32 0.0, %v5061
      %5063 = vmatmul.bf16.gmra.mxu0 %v4978
      %v5064 = vpop.f32.mrf.mxu0
      %v5065 = vadd.f32 0.0, %v5064
      %v5066 = vpop.f32.mrf.mxu0
      %v5067 = vadd.f32 0.0, %v5066
      %5068 = vdwg.mxu0
      %v5069 = vadd.f32 %v4925, %v4990
      %v5070 = vadd.f32 %v4926, %v4992
      %v5071 = vadd.f32 %v4927, %v4995
      %v5072 = vadd.f32 %v4928, %v4997
      %v5073 = vadd.f32 %v4929, %v5000
      %v5074 = vadd.f32 %v4930, %v5002
      %v5075 = vadd.f32 %v4931, %v5005
      %v5076 = vadd.f32 %v4932, %v5007
      %v5077 = vadd.f32 %v4933, %v5010
      %v5078 = vadd.f32 %v4934, %v5012
      %v5079 = vadd.f32 %v4935, %v5015
      %v5080 = vadd.f32 %v4936, %v5017
      %v5081 = vadd.f32 %v4937, %v5020
      %v5082 = vadd.f32 %v4938, %v5022
      %v5083 = vadd.f32 %v4939, %v5025
      %v5084 = vadd.f32 %v4940, %v5027
      %v5085 = vadd.f32 %v4941, %v5030
      %v5086 = vadd.f32 %v4942, %v5032
      %v5087 = vadd.f32 %v4943, %v5035
      %v5088 = vadd.f32 %v4944, %v5037
      %v5089 = vadd.f32 %v4945, %v5040
      %v5090 = vadd.f32 %v4946, %v5042
      %v5091 = vadd.f32 %v4947, %v5045
      %v5092 = vadd.f32 %v4948, %v5047
      %v5093 = vadd.f32 %v4949, %v5050
      %v5094 = vadd.f32 %v4950, %v5052
      %v5095 = vadd.f32 %v4951, %v5055
      %v5096 = vadd.f32 %v4952, %v5057
      %v5097 = vadd.f32 %v4953, %v5060
      %v5098 = vadd.f32 %v4954, %v5062
      %v5099 = vadd.f32 %v4955, %v5065
      %v5100 = vadd.f32 %v4956, %v5067
      %v5101 = vmax.f32 %v5069, 0.0
      %v5102 = vmax.f32 %v5070, 0.0
      %v5103 = vmax.f32 %v5071, 0.0
      %v5104 = vmax.f32 %v5072, 0.0
      %v5105 = vmax.f32 %v5073, 0.0
      %v5106 = vmax.f32 %v5074, 0.0
      %v5107 = vmax.f32 %v5075, 0.0
      %v5108 = vmax.f32 %v5076, 0.0
      %v5109 = vmax.f32 %v5077, 0.0
      %v5110 = vmax.f32 %v5078, 0.0
      %v5111 = vmax.f32 %v5079, 0.0
      %v5112 = vmax.f32 %v5080, 0.0
      %v5113 = vmax.f32 %v5081, 0.0
      %v5114 = vmax.f32 %v5082, 0.0
      %v5115 = vmax.f32 %v5083, 0.0
      %v5116 = vmax.f32 %v5084, 0.0
      %v5117 = vmax.f32 %v5085, 0.0
      %v5118 = vmax.f32 %v5086, 0.0
      %v5119 = vmax.f32 %v5087, 0.0
      %v5120 = vmax.f32 %v5088, 0.0
      %v5121 = vmax.f32 %v5089, 0.0
      %v5122 = vmax.f32 %v5090, 0.0
      %v5123 = vmax.f32 %v5091, 0.0
      %v5124 = vmax.f32 %v5092, 0.0
      %v5125 = vmax.f32 %v5093, 0.0
      %v5126 = vmax.f32 %v5094, 0.0
      %v5127 = vmax.f32 %v5095, 0.0
      %v5128 = vmax.f32 %v5096, 0.0
      %v5129 = vmax.f32 %v5097, 0.0
      %v5130 = vmax.f32 %v5098, 0.0
      %v5131 = vmax.f32 %v5099, 0.0
      %v5132 = vmax.f32 %v5100, 0.0
      %5165 = vrot.lane.b32.xlu0 %v5101, 16
      %v5166 = vpop.permute.xlu0 %5165
      %5167 = vrot.lane.b32.xlu0 %v5102, 16
      %v5168 = vpop.permute.xlu0 %5167
      %5169 = vrot.lane.b32.xlu0 %v5103, 16
      %v5170 = vpop.permute.xlu0 %5169
      %5171 = vrot.lane.b32.xlu0 %v5104, 16
      %v5172 = vpop.permute.xlu0 %5171
      %5173 = vrot.lane.b32.xlu0 %v5105, 16
      %v5174 = vpop.permute.xlu0 %5173
      %5175 = vrot.lane.b32.xlu0 %v5106, 16
      %v5176 = vpop.permute.xlu0 %5175
      %5177 = vrot.lane.b32.xlu0 %v5107, 16
      %v5178 = vpop.permute.xlu0 %5177
      %5179 = vrot.lane.b32.xlu0 %v5108, 16
      %v5180 = vpop.permute.xlu0 %5179
      %5181 = vrot.lane.b32.xlu0 %v5109, 16
      %v5182 = vpop.permute.xlu0 %5181
      %5183 = vrot.lane.b32.xlu0 %v5110, 16
      %v5184 = vpop.permute.xlu0 %5183
      %5185 = vrot.lane.b32.xlu0 %v5111, 16
      %v5186 = vpop.permute.xlu0 %5185
      %5187 = vrot.lane.b32.xlu0 %v5112, 16
      %v5188 = vpop.permute.xlu0 %5187
      %5189 = vrot.lane.b32.xlu0 %v5113, 16
      %v5190 = vpop.permute.xlu0 %5189
      %5191 = vrot.lane.b32.xlu0 %v5114, 16
      %v5192 = vpop.permute.xlu0 %5191
      %5193 = vrot.lane.b32.xlu0 %v5115, 16
      %v5194 = vpop.permute.xlu0 %5193
      %5195 = vrot.lane.b32.xlu0 %v5116, 16
      %v5196 = vpop.permute.xlu0 %5195
      %5197 = vrot.lane.b32.xlu0 %v5117, 16
      %v5198 = vpop.permute.xlu0 %5197
      %5199 = vrot.lane.b32.xlu0 %v5118, 16
      %v5200 = vpop.permute.xlu0 %5199
      %5201 = vrot.lane.b32.xlu0 %v5119, 16
      %v5202 = vpop.permute.xlu0 %5201
      %5203 = vrot.lane.b32.xlu0 %v5120, 16
      %v5204 = vpop.permute.xlu0 %5203
      %5205 = vrot.lane.b32.xlu0 %v5121, 16
      %v5206 = vpop.permute.xlu0 %5205
      %5207 = vrot.lane.b32.xlu0 %v5122, 16
      %v5208 = vpop.permute.xlu0 %5207
      %5209 = vrot.lane.b32.xlu0 %v5123, 16
      %v5210 = vpop.permute.xlu0 %5209
      %5211 = vrot.lane.b32.xlu0 %v5124, 16
      %v5212 = vpop.permute.xlu0 %5211
      %5213 = vrot.lane.b32.xlu0 %v5125, 16
      %v5214 = vpop.permute.xlu0 %5213
      %5215 = vrot.lane.b32.xlu0 %v5126, 16
      %v5216 = vpop.permute.xlu0 %5215
      %5217 = vrot.lane.b32.xlu0 %v5127, 16
      %v5218 = vpop.permute.xlu0 %5217
      %5219 = vrot.lane.b32.xlu0 %v5128, 16
      %v5220 = vpop.permute.xlu0 %5219
      %5221 = vrot.lane.b32.xlu0 %v5129, 16
      %v5222 = vpop.permute.xlu0 %5221
      %5223 = vrot.lane.b32.xlu0 %v5130, 16
      %v5224 = vpop.permute.xlu0 %5223
      %5225 = vrot.lane.b32.xlu0 %v5131, 16
      %v5226 = vpop.permute.xlu0 %5225
      %5227 = vrot.lane.b32.xlu0 %v5132, 16
      %v5228 = vpop.permute.xlu0 %5227
      %vm5261 = vcmask 261248
      %5262 = vst.msk [vmem:[%s412 + $0x1] sm:$0xff] %vm5261, %v5166
      %5263 = vst.msk [vmem:[%s412 + $0x9] sm:$0xff] %vm5261, %v5168
      %5264 = vst.msk [vmem:[%s412 + $0x19] sm:$0xff] %vm5261, %v5170
      %5265 = vst.msk [vmem:[%s412 + $0x21] sm:$0xff] %vm5261, %v5172
      %5266 = vst.msk [vmem:[%s412 + $0x31] sm:$0xff] %vm5261, %v5174
      %5267 = vst.msk [vmem:[%s412 + $0x39] sm:$0xff] %vm5261, %v5176
      %5268 = vst.msk [vmem:[%s412 + $0x49] sm:$0xff] %vm5261, %v5178
      %5269 = vst.msk [vmem:[%s412 + $0x51] sm:$0xff] %vm5261, %v5180
      %5270 = vst.msk [vmem:[%s412 + $0x61] sm:$0xff] %vm5261, %v5182
      %5271 = vst.msk [vmem:[%s412 + $0x69] sm:$0xff] %vm5261, %v5184
      %5272 = vst.msk [vmem:[%s412 + $0x79] sm:$0xff] %vm5261, %v5186
      %5273 = vst.msk [vmem:[%s412 + $0x81] sm:$0xff] %vm5261, %v5188
      %5274 = vst.msk [vmem:[%s412 + $0x91] sm:$0xff] %vm5261, %v5190
      %5275 = vst.msk [vmem:[%s412 + $0x99] sm:$0xff] %vm5261, %v5192
      %5276 = vst.msk [vmem:[%s412 + $0xa9] sm:$0xff] %vm5261, %v5194
      %5277 = vst.msk [vmem:[%s412 + $0xb1] sm:$0xff] %vm5261, %v5196
      %5278 = vst.msk [vmem:[%s412 + $0xc1] sm:$0xff] %vm5261, %v5198
      %5279 = vst.msk [vmem:[%s412 + $0xc9] sm:$0xff] %vm5261, %v5200
      %5280 = vst.msk [vmem:[%s412 + $0xd9] sm:$0xff] %vm5261, %v5202
      %5281 = vst.msk [vmem:[%s412 + $0xe1] sm:$0xff] %vm5261, %v5204
      %5282 = vst.msk [vmem:[%s412 + $0xf1] sm:$0xff] %vm5261, %v5206
      %5283 = vst.msk [vmem:[%s412 + $0xf9] sm:$0xff] %vm5261, %v5208
      %5284 = vst.msk [vmem:[%s412 + $0x109] sm:$0xff] %vm5261, %v5210
      %5285 = vst.msk [vmem:[%s412 + $0x111] sm:$0xff] %vm5261, %v5212
      %5286 = vst.msk [vmem:[%s412 + $0x121] sm:$0xff] %vm5261, %v5214
      %5287 = vst.msk [vmem:[%s412 + $0x129] sm:$0xff] %vm5261, %v5216
      %5288 = vst.msk [vmem:[%s412 + $0x139] sm:$0xff] %vm5261, %v5218
      %5289 = vst.msk [vmem:[%s412 + $0x141] sm:$0xff] %vm5261, %v5220
      %5290 = vst.msk [vmem:[%s412 + $0x151] sm:$0xff] %vm5261, %v5222
      %5291 = vst.msk [vmem:[%s412 + $0x159] sm:$0xff] %vm5261, %v5224
      %5292 = vst.msk [vmem:[%s412 + $0x169] sm:$0xff] %vm5261, %v5226
      %5293 = vst.msk [vmem:[%s412 + $0x171] sm:$0xff] %vm5261, %v5228
      %v5294 = vld [vmem:[#allocation2] sm:$0xff]
      %v5295 = vld [vmem:[#allocation2 + $0x8] sm:$0xff]
      %v5296 = vld [vmem:[#allocation2 + $0x10] sm:$0x3]
      %v5297 = vld [vmem:[#allocation2 + $0x18] sm:$0xff]
      %v5298 = vld [vmem:[#allocation2 + $0x20] sm:$0xff]
      %v5299 = vld [vmem:[#allocation2 + $0x28] sm:$0x3]
      %v5300 = vld [vmem:[#allocation2 + $0x30] sm:$0xff]
      %v5301 = vld [vmem:[#allocation2 + $0x38] sm:$0xff]
      %v5302 = vld [vmem:[#allocation2 + $0x40] sm:$0x3]
      %v5303 = vld [vmem:[#allocation2 + $0x48] sm:$0xff]
      %v5304 = vld [vmem:[#allocation2 + $0x50] sm:$0xff]
      %v5305 = vld [vmem:[#allocation2 + $0x58] sm:$0x3]
      %v5306 = vld [vmem:[#allocation2 + $0x60] sm:$0xff]
      %v5307 = vld [vmem:[#allocation2 + $0x68] sm:$0xff]
      %v5308 = vld [vmem:[#allocation2 + $0x70] sm:$0x3]
      %v5309 = vld [vmem:[#allocation2 + $0x78] sm:$0xff]
      %v5310 = vld [vmem:[#allocation2 + $0x80] sm:$0xff]
      %v5311 = vld [vmem:[#allocation2 + $0x88] sm:$0x3]
      %v5312 = vld [vmem:[#allocation2 + $0x90] sm:$0xff]
      %v5313 = vld [vmem:[#allocation2 + $0x98] sm:$0xff]
      %v5314 = vld [vmem:[#allocation2 + $0xa0] sm:$0x3]
      %v5315 = vld [vmem:[#allocation2 + $0xa8] sm:$0xff]
      %v5316 = vld [vmem:[#allocation2 + $0xb0] sm:$0xff]
      %v5317 = vld [vmem:[#allocation2 + $0xb8] sm:$0x3]
      %v5318 = vld [vmem:[#allocation2 + $0xc0] sm:$0xff]
      %v5319 = vld [vmem:[#allocation2 + $0xc8] sm:$0xff]
      %v5320 = vld [vmem:[#allocation2 + $0xd0] sm:$0x3]
      %v5321 = vld [vmem:[#allocation2 + $0xd8] sm:$0xff]
      %v5322 = vld [vmem:[#allocation2 + $0xe0] sm:$0xff]
      %v5323 = vld [vmem:[#allocation2 + $0xe8] sm:$0x3]
      %v5324 = vld [vmem:[#allocation2 + $0xf0] sm:$0xff]
      %v5325 = vld [vmem:[#allocation2 + $0xf8] sm:$0xff]
      %v5326 = vld [vmem:[#allocation2 + $0x100] sm:$0x3]
      %v5327 = vld [vmem:[#allocation2 + $0x108] sm:$0xff]
      %v5328 = vld [vmem:[#allocation2 + $0x110] sm:$0xff]
      %v5329 = vld [vmem:[#allocation2 + $0x118] sm:$0x3]
      %v5330 = vld [vmem:[#allocation2 + $0x120] sm:$0xff]
      %v5331 = vld [vmem:[#allocation2 + $0x128] sm:$0xff]
      %v5332 = vld [vmem:[#allocation2 + $0x130] sm:$0x3]
      %v5333 = vld [vmem:[#allocation2 + $0x138] sm:$0xff]
      %v5334 = vld [vmem:[#allocation2 + $0x140] sm:$0xff]
      %v5335 = vld [vmem:[#allocation2 + $0x148] sm:$0x3]
      %v5336 = vld [vmem:[#allocation2 + $0x150] sm:$0xff]
      %v5337 = vld [vmem:[#allocation2 + $0x158] sm:$0xff]
      %v5338 = vld [vmem:[#allocation2 + $0x160] sm:$0x3]
      %v5339 = vld [vmem:[#allocation2 + $0x168] sm:$0xff]
      %v5340 = vld [vmem:[#allocation2 + $0x170] sm:$0xff]
      %v5341 = vld [vmem:[#allocation2 + $0x178] sm:$0x3]
      %v5342 = vld [vmem:[#allocation2 + $0x180] sm:$0xff]
      %v5343 = vld [vmem:[#allocation2 + $0x188] sm:$0xff]
      %v5344 = vld [vmem:[#allocation2 + $0x190] sm:$0x3]
      %v5345 = vld [vmem:[#allocation2 + $0x198] sm:$0xff]
      %v5346 = vld [vmem:[#allocation2 + $0x1a0] sm:$0xff]
      %v5347 = vld [vmem:[#allocation2 + $0x1a8] sm:$0x3]
      %v5348 = vpack.c.bf16 %v5294, %v5294
      %v5349 = vpack.c.bf16 %v5295, %v5295
      %v5350 = vpack.c.bf16 %v5296, %v5296
      %v5351 = vpack.c.bf16 %v5297, %v5297
      %v5352 = vpack.c.bf16 %v5298, %v5298
      %v5353 = vpack.c.bf16 %v5299, %v5299
      %v5354 = vpack.c.bf16 %v5300, %v5300
      %v5355 = vpack.c.bf16 %v5301, %v5301
      %v5356 = vpack.c.bf16 %v5302, %v5302
      %v5357 = vpack.c.bf16 %v5303, %v5303
      %v5358 = vpack.c.bf16 %v5304, %v5304
      %v5359 = vpack.c.bf16 %v5305, %v5305
      %v5360 = vpack.c.bf16 %v5306, %v5306
      %v5361 = vpack.c.bf16 %v5307, %v5307
      %v5362 = vpack.c.bf16 %v5308, %v5308
      %v5363 = vpack.c.bf16 %v5309, %v5309
      %v5364 = vpack.c.bf16 %v5310, %v5310
      %v5365 = vpack.c.bf16 %v5311, %v5311
      %v5366 = vpack.c.bf16 %v5312, %v5312
      %v5367 = vpack.c.bf16 %v5313, %v5313
      %v5368 = vpack.c.bf16 %v5314, %v5314
      %v5369 = vpack.c.bf16 %v5315, %v5315
      %v5370 = vpack.c.bf16 %v5316, %v5316
      %v5371 = vpack.c.bf16 %v5317, %v5317
      %v5372 = vpack.c.bf16 %v5318, %v5318
      %v5373 = vpack.c.bf16 %v5319, %v5319
      %v5374 = vpack.c.bf16 %v5320, %v5320
      %v5375 = vpack.c.bf16 %v5321, %v5321
      %v5376 = vpack.c.bf16 %v5322, %v5322
      %v5377 = vpack.c.bf16 %v5323, %v5323
      %v5378 = vpack.c.bf16 %v5324, %v5324
      %v5379 = vpack.c.bf16 %v5325, %v5325
      %v5380 = vpack.c.bf16 %v5326, %v5326
      %v5381 = vpack.c.bf16 %v5327, %v5327
      %v5382 = vpack.c.bf16 %v5328, %v5328
      %v5383 = vpack.c.bf16 %v5329, %v5329
      %v5384 = vpack.c.bf16 %v5330, %v5330
      %v5385 = vpack.c.bf16 %v5331, %v5331
      %v5386 = vpack.c.bf16 %v5332, %v5332
      %v5387 = vpack.c.bf16 %v5333, %v5333
      %v5388 = vpack.c.bf16 %v5334, %v5334
      %v5389 = vpack.c.bf16 %v5335, %v5335
      %v5390 = vpack.c.bf16 %v5336, %v5336
      %v5391 = vpack.c.bf16 %v5337, %v5337
      %v5392 = vpack.c.bf16 %v5338, %v5338
      %v5393 = vpack.c.bf16 %v5339, %v5339
      %v5394 = vpack.c.bf16 %v5340, %v5340
      %v5395 = vpack.c.bf16 %v5341, %v5341
      %v5396 = vpack.c.bf16 %v5342, %v5342
      %v5397 = vpack.c.bf16 %v5343, %v5343
      %v5398 = vpack.c.bf16 %v5344, %v5344
      %v5399 = vpack.c.bf16 %v5345, %v5345
      %v5400 = vpack.c.bf16 %v5346, %v5346
      %v5401 = vpack.c.bf16 %v5347, %v5347
      %v5402 = vld [vmem:[%s6] sm:$0xff]
      %v5403 = vld [vmem:[%s6 + $0x8] sm:$0xff]
      %v5404 = vld [vmem:[%s6 + $0x10] sm:$0xff]
      %v5405 = vld [vmem:[%s6 + $0x18] sm:$0xff]
      %v5406 = vld [vmem:[%s6 + $0x20] sm:$0xff]
      %v5407 = vld [vmem:[%s6 + $0x28] sm:$0xff]
      %v5408 = vld [vmem:[%s6 + $0x30] sm:$0xff]
      %v5409 = vld [vmem:[%s6 + $0x38] sm:$0xff]
      %v5410 = vld [vmem:[%s6 + $0x40] sm:$0xff]
      %v5411 = vld [vmem:[%s6 + $0x48] sm:$0xff]
      %v5412 = vld [vmem:[%s6 + $0x50] sm:$0xff]
      %v5413 = vld [vmem:[%s6 + $0x58] sm:$0xff]
      %v5414 = vld [vmem:[%s6 + $0x60] sm:$0xff]
      %v5415 = vld [vmem:[%s6 + $0x68] sm:$0xff]
      %v5416 = vld [vmem:[%s6 + $0x70] sm:$0xff]
      %v5417 = vld [vmem:[%s6 + $0x78] sm:$0xff]
      %v5418 = vld [vmem:[%s6 + $0x80] sm:$0xff]
      %v5419 = vld [vmem:[%s6 + $0x88] sm:$0xff]
      %v5420 = vld [vmem:[%s6 + $0x90] sm:$0xff]
      %v5421 = vld [vmem:[%s6 + $0x98] sm:$0xff]
      %v5422 = vld [vmem:[%s6 + $0xa0] sm:$0xff]
      %v5423 = vld [vmem:[%s6 + $0xa8] sm:$0xff]
      %v5424 = vld [vmem:[%s6 + $0xb0] sm:$0xff]
      %v5425 = vld [vmem:[%s6 + $0xb8] sm:$0xff]
      %v5426 = vld [vmem:[%s6 + $0xc0] sm:$0xff]
      %v5427 = vld [vmem:[%s6 + $0xc8] sm:$0xff]
      %v5428 = vld [vmem:[%s6 + $0xd0] sm:$0xff]
      %v5429 = vld [vmem:[%s6 + $0xd8] sm:$0xff]
      %v5430 = vld [vmem:[%s6 + $0xe0] sm:$0xff]
      %v5431 = vld [vmem:[%s6 + $0xe8] sm:$0xff]
      %v5432 = vld [vmem:[%s6 + $0xf0] sm:$0xff]
      %v5433 = vld [vmem:[%s6 + $0xf8] sm:$0xff]
      %v5434 = vld [vmem:[%s5] sm:$0xf]
      %v5435 = vld [vmem:[%s5 + $0x4] sm:$0xf]
      %v5436 = vld [vmem:[%s5 + $0x8] sm:$0xf]
      %v5437 = vld [vmem:[%s5 + $0xc] sm:$0xf]
      %v5470 = vunpack.c.l.b16 %v5348
      %v5471 = vunpack.c.l.b16 %v5349
      %v5472 = vunpack.c.l.b16 %v5351
      %v5473 = vunpack.c.l.b16 %v5352
      %v5474 = vunpack.c.l.b16 %v5354
      %v5475 = vunpack.c.l.b16 %v5355
      %v5476 = vunpack.c.l.b16 %v5357
      %v5477 = vunpack.c.l.b16 %v5358
      %v5478 = vunpack.c.l.b16 %v5360
      %v5479 = vunpack.c.l.b16 %v5361
      %v5480 = vunpack.c.l.b16 %v5363
      %v5481 = vunpack.c.l.b16 %v5364
      %v5482 = vunpack.c.l.b16 %v5366
      %v5483 = vunpack.c.l.b16 %v5367
      %v5484 = vunpack.c.l.b16 %v5369
      %v5485 = vunpack.c.l.b16 %v5370
      %v5486 = vunpack.c.l.b16 %v5372
      %v5487 = vunpack.c.l.b16 %v5373
      %v5488 = vunpack.c.l.b16 %v5375
      %v5489 = vunpack.c.l.b16 %v5376
      %v5490 = vunpack.c.l.b16 %v5378
      %v5491 = vunpack.c.l.b16 %v5379
      %v5492 = vunpack.c.l.b16 %v5381
      %v5493 = vunpack.c.l.b16 %v5382
      %v5494 = vunpack.c.l.b16 %v5384
      %v5495 = vunpack.c.l.b16 %v5385
      %v5496 = vunpack.c.l.b16 %v5387
      %v5497 = vunpack.c.l.b16 %v5388
      %v5498 = vunpack.c.l.b16 %v5390
      %v5499 = vunpack.c.l.b16 %v5391
      %v5500 = vunpack.c.l.b16 %v5393
      %v5501 = vunpack.c.l.b16 %v5394
      %v5502 = vpack.c.b16 %v5471, %v5470
      %v5503 = vpack.c.b16 %v5473, %v5472
      %v5504 = vpack.c.b16 %v5475, %v5474
      %v5505 = vpack.c.b16 %v5477, %v5476
      %v5506 = vpack.c.b16 %v5479, %v5478
      %v5507 = vpack.c.b16 %v5481, %v5480
      %v5508 = vpack.c.b16 %v5483, %v5482
      %v5509 = vpack.c.b16 %v5485, %v5484
      %v5510 = vpack.c.b16 %v5487, %v5486
      %v5511 = vpack.c.b16 %v5489, %v5488
      %v5512 = vpack.c.b16 %v5491, %v5490
      %v5513 = vpack.c.b16 %v5493, %v5492
      %v5514 = vpack.c.b16 %v5495, %v5494
      %v5515 = vpack.c.b16 %v5497, %v5496
      %v5516 = vpack.c.b16 %v5499, %v5498
      %v5517 = vpack.c.b16 %v5501, %v5500
      %v5522 = vunpack.c.l.b16 %v5434
      %v5523 = vunpack.c.l.b16 %v5435
      %v5524 = vunpack.c.l.b16 %v5436
      %v5525 = vunpack.c.l.b16 %v5437
      %v5526 = vpack.c.b16 %v5523, %v5522
      %v5527 = vpack.c.b16 %v5525, %v5524
      %vm5530 = vcmask 261120
      %v5532 = vsel %vm5530, %v5502, 0
      %v5535 = vsel %vm5530, %v5503, 0
      %v5538 = vsel %vm5530, %v5504, 0
      %v5541 = vsel %vm5530, %v5505, 0
      %v5544 = vsel %vm5530, %v5506, 0
      %v5547 = vsel %vm5530, %v5507, 0
      %v5550 = vsel %vm5530, %v5508, 0
      %v5553 = vsel %vm5530, %v5509, 0
      %v5556 = vsel %vm5530, %v5510, 0
      %v5559 = vsel %vm5530, %v5511, 0
      %v5562 = vsel %vm5530, %v5512, 0
      %v5565 = vsel %vm5530, %v5513, 0
      %v5568 = vsel %vm5530, %v5514, 0
      %v5571 = vsel %vm5530, %v5515, 0
      %v5574 = vsel %vm5530, %v5516, 0
      %v5577 = vsel %vm5530, %v5517, 0
      %5579 = vmatpush.bf16.msra.mxu0 0
      %5580 = vmatpush.bf16.msra.mxu0 0
      %5581 = vmatpush.bf16.msra.mxu0 0
      %5582 = vmatpush.bf16.msra.mxu0 0
      %5583 = vmatpush.bf16.msra.mxu0 0
      %5584 = vmatpush.bf16.msra.mxu0 0
      %5585 = vmatpush.bf16.msra.mxu0 %v5527
      %5586 = vmatpush.bf16.msra.mxu0 %v5526
      %5587 = vmatmul.bf16.gmra.mxu0 %v5532
      %v5588 = vpop.f32.mrf.mxu0
      %v5589 = vadd.f32 0.0, %v5588
      %v5590 = vpop.f32.mrf.mxu0
      %v5591 = vadd.f32 0.0, %v5590
      %5592 = vmatmul.bf16.gmra.mxu0 %v5535
      %v5593 = vpop.f32.mrf.mxu0
      %v5594 = vadd.f32 0.0, %v5593
      %v5595 = vpop.f32.mrf.mxu0
      %v5596 = vadd.f32 0.0, %v5595
      %5597 = vmatmul.bf16.gmra.mxu0 %v5538
      %v5598 = vpop.f32.mrf.mxu0
      %v5599 = vadd.f32 0.0, %v5598
      %v5600 = vpop.f32.mrf.mxu0
      %v5601 = vadd.f32 0.0, %v5600
      %5602 = vmatmul.bf16.gmra.mxu0 %v5541
      %v5603 = vpop.f32.mrf.mxu0
      %v5604 = vadd.f32 0.0, %v5603
      %v5605 = vpop.f32.mrf.mxu0
      %v5606 = vadd.f32 0.0, %v5605
      %5607 = vmatmul.bf16.gmra.mxu0 %v5544
      %v5608 = vpop.f32.mrf.mxu0
      %v5609 = vadd.f32 0.0, %v5608
      %v5610 = vpop.f32.mrf.mxu0
      %v5611 = vadd.f32 0.0, %v5610
      %5612 = vmatmul.bf16.gmra.mxu0 %v5547
      %v5613 = vpop.f32.mrf.mxu0
      %v5614 = vadd.f32 0.0, %v5613
      %v5615 = vpop.f32.mrf.mxu0
      %v5616 = vadd.f32 0.0, %v5615
      %5617 = vmatmul.bf16.gmra.mxu0 %v5550
      %v5618 = vpop.f32.mrf.mxu0
      %v5619 = vadd.f32 0.0, %v5618
      %v5620 = vpop.f32.mrf.mxu0
      %v5621 = vadd.f32 0.0, %v5620
      %5622 = vmatmul.bf16.gmra.mxu0 %v5553
      %v5623 = vpop.f32.mrf.mxu0
      %v5624 = vadd.f32 0.0, %v5623
      %v5625 = vpop.f32.mrf.mxu0
      %v5626 = vadd.f32 0.0, %v5625
      %5627 = vmatmul.bf16.gmra.mxu0 %v5556
      %v5628 = vpop.f32.mrf.mxu0
      %v5629 = vadd.f32 0.0, %v5628
      %v5630 = vpop.f32.mrf.mxu0
      %v5631 = vadd.f32 0.0, %v5630
      %5632 = vmatmul.bf16.gmra.mxu0 %v5559
      %v5633 = vpop.f32.mrf.mxu0
      %v5634 = vadd.f32 0.0, %v5633
      %v5635 = vpop.f32.mrf.mxu0
      %v5636 = vadd.f32 0.0, %v5635
      %5637 = vmatmul.bf16.gmra.mxu0 %v5562
      %v5638 = vpop.f32.mrf.mxu0
      %v5639 = vadd.f32 0.0, %v5638
      %v5640 = vpop.f32.mrf.mxu0
      %v5641 = vadd.f32 0.0, %v5640
      %5642 = vmatmul.bf16.gmra.mxu0 %v5565
      %v5643 = vpop.f32.mrf.mxu0
      %v5644 = vadd.f32 0.0, %v5643
      %v5645 = vpop.f32.mrf.mxu0
      %v5646 = vadd.f32 0.0, %v5645
      %5647 = vmatmul.bf16.gmra.mxu0 %v5568
      %v5648 = vpop.f32.mrf.mxu0
      %v5649 = vadd.f32 0.0, %v5648
      %v5650 = vpop.f32.mrf.mxu0
      %v5651 = vadd.f32 0.0, %v5650
      %5652 = vmatmul.bf16.gmra.mxu0 %v5571
      %v5653 = vpop.f32.mrf.mxu0
      %v5654 = vadd.f32 0.0, %v5653
      %v5655 = vpop.f32.mrf.mxu0
      %v5656 = vadd.f32 0.0, %v5655
      %5657 = vmatmul.bf16.gmra.mxu0 %v5574
      %v5658 = vpop.f32.mrf.mxu0
      %v5659 = vadd.f32 0.0, %v5658
      %v5660 = vpop.f32.mrf.mxu0
      %v5661 = vadd.f32 0.0, %v5660
      %5662 = vmatmul.bf16.gmra.mxu0 %v5577
      %v5663 = vpop.f32.mrf.mxu0
      %v5664 = vadd.f32 0.0, %v5663
      %v5665 = vpop.f32.mrf.mxu0
      %v5666 = vadd.f32 0.0, %v5665
      %5667 = vdwg.mxu0
      %v5668 = vadd.f32 %v5402, %v5589
      %v5669 = vadd.f32 %v5403, %v5591
      %v5670 = vadd.f32 %v5404, %v5594
      %v5671 = vadd.f32 %v5405, %v5596
      %v5672 = vadd.f32 %v5406, %v5599
      %v5673 = vadd.f32 %v5407, %v5601
      %v5674 = vadd.f32 %v5408, %v5604
      %v5675 = vadd.f32 %v5409, %v5606
      %v5676 = vadd.f32 %v5410, %v5609
      %v5677 = vadd.f32 %v5411, %v5611
      %v5678 = vadd.f32 %v5412, %v5614
      %v5679 = vadd.f32 %v5413, %v5616
      %v5680 = vadd.f32 %v5414, %v5619
      %v5681 = vadd.f32 %v5415, %v5621
      %v5682 = vadd.f32 %v5416, %v5624
      %v5683 = vadd.f32 %v5417, %v5626
      %v5684 = vadd.f32 %v5418, %v5629
      %v5685 = vadd.f32 %v5419, %v5631
      %v5686 = vadd.f32 %v5420, %v5634
      %v5687 = vadd.f32 %v5421, %v5636
      %v5688 = vadd.f32 %v5422, %v5639
      %v5689 = vadd.f32 %v5423, %v5641
      %v5690 = vadd.f32 %v5424, %v5644
      %v5691 = vadd.f32 %v5425, %v5646
      %v5692 = vadd.f32 %v5426, %v5649
      %v5693 = vadd.f32 %v5427, %v5651
      %v5694 = vadd.f32 %v5428, %v5654
      %v5695 = vadd.f32 %v5429, %v5656
      %v5696 = vadd.f32 %v5430, %v5659
      %v5697 = vadd.f32 %v5431, %v5661
      %v5698 = vadd.f32 %v5432, %v5664
      %v5699 = vadd.f32 %v5433, %v5666
      %v5701 = vshrl.u32 %v5348, 16
      %v5703 = vrot.slane %v5701, 4
      %v5704 = vshll.u32 %v5348, 16
      %v5706 = vrot.slane %v5704, 5
      %v5707 = vor.u32 %v5703, %v5706
      %v5708 = vrot.slane %v5707, 4
      %v5710 = vshll.u32 %v5349, 16
      %v5712 = vrot.slane %v5710, 5
      %v5713 = vsel %vm842, %v5708, %v5712
      %v5714 = vshrl.u32 %v5349, 16
      %v5716 = vrot.slane %v5714, 4
      %v5717 = vor.u32 %v5716, %v5712
      %v5718 = vrot.slane %v5717, 4
      %v5720 = vshll.u32 %v5350, 16
      %v5722 = vrot.slane %v5720, 5
      %v5723 = vsel %vm842, %v5718, %v5722
      %v5725 = vshrl.u32 %v5351, 16
      %v5727 = vrot.slane %v5725, 4
      %v5728 = vshll.u32 %v5351, 16
      %v5730 = vrot.slane %v5728, 5
      %v5731 = vor.u32 %v5727, %v5730
      %v5732 = vrot.slane %v5731, 4
      %v5734 = vshll.u32 %v5352, 16
      %v5736 = vrot.slane %v5734, 5
      %v5737 = vsel %vm842, %v5732, %v5736
      %v5738 = vshrl.u32 %v5352, 16
      %v5740 = vrot.slane %v5738, 4
      %v5741 = vor.u32 %v5740, %v5736
      %v5742 = vrot.slane %v5741, 4
      %v5744 = vshll.u32 %v5353, 16
      %v5746 = vrot.slane %v5744, 5
      %v5747 = vsel %vm842, %v5742, %v5746
      %v5749 = vshrl.u32 %v5354, 16
      %v5751 = vrot.slane %v5749, 4
      %v5752 = vshll.u32 %v5354, 16
      %v5754 = vrot.slane %v5752, 5
      %v5755 = vor.u32 %v5751, %v5754
      %v5756 = vrot.slane %v5755, 4
      %v5758 = vshll.u32 %v5355, 16
      %v5760 = vrot.slane %v5758, 5
      %v5761 = vsel %vm842, %v5756, %v5760
      %v5762 = vshrl.u32 %v5355, 16
      %v5764 = vrot.slane %v5762, 4
      %v5765 = vor.u32 %v5764, %v5760
      %v5766 = vrot.slane %v5765, 4
      %v5768 = vshll.u32 %v5356, 16
      %v5770 = vrot.slane %v5768, 5
      %v5771 = vsel %vm842, %v5766, %v5770
      %v5773 = vshrl.u32 %v5357, 16
      %v5775 = vrot.slane %v5773, 4
      %v5776 = vshll.u32 %v5357, 16
      %v5778 = vrot.slane %v5776, 5
      %v5779 = vor.u32 %v5775, %v5778
      %v5780 = vrot.slane %v5779, 4
      %v5782 = vshll.u32 %v5358, 16
      %v5784 = vrot.slane %v5782, 5
      %v5785 = vsel %vm842, %v5780, %v5784
      %v5786 = vshrl.u32 %v5358, 16
      %v5788 = vrot.slane %v5786, 4
      %v5789 = vor.u32 %v5788, %v5784
      %v5790 = vrot.slane %v5789, 4
      %v5792 = vshll.u32 %v5359, 16
      %v5794 = vrot.slane %v5792, 5
      %v5795 = vsel %vm842, %v5790, %v5794
      %v5797 = vshrl.u32 %v5360, 16
      %v5799 = vrot.slane %v5797, 4
      %v5800 = vshll.u32 %v5360, 16
      %v5802 = vrot.slane %v5800, 5
      %v5803 = vor.u32 %v5799, %v5802
      %v5804 = vrot.slane %v5803, 4
      %v5806 = vshll.u32 %v5361, 16
      %v5808 = vrot.slane %v5806, 5
      %v5809 = vsel %vm842, %v5804, %v5808
      %v5810 = vshrl.u32 %v5361, 16
      %v5812 = vrot.slane %v5810, 4
      %v5813 = vor.u32 %v5812, %v5808
      %v5814 = vrot.slane %v5813, 4
      %v5816 = vshll.u32 %v5362, 16
      %v5818 = vrot.slane %v5816, 5
      %v5819 = vsel %vm842, %v5814, %v5818
      %v5821 = vshrl.u32 %v5363, 16
      %v5823 = vrot.slane %v5821, 4
      %v5824 = vshll.u32 %v5363, 16
      %v5826 = vrot.slane %v5824, 5
      %v5827 = vor.u32 %v5823, %v5826
      %v5828 = vrot.slane %v5827, 4
      %v5830 = vshll.u32 %v5364, 16
      %v5832 = vrot.slane %v5830, 5
      %v5833 = vsel %vm842, %v5828, %v5832
      %v5834 = vshrl.u32 %v5364, 16
      %v5836 = vrot.slane %v5834, 4
      %v5837 = vor.u32 %v5836, %v5832
      %v5838 = vrot.slane %v5837, 4
      %v5840 = vshll.u32 %v5365, 16
      %v5842 = vrot.slane %v5840, 5
      %v5843 = vsel %vm842, %v5838, %v5842
      %v5845 = vshrl.u32 %v5366, 16
      %v5847 = vrot.slane %v5845, 4
      %v5848 = vshll.u32 %v5366, 16
      %v5850 = vrot.slane %v5848, 5
      %v5851 = vor.u32 %v5847, %v5850
      %v5852 = vrot.slane %v5851, 4
      %v5854 = vshll.u32 %v5367, 16
      %v5856 = vrot.slane %v5854, 5
      %v5857 = vsel %vm842, %v5852, %v5856
      %v5858 = vshrl.u32 %v5367, 16
      %v5860 = vrot.slane %v5858, 4
      %v5861 = vor.u32 %v5860, %v5856
      %v5862 = vrot.slane %v5861, 4
      %v5864 = vshll.u32 %v5368, 16
      %v5866 = vrot.slane %v5864, 5
      %v5867 = vsel %vm842, %v5862, %v5866
      %v5869 = vshrl.u32 %v5369, 16
      %v5871 = vrot.slane %v5869, 4
      %v5872 = vshll.u32 %v5369, 16
      %v5874 = vrot.slane %v5872, 5
      %v5875 = vor.u32 %v5871, %v5874
      %v5876 = vrot.slane %v5875, 4
      %v5878 = vshll.u32 %v5370, 16
      %v5880 = vrot.slane %v5878, 5
      %v5881 = vsel %vm842, %v5876, %v5880
      %v5882 = vshrl.u32 %v5370, 16
      %v5884 = vrot.slane %v5882, 4
      %v5885 = vor.u32 %v5884, %v5880
      %v5886 = vrot.slane %v5885, 4
      %v5888 = vshll.u32 %v5371, 16
      %v5890 = vrot.slane %v5888, 5
      %v5891 = vsel %vm842, %v5886, %v5890
      %v5893 = vshrl.u32 %v5372, 16
      %v5895 = vrot.slane %v5893, 4
      %v5896 = vshll.u32 %v5372, 16
      %v5898 = vrot.slane %v5896, 5
      %v5899 = vor.u32 %v5895, %v5898
      %v5900 = vrot.slane %v5899, 4
      %v5902 = vshll.u32 %v5373, 16
      %v5904 = vrot.slane %v5902, 5
      %v5905 = vsel %vm842, %v5900, %v5904
      %v5906 = vshrl.u32 %v5373, 16
      %v5908 = vrot.slane %v5906, 4
      %v5909 = vor.u32 %v5908, %v5904
      %v5910 = vrot.slane %v5909, 4
      %v5912 = vshll.u32 %v5374, 16
      %v5914 = vrot.slane %v5912, 5
      %v5915 = vsel %vm842, %v5910, %v5914
      %v5917 = vshrl.u32 %v5375, 16
      %v5919 = vrot.slane %v5917, 4
      %v5920 = vshll.u32 %v5375, 16
      %v5922 = vrot.slane %v5920, 5
      %v5923 = vor.u32 %v5919, %v5922
      %v5924 = vrot.slane %v5923, 4
      %v5926 = vshll.u32 %v5376, 16
      %v5928 = vrot.slane %v5926, 5
      %v5929 = vsel %vm842, %v5924, %v5928
      %v5930 = vshrl.u32 %v5376, 16
      %v5932 = vrot.slane %v5930, 4
      %v5933 = vor.u32 %v5932, %v5928
      %v5934 = vrot.slane %v5933, 4
      %v5936 = vshll.u32 %v5377, 16
      %v5938 = vrot.slane %v5936, 5
      %v5939 = vsel %vm842, %v5934, %v5938
      %v5941 = vshrl.u32 %v5378, 16
      %v5943 = vrot.slane %v5941, 4
      %v5944 = vshll.u32 %v5378, 16
      %v5946 = vrot.slane %v5944, 5
      %v5947 = vor.u32 %v5943, %v5946
      %v5948 = vrot.slane %v5947, 4
      %v5950 = vshll.u32 %v5379, 16
      %v5952 = vrot.slane %v5950, 5
      %v5953 = vsel %vm842, %v5948, %v5952
      %v5954 = vshrl.u32 %v5379, 16
      %v5956 = vrot.slane %v5954, 4
      %v5957 = vor.u32 %v5956, %v5952
      %v5958 = vrot.slane %v5957, 4
      %v5960 = vshll.u32 %v5380, 16
      %v5962 = vrot.slane %v5960, 5
      %v5963 = vsel %vm842, %v5958, %v5962
      %v5965 = vshrl.u32 %v5381, 16
      %v5967 = vrot.slane %v5965, 4
      %v5968 = vshll.u32 %v5381, 16
      %v5970 = vrot.slane %v5968, 5
      %v5971 = vor.u32 %v5967, %v5970
      %v5972 = vrot.slane %v5971, 4
      %v5974 = vshll.u32 %v5382, 16
      %v5976 = vrot.slane %v5974, 5
      %v5977 = vsel %vm842, %v5972, %v5976
      %v5978 = vshrl.u32 %v5382, 16
      %v5980 = vrot.slane %v5978, 4
      %v5981 = vor.u32 %v5980, %v5976
      %v5982 = vrot.slane %v5981, 4
      %v5984 = vshll.u32 %v5383, 16
      %v5986 = vrot.slane %v5984, 5
      %v5987 = vsel %vm842, %v5982, %v5986
      %v5989 = vshrl.u32 %v5384, 16
      %v5991 = vrot.slane %v5989, 4
      %v5992 = vshll.u32 %v5384, 16
      %v5994 = vrot.slane %v5992, 5
      %v5995 = vor.u32 %v5991, %v5994
      %v5996 = vrot.slane %v5995, 4
      %v5998 = vshll.u32 %v5385, 16
      %v6000 = vrot.slane %v5998, 5
      %v6001 = vsel %vm842, %v5996, %v6000
      %v6002 = vshrl.u32 %v5385, 16
      %v6004 = vrot.slane %v6002, 4
      %v6005 = vor.u32 %v6004, %v6000
      %v6006 = vrot.slane %v6005, 4
      %v6008 = vshll.u32 %v5386, 16
      %v6010 = vrot.slane %v6008, 5
      %v6011 = vsel %vm842, %v6006, %v6010
      %v6013 = vshrl.u32 %v5387, 16
      %v6015 = vrot.slane %v6013, 4
      %v6016 = vshll.u32 %v5387, 16
      %v6018 = vrot.slane %v6016, 5
      %v6019 = vor.u32 %v6015, %v6018
      %v6020 = vrot.slane %v6019, 4
      %v6022 = vshll.u32 %v5388, 16
      %v6024 = vrot.slane %v6022, 5
      %v6025 = vsel %vm842, %v6020, %v6024
      %v6026 = vshrl.u32 %v5388, 16
      %v6028 = vrot.slane %v6026, 4
      %v6029 = vor.u32 %v6028, %v6024
      %v6030 = vrot.slane %v6029, 4
      %v6032 = vshll.u32 %v5389, 16
      %v6034 = vrot.slane %v6032, 5
      %v6035 = vsel %vm842, %v6030, %v6034
      %v6037 = vshrl.u32 %v5390, 16
      %v6039 = vrot.slane %v6037, 4
      %v6040 = vshll.u32 %v5390, 16
      %v6042 = vrot.slane %v6040, 5
      %v6043 = vor.u32 %v6039, %v6042
      %v6044 = vrot.slane %v6043, 4
      %v6046 = vshll.u32 %v5391, 16
      %v6048 = vrot.slane %v6046, 5
      %v6049 = vsel %vm842, %v6044, %v6048
      %v6050 = vshrl.u32 %v5391, 16
      %v6052 = vrot.slane %v6050, 4
      %v6053 = vor.u32 %v6052, %v6048
      %v6054 = vrot.slane %v6053, 4
      %v6056 = vshll.u32 %v5392, 16
      %v6058 = vrot.slane %v6056, 5
      %v6059 = vsel %vm842, %v6054, %v6058
      %v6061 = vshrl.u32 %v5393, 16
      %v6063 = vrot.slane %v6061, 4
      %v6064 = vshll.u32 %v5393, 16
      %v6066 = vrot.slane %v6064, 5
      %v6067 = vor.u32 %v6063, %v6066
      %v6068 = vrot.slane %v6067, 4
      %v6070 = vshll.u32 %v5394, 16
      %v6072 = vrot.slane %v6070, 5
      %v6073 = vsel %vm842, %v6068, %v6072
      %v6074 = vshrl.u32 %v5394, 16
      %v6076 = vrot.slane %v6074, 4
      %v6077 = vor.u32 %v6076, %v6072
      %v6078 = vrot.slane %v6077, 4
      %v6080 = vshll.u32 %v5395, 16
      %v6082 = vrot.slane %v6080, 5
      %v6083 = vsel %vm842, %v6078, %v6082
      %s6084 = scalar_lea.vmem %s5, 16
      %v6085 = vld [vmem:[%s6084] sm:$0xf]
      %v6086 = vld [vmem:[%s6084 + $0x4] sm:$0xf]
      %v6087 = vld [vmem:[%s6084 + $0x8] sm:$0xf]
      %v6088 = vld [vmem:[%s6084 + $0xc] sm:$0xf]
      %v6089 = vunpack.c.l.b16 %v5713
      %v6090 = vunpack.c.l.b16 %v5723
      %v6091 = vunpack.c.l.b16 %v5737
      %v6092 = vunpack.c.l.b16 %v5747
      %v6093 = vunpack.c.l.b16 %v5761
      %v6094 = vunpack.c.l.b16 %v5771
      %v6095 = vunpack.c.l.b16 %v5785
      %v6096 = vunpack.c.l.b16 %v5795
      %v6097 = vunpack.c.l.b16 %v5809
      %v6098 = vunpack.c.l.b16 %v5819
      %v6099 = vunpack.c.l.b16 %v5833
      %v6100 = vunpack.c.l.b16 %v5843
      %v6101 = vunpack.c.l.b16 %v5857
      %v6102 = vunpack.c.l.b16 %v5867
      %v6103 = vunpack.c.l.b16 %v5881
      %v6104 = vunpack.c.l.b16 %v5891
      %v6105 = vunpack.c.l.b16 %v5905
      %v6106 = vunpack.c.l.b16 %v5915
      %v6107 = vunpack.c.l.b16 %v5929
      %v6108 = vunpack.c.l.b16 %v5939
      %v6109 = vunpack.c.l.b16 %v5953
      %v6110 = vunpack.c.l.b16 %v5963
      %v6111 = vunpack.c.l.b16 %v5977
      %v6112 = vunpack.c.l.b16 %v5987
      %v6113 = vunpack.c.l.b16 %v6001
      %v6114 = vunpack.c.l.b16 %v6011
      %v6115 = vunpack.c.l.b16 %v6025
      %v6116 = vunpack.c.l.b16 %v6035
      %v6117 = vunpack.c.l.b16 %v6049
      %v6118 = vunpack.c.l.b16 %v6059
      %v6119 = vunpack.c.l.b16 %v6073
      %v6120 = vunpack.c.l.b16 %v6083
      %v6121 = vpack.c.b16 %v6090, %v6089
      %v6122 = vpack.c.b16 %v6092, %v6091
      %v6123 = vpack.c.b16 %v6094, %v6093
      %v6124 = vpack.c.b16 %v6096, %v6095
      %v6125 = vpack.c.b16 %v6098, %v6097
      %v6126 = vpack.c.b16 %v6100, %v6099
      %v6127 = vpack.c.b16 %v6102, %v6101
      %v6128 = vpack.c.b16 %v6104, %v6103
      %v6129 = vpack.c.b16 %v6106, %v6105
      %v6130 = vpack.c.b16 %v6108, %v6107
      %v6131 = vpack.c.b16 %v6110, %v6109
      %v6132 = vpack.c.b16 %v6112, %v6111
      %v6133 = vpack.c.b16 %v6114, %v6113
      %v6134 = vpack.c.b16 %v6116, %v6115
      %v6135 = vpack.c.b16 %v6118, %v6117
      %v6136 = vpack.c.b16 %v6120, %v6119
      %v6141 = vunpack.c.l.b16 %v6085
      %v6142 = vunpack.c.l.b16 %v6086
      %v6143 = vunpack.c.l.b16 %v6087
      %v6144 = vunpack.c.l.b16 %v6088
      %v6145 = vpack.c.b16 %v6142, %v6141
      %v6146 = vpack.c.b16 %v6144, %v6143
      %v6150 = vsel %vm5530, %v6121, 0
      %v6153 = vsel %vm5530, %v6122, 0
      %v6156 = vsel %vm5530, %v6123, 0
      %v6159 = vsel %vm5530, %v6124, 0
      %v6162 = vsel %vm5530, %v6125, 0
      %v6165 = vsel %vm5530, %v6126, 0
      %v6168 = vsel %vm5530, %v6127, 0
      %v6171 = vsel %vm5530, %v6128, 0
      %v6174 = vsel %vm5530, %v6129, 0
      %v6177 = vsel %vm5530, %v6130, 0
      %v6180 = vsel %vm5530, %v6131, 0
      %v6183 = vsel %vm5530, %v6132, 0
      %v6186 = vsel %vm5530, %v6133, 0
      %v6189 = vsel %vm5530, %v6134, 0
      %v6192 = vsel %vm5530, %v6135, 0
      %v6195 = vsel %vm5530, %v6136, 0
      %6197 = vmatpush.bf16.msra.mxu0 0
      %6198 = vmatpush.bf16.msra.mxu0 0
      %6199 = vmatpush.bf16.msra.mxu0 0
      %6200 = vmatpush.bf16.msra.mxu0 0
      %6201 = vmatpush.bf16.msra.mxu0 0
      %6202 = vmatpush.bf16.msra.mxu0 0
      %6203 = vmatpush.bf16.msra.mxu0 %v6146
      %6204 = vmatpush.bf16.msra.mxu0 %v6145
      %6205 = vmatmul.bf16.gmra.mxu0 %v6150
      %v6206 = vpop.f32.mrf.mxu0
      %v6207 = vadd.f32 0.0, %v6206
      %v6208 = vpop.f32.mrf.mxu0
      %v6209 = vadd.f32 0.0, %v6208
      %6210 = vmatmul.bf16.gmra.mxu0 %v6153
      %v6211 = vpop.f32.mrf.mxu0
      %v6212 = vadd.f32 0.0, %v6211
      %v6213 = vpop.f32.mrf.mxu0
      %v6214 = vadd.f32 0.0, %v6213
      %6215 = vmatmul.bf16.gmra.mxu0 %v6156
      %v6216 = vpop.f32.mrf.mxu0
      %v6217 = vadd.f32 0.0, %v6216
      %v6218 = vpop.f32.mrf.mxu0
      %v6219 = vadd.f32 0.0, %v6218
      %6220 = vmatmul.bf16.gmra.mxu0 %v6159
      %v6221 = vpop.f32.mrf.mxu0
      %v6222 = vadd.f32 0.0, %v6221
      %v6223 = vpop.f32.mrf.mxu0
      %v6224 = vadd.f32 0.0, %v6223
      %6225 = vmatmul.bf16.gmra.mxu0 %v6162
      %v6226 = vpop.f32.mrf.mxu0
      %v6227 = vadd.f32 0.0, %v6226
      %v6228 = vpop.f32.mrf.mxu0
      %v6229 = vadd.f32 0.0, %v6228
      %6230 = vmatmul.bf16.gmra.mxu0 %v6165
      %v6231 = vpop.f32.mrf.mxu0
      %v6232 = vadd.f32 0.0, %v6231
      %v6233 = vpop.f32.mrf.mxu0
      %v6234 = vadd.f32 0.0, %v6233
      %6235 = vmatmul.bf16.gmra.mxu0 %v6168
      %v6236 = vpop.f32.mrf.mxu0
      %v6237 = vadd.f32 0.0, %v6236
      %v6238 = vpop.f32.mrf.mxu0
      %v6239 = vadd.f32 0.0, %v6238
      %6240 = vmatmul.bf16.gmra.mxu0 %v6171
      %v6241 = vpop.f32.mrf.mxu0
      %v6242 = vadd.f32 0.0, %v6241
      %v6243 = vpop.f32.mrf.mxu0
      %v6244 = vadd.f32 0.0, %v6243
      %6245 = vmatmul.bf16.gmra.mxu0 %v6174
      %v6246 = vpop.f32.mrf.mxu0
      %v6247 = vadd.f32 0.0, %v6246
      %v6248 = vpop.f32.mrf.mxu0
      %v6249 = vadd.f32 0.0, %v6248
      %6250 = vmatmul.bf16.gmra.mxu0 %v6177
      %v6251 = vpop.f32.mrf.mxu0
      %v6252 = vadd.f32 0.0, %v6251
      %v6253 = vpop.f32.mrf.mxu0
      %v6254 = vadd.f32 0.0, %v6253
      %6255 = vmatmul.bf16.gmra.mxu0 %v6180
      %v6256 = vpop.f32.mrf.mxu0
      %v6257 = vadd.f32 0.0, %v6256
      %v6258 = vpop.f32.mrf.mxu0
      %v6259 = vadd.f32 0.0, %v6258
      %6260 = vmatmul.bf16.gmra.mxu0 %v6183
      %v6261 = vpop.f32.mrf.mxu0
      %v6262 = vadd.f32 0.0, %v6261
      %v6263 = vpop.f32.mrf.mxu0
      %v6264 = vadd.f32 0.0, %v6263
      %6265 = vmatmul.bf16.gmra.mxu0 %v6186
      %v6266 = vpop.f32.mrf.mxu0
      %v6267 = vadd.f32 0.0, %v6266
      %v6268 = vpop.f32.mrf.mxu0
      %v6269 = vadd.f32 0.0, %v6268
      %6270 = vmatmul.bf16.gmra.mxu0 %v6189
      %v6271 = vpop.f32.mrf.mxu0
      %v6272 = vadd.f32 0.0, %v6271
      %v6273 = vpop.f32.mrf.mxu0
      %v6274 = vadd.f32 0.0, %v6273
      %6275 = vmatmul.bf16.gmra.mxu0 %v6192
      %v6276 = vpop.f32.mrf.mxu0
      %v6277 = vadd.f32 0.0, %v6276
      %v6278 = vpop.f32.mrf.mxu0
      %v6279 = vadd.f32 0.0, %v6278
      %6280 = vmatmul.bf16.gmra.mxu0 %v6195
      %v6281 = vpop.f32.mrf.mxu0
      %v6282 = vadd.f32 0.0, %v6281
      %v6283 = vpop.f32.mrf.mxu0
      %v6284 = vadd.f32 0.0, %v6283
      %6285 = vdwg.mxu0
      %v6286 = vadd.f32 %v5668, %v6207
      %v6287 = vadd.f32 %v5669, %v6209
      %v6288 = vadd.f32 %v5670, %v6212
      %v6289 = vadd.f32 %v5671, %v6214
      %v6290 = vadd.f32 %v5672, %v6217
      %v6291 = vadd.f32 %v5673, %v6219
      %v6292 = vadd.f32 %v5674, %v6222
      %v6293 = vadd.f32 %v5675, %v6224
      %v6294 = vadd.f32 %v5676, %v6227
      %v6295 = vadd.f32 %v5677, %v6229
      %v6296 = vadd.f32 %v5678, %v6232
      %v6297 = vadd.f32 %v5679, %v6234
      %v6298 = vadd.f32 %v5680, %v6237
      %v6299 = vadd.f32 %v5681, %v6239
      %v6300 = vadd.f32 %v5682, %v6242
      %v6301 = vadd.f32 %v5683, %v6244
      %v6302 = vadd.f32 %v5684, %v6247
      %v6303 = vadd.f32 %v5685, %v6249
      %v6304 = vadd.f32 %v5686, %v6252
      %v6305 = vadd.f32 %v5687, %v6254
      %v6306 = vadd.f32 %v5688, %v6257
      %v6307 = vadd.f32 %v5689, %v6259
      %v6308 = vadd.f32 %v5690, %v6262
      %v6309 = vadd.f32 %v5691, %v6264
      %v6310 = vadd.f32 %v5692, %v6267
      %v6311 = vadd.f32 %v5693, %v6269
      %v6312 = vadd.f32 %v5694, %v6272
      %v6313 = vadd.f32 %v5695, %v6274
      %v6314 = vadd.f32 %v5696, %v6277
      %v6315 = vadd.f32 %v5697, %v6279
      %v6316 = vadd.f32 %v5698, %v6282
      %v6317 = vadd.f32 %v5699, %v6284
      %v6334 = vrot.slane %v5348, 5
      %v6335 = vrot.slane %v6334, 4
      %v6336 = vrot.slane %v5349, 5
      %v6337 = vsel %vm1467, %v6335, %v6336
      %v6338 = vrot.slane %v6336, 4
      %v6339 = vrot.slane %v5350, 5
      %v6340 = vsel %vm1467, %v6338, %v6339
      %v6341 = vrot.slane %v5351, 5
      %v6342 = vrot.slane %v6341, 4
      %v6343 = vrot.slane %v5352, 5
      %v6344 = vsel %vm1467, %v6342, %v6343
      %v6345 = vrot.slane %v6343, 4
      %v6346 = vrot.slane %v5353, 5
      %v6347 = vsel %vm1467, %v6345, %v6346
      %v6348 = vrot.slane %v5354, 5
      %v6349 = vrot.slane %v6348, 4
      %v6350 = vrot.slane %v5355, 5
      %v6351 = vsel %vm1467, %v6349, %v6350
      %v6352 = vrot.slane %v6350, 4
      %v6353 = vrot.slane %v5356, 5
      %v6354 = vsel %vm1467, %v6352, %v6353
      %v6355 = vrot.slane %v5357, 5
      %v6356 = vrot.slane %v6355, 4
      %v6357 = vrot.slane %v5358, 5
      %v6358 = vsel %vm1467, %v6356, %v6357
      %v6359 = vrot.slane %v6357, 4
      %v6360 = vrot.slane %v5359, 5
      %v6361 = vsel %vm1467, %v6359, %v6360
      %v6362 = vrot.slane %v5360, 5
      %v6363 = vrot.slane %v6362, 4
      %v6364 = vrot.slane %v5361, 5
      %v6365 = vsel %vm1467, %v6363, %v6364
      %v6366 = vrot.slane %v6364, 4
      %v6367 = vrot.slane %v5362, 5
      %v6368 = vsel %vm1467, %v6366, %v6367
      %v6369 = vrot.slane %v5363, 5
      %v6370 = vrot.slane %v6369, 4
      %v6371 = vrot.slane %v5364, 5
      %v6372 = vsel %vm1467, %v6370, %v6371
      %v6373 = vrot.slane %v6371, 4
      %v6374 = vrot.slane %v5365, 5
      %v6375 = vsel %vm1467, %v6373, %v6374
      %v6376 = vrot.slane %v5366, 5
      %v6377 = vrot.slane %v6376, 4
      %v6378 = vrot.slane %v5367, 5
      %v6379 = vsel %vm1467, %v6377, %v6378
      %v6380 = vrot.slane %v6378, 4
      %v6381 = vrot.slane %v5368, 5
      %v6382 = vsel %vm1467, %v6380, %v6381
      %v6383 = vrot.slane %v5369, 5
      %v6384 = vrot.slane %v6383, 4
      %v6385 = vrot.slane %v5370, 5
      %v6386 = vsel %vm1467, %v6384, %v6385
      %v6387 = vrot.slane %v6385, 4
      %v6388 = vrot.slane %v5371, 5
      %v6389 = vsel %vm1467, %v6387, %v6388
      %v6390 = vrot.slane %v5372, 5
      %v6391 = vrot.slane %v6390, 4
      %v6392 = vrot.slane %v5373, 5
      %v6393 = vsel %vm1467, %v6391, %v6392
      %v6394 = vrot.slane %v6392, 4
      %v6395 = vrot.slane %v5374, 5
      %v6396 = vsel %vm1467, %v6394, %v6395
      %v6397 = vrot.slane %v5375, 5
      %v6398 = vrot.slane %v6397, 4
      %v6399 = vrot.slane %v5376, 5
      %v6400 = vsel %vm1467, %v6398, %v6399
      %v6401 = vrot.slane %v6399, 4
      %v6402 = vrot.slane %v5377, 5
      %v6403 = vsel %vm1467, %v6401, %v6402
      %v6404 = vrot.slane %v5378, 5
      %v6405 = vrot.slane %v6404, 4
      %v6406 = vrot.slane %v5379, 5
      %v6407 = vsel %vm1467, %v6405, %v6406
      %v6408 = vrot.slane %v6406, 4
      %v6409 = vrot.slane %v5380, 5
      %v6410 = vsel %vm1467, %v6408, %v6409
      %v6411 = vrot.slane %v5381, 5
      %v6412 = vrot.slane %v6411, 4
      %v6413 = vrot.slane %v5382, 5
      %v6414 = vsel %vm1467, %v6412, %v6413
      %v6415 = vrot.slane %v6413, 4
      %v6416 = vrot.slane %v5383, 5
      %v6417 = vsel %vm1467, %v6415, %v6416
      %v6418 = vrot.slane %v5384, 5
      %v6419 = vrot.slane %v6418, 4
      %v6420 = vrot.slane %v5385, 5
      %v6421 = vsel %vm1467, %v6419, %v6420
      %v6422 = vrot.slane %v6420, 4
      %v6423 = vrot.slane %v5386, 5
      %v6424 = vsel %vm1467, %v6422, %v6423
      %v6425 = vrot.slane %v5387, 5
      %v6426 = vrot.slane %v6425, 4
      %v6427 = vrot.slane %v5388, 5
      %v6428 = vsel %vm1467, %v6426, %v6427
      %v6429 = vrot.slane %v6427, 4
      %v6430 = vrot.slane %v5389, 5
      %v6431 = vsel %vm1467, %v6429, %v6430
      %v6432 = vrot.slane %v5390, 5
      %v6433 = vrot.slane %v6432, 4
      %v6434 = vrot.slane %v5391, 5
      %v6435 = vsel %vm1467, %v6433, %v6434
      %v6436 = vrot.slane %v6434, 4
      %v6437 = vrot.slane %v5392, 5
      %v6438 = vsel %vm1467, %v6436, %v6437
      %v6439 = vrot.slane %v5393, 5
      %v6440 = vrot.slane %v6439, 4
      %v6441 = vrot.slane %v5394, 5
      %v6442 = vsel %vm1467, %v6440, %v6441
      %v6443 = vrot.slane %v6441, 4
      %v6444 = vrot.slane %v5395, 5
      %v6445 = vsel %vm1467, %v6443, %v6444
      %s6446 = scalar_lea.vmem %s5, 32
      %v6447 = vld [vmem:[%s6446] sm:$0xf]
      %v6448 = vld [vmem:[%s6446 + $0x4] sm:$0xf]
      %v6449 = vld [vmem:[%s6446 + $0x8] sm:$0xf]
      %v6450 = vld [vmem:[%s6446 + $0xc] sm:$0xf]
      %v6451 = vunpack.c.l.b16 %v6337
      %v6452 = vunpack.c.l.b16 %v6340
      %v6453 = vunpack.c.l.b16 %v6344
      %v6454 = vunpack.c.l.b16 %v6347
      %v6455 = vunpack.c.l.b16 %v6351
      %v6456 = vunpack.c.l.b16 %v6354
      %v6457 = vunpack.c.l.b16 %v6358
      %v6458 = vunpack.c.l.b16 %v6361
      %v6459 = vunpack.c.l.b16 %v6365
      %v6460 = vunpack.c.l.b16 %v6368
      %v6461 = vunpack.c.l.b16 %v6372
      %v6462 = vunpack.c.l.b16 %v6375
      %v6463 = vunpack.c.l.b16 %v6379
      %v6464 = vunpack.c.l.b16 %v6382
      %v6465 = vunpack.c.l.b16 %v6386
      %v6466 = vunpack.c.l.b16 %v6389
      %v6467 = vunpack.c.l.b16 %v6393
      %v6468 = vunpack.c.l.b16 %v6396
      %v6469 = vunpack.c.l.b16 %v6400
      %v6470 = vunpack.c.l.b16 %v6403
      %v6471 = vunpack.c.l.b16 %v6407
      %v6472 = vunpack.c.l.b16 %v6410
      %v6473 = vunpack.c.l.b16 %v6414
      %v6474 = vunpack.c.l.b16 %v6417
      %v6475 = vunpack.c.l.b16 %v6421
      %v6476 = vunpack.c.l.b16 %v6424
      %v6477 = vunpack.c.l.b16 %v6428
      %v6478 = vunpack.c.l.b16 %v6431
      %v6479 = vunpack.c.l.b16 %v6435
      %v6480 = vunpack.c.l.b16 %v6438
      %v6481 = vunpack.c.l.b16 %v6442
      %v6482 = vunpack.c.l.b16 %v6445
      %v6483 = vpack.c.b16 %v6452, %v6451
      %v6484 = vpack.c.b16 %v6454, %v6453
      %v6485 = vpack.c.b16 %v6456, %v6455
      %v6486 = vpack.c.b16 %v6458, %v6457
      %v6487 = vpack.c.b16 %v6460, %v6459
      %v6488 = vpack.c.b16 %v6462, %v6461
      %v6489 = vpack.c.b16 %v6464, %v6463
      %v6490 = vpack.c.b16 %v6466, %v6465
      %v6491 = vpack.c.b16 %v6468, %v6467
      %v6492 = vpack.c.b16 %v6470, %v6469
      %v6493 = vpack.c.b16 %v6472, %v6471
      %v6494 = vpack.c.b16 %v6474, %v6473
      %v6495 = vpack.c.b16 %v6476, %v6475
      %v6496 = vpack.c.b16 %v6478, %v6477
      %v6497 = vpack.c.b16 %v6480, %v6479
      %v6498 = vpack.c.b16 %v6482, %v6481
      %v6503 = vunpack.c.l.b16 %v6447
      %v6504 = vunpack.c.l.b16 %v6448
      %v6505 = vunpack.c.l.b16 %v6449
      %v6506 = vunpack.c.l.b16 %v6450
      %v6507 = vpack.c.b16 %v6504, %v6503
      %v6508 = vpack.c.b16 %v6506, %v6505
      %v6512 = vsel %vm5530, %v6483, 0
      %v6515 = vsel %vm5530, %v6484, 0
      %v6518 = vsel %vm5530, %v6485, 0
      %v6521 = vsel %vm5530, %v6486, 0
      %v6524 = vsel %vm5530, %v6487, 0
      %v6527 = vsel %vm5530, %v6488, 0
      %v6530 = vsel %vm5530, %v6489, 0
      %v6533 = vsel %vm5530, %v6490, 0
      %v6536 = vsel %vm5530, %v6491, 0
      %v6539 = vsel %vm5530, %v6492, 0
      %v6542 = vsel %vm5530, %v6493, 0
      %v6545 = vsel %vm5530, %v6494, 0
      %v6548 = vsel %vm5530, %v6495, 0
      %v6551 = vsel %vm5530, %v6496, 0
      %v6554 = vsel %vm5530, %v6497, 0
      %v6557 = vsel %vm5530, %v6498, 0
      %6559 = vmatpush.bf16.msra.mxu0 0
      %6560 = vmatpush.bf16.msra.mxu0 0
      %6561 = vmatpush.bf16.msra.mxu0 0
      %6562 = vmatpush.bf16.msra.mxu0 0
      %6563 = vmatpush.bf16.msra.mxu0 0
      %6564 = vmatpush.bf16.msra.mxu0 0
      %6565 = vmatpush.bf16.msra.mxu0 %v6508
      %6566 = vmatpush.bf16.msra.mxu0 %v6507
      %6567 = vmatmul.bf16.gmra.mxu0 %v6512
      %v6568 = vpop.f32.mrf.mxu0
      %v6569 = vadd.f32 0.0, %v6568
      %v6570 = vpop.f32.mrf.mxu0
      %v6571 = vadd.f32 0.0, %v6570
      %6572 = vmatmul.bf16.gmra.mxu0 %v6515
      %v6573 = vpop.f32.mrf.mxu0
      %v6574 = vadd.f32 0.0, %v6573
      %v6575 = vpop.f32.mrf.mxu0
      %v6576 = vadd.f32 0.0, %v6575
      %6577 = vmatmul.bf16.gmra.mxu0 %v6518
      %v6578 = vpop.f32.mrf.mxu0
      %v6579 = vadd.f32 0.0, %v6578
      %v6580 = vpop.f32.mrf.mxu0
      %v6581 = vadd.f32 0.0, %v6580
      %6582 = vmatmul.bf16.gmra.mxu0 %v6521
      %v6583 = vpop.f32.mrf.mxu0
      %v6584 = vadd.f32 0.0, %v6583
      %v6585 = vpop.f32.mrf.mxu0
      %v6586 = vadd.f32 0.0, %v6585
      %6587 = vmatmul.bf16.gmra.mxu0 %v6524
      %v6588 = vpop.f32.mrf.mxu0
      %v6589 = vadd.f32 0.0, %v6588
      %v6590 = vpop.f32.mrf.mxu0
      %v6591 = vadd.f32 0.0, %v6590
      %6592 = vmatmul.bf16.gmra.mxu0 %v6527
      %v6593 = vpop.f32.mrf.mxu0
      %v6594 = vadd.f32 0.0, %v6593
      %v6595 = vpop.f32.mrf.mxu0
      %v6596 = vadd.f32 0.0, %v6595
      %6597 = vmatmul.bf16.gmra.mxu0 %v6530
      %v6598 = vpop.f32.mrf.mxu0
      %v6599 = vadd.f32 0.0, %v6598
      %v6600 = vpop.f32.mrf.mxu0
      %v6601 = vadd.f32 0.0, %v6600
      %6602 = vmatmul.bf16.gmra.mxu0 %v6533
      %v6603 = vpop.f32.mrf.mxu0
      %v6604 = vadd.f32 0.0, %v6603
      %v6605 = vpop.f32.mrf.mxu0
      %v6606 = vadd.f32 0.0, %v6605
      %6607 = vmatmul.bf16.gmra.mxu0 %v6536
      %v6608 = vpop.f32.mrf.mxu0
      %v6609 = vadd.f32 0.0, %v6608
      %v6610 = vpop.f32.mrf.mxu0
      %v6611 = vadd.f32 0.0, %v6610
      %6612 = vmatmul.bf16.gmra.mxu0 %v6539
      %v6613 = vpop.f32.mrf.mxu0
      %v6614 = vadd.f32 0.0, %v6613
      %v6615 = vpop.f32.mrf.mxu0
      %v6616 = vadd.f32 0.0, %v6615
      %6617 = vmatmul.bf16.gmra.mxu0 %v6542
      %v6618 = vpop.f32.mrf.mxu0
      %v6619 = vadd.f32 0.0, %v6618
      %v6620 = vpop.f32.mrf.mxu0
      %v6621 = vadd.f32 0.0, %v6620
      %6622 = vmatmul.bf16.gmra.mxu0 %v6545
      %v6623 = vpop.f32.mrf.mxu0
      %v6624 = vadd.f32 0.0, %v6623
      %v6625 = vpop.f32.mrf.mxu0
      %v6626 = vadd.f32 0.0, %v6625
      %6627 = vmatmul.bf16.gmra.mxu0 %v6548
      %v6628 = vpop.f32.mrf.mxu0
      %v6629 = vadd.f32 0.0, %v6628
      %v6630 = vpop.f32.mrf.mxu0
      %v6631 = vadd.f32 0.0, %v6630
      %6632 = vmatmul.bf16.gmra.mxu0 %v6551
      %v6633 = vpop.f32.mrf.mxu0
      %v6634 = vadd.f32 0.0, %v6633
      %v6635 = vpop.f32.mrf.mxu0
      %v6636 = vadd.f32 0.0, %v6635
      %6637 = vmatmul.bf16.gmra.mxu0 %v6554
      %v6638 = vpop.f32.mrf.mxu0
      %v6639 = vadd.f32 0.0, %v6638
      %v6640 = vpop.f32.mrf.mxu0
      %v6641 = vadd.f32 0.0, %v6640
      %6642 = vmatmul.bf16.gmra.mxu0 %v6557
      %v6643 = vpop.f32.mrf.mxu0
      %v6644 = vadd.f32 0.0, %v6643
      %v6645 = vpop.f32.mrf.mxu0
      %v6646 = vadd.f32 0.0, %v6645
      %6647 = vdwg.mxu0
      %v6648 = vadd.f32 %v6286, %v6569
      %v6649 = vadd.f32 %v6287, %v6571
      %v6650 = vadd.f32 %v6288, %v6574
      %v6651 = vadd.f32 %v6289, %v6576
      %v6652 = vadd.f32 %v6290, %v6579
      %v6653 = vadd.f32 %v6291, %v6581
      %v6654 = vadd.f32 %v6292, %v6584
      %v6655 = vadd.f32 %v6293, %v6586
      %v6656 = vadd.f32 %v6294, %v6589
      %v6657 = vadd.f32 %v6295, %v6591
      %v6658 = vadd.f32 %v6296, %v6594
      %v6659 = vadd.f32 %v6297, %v6596
      %v6660 = vadd.f32 %v6298, %v6599
      %v6661 = vadd.f32 %v6299, %v6601
      %v6662 = vadd.f32 %v6300, %v6604
      %v6663 = vadd.f32 %v6301, %v6606
      %v6664 = vadd.f32 %v6302, %v6609
      %v6665 = vadd.f32 %v6303, %v6611
      %v6666 = vadd.f32 %v6304, %v6614
      %v6667 = vadd.f32 %v6305, %v6616
      %v6668 = vadd.f32 %v6306, %v6619
      %v6669 = vadd.f32 %v6307, %v6621
      %v6670 = vadd.f32 %v6308, %v6624
      %v6671 = vadd.f32 %v6309, %v6626
      %v6672 = vadd.f32 %v6310, %v6629
      %v6673 = vadd.f32 %v6311, %v6631
      %v6674 = vadd.f32 %v6312, %v6634
      %v6675 = vadd.f32 %v6313, %v6636
      %v6676 = vadd.f32 %v6314, %v6639
      %v6677 = vadd.f32 %v6315, %v6641
      %v6678 = vadd.f32 %v6316, %v6644
      %v6679 = vadd.f32 %v6317, %v6646
      %s6680 = scalar_lea.vmem %s5, 48
      %v6681 = vld [vmem:[%s6680] sm:$0xf]
      %v6682 = vld [vmem:[%s6680 + $0x4] sm:$0xf]
      %v6683 = vld [vmem:[%s6680 + $0x8] sm:$0xf]
      %v6684 = vld [vmem:[%s6680 + $0xc] sm:$0xf]
      %v6687 = vunpack.c.l.b16 %v5396
      %v6688 = vunpack.c.l.b16 %v5397
      %v6689 = vpack.c.b16 %v6688, %v6687
      %v6694 = vunpack.c.l.b16 %v6681
      %v6695 = vunpack.c.l.b16 %v6682
      %v6696 = vunpack.c.l.b16 %v6683
      %v6697 = vunpack.c.l.b16 %v6684
      %v6698 = vpack.c.b16 %v6695, %v6694
      %v6699 = vpack.c.b16 %v6697, %v6696
      %v6703 = vsel %vm5530, %v6689, 0
      %6705 = vmatpush.bf16.msra.mxu0 0
      %6706 = vmatpush.bf16.msra.mxu0 0
      %6707 = vmatpush.bf16.msra.mxu0 0
      %6708 = vmatpush.bf16.msra.mxu0 0
      %6709 = vmatpush.bf16.msra.mxu0 0
      %6710 = vmatpush.bf16.msra.mxu0 0
      %6711 = vmatpush.bf16.msra.mxu0 %v6699
      %6712 = vmatpush.bf16.msra.mxu0 %v6698
      %6713 = vmatmul.bf16.gmra.mxu0 %v5535
      %v6714 = vpop.f32.mrf.mxu0
      %v6715 = vadd.f32 0.0, %v6714
      %v6716 = vpop.f32.mrf.mxu0
      %v6717 = vadd.f32 0.0, %v6716
      %6718 = vmatmul.bf16.gmra.mxu0 %v5538
      %v6719 = vpop.f32.mrf.mxu0
      %v6720 = vadd.f32 0.0, %v6719
      %v6721 = vpop.f32.mrf.mxu0
      %v6722 = vadd.f32 0.0, %v6721
      %6723 = vmatmul.bf16.gmra.mxu0 %v5541
      %v6724 = vpop.f32.mrf.mxu0
      %v6725 = vadd.f32 0.0, %v6724
      %v6726 = vpop.f32.mrf.mxu0
      %v6727 = vadd.f32 0.0, %v6726
      %6728 = vmatmul.bf16.gmra.mxu0 %v5544
      %v6729 = vpop.f32.mrf.mxu0
      %v6730 = vadd.f32 0.0, %v6729
      %v6731 = vpop.f32.mrf.mxu0
      %v6732 = vadd.f32 0.0, %v6731
      %6733 = vmatmul.bf16.gmra.mxu0 %v5547
      %v6734 = vpop.f32.mrf.mxu0
      %v6735 = vadd.f32 0.0, %v6734
      %v6736 = vpop.f32.mrf.mxu0
      %v6737 = vadd.f32 0.0, %v6736
      %6738 = vmatmul.bf16.gmra.mxu0 %v5550
      %v6739 = vpop.f32.mrf.mxu0
      %v6740 = vadd.f32 0.0, %v6739
      %v6741 = vpop.f32.mrf.mxu0
      %v6742 = vadd.f32 0.0, %v6741
      %6743 = vmatmul.bf16.gmra.mxu0 %v5553
      %v6744 = vpop.f32.mrf.mxu0
      %v6745 = vadd.f32 0.0, %v6744
      %v6746 = vpop.f32.mrf.mxu0
      %v6747 = vadd.f32 0.0, %v6746
      %6748 = vmatmul.bf16.gmra.mxu0 %v5556
      %v6749 = vpop.f32.mrf.mxu0
      %v6750 = vadd.f32 0.0, %v6749
      %v6751 = vpop.f32.mrf.mxu0
      %v6752 = vadd.f32 0.0, %v6751
      %6753 = vmatmul.bf16.gmra.mxu0 %v5559
      %v6754 = vpop.f32.mrf.mxu0
      %v6755 = vadd.f32 0.0, %v6754
      %v6756 = vpop.f32.mrf.mxu0
      %v6757 = vadd.f32 0.0, %v6756
      %6758 = vmatmul.bf16.gmra.mxu0 %v5562
      %v6759 = vpop.f32.mrf.mxu0
      %v6760 = vadd.f32 0.0, %v6759
      %v6761 = vpop.f32.mrf.mxu0
      %v6762 = vadd.f32 0.0, %v6761
      %6763 = vmatmul.bf16.gmra.mxu0 %v5565
      %v6764 = vpop.f32.mrf.mxu0
      %v6765 = vadd.f32 0.0, %v6764
      %v6766 = vpop.f32.mrf.mxu0
      %v6767 = vadd.f32 0.0, %v6766
      %6768 = vmatmul.bf16.gmra.mxu0 %v5568
      %v6769 = vpop.f32.mrf.mxu0
      %v6770 = vadd.f32 0.0, %v6769
      %v6771 = vpop.f32.mrf.mxu0
      %v6772 = vadd.f32 0.0, %v6771
      %6773 = vmatmul.bf16.gmra.mxu0 %v5571
      %v6774 = vpop.f32.mrf.mxu0
      %v6775 = vadd.f32 0.0, %v6774
      %v6776 = vpop.f32.mrf.mxu0
      %v6777 = vadd.f32 0.0, %v6776
      %6778 = vmatmul.bf16.gmra.mxu0 %v5574
      %v6779 = vpop.f32.mrf.mxu0
      %v6780 = vadd.f32 0.0, %v6779
      %v6781 = vpop.f32.mrf.mxu0
      %v6782 = vadd.f32 0.0, %v6781
      %6783 = vmatmul.bf16.gmra.mxu0 %v5577
      %v6784 = vpop.f32.mrf.mxu0
      %v6785 = vadd.f32 0.0, %v6784
      %v6786 = vpop.f32.mrf.mxu0
      %v6787 = vadd.f32 0.0, %v6786
      %6788 = vmatmul.bf16.gmra.mxu0 %v6703
      %v6789 = vpop.f32.mrf.mxu0
      %v6790 = vadd.f32 0.0, %v6789
      %v6791 = vpop.f32.mrf.mxu0
      %v6792 = vadd.f32 0.0, %v6791
      %6793 = vdwg.mxu0
      %v6794 = vadd.f32 %v6648, %v6715
      %v6795 = vadd.f32 %v6649, %v6717
      %v6796 = vadd.f32 %v6650, %v6720
      %v6797 = vadd.f32 %v6651, %v6722
      %v6798 = vadd.f32 %v6652, %v6725
      %v6799 = vadd.f32 %v6653, %v6727
      %v6800 = vadd.f32 %v6654, %v6730
      %v6801 = vadd.f32 %v6655, %v6732
      %v6802 = vadd.f32 %v6656, %v6735
      %v6803 = vadd.f32 %v6657, %v6737
      %v6804 = vadd.f32 %v6658, %v6740
      %v6805 = vadd.f32 %v6659, %v6742
      %v6806 = vadd.f32 %v6660, %v6745
      %v6807 = vadd.f32 %v6661, %v6747
      %v6808 = vadd.f32 %v6662, %v6750
      %v6809 = vadd.f32 %v6663, %v6752
      %v6810 = vadd.f32 %v6664, %v6755
      %v6811 = vadd.f32 %v6665, %v6757
      %v6812 = vadd.f32 %v6666, %v6760
      %v6813 = vadd.f32 %v6667, %v6762
      %v6814 = vadd.f32 %v6668, %v6765
      %v6815 = vadd.f32 %v6669, %v6767
      %v6816 = vadd.f32 %v6670, %v6770
      %v6817 = vadd.f32 %v6671, %v6772
      %v6818 = vadd.f32 %v6672, %v6775
      %v6819 = vadd.f32 %v6673, %v6777
      %v6820 = vadd.f32 %v6674, %v6780
      %v6821 = vadd.f32 %v6675, %v6782
      %v6822 = vadd.f32 %v6676, %v6785
      %v6823 = vadd.f32 %v6677, %v6787
      %v6824 = vadd.f32 %v6678, %v6790
      %v6825 = vadd.f32 %v6679, %v6792
      %v6827 = vshrl.u32 %v5396, 16
      %v6829 = vrot.slane %v6827, 4
      %v6830 = vshll.u32 %v5396, 16
      %v6832 = vrot.slane %v6830, 5
      %v6833 = vor.u32 %v6829, %v6832
      %v6834 = vrot.slane %v6833, 4
      %v6836 = vshll.u32 %v5397, 16
      %v6838 = vrot.slane %v6836, 5
      %v6839 = vsel %vm842, %v6834, %v6838
      %v6840 = vshrl.u32 %v5397, 16
      %v6842 = vrot.slane %v6840, 4
      %v6843 = vor.u32 %v6842, %v6838
      %v6844 = vrot.slane %v6843, 4
      %v6846 = vshll.u32 %v5398, 16
      %v6848 = vrot.slane %v6846, 5
      %v6849 = vsel %vm842, %v6844, %v6848
      %s6850 = scalar_lea.vmem %s5, 64
      %v6851 = vld [vmem:[%s6850] sm:$0xf]
      %v6852 = vld [vmem:[%s6850 + $0x4] sm:$0xf]
      %v6853 = vld [vmem:[%s6850 + $0x8] sm:$0xf]
      %v6854 = vld [vmem:[%s6850 + $0xc] sm:$0xf]
      %v6855 = vunpack.c.l.b16 %v6839
      %v6856 = vunpack.c.l.b16 %v6849
      %v6857 = vpack.c.b16 %v6856, %v6855
      %v6862 = vunpack.c.l.b16 %v6851
      %v6863 = vunpack.c.l.b16 %v6852
      %v6864 = vunpack.c.l.b16 %v6853
      %v6865 = vunpack.c.l.b16 %v6854
      %v6866 = vpack.c.b16 %v6863, %v6862
      %v6867 = vpack.c.b16 %v6865, %v6864
      %v6871 = vsel %vm5530, %v6857, 0
      %6873 = vmatpush.bf16.msra.mxu0 0
      %6874 = vmatpush.bf16.msra.mxu0 0
      %6875 = vmatpush.bf16.msra.mxu0 0
      %6876 = vmatpush.bf16.msra.mxu0 0
      %6877 = vmatpush.bf16.msra.mxu0 0
      %6878 = vmatpush.bf16.msra.mxu0 0
      %6879 = vmatpush.bf16.msra.mxu0 %v6867
      %6880 = vmatpush.bf16.msra.mxu0 %v6866
      %6881 = vmatmul.bf16.gmra.mxu0 %v6153
      %v6882 = vpop.f32.mrf.mxu0
      %v6883 = vadd.f32 0.0, %v6882
      %v6884 = vpop.f32.mrf.mxu0
      %v6885 = vadd.f32 0.0, %v6884
      %6886 = vmatmul.bf16.gmra.mxu0 %v6156
      %v6887 = vpop.f32.mrf.mxu0
      %v6888 = vadd.f32 0.0, %v6887
      %v6889 = vpop.f32.mrf.mxu0
      %v6890 = vadd.f32 0.0, %v6889
      %6891 = vmatmul.bf16.gmra.mxu0 %v6159
      %v6892 = vpop.f32.mrf.mxu0
      %v6893 = vadd.f32 0.0, %v6892
      %v6894 = vpop.f32.mrf.mxu0
      %v6895 = vadd.f32 0.0, %v6894
      %6896 = vmatmul.bf16.gmra.mxu0 %v6162
      %v6897 = vpop.f32.mrf.mxu0
      %v6898 = vadd.f32 0.0, %v6897
      %v6899 = vpop.f32.mrf.mxu0
      %v6900 = vadd.f32 0.0, %v6899
      %6901 = vmatmul.bf16.gmra.mxu0 %v6165
      %v6902 = vpop.f32.mrf.mxu0
      %v6903 = vadd.f32 0.0, %v6902
      %v6904 = vpop.f32.mrf.mxu0
      %v6905 = vadd.f32 0.0, %v6904
      %6906 = vmatmul.bf16.gmra.mxu0 %v6168
      %v6907 = vpop.f32.mrf.mxu0
      %v6908 = vadd.f32 0.0, %v6907
      %v6909 = vpop.f32.mrf.mxu0
      %v6910 = vadd.f32 0.0, %v6909
      %6911 = vmatmul.bf16.gmra.mxu0 %v6171
      %v6912 = vpop.f32.mrf.mxu0
      %v6913 = vadd.f32 0.0, %v6912
      %v6914 = vpop.f32.mrf.mxu0
      %v6915 = vadd.f32 0.0, %v6914
      %6916 = vmatmul.bf16.gmra.mxu0 %v6174
      %v6917 = vpop.f32.mrf.mxu0
      %v6918 = vadd.f32 0.0, %v6917
      %v6919 = vpop.f32.mrf.mxu0
      %v6920 = vadd.f32 0.0, %v6919
      %6921 = vmatmul.bf16.gmra.mxu0 %v6177
      %v6922 = vpop.f32.mrf.mxu0
      %v6923 = vadd.f32 0.0, %v6922
      %v6924 = vpop.f32.mrf.mxu0
      %v6925 = vadd.f32 0.0, %v6924
      %6926 = vmatmul.bf16.gmra.mxu0 %v6180
      %v6927 = vpop.f32.mrf.mxu0
      %v6928 = vadd.f32 0.0, %v6927
      %v6929 = vpop.f32.mrf.mxu0
      %v6930 = vadd.f32 0.0, %v6929
      %6931 = vmatmul.bf16.gmra.mxu0 %v6183
      %v6932 = vpop.f32.mrf.mxu0
      %v6933 = vadd.f32 0.0, %v6932
      %v6934 = vpop.f32.mrf.mxu0
      %v6935 = vadd.f32 0.0, %v6934
      %6936 = vmatmul.bf16.gmra.mxu0 %v6186
      %v6937 = vpop.f32.mrf.mxu0
      %v6938 = vadd.f32 0.0, %v6937
      %v6939 = vpop.f32.mrf.mxu0
      %v6940 = vadd.f32 0.0, %v6939
      %6941 = vmatmul.bf16.gmra.mxu0 %v6189
      %v6942 = vpop.f32.mrf.mxu0
      %v6943 = vadd.f32 0.0, %v6942
      %v6944 = vpop.f32.mrf.mxu0
      %v6945 = vadd.f32 0.0, %v6944
      %6946 = vmatmul.bf16.gmra.mxu0 %v6192
      %v6947 = vpop.f32.mrf.mxu0
      %v6948 = vadd.f32 0.0, %v6947
      %v6949 = vpop.f32.mrf.mxu0
      %v6950 = vadd.f32 0.0, %v6949
      %6951 = vmatmul.bf16.gmra.mxu0 %v6195
      %v6952 = vpop.f32.mrf.mxu0
      %v6953 = vadd.f32 0.0, %v6952
      %v6954 = vpop.f32.mrf.mxu0
      %v6955 = vadd.f32 0.0, %v6954
      %6956 = vmatmul.bf16.gmra.mxu0 %v6871
      %v6957 = vpop.f32.mrf.mxu0
      %v6958 = vadd.f32 0.0, %v6957
      %v6959 = vpop.f32.mrf.mxu0
      %v6960 = vadd.f32 0.0, %v6959
      %6961 = vdwg.mxu0
      %v6962 = vadd.f32 %v6794, %v6883
      %v6963 = vadd.f32 %v6795, %v6885
      %v6964 = vadd.f32 %v6796, %v6888
      %v6965 = vadd.f32 %v6797, %v6890
      %v6966 = vadd.f32 %v6798, %v6893
      %v6967 = vadd.f32 %v6799, %v6895
      %v6968 = vadd.f32 %v6800, %v6898
      %v6969 = vadd.f32 %v6801, %v6900
      %v6970 = vadd.f32 %v6802, %v6903
      %v6971 = vadd.f32 %v6803, %v6905
      %v6972 = vadd.f32 %v6804, %v6908
      %v6973 = vadd.f32 %v6805, %v6910
      %v6974 = vadd.f32 %v6806, %v6913
      %v6975 = vadd.f32 %v6807, %v6915
      %v6976 = vadd.f32 %v6808, %v6918
      %v6977 = vadd.f32 %v6809, %v6920
      %v6978 = vadd.f32 %v6810, %v6923
      %v6979 = vadd.f32 %v6811, %v6925
      %v6980 = vadd.f32 %v6812, %v6928
      %v6981 = vadd.f32 %v6813, %v6930
      %v6982 = vadd.f32 %v6814, %v6933
      %v6983 = vadd.f32 %v6815, %v6935
      %v6984 = vadd.f32 %v6816, %v6938
      %v6985 = vadd.f32 %v6817, %v6940
      %v6986 = vadd.f32 %v6818, %v6943
      %v6987 = vadd.f32 %v6819, %v6945
      %v6988 = vadd.f32 %v6820, %v6948
      %v6989 = vadd.f32 %v6821, %v6950
      %v6990 = vadd.f32 %v6822, %v6953
      %v6991 = vadd.f32 %v6823, %v6955
      %v6992 = vadd.f32 %v6824, %v6958
      %v6993 = vadd.f32 %v6825, %v6960
      %v6995 = vrot.slane %v5396, 5
      %v6996 = vrot.slane %v6995, 4
      %v6997 = vrot.slane %v5397, 5
      %v6998 = vsel %vm1467, %v6996, %v6997
      %v6999 = vrot.slane %v6997, 4
      %v7000 = vrot.slane %v5398, 5
      %v7001 = vsel %vm1467, %v6999, %v7000
      %s7002 = scalar_lea.vmem %s5, 80
      %v7003 = vld [vmem:[%s7002] sm:$0xf]
      %v7004 = vld [vmem:[%s7002 + $0x4] sm:$0xf]
      %v7005 = vld [vmem:[%s7002 + $0x8] sm:$0xf]
      %v7006 = vld [vmem:[%s7002 + $0xc] sm:$0xf]
      %v7007 = vunpack.c.l.b16 %v6998
      %v7008 = vunpack.c.l.b16 %v7001
      %v7009 = vpack.c.b16 %v7008, %v7007
      %v7014 = vunpack.c.l.b16 %v7003
      %v7015 = vunpack.c.l.b16 %v7004
      %v7016 = vunpack.c.l.b16 %v7005
      %v7017 = vunpack.c.l.b16 %v7006
      %v7018 = vpack.c.b16 %v7015, %v7014
      %v7019 = vpack.c.b16 %v7017, %v7016
      %v7023 = vsel %vm5530, %v7009, 0
      %7025 = vmatpush.bf16.msra.mxu0 0
      %7026 = vmatpush.bf16.msra.mxu0 0
      %7027 = vmatpush.bf16.msra.mxu0 0
      %7028 = vmatpush.bf16.msra.mxu0 0
      %7029 = vmatpush.bf16.msra.mxu0 0
      %7030 = vmatpush.bf16.msra.mxu0 0
      %7031 = vmatpush.bf16.msra.mxu0 %v7019
      %7032 = vmatpush.bf16.msra.mxu0 %v7018
      %7033 = vmatmul.bf16.gmra.mxu0 %v6515
      %v7034 = vpop.f32.mrf.mxu0
      %v7035 = vadd.f32 0.0, %v7034
      %v7036 = vpop.f32.mrf.mxu0
      %v7037 = vadd.f32 0.0, %v7036
      %7038 = vmatmul.bf16.gmra.mxu0 %v6518
      %v7039 = vpop.f32.mrf.mxu0
      %v7040 = vadd.f32 0.0, %v7039
      %v7041 = vpop.f32.mrf.mxu0
      %v7042 = vadd.f32 0.0, %v7041
      %7043 = vmatmul.bf16.gmra.mxu0 %v6521
      %v7044 = vpop.f32.mrf.mxu0
      %v7045 = vadd.f32 0.0, %v7044
      %v7046 = vpop.f32.mrf.mxu0
      %v7047 = vadd.f32 0.0, %v7046
      %7048 = vmatmul.bf16.gmra.mxu0 %v6524
      %v7049 = vpop.f32.mrf.mxu0
      %v7050 = vadd.f32 0.0, %v7049
      %v7051 = vpop.f32.mrf.mxu0
      %v7052 = vadd.f32 0.0, %v7051
      %7053 = vmatmul.bf16.gmra.mxu0 %v6527
      %v7054 = vpop.f32.mrf.mxu0
      %v7055 = vadd.f32 0.0, %v7054
      %v7056 = vpop.f32.mrf.mxu0
      %v7057 = vadd.f32 0.0, %v7056
      %7058 = vmatmul.bf16.gmra.mxu0 %v6530
      %v7059 = vpop.f32.mrf.mxu0
      %v7060 = vadd.f32 0.0, %v7059
      %v7061 = vpop.f32.mrf.mxu0
      %v7062 = vadd.f32 0.0, %v7061
      %7063 = vmatmul.bf16.gmra.mxu0 %v6533
      %v7064 = vpop.f32.mrf.mxu0
      %v7065 = vadd.f32 0.0, %v7064
      %v7066 = vpop.f32.mrf.mxu0
      %v7067 = vadd.f32 0.0, %v7066
      %7068 = vmatmul.bf16.gmra.mxu0 %v6536
      %v7069 = vpop.f32.mrf.mxu0
      %v7070 = vadd.f32 0.0, %v7069
      %v7071 = vpop.f32.mrf.mxu0
      %v7072 = vadd.f32 0.0, %v7071
      %7073 = vmatmul.bf16.gmra.mxu0 %v6539
      %v7074 = vpop.f32.mrf.mxu0
      %v7075 = vadd.f32 0.0, %v7074
      %v7076 = vpop.f32.mrf.mxu0
      %v7077 = vadd.f32 0.0, %v7076
      %7078 = vmatmul.bf16.gmra.mxu0 %v6542
      %v7079 = vpop.f32.mrf.mxu0
      %v7080 = vadd.f32 0.0, %v7079
      %v7081 = vpop.f32.mrf.mxu0
      %v7082 = vadd.f32 0.0, %v7081
      %7083 = vmatmul.bf16.gmra.mxu0 %v6545
      %v7084 = vpop.f32.mrf.mxu0
      %v7085 = vadd.f32 0.0, %v7084
      %v7086 = vpop.f32.mrf.mxu0
      %v7087 = vadd.f32 0.0, %v7086
      %7088 = vmatmul.bf16.gmra.mxu0 %v6548
      %v7089 = vpop.f32.mrf.mxu0
      %v7090 = vadd.f32 0.0, %v7089
      %v7091 = vpop.f32.mrf.mxu0
      %v7092 = vadd.f32 0.0, %v7091
      %7093 = vmatmul.bf16.gmra.mxu0 %v6551
      %v7094 = vpop.f32.mrf.mxu0
      %v7095 = vadd.f32 0.0, %v7094
      %v7096 = vpop.f32.mrf.mxu0
      %v7097 = vadd.f32 0.0, %v7096
      %7098 = vmatmul.bf16.gmra.mxu0 %v6554
      %v7099 = vpop.f32.mrf.mxu0
      %v7100 = vadd.f32 0.0, %v7099
      %v7101 = vpop.f32.mrf.mxu0
      %v7102 = vadd.f32 0.0, %v7101
      %7103 = vmatmul.bf16.gmra.mxu0 %v6557
      %v7104 = vpop.f32.mrf.mxu0
      %v7105 = vadd.f32 0.0, %v7104
      %v7106 = vpop.f32.mrf.mxu0
      %v7107 = vadd.f32 0.0, %v7106
      %7108 = vmatmul.bf16.gmra.mxu0 %v7023
      %v7109 = vpop.f32.mrf.mxu0
      %v7110 = vadd.f32 0.0, %v7109
      %v7111 = vpop.f32.mrf.mxu0
      %v7112 = vadd.f32 0.0, %v7111
      %7113 = vdwg.mxu0
      %v7114 = vadd.f32 %v6962, %v7035
      %v7115 = vadd.f32 %v6963, %v7037
      %v7116 = vadd.f32 %v6964, %v7040
      %v7117 = vadd.f32 %v6965, %v7042
      %v7118 = vadd.f32 %v6966, %v7045
      %v7119 = vadd.f32 %v6967, %v7047
      %v7120 = vadd.f32 %v6968, %v7050
      %v7121 = vadd.f32 %v6969, %v7052
      %v7122 = vadd.f32 %v6970, %v7055
      %v7123 = vadd.f32 %v6971, %v7057
      %v7124 = vadd.f32 %v6972, %v7060
      %v7125 = vadd.f32 %v6973, %v7062
      %v7126 = vadd.f32 %v6974, %v7065
      %v7127 = vadd.f32 %v6975, %v7067
      %v7128 = vadd.f32 %v6976, %v7070
      %v7129 = vadd.f32 %v6977, %v7072
      %v7130 = vadd.f32 %v6978, %v7075
      %v7131 = vadd.f32 %v6979, %v7077
      %v7132 = vadd.f32 %v6980, %v7080
      %v7133 = vadd.f32 %v6981, %v7082
      %v7134 = vadd.f32 %v6982, %v7085
      %v7135 = vadd.f32 %v6983, %v7087
      %v7136 = vadd.f32 %v6984, %v7090
      %v7137 = vadd.f32 %v6985, %v7092
      %v7138 = vadd.f32 %v6986, %v7095
      %v7139 = vadd.f32 %v6987, %v7097
      %v7140 = vadd.f32 %v6988, %v7100
      %v7141 = vadd.f32 %v6989, %v7102
      %v7142 = vadd.f32 %v6990, %v7105
      %v7143 = vadd.f32 %v6991, %v7107
      %v7144 = vadd.f32 %v6992, %v7110
      %v7145 = vadd.f32 %v6993, %v7112
      %s7146 = scalar_lea.vmem %s5, 96
      %v7147 = vld [vmem:[%s7146] sm:$0xf]
      %v7148 = vld [vmem:[%s7146 + $0x4] sm:$0xf]
      %v7149 = vld [vmem:[%s7146 + $0x8] sm:$0xf]
      %v7150 = vld [vmem:[%s7146 + $0xc] sm:$0xf]
      %v7153 = vunpack.c.l.b16 %v5399
      %v7154 = vunpack.c.l.b16 %v5400
      %v7155 = vpack.c.b16 %v7154, %v7153
      %v7160 = vunpack.c.l.b16 %v7147
      %v7161 = vunpack.c.l.b16 %v7148
      %v7162 = vunpack.c.l.b16 %v7149
      %v7163 = vunpack.c.l.b16 %v7150
      %v7164 = vpack.c.b16 %v7161, %v7160
      %v7165 = vpack.c.b16 %v7163, %v7162
      %v7169 = vsel %vm5530, %v7155, 0
      %7171 = vmatpush.bf16.msra.mxu0 0
      %7172 = vmatpush.bf16.msra.mxu0 0
      %7173 = vmatpush.bf16.msra.mxu0 0
      %7174 = vmatpush.bf16.msra.mxu0 0
      %7175 = vmatpush.bf16.msra.mxu0 0
      %7176 = vmatpush.bf16.msra.mxu0 0
      %7177 = vmatpush.bf16.msra.mxu0 %v7165
      %7178 = vmatpush.bf16.msra.mxu0 %v7164
      %7179 = vmatmul.bf16.gmra.mxu0 %v5538
      %v7180 = vpop.f32.mrf.mxu0
      %v7181 = vadd.f32 0.0, %v7180
      %v7182 = vpop.f32.mrf.mxu0
      %v7183 = vadd.f32 0.0, %v7182
      %7184 = vmatmul.bf16.gmra.mxu0 %v5541
      %v7185 = vpop.f32.mrf.mxu0
      %v7186 = vadd.f32 0.0, %v7185
      %v7187 = vpop.f32.mrf.mxu0
      %v7188 = vadd.f32 0.0, %v7187
      %7189 = vmatmul.bf16.gmra.mxu0 %v5544
      %v7190 = vpop.f32.mrf.mxu0
      %v7191 = vadd.f32 0.0, %v7190
      %v7192 = vpop.f32.mrf.mxu0
      %v7193 = vadd.f32 0.0, %v7192
      %7194 = vmatmul.bf16.gmra.mxu0 %v5547
      %v7195 = vpop.f32.mrf.mxu0
      %v7196 = vadd.f32 0.0, %v7195
      %v7197 = vpop.f32.mrf.mxu0
      %v7198 = vadd.f32 0.0, %v7197
      %7199 = vmatmul.bf16.gmra.mxu0 %v5550
      %v7200 = vpop.f32.mrf.mxu0
      %v7201 = vadd.f32 0.0, %v7200
      %v7202 = vpop.f32.mrf.mxu0
      %v7203 = vadd.f32 0.0, %v7202
      %7204 = vmatmul.bf16.gmra.mxu0 %v5553
      %v7205 = vpop.f32.mrf.mxu0
      %v7206 = vadd.f32 0.0, %v7205
      %v7207 = vpop.f32.mrf.mxu0
      %v7208 = vadd.f32 0.0, %v7207
      %7209 = vmatmul.bf16.gmra.mxu0 %v5556
      %v7210 = vpop.f32.mrf.mxu0
      %v7211 = vadd.f32 0.0, %v7210
      %v7212 = vpop.f32.mrf.mxu0
      %v7213 = vadd.f32 0.0, %v7212
      %7214 = vmatmul.bf16.gmra.mxu0 %v5559
      %v7215 = vpop.f32.mrf.mxu0
      %v7216 = vadd.f32 0.0, %v7215
      %v7217 = vpop.f32.mrf.mxu0
      %v7218 = vadd.f32 0.0, %v7217
      %7219 = vmatmul.bf16.gmra.mxu0 %v5562
      %v7220 = vpop.f32.mrf.mxu0
      %v7221 = vadd.f32 0.0, %v7220
      %v7222 = vpop.f32.mrf.mxu0
      %v7223 = vadd.f32 0.0, %v7222
      %7224 = vmatmul.bf16.gmra.mxu0 %v5565
      %v7225 = vpop.f32.mrf.mxu0
      %v7226 = vadd.f32 0.0, %v7225
      %v7227 = vpop.f32.mrf.mxu0
      %v7228 = vadd.f32 0.0, %v7227
      %7229 = vmatmul.bf16.gmra.mxu0 %v5568
      %v7230 = vpop.f32.mrf.mxu0
      %v7231 = vadd.f32 0.0, %v7230
      %v7232 = vpop.f32.mrf.mxu0
      %v7233 = vadd.f32 0.0, %v7232
      %7234 = vmatmul.bf16.gmra.mxu0 %v5571
      %v7235 = vpop.f32.mrf.mxu0
      %v7236 = vadd.f32 0.0, %v7235
      %v7237 = vpop.f32.mrf.mxu0
      %v7238 = vadd.f32 0.0, %v7237
      %7239 = vmatmul.bf16.gmra.mxu0 %v5574
      %v7240 = vpop.f32.mrf.mxu0
      %v7241 = vadd.f32 0.0, %v7240
      %v7242 = vpop.f32.mrf.mxu0
      %v7243 = vadd.f32 0.0, %v7242
      %7244 = vmatmul.bf16.gmra.mxu0 %v5577
      %v7245 = vpop.f32.mrf.mxu0
      %v7246 = vadd.f32 0.0, %v7245
      %v7247 = vpop.f32.mrf.mxu0
      %v7248 = vadd.f32 0.0, %v7247
      %7249 = vmatmul.bf16.gmra.mxu0 %v6703
      %v7250 = vpop.f32.mrf.mxu0
      %v7251 = vadd.f32 0.0, %v7250
      %v7252 = vpop.f32.mrf.mxu0
      %v7253 = vadd.f32 0.0, %v7252
      %7254 = vmatmul.bf16.gmra.mxu0 %v7169
      %v7255 = vpop.f32.mrf.mxu0
      %v7256 = vadd.f32 0.0, %v7255
      %v7257 = vpop.f32.mrf.mxu0
      %v7258 = vadd.f32 0.0, %v7257
      %7259 = vdwg.mxu0
      %v7260 = vadd.f32 %v7114, %v7181
      %v7261 = vadd.f32 %v7115, %v7183
      %v7262 = vadd.f32 %v7116, %v7186
      %v7263 = vadd.f32 %v7117, %v7188
      %v7264 = vadd.f32 %v7118, %v7191
      %v7265 = vadd.f32 %v7119, %v7193
      %v7266 = vadd.f32 %v7120, %v7196
      %v7267 = vadd.f32 %v7121, %v7198
      %v7268 = vadd.f32 %v7122, %v7201
      %v7269 = vadd.f32 %v7123, %v7203
      %v7270 = vadd.f32 %v7124, %v7206
      %v7271 = vadd.f32 %v7125, %v7208
      %v7272 = vadd.f32 %v7126, %v7211
      %v7273 = vadd.f32 %v7127, %v7213
      %v7274 = vadd.f32 %v7128, %v7216
      %v7275 = vadd.f32 %v7129, %v7218
      %v7276 = vadd.f32 %v7130, %v7221
      %v7277 = vadd.f32 %v7131, %v7223
      %v7278 = vadd.f32 %v7132, %v7226
      %v7279 = vadd.f32 %v7133, %v7228
      %v7280 = vadd.f32 %v7134, %v7231
      %v7281 = vadd.f32 %v7135, %v7233
      %v7282 = vadd.f32 %v7136, %v7236
      %v7283 = vadd.f32 %v7137, %v7238
      %v7284 = vadd.f32 %v7138, %v7241
      %v7285 = vadd.f32 %v7139, %v7243
      %v7286 = vadd.f32 %v7140, %v7246
      %v7287 = vadd.f32 %v7141, %v7248
      %v7288 = vadd.f32 %v7142, %v7251
      %v7289 = vadd.f32 %v7143, %v7253
      %v7290 = vadd.f32 %v7144, %v7256
      %v7291 = vadd.f32 %v7145, %v7258
      %v7293 = vshrl.u32 %v5399, 16
      %v7295 = vrot.slane %v7293, 4
      %v7296 = vshll.u32 %v5399, 16
      %v7298 = vrot.slane %v7296, 5
      %v7299 = vor.u32 %v7295, %v7298
      %v7300 = vrot.slane %v7299, 4
      %v7302 = vshll.u32 %v5400, 16
      %v7304 = vrot.slane %v7302, 5
      %v7305 = vsel %vm842, %v7300, %v7304
      %v7306 = vshrl.u32 %v5400, 16
      %v7308 = vrot.slane %v7306, 4
      %v7309 = vor.u32 %v7308, %v7304
      %v7310 = vrot.slane %v7309, 4
      %v7312 = vshll.u32 %v5401, 16
      %v7314 = vrot.slane %v7312, 5
      %v7315 = vsel %vm842, %v7310, %v7314
      %s7316 = scalar_lea.vmem %s5, 112
      %v7317 = vld [vmem:[%s7316] sm:$0xf]
      %v7318 = vld [vmem:[%s7316 + $0x4] sm:$0xf]
      %v7319 = vld [vmem:[%s7316 + $0x8] sm:$0xf]
      %v7320 = vld [vmem:[%s7316 + $0xc] sm:$0xf]
      %v7321 = vunpack.c.l.b16 %v7305
      %v7322 = vunpack.c.l.b16 %v7315
      %v7323 = vpack.c.b16 %v7322, %v7321
      %v7328 = vunpack.c.l.b16 %v7317
      %v7329 = vunpack.c.l.b16 %v7318
      %v7330 = vunpack.c.l.b16 %v7319
      %v7331 = vunpack.c.l.b16 %v7320
      %v7332 = vpack.c.b16 %v7329, %v7328
      %v7333 = vpack.c.b16 %v7331, %v7330
      %v7337 = vsel %vm5530, %v7323, 0
      %7339 = vmatpush.bf16.msra.mxu0 0
      %7340 = vmatpush.bf16.msra.mxu0 0
      %7341 = vmatpush.bf16.msra.mxu0 0
      %7342 = vmatpush.bf16.msra.mxu0 0
      %7343 = vmatpush.bf16.msra.mxu0 0
      %7344 = vmatpush.bf16.msra.mxu0 0
      %7345 = vmatpush.bf16.msra.mxu0 %v7333
      %7346 = vmatpush.bf16.msra.mxu0 %v7332
      %7347 = vmatmul.bf16.gmra.mxu0 %v6156
      %v7348 = vpop.f32.mrf.mxu0
      %v7349 = vadd.f32 0.0, %v7348
      %v7350 = vpop.f32.mrf.mxu0
      %v7351 = vadd.f32 0.0, %v7350
      %7352 = vmatmul.bf16.gmra.mxu0 %v6159
      %v7353 = vpop.f32.mrf.mxu0
      %v7354 = vadd.f32 0.0, %v7353
      %v7355 = vpop.f32.mrf.mxu0
      %v7356 = vadd.f32 0.0, %v7355
      %7357 = vmatmul.bf16.gmra.mxu0 %v6162
      %v7358 = vpop.f32.mrf.mxu0
      %v7359 = vadd.f32 0.0, %v7358
      %v7360 = vpop.f32.mrf.mxu0
      %v7361 = vadd.f32 0.0, %v7360
      %7362 = vmatmul.bf16.gmra.mxu0 %v6165
      %v7363 = vpop.f32.mrf.mxu0
      %v7364 = vadd.f32 0.0, %v7363
      %v7365 = vpop.f32.mrf.mxu0
      %v7366 = vadd.f32 0.0, %v7365
      %7367 = vmatmul.bf16.gmra.mxu0 %v6168
      %v7368 = vpop.f32.mrf.mxu0
      %v7369 = vadd.f32 0.0, %v7368
      %v7370 = vpop.f32.mrf.mxu0
      %v7371 = vadd.f32 0.0, %v7370
      %7372 = vmatmul.bf16.gmra.mxu0 %v6171
      %v7373 = vpop.f32.mrf.mxu0
      %v7374 = vadd.f32 0.0, %v7373
      %v7375 = vpop.f32.mrf.mxu0
      %v7376 = vadd.f32 0.0, %v7375
      %7377 = vmatmul.bf16.gmra.mxu0 %v6174
      %v7378 = vpop.f32.mrf.mxu0
      %v7379 = vadd.f32 0.0, %v7378
      %v7380 = vpop.f32.mrf.mxu0
      %v7381 = vadd.f32 0.0, %v7380
      %7382 = vmatmul.bf16.gmra.mxu0 %v6177
      %v7383 = vpop.f32.mrf.mxu0
      %v7384 = vadd.f32 0.0, %v7383
      %v7385 = vpop.f32.mrf.mxu0
      %v7386 = vadd.f32 0.0, %v7385
      %7387 = vmatmul.bf16.gmra.mxu0 %v6180
      %v7388 = vpop.f32.mrf.mxu0
      %v7389 = vadd.f32 0.0, %v7388
      %v7390 = vpop.f32.mrf.mxu0
      %v7391 = vadd.f32 0.0, %v7390
      %7392 = vmatmul.bf16.gmra.mxu0 %v6183
      %v7393 = vpop.f32.mrf.mxu0
      %v7394 = vadd.f32 0.0, %v7393
      %v7395 = vpop.f32.mrf.mxu0
      %v7396 = vadd.f32 0.0, %v7395
      %7397 = vmatmul.bf16.gmra.mxu0 %v6186
      %v7398 = vpop.f32.mrf.mxu0
      %v7399 = vadd.f32 0.0, %v7398
      %v7400 = vpop.f32.mrf.mxu0
      %v7401 = vadd.f32 0.0, %v7400
      %7402 = vmatmul.bf16.gmra.mxu0 %v6189
      %v7403 = vpop.f32.mrf.mxu0
      %v7404 = vadd.f32 0.0, %v7403
      %v7405 = vpop.f32.mrf.mxu0
      %v7406 = vadd.f32 0.0, %v7405
      %7407 = vmatmul.bf16.gmra.mxu0 %v6192
      %v7408 = vpop.f32.mrf.mxu0
      %v7409 = vadd.f32 0.0, %v7408
      %v7410 = vpop.f32.mrf.mxu0
      %v7411 = vadd.f32 0.0, %v7410
      %7412 = vmatmul.bf16.gmra.mxu0 %v6195
      %v7413 = vpop.f32.mrf.mxu0
      %v7414 = vadd.f32 0.0, %v7413
      %v7415 = vpop.f32.mrf.mxu0
      %v7416 = vadd.f32 0.0, %v7415
      %7417 = vmatmul.bf16.gmra.mxu0 %v6871
      %v7418 = vpop.f32.mrf.mxu0
      %v7419 = vadd.f32 0.0, %v7418
      %v7420 = vpop.f32.mrf.mxu0
      %v7421 = vadd.f32 0.0, %v7420
      %7422 = vmatmul.bf16.gmra.mxu0 %v7337
      %v7423 = vpop.f32.mrf.mxu0
      %v7424 = vadd.f32 0.0, %v7423
      %v7425 = vpop.f32.mrf.mxu0
      %v7426 = vadd.f32 0.0, %v7425
      %7427 = vdwg.mxu0
      %v7428 = vadd.f32 %v7260, %v7349
      %v7429 = vadd.f32 %v7261, %v7351
      %v7430 = vadd.f32 %v7262, %v7354
      %v7431 = vadd.f32 %v7263, %v7356
      %v7432 = vadd.f32 %v7264, %v7359
      %v7433 = vadd.f32 %v7265, %v7361
      %v7434 = vadd.f32 %v7266, %v7364
      %v7435 = vadd.f32 %v7267, %v7366
      %v7436 = vadd.f32 %v7268, %v7369
      %v7437 = vadd.f32 %v7269, %v7371
      %v7438 = vadd.f32 %v7270, %v7374
      %v7439 = vadd.f32 %v7271, %v7376
      %v7440 = vadd.f32 %v7272, %v7379
      %v7441 = vadd.f32 %v7273, %v7381
      %v7442 = vadd.f32 %v7274, %v7384
      %v7443 = vadd.f32 %v7275, %v7386
      %v7444 = vadd.f32 %v7276, %v7389
      %v7445 = vadd.f32 %v7277, %v7391
      %v7446 = vadd.f32 %v7278, %v7394
      %v7447 = vadd.f32 %v7279, %v7396
      %v7448 = vadd.f32 %v7280, %v7399
      %v7449 = vadd.f32 %v7281, %v7401
      %v7450 = vadd.f32 %v7282, %v7404
      %v7451 = vadd.f32 %v7283, %v7406
      %v7452 = vadd.f32 %v7284, %v7409
      %v7453 = vadd.f32 %v7285, %v7411
      %v7454 = vadd.f32 %v7286, %v7414
      %v7455 = vadd.f32 %v7287, %v7416
      %v7456 = vadd.f32 %v7288, %v7419
      %v7457 = vadd.f32 %v7289, %v7421
      %v7458 = vadd.f32 %v7290, %v7424
      %v7459 = vadd.f32 %v7291, %v7426
      %v7461 = vrot.slane %v5399, 5
      %v7462 = vrot.slane %v7461, 4
      %v7463 = vrot.slane %v5400, 5
      %v7464 = vsel %vm1467, %v7462, %v7463
      %v7465 = vrot.slane %v7463, 4
      %v7466 = vrot.slane %v5401, 5
      %v7467 = vsel %vm1467, %v7465, %v7466
      %s7468 = scalar_lea.vmem %s5, 128
      %v7469 = vld [vmem:[%s7468] sm:$0xf]
      %v7470 = vld [vmem:[%s7468 + $0x4] sm:$0xf]
      %v7471 = vld [vmem:[%s7468 + $0x8] sm:$0xf]
      %v7472 = vld [vmem:[%s7468 + $0xc] sm:$0xf]
      %v7473 = vunpack.c.l.b16 %v7464
      %v7474 = vunpack.c.l.b16 %v7467
      %v7475 = vpack.c.b16 %v7474, %v7473
      %v7480 = vunpack.c.l.b16 %v7469
      %v7481 = vunpack.c.l.b16 %v7470
      %v7482 = vunpack.c.l.b16 %v7471
      %v7483 = vunpack.c.l.b16 %v7472
      %v7484 = vpack.c.b16 %v7481, %v7480
      %v7485 = vpack.c.b16 %v7483, %v7482
      %v7489 = vsel %vm5530, %v7475, 0
      %7491 = vmatpush.bf16.msra.mxu0 0
      %7492 = vmatpush.bf16.msra.mxu0 0
      %7493 = vmatpush.bf16.msra.mxu0 0
      %7494 = vmatpush.bf16.msra.mxu0 0
      %7495 = vmatpush.bf16.msra.mxu0 0
      %7496 = vmatpush.bf16.msra.mxu0 0
      %7497 = vmatpush.bf16.msra.mxu0 %v7485
      %7498 = vmatpush.bf16.msra.mxu0 %v7484
      %7499 = vmatmul.bf16.gmra.mxu0 %v6518
      %v7500 = vpop.f32.mrf.mxu0
      %v7501 = vadd.f32 0.0, %v7500
      %v7502 = vpop.f32.mrf.mxu0
      %v7503 = vadd.f32 0.0, %v7502
      %7504 = vmatmul.bf16.gmra.mxu0 %v6521
      %v7505 = vpop.f32.mrf.mxu0
      %v7506 = vadd.f32 0.0, %v7505
      %v7507 = vpop.f32.mrf.mxu0
      %v7508 = vadd.f32 0.0, %v7507
      %7509 = vmatmul.bf16.gmra.mxu0 %v6524
      %v7510 = vpop.f32.mrf.mxu0
      %v7511 = vadd.f32 0.0, %v7510
      %v7512 = vpop.f32.mrf.mxu0
      %v7513 = vadd.f32 0.0, %v7512
      %7514 = vmatmul.bf16.gmra.mxu0 %v6527
      %v7515 = vpop.f32.mrf.mxu0
      %v7516 = vadd.f32 0.0, %v7515
      %v7517 = vpop.f32.mrf.mxu0
      %v7518 = vadd.f32 0.0, %v7517
      %7519 = vmatmul.bf16.gmra.mxu0 %v6530
      %v7520 = vpop.f32.mrf.mxu0
      %v7521 = vadd.f32 0.0, %v7520
      %v7522 = vpop.f32.mrf.mxu0
      %v7523 = vadd.f32 0.0, %v7522
      %7524 = vmatmul.bf16.gmra.mxu0 %v6533
      %v7525 = vpop.f32.mrf.mxu0
      %v7526 = vadd.f32 0.0, %v7525
      %v7527 = vpop.f32.mrf.mxu0
      %v7528 = vadd.f32 0.0, %v7527
      %7529 = vmatmul.bf16.gmra.mxu0 %v6536
      %v7530 = vpop.f32.mrf.mxu0
      %v7531 = vadd.f32 0.0, %v7530
      %v7532 = vpop.f32.mrf.mxu0
      %v7533 = vadd.f32 0.0, %v7532
      %7534 = vmatmul.bf16.gmra.mxu0 %v6539
      %v7535 = vpop.f32.mrf.mxu0
      %v7536 = vadd.f32 0.0, %v7535
      %v7537 = vpop.f32.mrf.mxu0
      %v7538 = vadd.f32 0.0, %v7537
      %7539 = vmatmul.bf16.gmra.mxu0 %v6542
      %v7540 = vpop.f32.mrf.mxu0
      %v7541 = vadd.f32 0.0, %v7540
      %v7542 = vpop.f32.mrf.mxu0
      %v7543 = vadd.f32 0.0, %v7542
      %7544 = vmatmul.bf16.gmra.mxu0 %v6545
      %v7545 = vpop.f32.mrf.mxu0
      %v7546 = vadd.f32 0.0, %v7545
      %v7547 = vpop.f32.mrf.mxu0
      %v7548 = vadd.f32 0.0, %v7547
      %7549 = vmatmul.bf16.gmra.mxu0 %v6548
      %v7550 = vpop.f32.mrf.mxu0
      %v7551 = vadd.f32 0.0, %v7550
      %v7552 = vpop.f32.mrf.mxu0
      %v7553 = vadd.f32 0.0, %v7552
      %7554 = vmatmul.bf16.gmra.mxu0 %v6551
      %v7555 = vpop.f32.mrf.mxu0
      %v7556 = vadd.f32 0.0, %v7555
      %v7557 = vpop.f32.mrf.mxu0
      %v7558 = vadd.f32 0.0, %v7557
      %7559 = vmatmul.bf16.gmra.mxu0 %v6554
      %v7560 = vpop.f32.mrf.mxu0
      %v7561 = vadd.f32 0.0, %v7560
      %v7562 = vpop.f32.mrf.mxu0
      %v7563 = vadd.f32 0.0, %v7562
      %7564 = vmatmul.bf16.gmra.mxu0 %v6557
      %v7565 = vpop.f32.mrf.mxu0
      %v7566 = vadd.f32 0.0, %v7565
      %v7567 = vpop.f32.mrf.mxu0
      %v7568 = vadd.f32 0.0, %v7567
      %7569 = vmatmul.bf16.gmra.mxu0 %v7023
      %v7570 = vpop.f32.mrf.mxu0
      %v7571 = vadd.f32 0.0, %v7570
      %v7572 = vpop.f32.mrf.mxu0
      %v7573 = vadd.f32 0.0, %v7572
      %7574 = vmatmul.bf16.gmra.mxu0 %v7489
      %v7575 = vpop.f32.mrf.mxu0
      %v7576 = vadd.f32 0.0, %v7575
      %v7577 = vpop.f32.mrf.mxu0
      %v7578 = vadd.f32 0.0, %v7577
      %7579 = vdwg.mxu0
      %v7580 = vadd.f32 %v7428, %v7501
      %v7581 = vadd.f32 %v7429, %v7503
      %v7582 = vadd.f32 %v7430, %v7506
      %v7583 = vadd.f32 %v7431, %v7508
      %v7584 = vadd.f32 %v7432, %v7511
      %v7585 = vadd.f32 %v7433, %v7513
      %v7586 = vadd.f32 %v7434, %v7516
      %v7587 = vadd.f32 %v7435, %v7518
      %v7588 = vadd.f32 %v7436, %v7521
      %v7589 = vadd.f32 %v7437, %v7523
      %v7590 = vadd.f32 %v7438, %v7526
      %v7591 = vadd.f32 %v7439, %v7528
      %v7592 = vadd.f32 %v7440, %v7531
      %v7593 = vadd.f32 %v7441, %v7533
      %v7594 = vadd.f32 %v7442, %v7536
      %v7595 = vadd.f32 %v7443, %v7538
      %v7596 = vadd.f32 %v7444, %v7541
      %v7597 = vadd.f32 %v7445, %v7543
      %v7598 = vadd.f32 %v7446, %v7546
      %v7599 = vadd.f32 %v7447, %v7548
      %v7600 = vadd.f32 %v7448, %v7551
      %v7601 = vadd.f32 %v7449, %v7553
      %v7602 = vadd.f32 %v7450, %v7556
      %v7603 = vadd.f32 %v7451, %v7558
      %v7604 = vadd.f32 %v7452, %v7561
      %v7605 = vadd.f32 %v7453, %v7563
      %v7606 = vadd.f32 %v7454, %v7566
      %v7607 = vadd.f32 %v7455, %v7568
      %v7608 = vadd.f32 %v7456, %v7571
      %v7609 = vadd.f32 %v7457, %v7573
      %v7610 = vadd.f32 %v7458, %v7576
      %v7611 = vadd.f32 %v7459, %v7578
      %v7612 = vmax.f32 %v7580, 0.0
      %v7613 = vmax.f32 %v7581, 0.0
      %v7614 = vmax.f32 %v7582, 0.0
      %v7615 = vmax.f32 %v7583, 0.0
      %v7616 = vmax.f32 %v7584, 0.0
      %v7617 = vmax.f32 %v7585, 0.0
      %v7618 = vmax.f32 %v7586, 0.0
      %v7619 = vmax.f32 %v7587, 0.0
      %v7620 = vmax.f32 %v7588, 0.0
      %v7621 = vmax.f32 %v7589, 0.0
      %v7622 = vmax.f32 %v7590, 0.0
      %v7623 = vmax.f32 %v7591, 0.0
      %v7624 = vmax.f32 %v7592, 0.0
      %v7625 = vmax.f32 %v7593, 0.0
      %v7626 = vmax.f32 %v7594, 0.0
      %v7627 = vmax.f32 %v7595, 0.0
      %v7628 = vmax.f32 %v7596, 0.0
      %v7629 = vmax.f32 %v7597, 0.0
      %v7630 = vmax.f32 %v7598, 0.0
      %v7631 = vmax.f32 %v7599, 0.0
      %v7632 = vmax.f32 %v7600, 0.0
      %v7633 = vmax.f32 %v7601, 0.0
      %v7634 = vmax.f32 %v7602, 0.0
      %v7635 = vmax.f32 %v7603, 0.0
      %v7636 = vmax.f32 %v7604, 0.0
      %v7637 = vmax.f32 %v7605, 0.0
      %v7638 = vmax.f32 %v7606, 0.0
      %v7639 = vmax.f32 %v7607, 0.0
      %v7640 = vmax.f32 %v7608, 0.0
      %v7641 = vmax.f32 %v7609, 0.0
      %v7642 = vmax.f32 %v7610, 0.0
      %v7643 = vmax.f32 %v7611, 0.0
      %7676 = vrot.lane.b32.xlu0 %v7612, 32
      %v7677 = vpop.permute.xlu0 %7676
      %7678 = vrot.lane.b32.xlu0 %v7613, 32
      %v7679 = vpop.permute.xlu0 %7678
      %7680 = vrot.lane.b32.xlu0 %v7614, 32
      %v7681 = vpop.permute.xlu0 %7680
      %7682 = vrot.lane.b32.xlu0 %v7615, 32
      %v7683 = vpop.permute.xlu0 %7682
      %7684 = vrot.lane.b32.xlu0 %v7616, 32
      %v7685 = vpop.permute.xlu0 %7684
      %7686 = vrot.lane.b32.xlu0 %v7617, 32
      %v7687 = vpop.permute.xlu0 %7686
      %7688 = vrot.lane.b32.xlu0 %v7618, 32
      %v7689 = vpop.permute.xlu0 %7688
      %7690 = vrot.lane.b32.xlu0 %v7619, 32
      %v7691 = vpop.permute.xlu0 %7690
      %7692 = vrot.lane.b32.xlu0 %v7620, 32
      %v7693 = vpop.permute.xlu0 %7692
      %7694 = vrot.lane.b32.xlu0 %v7621, 32
      %v7695 = vpop.permute.xlu0 %7694
      %7696 = vrot.lane.b32.xlu0 %v7622, 32
      %v7697 = vpop.permute.xlu0 %7696
      %7698 = vrot.lane.b32.xlu0 %v7623, 32
      %v7699 = vpop.permute.xlu0 %7698
      %7700 = vrot.lane.b32.xlu0 %v7624, 32
      %v7701 = vpop.permute.xlu0 %7700
      %7702 = vrot.lane.b32.xlu0 %v7625, 32
      %v7703 = vpop.permute.xlu0 %7702
      %7704 = vrot.lane.b32.xlu0 %v7626, 32
      %v7705 = vpop.permute.xlu0 %7704
      %7706 = vrot.lane.b32.xlu0 %v7627, 32
      %v7707 = vpop.permute.xlu0 %7706
      %7708 = vrot.lane.b32.xlu0 %v7628, 32
      %v7709 = vpop.permute.xlu0 %7708
      %7710 = vrot.lane.b32.xlu0 %v7629, 32
      %v7711 = vpop.permute.xlu0 %7710
      %7712 = vrot.lane.b32.xlu0 %v7630, 32
      %v7713 = vpop.permute.xlu0 %7712
      %7714 = vrot.lane.b32.xlu0 %v7631, 32
      %v7715 = vpop.permute.xlu0 %7714
      %7716 = vrot.lane.b32.xlu0 %v7632, 32
      %v7717 = vpop.permute.xlu0 %7716
      %7718 = vrot.lane.b32.xlu0 %v7633, 32
      %v7719 = vpop.permute.xlu0 %7718
      %7720 = vrot.lane.b32.xlu0 %v7634, 32
      %v7721 = vpop.permute.xlu0 %7720
      %7722 = vrot.lane.b32.xlu0 %v7635, 32
      %v7723 = vpop.permute.xlu0 %7722
      %7724 = vrot.lane.b32.xlu0 %v7636, 32
      %v7725 = vpop.permute.xlu0 %7724
      %7726 = vrot.lane.b32.xlu0 %v7637, 32
      %v7727 = vpop.permute.xlu0 %7726
      %7728 = vrot.lane.b32.xlu0 %v7638, 32
      %v7729 = vpop.permute.xlu0 %7728
      %7730 = vrot.lane.b32.xlu0 %v7639, 32
      %v7731 = vpop.permute.xlu0 %7730
      %7732 = vrot.lane.b32.xlu0 %v7640, 32
      %v7733 = vpop.permute.xlu0 %7732
      %7734 = vrot.lane.b32.xlu0 %v7641, 32
      %v7735 = vpop.permute.xlu0 %7734
      %7736 = vrot.lane.b32.xlu0 %v7642, 32
      %v7737 = vpop.permute.xlu0 %7736
      %7738 = vrot.lane.b32.xlu0 %v7643, 32
      %v7739 = vpop.permute.xlu0 %7738
      %vm7772 = vcmask 392448
      %7773 = vst.msk [vmem:[%s412 + $0x1] sm:$0xff] %vm7772, %v7677
      %7774 = vst.msk [vmem:[%s412 + $0x9] sm:$0xff] %vm7772, %v7679
      %7775 = vst.msk [vmem:[%s412 + $0x19] sm:$0xff] %vm7772, %v7681
      %7776 = vst.msk [vmem:[%s412 + $0x21] sm:$0xff] %vm7772, %v7683
      %7777 = vst.msk [vmem:[%s412 + $0x31] sm:$0xff] %vm7772, %v7685
      %7778 = vst.msk [vmem:[%s412 + $0x39] sm:$0xff] %vm7772, %v7687
      %7779 = vst.msk [vmem:[%s412 + $0x49] sm:$0xff] %vm7772, %v7689
      %7780 = vst.msk [vmem:[%s412 + $0x51] sm:$0xff] %vm7772, %v7691
      %7781 = vst.msk [vmem:[%s412 + $0x61] sm:$0xff] %vm7772, %v7693
      %7782 = vst.msk [vmem:[%s412 + $0x69] sm:$0xff] %vm7772, %v7695
      %7783 = vst.msk [vmem:[%s412 + $0x79] sm:$0xff] %vm7772, %v7697
      %7784 = vst.msk [vmem:[%s412 + $0x81] sm:$0xff] %vm7772, %v7699
      %7785 = vst.msk [vmem:[%s412 + $0x91] sm:$0xff] %vm7772, %v7701
      %7786 = vst.msk [vmem:[%s412 + $0x99] sm:$0xff] %vm7772, %v7703
      %7787 = vst.msk [vmem:[%s412 + $0xa9] sm:$0xff] %vm7772, %v7705
      %7788 = vst.msk [vmem:[%s412 + $0xb1] sm:$0xff] %vm7772, %v7707
      %7789 = vst.msk [vmem:[%s412 + $0xc1] sm:$0xff] %vm7772, %v7709
      %7790 = vst.msk [vmem:[%s412 + $0xc9] sm:$0xff] %vm7772, %v7711
      %7791 = vst.msk [vmem:[%s412 + $0xd9] sm:$0xff] %vm7772, %v7713
      %7792 = vst.msk [vmem:[%s412 + $0xe1] sm:$0xff] %vm7772, %v7715
      %7793 = vst.msk [vmem:[%s412 + $0xf1] sm:$0xff] %vm7772, %v7717
      %7794 = vst.msk [vmem:[%s412 + $0xf9] sm:$0xff] %vm7772, %v7719
      %7795 = vst.msk [vmem:[%s412 + $0x109] sm:$0xff] %vm7772, %v7721
      %7796 = vst.msk [vmem:[%s412 + $0x111] sm:$0xff] %vm7772, %v7723
      %7797 = vst.msk [vmem:[%s412 + $0x121] sm:$0xff] %vm7772, %v7725
      %7798 = vst.msk [vmem:[%s412 + $0x129] sm:$0xff] %vm7772, %v7727
      %7799 = vst.msk [vmem:[%s412 + $0x139] sm:$0xff] %vm7772, %v7729
      %7800 = vst.msk [vmem:[%s412 + $0x141] sm:$0xff] %vm7772, %v7731
      %7801 = vst.msk [vmem:[%s412 + $0x151] sm:$0xff] %vm7772, %v7733
      %7802 = vst.msk [vmem:[%s412 + $0x159] sm:$0xff] %vm7772, %v7735
      %7803 = vst.msk [vmem:[%s412 + $0x169] sm:$0xff] %vm7772, %v7737
      %7804 = vst.msk [vmem:[%s412 + $0x171] sm:$0xff] %vm7772, %v7739
      %v7805 = vld [vmem:[#allocation2] sm:$0xff]
      %v7806 = vld [vmem:[#allocation2 + $0x8] sm:$0xff]
      %v7807 = vld [vmem:[#allocation2 + $0x10] sm:$0x3]
      %v7808 = vld [vmem:[#allocation2 + $0x18] sm:$0xff]
      %v7809 = vld [vmem:[#allocation2 + $0x20] sm:$0xff]
      %v7810 = vld [vmem:[#allocation2 + $0x28] sm:$0x3]
      %v7811 = vld [vmem:[#allocation2 + $0x30] sm:$0xff]
      %v7812 = vld [vmem:[#allocation2 + $0x38] sm:$0xff]
      %v7813 = vld [vmem:[#allocation2 + $0x40] sm:$0x3]
      %v7814 = vld [vmem:[#allocation2 + $0x48] sm:$0xff]
      %v7815 = vld [vmem:[#allocation2 + $0x50] sm:$0xff]
      %v7816 = vld [vmem:[#allocation2 + $0x58] sm:$0x3]
      %v7817 = vld [vmem:[#allocation2 + $0x60] sm:$0xff]
      %v7818 = vld [vmem:[#allocation2 + $0x68] sm:$0xff]
      %v7819 = vld [vmem:[#allocation2 + $0x70] sm:$0x3]
      %v7820 = vld [vmem:[#allocation2 + $0x78] sm:$0xff]
      %v7821 = vld [vmem:[#allocation2 + $0x80] sm:$0xff]
      %v7822 = vld [vmem:[#allocation2 + $0x88] sm:$0x3]
      %v7823 = vld [vmem:[#allocation2 + $0x90] sm:$0xff]
      %v7824 = vld [vmem:[#allocation2 + $0x98] sm:$0xff]
      %v7825 = vld [vmem:[#allocation2 + $0xa0] sm:$0x3]
      %v7826 = vld [vmem:[#allocation2 + $0xa8] sm:$0xff]
      %v7827 = vld [vmem:[#allocation2 + $0xb0] sm:$0xff]
      %v7828 = vld [vmem:[#allocation2 + $0xb8] sm:$0x3]
      %v7829 = vld [vmem:[#allocation2 + $0xc0] sm:$0xff]
      %v7830 = vld [vmem:[#allocation2 + $0xc8] sm:$0xff]
      %v7831 = vld [vmem:[#allocation2 + $0xd0] sm:$0x3]
      %v7832 = vld [vmem:[#allocation2 + $0xd8] sm:$0xff]
      %v7833 = vld [vmem:[#allocation2 + $0xe0] sm:$0xff]
      %v7834 = vld [vmem:[#allocation2 + $0xe8] sm:$0x3]
      %v7835 = vld [vmem:[#allocation2 + $0xf0] sm:$0xff]
      %v7836 = vld [vmem:[#allocation2 + $0xf8] sm:$0xff]
      %v7837 = vld [vmem:[#allocation2 + $0x100] sm:$0x3]
      %v7838 = vld [vmem:[#allocation2 + $0x108] sm:$0xff]
      %v7839 = vld [vmem:[#allocation2 + $0x110] sm:$0xff]
      %v7840 = vld [vmem:[#allocation2 + $0x118] sm:$0x3]
      %v7841 = vld [vmem:[#allocation2 + $0x120] sm:$0xff]
      %v7842 = vld [vmem:[#allocation2 + $0x128] sm:$0xff]
      %v7843 = vld [vmem:[#allocation2 + $0x130] sm:$0x3]
      %v7844 = vld [vmem:[#allocation2 + $0x138] sm:$0xff]
      %v7845 = vld [vmem:[#allocation2 + $0x140] sm:$0xff]
      %v7846 = vld [vmem:[#allocation2 + $0x148] sm:$0x3]
      %v7847 = vld [vmem:[#allocation2 + $0x150] sm:$0xff]
      %v7848 = vld [vmem:[#allocation2 + $0x158] sm:$0xff]
      %v7849 = vld [vmem:[#allocation2 + $0x160] sm:$0x3]
      %v7850 = vld [vmem:[#allocation2 + $0x168] sm:$0xff]
      %v7851 = vld [vmem:[#allocation2 + $0x170] sm:$0xff]
      %v7852 = vld [vmem:[#allocation2 + $0x178] sm:$0x3]
      %v7853 = vld [vmem:[#allocation2 + $0x180] sm:$0xff]
      %v7854 = vld [vmem:[#allocation2 + $0x188] sm:$0xff]
      %v7855 = vld [vmem:[#allocation2 + $0x190] sm:$0x3]
      %v7856 = vld [vmem:[#allocation2 + $0x198] sm:$0xff]
      %v7857 = vld [vmem:[#allocation2 + $0x1a0] sm:$0xff]
      %v7858 = vld [vmem:[#allocation2 + $0x1a8] sm:$0x3]
      %v7859 = vpack.c.bf16 %v7805, %v7805
      %v7860 = vpack.c.bf16 %v7806, %v7806
      %v7861 = vpack.c.bf16 %v7807, %v7807
      %v7862 = vpack.c.bf16 %v7808, %v7808
      %v7863 = vpack.c.bf16 %v7809, %v7809
      %v7864 = vpack.c.bf16 %v7810, %v7810
      %v7865 = vpack.c.bf16 %v7811, %v7811
      %v7866 = vpack.c.bf16 %v7812, %v7812
      %v7867 = vpack.c.bf16 %v7813, %v7813
      %v7868 = vpack.c.bf16 %v7814, %v7814
      %v7869 = vpack.c.bf16 %v7815, %v7815
      %v7870 = vpack.c.bf16 %v7816, %v7816
      %v7871 = vpack.c.bf16 %v7817, %v7817
      %v7872 = vpack.c.bf16 %v7818, %v7818
      %v7873 = vpack.c.bf16 %v7819, %v7819
      %v7874 = vpack.c.bf16 %v7820, %v7820
      %v7875 = vpack.c.bf16 %v7821, %v7821
      %v7876 = vpack.c.bf16 %v7822, %v7822
      %v7877 = vpack.c.bf16 %v7823, %v7823
      %v7878 = vpack.c.bf16 %v7824, %v7824
      %v7879 = vpack.c.bf16 %v7825, %v7825
      %v7880 = vpack.c.bf16 %v7826, %v7826
      %v7881 = vpack.c.bf16 %v7827, %v7827
      %v7882 = vpack.c.bf16 %v7828, %v7828
      %v7883 = vpack.c.bf16 %v7829, %v7829
      %v7884 = vpack.c.bf16 %v7830, %v7830
      %v7885 = vpack.c.bf16 %v7831, %v7831
      %v7886 = vpack.c.bf16 %v7832, %v7832
      %v7887 = vpack.c.bf16 %v7833, %v7833
      %v7888 = vpack.c.bf16 %v7834, %v7834
      %v7889 = vpack.c.bf16 %v7835, %v7835
      %v7890 = vpack.c.bf16 %v7836, %v7836
      %v7891 = vpack.c.bf16 %v7837, %v7837
      %v7892 = vpack.c.bf16 %v7838, %v7838
      %v7893 = vpack.c.bf16 %v7839, %v7839
      %v7894 = vpack.c.bf16 %v7840, %v7840
      %v7895 = vpack.c.bf16 %v7841, %v7841
      %v7896 = vpack.c.bf16 %v7842, %v7842
      %v7897 = vpack.c.bf16 %v7843, %v7843
      %v7898 = vpack.c.bf16 %v7844, %v7844
      %v7899 = vpack.c.bf16 %v7845, %v7845
      %v7900 = vpack.c.bf16 %v7846, %v7846
      %v7901 = vpack.c.bf16 %v7847, %v7847
      %v7902 = vpack.c.bf16 %v7848, %v7848
      %v7903 = vpack.c.bf16 %v7849, %v7849
      %v7904 = vpack.c.bf16 %v7850, %v7850
      %v7905 = vpack.c.bf16 %v7851, %v7851
      %v7906 = vpack.c.bf16 %v7852, %v7852
      %v7907 = vpack.c.bf16 %v7853, %v7853
      %v7908 = vpack.c.bf16 %v7854, %v7854
      %v7909 = vpack.c.bf16 %v7855, %v7855
      %v7910 = vpack.c.bf16 %v7856, %v7856
      %v7911 = vpack.c.bf16 %v7857, %v7857
      %v7912 = vpack.c.bf16 %v7858, %v7858
      %v7913 = vld [vmem:[%s8] sm:$0xff]
      %v7914 = vld [vmem:[%s8 + $0x8] sm:$0xff]
      %v7915 = vld [vmem:[%s8 + $0x10] sm:$0xff]
      %v7916 = vld [vmem:[%s8 + $0x18] sm:$0xff]
      %v7917 = vld [vmem:[%s8 + $0x20] sm:$0xff]
      %v7918 = vld [vmem:[%s8 + $0x28] sm:$0xff]
      %v7919 = vld [vmem:[%s8 + $0x30] sm:$0xff]
      %v7920 = vld [vmem:[%s8 + $0x38] sm:$0xff]
      %v7921 = vld [vmem:[%s8 + $0x40] sm:$0xff]
      %v7922 = vld [vmem:[%s8 + $0x48] sm:$0xff]
      %v7923 = vld [vmem:[%s8 + $0x50] sm:$0xff]
      %v7924 = vld [vmem:[%s8 + $0x58] sm:$0xff]
      %v7925 = vld [vmem:[%s8 + $0x60] sm:$0xff]
      %v7926 = vld [vmem:[%s8 + $0x68] sm:$0xff]
      %v7927 = vld [vmem:[%s8 + $0x70] sm:$0xff]
      %v7928 = vld [vmem:[%s8 + $0x78] sm:$0xff]
      %v7929 = vld [vmem:[%s8 + $0x80] sm:$0xff]
      %v7930 = vld [vmem:[%s8 + $0x88] sm:$0xff]
      %v7931 = vld [vmem:[%s8 + $0x90] sm:$0xff]
      %v7932 = vld [vmem:[%s8 + $0x98] sm:$0xff]
      %v7933 = vld [vmem:[%s8 + $0xa0] sm:$0xff]
      %v7934 = vld [vmem:[%s8 + $0xa8] sm:$0xff]
      %v7935 = vld [vmem:[%s8 + $0xb0] sm:$0xff]
      %v7936 = vld [vmem:[%s8 + $0xb8] sm:$0xff]
      %v7937 = vld [vmem:[%s8 + $0xc0] sm:$0xff]
      %v7938 = vld [vmem:[%s8 + $0xc8] sm:$0xff]
      %v7939 = vld [vmem:[%s8 + $0xd0] sm:$0xff]
      %v7940 = vld [vmem:[%s8 + $0xd8] sm:$0xff]
      %v7941 = vld [vmem:[%s8 + $0xe0] sm:$0xff]
      %v7942 = vld [vmem:[%s8 + $0xe8] sm:$0xff]
      %v7943 = vld [vmem:[%s8 + $0xf0] sm:$0xff]
      %v7944 = vld [vmem:[%s8 + $0xf8] sm:$0xff]
      %v7945 = vld [vmem:[%s7] sm:$0xf]
      %v7946 = vld [vmem:[%s7 + $0x4] sm:$0xf]
      %v7947 = vld [vmem:[%s7 + $0x8] sm:$0xf]
      %v7948 = vld [vmem:[%s7 + $0xc] sm:$0xf]
      %v7949 = vld [vmem:[%s7 + $0x10] sm:$0xf]
      %v7950 = vld [vmem:[%s7 + $0x14] sm:$0xf]
      %v7983 = vunpack.c.l.b16 %v7859
      %v7984 = vunpack.c.l.b16 %v7860
      %v7985 = vunpack.c.l.b16 %v7862
      %v7986 = vunpack.c.l.b16 %v7863
      %v7987 = vunpack.c.l.b16 %v7865
      %v7988 = vunpack.c.l.b16 %v7866
      %v7989 = vunpack.c.l.b16 %v7868
      %v7990 = vunpack.c.l.b16 %v7869
      %v7991 = vunpack.c.l.b16 %v7871
      %v7992 = vunpack.c.l.b16 %v7872
      %v7993 = vunpack.c.l.b16 %v7874
      %v7994 = vunpack.c.l.b16 %v7875
      %v7995 = vunpack.c.l.b16 %v7877
      %v7996 = vunpack.c.l.b16 %v7878
      %v7997 = vunpack.c.l.b16 %v7880
      %v7998 = vunpack.c.l.b16 %v7881
      %v7999 = vunpack.c.l.b16 %v7883
      %v8000 = vunpack.c.l.b16 %v7884
      %v8001 = vunpack.c.l.b16 %v7886
      %v8002 = vunpack.c.l.b16 %v7887
      %v8003 = vunpack.c.l.b16 %v7889
      %v8004 = vunpack.c.l.b16 %v7890
      %v8005 = vunpack.c.l.b16 %v7892
      %v8006 = vunpack.c.l.b16 %v7893
      %v8007 = vunpack.c.l.b16 %v7895
      %v8008 = vunpack.c.l.b16 %v7896
      %v8009 = vunpack.c.l.b16 %v7898
      %v8010 = vunpack.c.l.b16 %v7899
      %v8011 = vunpack.c.l.b16 %v7901
      %v8012 = vunpack.c.l.b16 %v7902
      %v8013 = vunpack.c.l.b16 %v7904
      %v8014 = vunpack.c.l.b16 %v7905
      %v8015 = vpack.c.b16 %v7984, %v7983
      %v8016 = vpack.c.b16 %v7986, %v7985
      %v8017 = vpack.c.b16 %v7988, %v7987
      %v8018 = vpack.c.b16 %v7990, %v7989
      %v8019 = vpack.c.b16 %v7992, %v7991
      %v8020 = vpack.c.b16 %v7994, %v7993
      %v8021 = vpack.c.b16 %v7996, %v7995
      %v8022 = vpack.c.b16 %v7998, %v7997
      %v8023 = vpack.c.b16 %v8000, %v7999
      %v8024 = vpack.c.b16 %v8002, %v8001
      %v8025 = vpack.c.b16 %v8004, %v8003
      %v8026 = vpack.c.b16 %v8006, %v8005
      %v8027 = vpack.c.b16 %v8008, %v8007
      %v8028 = vpack.c.b16 %v8010, %v8009
      %v8029 = vpack.c.b16 %v8012, %v8011
      %v8030 = vpack.c.b16 %v8014, %v8013
      %v8037 = vunpack.c.l.b16 %v7945
      %v8038 = vunpack.c.l.b16 %v7946
      %v8039 = vunpack.c.l.b16 %v7947
      %v8040 = vunpack.c.l.b16 %v7948
      %v8041 = vunpack.c.l.b16 %v7949
      %v8042 = vunpack.c.l.b16 %v7950
      %v8043 = vpack.c.b16 %v8038, %v8037
      %v8044 = vpack.c.b16 %v8040, %v8039
      %v8045 = vpack.c.b16 %v8042, %v8041
      %v8050 = vsel %vm334, %v8015, 0
      %v8053 = vsel %vm334, %v8016, 0
      %v8056 = vsel %vm334, %v8017, 0
      %v8059 = vsel %vm334, %v8018, 0
      %v8062 = vsel %vm334, %v8019, 0
      %v8065 = vsel %vm334, %v8020, 0
      %v8068 = vsel %vm334, %v8021, 0
      %v8071 = vsel %vm334, %v8022, 0
      %v8074 = vsel %vm334, %v8023, 0
      %v8077 = vsel %vm334, %v8024, 0
      %v8080 = vsel %vm334, %v8025, 0
      %v8083 = vsel %vm334, %v8026, 0
      %v8086 = vsel %vm334, %v8027, 0
      %v8089 = vsel %vm334, %v8028, 0
      %v8092 = vsel %vm334, %v8029, 0
      %v8095 = vsel %vm334, %v8030, 0
      %8097 = vmatpush.bf16.msra.mxu0 0
      %8098 = vmatpush.bf16.msra.mxu0 0
      %8099 = vmatpush.bf16.msra.mxu0 0
      %8100 = vmatpush.bf16.msra.mxu0 0
      %8101 = vmatpush.bf16.msra.mxu0 0
      %8102 = vmatpush.bf16.msra.mxu0 %v8045
      %8103 = vmatpush.bf16.msra.mxu0 %v8044
      %8104 = vmatpush.bf16.msra.mxu0 %v8043
      %8105 = vmatmul.bf16.gmra.mxu0 %v8050
      %v8106 = vpop.f32.mrf.mxu0
      %v8107 = vadd.f32 0.0, %v8106
      %v8108 = vpop.f32.mrf.mxu0
      %v8109 = vadd.f32 0.0, %v8108
      %8110 = vmatmul.bf16.gmra.mxu0 %v8053
      %v8111 = vpop.f32.mrf.mxu0
      %v8112 = vadd.f32 0.0, %v8111
      %v8113 = vpop.f32.mrf.mxu0
      %v8114 = vadd.f32 0.0, %v8113
      %8115 = vmatmul.bf16.gmra.mxu0 %v8056
      %v8116 = vpop.f32.mrf.mxu0
      %v8117 = vadd.f32 0.0, %v8116
      %v8118 = vpop.f32.mrf.mxu0
      %v8119 = vadd.f32 0.0, %v8118
      %8120 = vmatmul.bf16.gmra.mxu0 %v8059
      %v8121 = vpop.f32.mrf.mxu0
      %v8122 = vadd.f32 0.0, %v8121
      %v8123 = vpop.f32.mrf.mxu0
      %v8124 = vadd.f32 0.0, %v8123
      %8125 = vmatmul.bf16.gmra.mxu0 %v8062
      %v8126 = vpop.f32.mrf.mxu0
      %v8127 = vadd.f32 0.0, %v8126
      %v8128 = vpop.f32.mrf.mxu0
      %v8129 = vadd.f32 0.0, %v8128
      %8130 = vmatmul.bf16.gmra.mxu0 %v8065
      %v8131 = vpop.f32.mrf.mxu0
      %v8132 = vadd.f32 0.0, %v8131
      %v8133 = vpop.f32.mrf.mxu0
      %v8134 = vadd.f32 0.0, %v8133
      %8135 = vmatmul.bf16.gmra.mxu0 %v8068
      %v8136 = vpop.f32.mrf.mxu0
      %v8137 = vadd.f32 0.0, %v8136
      %v8138 = vpop.f32.mrf.mxu0
      %v8139 = vadd.f32 0.0, %v8138
      %8140 = vmatmul.bf16.gmra.mxu0 %v8071
      %v8141 = vpop.f32.mrf.mxu0
      %v8142 = vadd.f32 0.0, %v8141
      %v8143 = vpop.f32.mrf.mxu0
      %v8144 = vadd.f32 0.0, %v8143
      %8145 = vmatmul.bf16.gmra.mxu0 %v8074
      %v8146 = vpop.f32.mrf.mxu0
      %v8147 = vadd.f32 0.0, %v8146
      %v8148 = vpop.f32.mrf.mxu0
      %v8149 = vadd.f32 0.0, %v8148
      %8150 = vmatmul.bf16.gmra.mxu0 %v8077
      %v8151 = vpop.f32.mrf.mxu0
      %v8152 = vadd.f32 0.0, %v8151
      %v8153 = vpop.f32.mrf.mxu0
      %v8154 = vadd.f32 0.0, %v8153
      %8155 = vmatmul.bf16.gmra.mxu0 %v8080
      %v8156 = vpop.f32.mrf.mxu0
      %v8157 = vadd.f32 0.0, %v8156
      %v8158 = vpop.f32.mrf.mxu0
      %v8159 = vadd.f32 0.0, %v8158
      %8160 = vmatmul.bf16.gmra.mxu0 %v8083
      %v8161 = vpop.f32.mrf.mxu0
      %v8162 = vadd.f32 0.0, %v8161
      %v8163 = vpop.f32.mrf.mxu0
      %v8164 = vadd.f32 0.0, %v8163
      %8165 = vmatmul.bf16.gmra.mxu0 %v8086
      %v8166 = vpop.f32.mrf.mxu0
      %v8167 = vadd.f32 0.0, %v8166
      %v8168 = vpop.f32.mrf.mxu0
      %v8169 = vadd.f32 0.0, %v8168
      %8170 = vmatmul.bf16.gmra.mxu0 %v8089
      %v8171 = vpop.f32.mrf.mxu0
      %v8172 = vadd.f32 0.0, %v8171
      %v8173 = vpop.f32.mrf.mxu0
      %v8174 = vadd.f32 0.0, %v8173
      %8175 = vmatmul.bf16.gmra.mxu0 %v8092
      %v8176 = vpop.f32.mrf.mxu0
      %v8177 = vadd.f32 0.0, %v8176
      %v8178 = vpop.f32.mrf.mxu0
      %v8179 = vadd.f32 0.0, %v8178
      %8180 = vmatmul.bf16.gmra.mxu0 %v8095
      %v8181 = vpop.f32.mrf.mxu0
      %v8182 = vadd.f32 0.0, %v8181
      %v8183 = vpop.f32.mrf.mxu0
      %v8184 = vadd.f32 0.0, %v8183
      %8185 = vdwg.mxu0
      %v8186 = vadd.f32 %v7913, %v8107
      %v8187 = vadd.f32 %v7914, %v8109
      %v8188 = vadd.f32 %v7915, %v8112
      %v8189 = vadd.f32 %v7916, %v8114
      %v8190 = vadd.f32 %v7917, %v8117
      %v8191 = vadd.f32 %v7918, %v8119
      %v8192 = vadd.f32 %v7919, %v8122
      %v8193 = vadd.f32 %v7920, %v8124
      %v8194 = vadd.f32 %v7921, %v8127
      %v8195 = vadd.f32 %v7922, %v8129
      %v8196 = vadd.f32 %v7923, %v8132
      %v8197 = vadd.f32 %v7924, %v8134
      %v8198 = vadd.f32 %v7925, %v8137
      %v8199 = vadd.f32 %v7926, %v8139
      %v8200 = vadd.f32 %v7927, %v8142
      %v8201 = vadd.f32 %v7928, %v8144
      %v8202 = vadd.f32 %v7929, %v8147
      %v8203 = vadd.f32 %v7930, %v8149
      %v8204 = vadd.f32 %v7931, %v8152
      %v8205 = vadd.f32 %v7932, %v8154
      %v8206 = vadd.f32 %v7933, %v8157
      %v8207 = vadd.f32 %v7934, %v8159
      %v8208 = vadd.f32 %v7935, %v8162
      %v8209 = vadd.f32 %v7936, %v8164
      %v8210 = vadd.f32 %v7937, %v8167
      %v8211 = vadd.f32 %v7938, %v8169
      %v8212 = vadd.f32 %v7939, %v8172
      %v8213 = vadd.f32 %v7940, %v8174
      %v8214 = vadd.f32 %v7941, %v8177
      %v8215 = vadd.f32 %v7942, %v8179
      %v8216 = vadd.f32 %v7943, %v8182
      %v8217 = vadd.f32 %v7944, %v8184
      %v8219 = vshrl.u32 %v7859, 16
      %v8221 = vrot.slane %v8219, 4
      %v8222 = vshll.u32 %v7859, 16
      %v8224 = vrot.slane %v8222, 5
      %v8225 = vor.u32 %v8221, %v8224
      %v8226 = vrot.slane %v8225, 4
      %v8228 = vshll.u32 %v7860, 16
      %v8230 = vrot.slane %v8228, 5
      %v8231 = vsel %vm842, %v8226, %v8230
      %v8232 = vshrl.u32 %v7860, 16
      %v8234 = vrot.slane %v8232, 4
      %v8235 = vor.u32 %v8234, %v8230
      %v8236 = vrot.slane %v8235, 4
      %v8238 = vshll.u32 %v7861, 16
      %v8240 = vrot.slane %v8238, 5
      %v8241 = vsel %vm842, %v8236, %v8240
      %v8243 = vshrl.u32 %v7862, 16
      %v8245 = vrot.slane %v8243, 4
      %v8246 = vshll.u32 %v7862, 16
      %v8248 = vrot.slane %v8246, 5
      %v8249 = vor.u32 %v8245, %v8248
      %v8250 = vrot.slane %v8249, 4
      %v8252 = vshll.u32 %v7863, 16
      %v8254 = vrot.slane %v8252, 5
      %v8255 = vsel %vm842, %v8250, %v8254
      %v8256 = vshrl.u32 %v7863, 16
      %v8258 = vrot.slane %v8256, 4
      %v8259 = vor.u32 %v8258, %v8254
      %v8260 = vrot.slane %v8259, 4
      %v8262 = vshll.u32 %v7864, 16
      %v8264 = vrot.slane %v8262, 5
      %v8265 = vsel %vm842, %v8260, %v8264
      %v8267 = vshrl.u32 %v7865, 16
      %v8269 = vrot.slane %v8267, 4
      %v8270 = vshll.u32 %v7865, 16
      %v8272 = vrot.slane %v8270, 5
      %v8273 = vor.u32 %v8269, %v8272
      %v8274 = vrot.slane %v8273, 4
      %v8276 = vshll.u32 %v7866, 16
      %v8278 = vrot.slane %v8276, 5
      %v8279 = vsel %vm842, %v8274, %v8278
      %v8280 = vshrl.u32 %v7866, 16
      %v8282 = vrot.slane %v8280, 4
      %v8283 = vor.u32 %v8282, %v8278
      %v8284 = vrot.slane %v8283, 4
      %v8286 = vshll.u32 %v7867, 16
      %v8288 = vrot.slane %v8286, 5
      %v8289 = vsel %vm842, %v8284, %v8288
      %v8291 = vshrl.u32 %v7868, 16
      %v8293 = vrot.slane %v8291, 4
      %v8294 = vshll.u32 %v7868, 16
      %v8296 = vrot.slane %v8294, 5
      %v8297 = vor.u32 %v8293, %v8296
      %v8298 = vrot.slane %v8297, 4
      %v8300 = vshll.u32 %v7869, 16
      %v8302 = vrot.slane %v8300, 5
      %v8303 = vsel %vm842, %v8298, %v8302
      %v8304 = vshrl.u32 %v7869, 16
      %v8306 = vrot.slane %v8304, 4
      %v8307 = vor.u32 %v8306, %v8302
      %v8308 = vrot.slane %v8307, 4
      %v8310 = vshll.u32 %v7870, 16
      %v8312 = vrot.slane %v8310, 5
      %v8313 = vsel %vm842, %v8308, %v8312
      %v8315 = vshrl.u32 %v7871, 16
      %v8317 = vrot.slane %v8315, 4
      %v8318 = vshll.u32 %v7871, 16
      %v8320 = vrot.slane %v8318, 5
      %v8321 = vor.u32 %v8317, %v8320
      %v8322 = vrot.slane %v8321, 4
      %v8324 = vshll.u32 %v7872, 16
      %v8326 = vrot.slane %v8324, 5
      %v8327 = vsel %vm842, %v8322, %v8326
      %v8328 = vshrl.u32 %v7872, 16
      %v8330 = vrot.slane %v8328, 4
      %v8331 = vor.u32 %v8330, %v8326
      %v8332 = vrot.slane %v8331, 4
      %v8334 = vshll.u32 %v7873, 16
      %v8336 = vrot.slane %v8334, 5
      %v8337 = vsel %vm842, %v8332, %v8336
      %v8339 = vshrl.u32 %v7874, 16
      %v8341 = vrot.slane %v8339, 4
      %v8342 = vshll.u32 %v7874, 16
      %v8344 = vrot.slane %v8342, 5
      %v8345 = vor.u32 %v8341, %v8344
      %v8346 = vrot.slane %v8345, 4
      %v8348 = vshll.u32 %v7875, 16
      %v8350 = vrot.slane %v8348, 5
      %v8351 = vsel %vm842, %v8346, %v8350
      %v8352 = vshrl.u32 %v7875, 16
      %v8354 = vrot.slane %v8352, 4
      %v8355 = vor.u32 %v8354, %v8350
      %v8356 = vrot.slane %v8355, 4
      %v8358 = vshll.u32 %v7876, 16
      %v8360 = vrot.slane %v8358, 5
      %v8361 = vsel %vm842, %v8356, %v8360
      %v8363 = vshrl.u32 %v7877, 16
      %v8365 = vrot.slane %v8363, 4
      %v8366 = vshll.u32 %v7877, 16
      %v8368 = vrot.slane %v8366, 5
      %v8369 = vor.u32 %v8365, %v8368
      %v8370 = vrot.slane %v8369, 4
      %v8372 = vshll.u32 %v7878, 16
      %v8374 = vrot.slane %v8372, 5
      %v8375 = vsel %vm842, %v8370, %v8374
      %v8376 = vshrl.u32 %v7878, 16
      %v8378 = vrot.slane %v8376, 4
      %v8379 = vor.u32 %v8378, %v8374
      %v8380 = vrot.slane %v8379, 4
      %v8382 = vshll.u32 %v7879, 16
      %v8384 = vrot.slane %v8382, 5
      %v8385 = vsel %vm842, %v8380, %v8384
      %v8387 = vshrl.u32 %v7880, 16
      %v8389 = vrot.slane %v8387, 4
      %v8390 = vshll.u32 %v7880, 16
      %v8392 = vrot.slane %v8390, 5
      %v8393 = vor.u32 %v8389, %v8392
      %v8394 = vrot.slane %v8393, 4
      %v8396 = vshll.u32 %v7881, 16
      %v8398 = vrot.slane %v8396, 5
      %v8399 = vsel %vm842, %v8394, %v8398
      %v8400 = vshrl.u32 %v7881, 16
      %v8402 = vrot.slane %v8400, 4
      %v8403 = vor.u32 %v8402, %v8398
      %v8404 = vrot.slane %v8403, 4
      %v8406 = vshll.u32 %v7882, 16
      %v8408 = vrot.slane %v8406, 5
      %v8409 = vsel %vm842, %v8404, %v8408
      %v8411 = vshrl.u32 %v7883, 16
      %v8413 = vrot.slane %v8411, 4
      %v8414 = vshll.u32 %v7883, 16
      %v8416 = vrot.slane %v8414, 5
      %v8417 = vor.u32 %v8413, %v8416
      %v8418 = vrot.slane %v8417, 4
      %v8420 = vshll.u32 %v7884, 16
      %v8422 = vrot.slane %v8420, 5
      %v8423 = vsel %vm842, %v8418, %v8422
      %v8424 = vshrl.u32 %v7884, 16
      %v8426 = vrot.slane %v8424, 4
      %v8427 = vor.u32 %v8426, %v8422
      %v8428 = vrot.slane %v8427, 4
      %v8430 = vshll.u32 %v7885, 16
      %v8432 = vrot.slane %v8430, 5
      %v8433 = vsel %vm842, %v8428, %v8432
      %v8435 = vshrl.u32 %v7886, 16
      %v8437 = vrot.slane %v8435, 4
      %v8438 = vshll.u32 %v7886, 16
      %v8440 = vrot.slane %v8438, 5
      %v8441 = vor.u32 %v8437, %v8440
      %v8442 = vrot.slane %v8441, 4
      %v8444 = vshll.u32 %v7887, 16
      %v8446 = vrot.slane %v8444, 5
      %v8447 = vsel %vm842, %v8442, %v8446
      %v8448 = vshrl.u32 %v7887, 16
      %v8450 = vrot.slane %v8448, 4
      %v8451 = vor.u32 %v8450, %v8446
      %v8452 = vrot.slane %v8451, 4
      %v8454 = vshll.u32 %v7888, 16
      %v8456 = vrot.slane %v8454, 5
      %v8457 = vsel %vm842, %v8452, %v8456
      %v8459 = vshrl.u32 %v7889, 16
      %v8461 = vrot.slane %v8459, 4
      %v8462 = vshll.u32 %v7889, 16
      %v8464 = vrot.slane %v8462, 5
      %v8465 = vor.u32 %v8461, %v8464
      %v8466 = vrot.slane %v8465, 4
      %v8468 = vshll.u32 %v7890, 16
      %v8470 = vrot.slane %v8468, 5
      %v8471 = vsel %vm842, %v8466, %v8470
      %v8472 = vshrl.u32 %v7890, 16
      %v8474 = vrot.slane %v8472, 4
      %v8475 = vor.u32 %v8474, %v8470
      %v8476 = vrot.slane %v8475, 4
      %v8478 = vshll.u32 %v7891, 16
      %v8480 = vrot.slane %v8478, 5
      %v8481 = vsel %vm842, %v8476, %v8480
      %v8483 = vshrl.u32 %v7892, 16
      %v8485 = vrot.slane %v8483, 4
      %v8486 = vshll.u32 %v7892, 16
      %v8488 = vrot.slane %v8486, 5
      %v8489 = vor.u32 %v8485, %v8488
      %v8490 = vrot.slane %v8489, 4
      %v8492 = vshll.u32 %v7893, 16
      %v8494 = vrot.slane %v8492, 5
      %v8495 = vsel %vm842, %v8490, %v8494
      %v8496 = vshrl.u32 %v7893, 16
      %v8498 = vrot.slane %v8496, 4
      %v8499 = vor.u32 %v8498, %v8494
      %v8500 = vrot.slane %v8499, 4
      %v8502 = vshll.u32 %v7894, 16
      %v8504 = vrot.slane %v8502, 5
      %v8505 = vsel %vm842, %v8500, %v8504
      %v8507 = vshrl.u32 %v7895, 16
      %v8509 = vrot.slane %v8507, 4
      %v8510 = vshll.u32 %v7895, 16
      %v8512 = vrot.slane %v8510, 5
      %v8513 = vor.u32 %v8509, %v8512
      %v8514 = vrot.slane %v8513, 4
      %v8516 = vshll.u32 %v7896, 16
      %v8518 = vrot.slane %v8516, 5
      %v8519 = vsel %vm842, %v8514, %v8518
      %v8520 = vshrl.u32 %v7896, 16
      %v8522 = vrot.slane %v8520, 4
      %v8523 = vor.u32 %v8522, %v8518
      %v8524 = vrot.slane %v8523, 4
      %v8526 = vshll.u32 %v7897, 16
      %v8528 = vrot.slane %v8526, 5
      %v8529 = vsel %vm842, %v8524, %v8528
      %v8531 = vshrl.u32 %v7898, 16
      %v8533 = vrot.slane %v8531, 4
      %v8534 = vshll.u32 %v7898, 16
      %v8536 = vrot.slane %v8534, 5
      %v8537 = vor.u32 %v8533, %v8536
      %v8538 = vrot.slane %v8537, 4
      %v8540 = vshll.u32 %v7899, 16
      %v8542 = vrot.slane %v8540, 5
      %v8543 = vsel %vm842, %v8538, %v8542
      %v8544 = vshrl.u32 %v7899, 16
      %v8546 = vrot.slane %v8544, 4
      %v8547 = vor.u32 %v8546, %v8542
      %v8548 = vrot.slane %v8547, 4
      %v8550 = vshll.u32 %v7900, 16
      %v8552 = vrot.slane %v8550, 5
      %v8553 = vsel %vm842, %v8548, %v8552
      %v8555 = vshrl.u32 %v7901, 16
      %v8557 = vrot.slane %v8555, 4
      %v8558 = vshll.u32 %v7901, 16
      %v8560 = vrot.slane %v8558, 5
      %v8561 = vor.u32 %v8557, %v8560
      %v8562 = vrot.slane %v8561, 4
      %v8564 = vshll.u32 %v7902, 16
      %v8566 = vrot.slane %v8564, 5
      %v8567 = vsel %vm842, %v8562, %v8566
      %v8568 = vshrl.u32 %v7902, 16
      %v8570 = vrot.slane %v8568, 4
      %v8571 = vor.u32 %v8570, %v8566
      %v8572 = vrot.slane %v8571, 4
      %v8574 = vshll.u32 %v7903, 16
      %v8576 = vrot.slane %v8574, 5
      %v8577 = vsel %vm842, %v8572, %v8576
      %v8579 = vshrl.u32 %v7904, 16
      %v8581 = vrot.slane %v8579, 4
      %v8582 = vshll.u32 %v7904, 16
      %v8584 = vrot.slane %v8582, 5
      %v8585 = vor.u32 %v8581, %v8584
      %v8586 = vrot.slane %v8585, 4
      %v8588 = vshll.u32 %v7905, 16
      %v8590 = vrot.slane %v8588, 5
      %v8591 = vsel %vm842, %v8586, %v8590
      %v8592 = vshrl.u32 %v7905, 16
      %v8594 = vrot.slane %v8592, 4
      %v8595 = vor.u32 %v8594, %v8590
      %v8596 = vrot.slane %v8595, 4
      %v8598 = vshll.u32 %v7906, 16
      %v8600 = vrot.slane %v8598, 5
      %v8601 = vsel %vm842, %v8596, %v8600
      %s8602 = scalar_lea.vmem %s7, 24
      %v8603 = vld [vmem:[%s8602] sm:$0xf]
      %v8604 = vld [vmem:[%s8602 + $0x4] sm:$0xf]
      %v8605 = vld [vmem:[%s8602 + $0x8] sm:$0xf]
      %v8606 = vld [vmem:[%s8602 + $0xc] sm:$0xf]
      %v8607 = vld [vmem:[%s8602 + $0x10] sm:$0xf]
      %v8608 = vld [vmem:[%s8602 + $0x14] sm:$0xf]
      %v8609 = vunpack.c.l.b16 %v8231
      %v8610 = vunpack.c.l.b16 %v8241
      %v8611 = vunpack.c.l.b16 %v8255
      %v8612 = vunpack.c.l.b16 %v8265
      %v8613 = vunpack.c.l.b16 %v8279
      %v8614 = vunpack.c.l.b16 %v8289
      %v8615 = vunpack.c.l.b16 %v8303
      %v8616 = vunpack.c.l.b16 %v8313
      %v8617 = vunpack.c.l.b16 %v8327
      %v8618 = vunpack.c.l.b16 %v8337
      %v8619 = vunpack.c.l.b16 %v8351
      %v8620 = vunpack.c.l.b16 %v8361
      %v8621 = vunpack.c.l.b16 %v8375
      %v8622 = vunpack.c.l.b16 %v8385
      %v8623 = vunpack.c.l.b16 %v8399
      %v8624 = vunpack.c.l.b16 %v8409
      %v8625 = vunpack.c.l.b16 %v8423
      %v8626 = vunpack.c.l.b16 %v8433
      %v8627 = vunpack.c.l.b16 %v8447
      %v8628 = vunpack.c.l.b16 %v8457
      %v8629 = vunpack.c.l.b16 %v8471
      %v8630 = vunpack.c.l.b16 %v8481
      %v8631 = vunpack.c.l.b16 %v8495
      %v8632 = vunpack.c.l.b16 %v8505
      %v8633 = vunpack.c.l.b16 %v8519
      %v8634 = vunpack.c.l.b16 %v8529
      %v8635 = vunpack.c.l.b16 %v8543
      %v8636 = vunpack.c.l.b16 %v8553
      %v8637 = vunpack.c.l.b16 %v8567
      %v8638 = vunpack.c.l.b16 %v8577
      %v8639 = vunpack.c.l.b16 %v8591
      %v8640 = vunpack.c.l.b16 %v8601
      %v8641 = vpack.c.b16 %v8610, %v8609
      %v8642 = vpack.c.b16 %v8612, %v8611
      %v8643 = vpack.c.b16 %v8614, %v8613
      %v8644 = vpack.c.b16 %v8616, %v8615
      %v8645 = vpack.c.b16 %v8618, %v8617
      %v8646 = vpack.c.b16 %v8620, %v8619
      %v8647 = vpack.c.b16 %v8622, %v8621
      %v8648 = vpack.c.b16 %v8624, %v8623
      %v8649 = vpack.c.b16 %v8626, %v8625
      %v8650 = vpack.c.b16 %v8628, %v8627
      %v8651 = vpack.c.b16 %v8630, %v8629
      %v8652 = vpack.c.b16 %v8632, %v8631
      %v8653 = vpack.c.b16 %v8634, %v8633
      %v8654 = vpack.c.b16 %v8636, %v8635
      %v8655 = vpack.c.b16 %v8638, %v8637
      %v8656 = vpack.c.b16 %v8640, %v8639
      %v8663 = vunpack.c.l.b16 %v8603
      %v8664 = vunpack.c.l.b16 %v8604
      %v8665 = vunpack.c.l.b16 %v8605
      %v8666 = vunpack.c.l.b16 %v8606
      %v8667 = vunpack.c.l.b16 %v8607
      %v8668 = vunpack.c.l.b16 %v8608
      %v8669 = vpack.c.b16 %v8664, %v8663
      %v8670 = vpack.c.b16 %v8666, %v8665
      %v8671 = vpack.c.b16 %v8668, %v8667
      %v8676 = vsel %vm334, %v8641, 0
      %v8679 = vsel %vm334, %v8642, 0
      %v8682 = vsel %vm334, %v8643, 0
      %v8685 = vsel %vm334, %v8644, 0
      %v8688 = vsel %vm334, %v8645, 0
      %v8691 = vsel %vm334, %v8646, 0
      %v8694 = vsel %vm334, %v8647, 0
      %v8697 = vsel %vm334, %v8648, 0
      %v8700 = vsel %vm334, %v8649, 0
      %v8703 = vsel %vm334, %v8650, 0
      %v8706 = vsel %vm334, %v8651, 0
      %v8709 = vsel %vm334, %v8652, 0
      %v8712 = vsel %vm334, %v8653, 0
      %v8715 = vsel %vm334, %v8654, 0
      %v8718 = vsel %vm334, %v8655, 0
      %v8721 = vsel %vm334, %v8656, 0
      %8723 = vmatpush.bf16.msra.mxu0 0
      %8724 = vmatpush.bf16.msra.mxu0 0
      %8725 = vmatpush.bf16.msra.mxu0 0
      %8726 = vmatpush.bf16.msra.mxu0 0
      %8727 = vmatpush.bf16.msra.mxu0 0
      %8728 = vmatpush.bf16.msra.mxu0 %v8671
      %8729 = vmatpush.bf16.msra.mxu0 %v8670
      %8730 = vmatpush.bf16.msra.mxu0 %v8669
      %8731 = vmatmul.bf16.gmra.mxu0 %v8676
      %v8732 = vpop.f32.mrf.mxu0
      %v8733 = vadd.f32 0.0, %v8732
      %v8734 = vpop.f32.mrf.mxu0
      %v8735 = vadd.f32 0.0, %v8734
      %8736 = vmatmul.bf16.gmra.mxu0 %v8679
      %v8737 = vpop.f32.mrf.mxu0
      %v8738 = vadd.f32 0.0, %v8737
      %v8739 = vpop.f32.mrf.mxu0
      %v8740 = vadd.f32 0.0, %v8739
      %8741 = vmatmul.bf16.gmra.mxu0 %v8682
      %v8742 = vpop.f32.mrf.mxu0
      %v8743 = vadd.f32 0.0, %v8742
      %v8744 = vpop.f32.mrf.mxu0
      %v8745 = vadd.f32 0.0, %v8744
      %8746 = vmatmul.bf16.gmra.mxu0 %v8685
      %v8747 = vpop.f32.mrf.mxu0
      %v8748 = vadd.f32 0.0, %v8747
      %v8749 = vpop.f32.mrf.mxu0
      %v8750 = vadd.f32 0.0, %v8749
      %8751 = vmatmul.bf16.gmra.mxu0 %v8688
      %v8752 = vpop.f32.mrf.mxu0
      %v8753 = vadd.f32 0.0, %v8752
      %v8754 = vpop.f32.mrf.mxu0
      %v8755 = vadd.f32 0.0, %v8754
      %8756 = vmatmul.bf16.gmra.mxu0 %v8691
      %v8757 = vpop.f32.mrf.mxu0
      %v8758 = vadd.f32 0.0, %v8757
      %v8759 = vpop.f32.mrf.mxu0
      %v8760 = vadd.f32 0.0, %v8759
      %8761 = vmatmul.bf16.gmra.mxu0 %v8694
      %v8762 = vpop.f32.mrf.mxu0
      %v8763 = vadd.f32 0.0, %v8762
      %v8764 = vpop.f32.mrf.mxu0
      %v8765 = vadd.f32 0.0, %v8764
      %8766 = vmatmul.bf16.gmra.mxu0 %v8697
      %v8767 = vpop.f32.mrf.mxu0
      %v8768 = vadd.f32 0.0, %v8767
      %v8769 = vpop.f32.mrf.mxu0
      %v8770 = vadd.f32 0.0, %v8769
      %8771 = vmatmul.bf16.gmra.mxu0 %v8700
      %v8772 = vpop.f32.mrf.mxu0
      %v8773 = vadd.f32 0.0, %v8772
      %v8774 = vpop.f32.mrf.mxu0
      %v8775 = vadd.f32 0.0, %v8774
      %8776 = vmatmul.bf16.gmra.mxu0 %v8703
      %v8777 = vpop.f32.mrf.mxu0
      %v8778 = vadd.f32 0.0, %v8777
      %v8779 = vpop.f32.mrf.mxu0
      %v8780 = vadd.f32 0.0, %v8779
      %8781 = vmatmul.bf16.gmra.mxu0 %v8706
      %v8782 = vpop.f32.mrf.mxu0
      %v8783 = vadd.f32 0.0, %v8782
      %v8784 = vpop.f32.mrf.mxu0
      %v8785 = vadd.f32 0.0, %v8784
      %8786 = vmatmul.bf16.gmra.mxu0 %v8709
      %v8787 = vpop.f32.mrf.mxu0
      %v8788 = vadd.f32 0.0, %v8787
      %v8789 = vpop.f32.mrf.mxu0
      %v8790 = vadd.f32 0.0, %v8789
      %8791 = vmatmul.bf16.gmra.mxu0 %v8712
      %v8792 = vpop.f32.mrf.mxu0
      %v8793 = vadd.f32 0.0, %v8792
      %v8794 = vpop.f32.mrf.mxu0
      %v8795 = vadd.f32 0.0, %v8794
      %8796 = vmatmul.bf16.gmra.mxu0 %v8715
      %v8797 = vpop.f32.mrf.mxu0
      %v8798 = vadd.f32 0.0, %v8797
      %v8799 = vpop.f32.mrf.mxu0
      %v8800 = vadd.f32 0.0, %v8799
      %8801 = vmatmul.bf16.gmra.mxu0 %v8718
      %v8802 = vpop.f32.mrf.mxu0
      %v8803 = vadd.f32 0.0, %v8802
      %v8804 = vpop.f32.mrf.mxu0
      %v8805 = vadd.f32 0.0, %v8804
      %8806 = vmatmul.bf16.gmra.mxu0 %v8721
      %v8807 = vpop.f32.mrf.mxu0
      %v8808 = vadd.f32 0.0, %v8807
      %v8809 = vpop.f32.mrf.mxu0
      %v8810 = vadd.f32 0.0, %v8809
      %8811 = vdwg.mxu0
      %v8812 = vadd.f32 %v8186, %v8733
      %v8813 = vadd.f32 %v8187, %v8735
      %v8814 = vadd.f32 %v8188, %v8738
      %v8815 = vadd.f32 %v8189, %v8740
      %v8816 = vadd.f32 %v8190, %v8743
      %v8817 = vadd.f32 %v8191, %v8745
      %v8818 = vadd.f32 %v8192, %v8748
      %v8819 = vadd.f32 %v8193, %v8750
      %v8820 = vadd.f32 %v8194, %v8753
      %v8821 = vadd.f32 %v8195, %v8755
      %v8822 = vadd.f32 %v8196, %v8758
      %v8823 = vadd.f32 %v8197, %v8760
      %v8824 = vadd.f32 %v8198, %v8763
      %v8825 = vadd.f32 %v8199, %v8765
      %v8826 = vadd.f32 %v8200, %v8768
      %v8827 = vadd.f32 %v8201, %v8770
      %v8828 = vadd.f32 %v8202, %v8773
      %v8829 = vadd.f32 %v8203, %v8775
      %v8830 = vadd.f32 %v8204, %v8778
      %v8831 = vadd.f32 %v8205, %v8780
      %v8832 = vadd.f32 %v8206, %v8783
      %v8833 = vadd.f32 %v8207, %v8785
      %v8834 = vadd.f32 %v8208, %v8788
      %v8835 = vadd.f32 %v8209, %v8790
      %v8836 = vadd.f32 %v8210, %v8793
      %v8837 = vadd.f32 %v8211, %v8795
      %v8838 = vadd.f32 %v8212, %v8798
      %v8839 = vadd.f32 %v8213, %v8800
      %v8840 = vadd.f32 %v8214, %v8803
      %v8841 = vadd.f32 %v8215, %v8805
      %v8842 = vadd.f32 %v8216, %v8808
      %v8843 = vadd.f32 %v8217, %v8810
      %v8860 = vrot.slane %v7859, 5
      %v8861 = vrot.slane %v8860, 4
      %v8862 = vrot.slane %v7860, 5
      %v8863 = vsel %vm1467, %v8861, %v8862
      %v8864 = vrot.slane %v8862, 4
      %v8865 = vrot.slane %v7861, 5
      %v8866 = vsel %vm1467, %v8864, %v8865
      %v8867 = vrot.slane %v7862, 5
      %v8868 = vrot.slane %v8867, 4
      %v8869 = vrot.slane %v7863, 5
      %v8870 = vsel %vm1467, %v8868, %v8869
      %v8871 = vrot.slane %v8869, 4
      %v8872 = vrot.slane %v7864, 5
      %v8873 = vsel %vm1467, %v8871, %v8872
      %v8874 = vrot.slane %v7865, 5
      %v8875 = vrot.slane %v8874, 4
      %v8876 = vrot.slane %v7866, 5
      %v8877 = vsel %vm1467, %v8875, %v8876
      %v8878 = vrot.slane %v8876, 4
      %v8879 = vrot.slane %v7867, 5
      %v8880 = vsel %vm1467, %v8878, %v8879
      %v8881 = vrot.slane %v7868, 5
      %v8882 = vrot.slane %v8881, 4
      %v8883 = vrot.slane %v7869, 5
      %v8884 = vsel %vm1467, %v8882, %v8883
      %v8885 = vrot.slane %v8883, 4
      %v8886 = vrot.slane %v7870, 5
      %v8887 = vsel %vm1467, %v8885, %v8886
      %v8888 = vrot.slane %v7871, 5
      %v8889 = vrot.slane %v8888, 4
      %v8890 = vrot.slane %v7872, 5
      %v8891 = vsel %vm1467, %v8889, %v8890
      %v8892 = vrot.slane %v8890, 4
      %v8893 = vrot.slane %v7873, 5
      %v8894 = vsel %vm1467, %v8892, %v8893
      %v8895 = vrot.slane %v7874, 5
      %v8896 = vrot.slane %v8895, 4
      %v8897 = vrot.slane %v7875, 5
      %v8898 = vsel %vm1467, %v8896, %v8897
      %v8899 = vrot.slane %v8897, 4
      %v8900 = vrot.slane %v7876, 5
      %v8901 = vsel %vm1467, %v8899, %v8900
      %v8902 = vrot.slane %v7877, 5
      %v8903 = vrot.slane %v8902, 4
      %v8904 = vrot.slane %v7878, 5
      %v8905 = vsel %vm1467, %v8903, %v8904
      %v8906 = vrot.slane %v8904, 4
      %v8907 = vrot.slane %v7879, 5
      %v8908 = vsel %vm1467, %v8906, %v8907
      %v8909 = vrot.slane %v7880, 5
      %v8910 = vrot.slane %v8909, 4
      %v8911 = vrot.slane %v7881, 5
      %v8912 = vsel %vm1467, %v8910, %v8911
      %v8913 = vrot.slane %v8911, 4
      %v8914 = vrot.slane %v7882, 5
      %v8915 = vsel %vm1467, %v8913, %v8914
      %v8916 = vrot.slane %v7883, 5
      %v8917 = vrot.slane %v8916, 4
      %v8918 = vrot.slane %v7884, 5
      %v8919 = vsel %vm1467, %v8917, %v8918
      %v8920 = vrot.slane %v8918, 4
      %v8921 = vrot.slane %v7885, 5
      %v8922 = vsel %vm1467, %v8920, %v8921
      %v8923 = vrot.slane %v7886, 5
      %v8924 = vrot.slane %v8923, 4
      %v8925 = vrot.slane %v7887, 5
      %v8926 = vsel %vm1467, %v8924, %v8925
      %v8927 = vrot.slane %v8925, 4
      %v8928 = vrot.slane %v7888, 5
      %v8929 = vsel %vm1467, %v8927, %v8928
      %v8930 = vrot.slane %v7889, 5
      %v8931 = vrot.slane %v8930, 4
      %v8932 = vrot.slane %v7890, 5
      %v8933 = vsel %vm1467, %v8931, %v8932
      %v8934 = vrot.slane %v8932, 4
      %v8935 = vrot.slane %v7891, 5
      %v8936 = vsel %vm1467, %v8934, %v8935
      %v8937 = vrot.slane %v7892, 5
      %v8938 = vrot.slane %v8937, 4
      %v8939 = vrot.slane %v7893, 5
      %v8940 = vsel %vm1467, %v8938, %v8939
      %v8941 = vrot.slane %v8939, 4
      %v8942 = vrot.slane %v7894, 5
      %v8943 = vsel %vm1467, %v8941, %v8942
      %v8944 = vrot.slane %v7895, 5
      %v8945 = vrot.slane %v8944, 4
      %v8946 = vrot.slane %v7896, 5
      %v8947 = vsel %vm1467, %v8945, %v8946
      %v8948 = vrot.slane %v8946, 4
      %v8949 = vrot.slane %v7897, 5
      %v8950 = vsel %vm1467, %v8948, %v8949
      %v8951 = vrot.slane %v7898, 5
      %v8952 = vrot.slane %v8951, 4
      %v8953 = vrot.slane %v7899, 5
      %v8954 = vsel %vm1467, %v8952, %v8953
      %v8955 = vrot.slane %v8953, 4
      %v8956 = vrot.slane %v7900, 5
      %v8957 = vsel %vm1467, %v8955, %v8956
      %v8958 = vrot.slane %v7901, 5
      %v8959 = vrot.slane %v8958, 4
      %v8960 = vrot.slane %v7902, 5
      %v8961 = vsel %vm1467, %v8959, %v8960
      %v8962 = vrot.slane %v8960, 4
      %v8963 = vrot.slane %v7903, 5
      %v8964 = vsel %vm1467, %v8962, %v8963
      %v8965 = vrot.slane %v7904, 5
      %v8966 = vrot.slane %v8965, 4
      %v8967 = vrot.slane %v7905, 5
      %v8968 = vsel %vm1467, %v8966, %v8967
      %v8969 = vrot.slane %v8967, 4
      %v8970 = vrot.slane %v7906, 5
      %v8971 = vsel %vm1467, %v8969, %v8970
      %s8972 = scalar_lea.vmem %s7, 48
      %v8973 = vld [vmem:[%s8972] sm:$0xf]
      %v8974 = vld [vmem:[%s8972 + $0x4] sm:$0xf]
      %v8975 = vld [vmem:[%s8972 + $0x8] sm:$0xf]
      %v8976 = vld [vmem:[%s8972 + $0xc] sm:$0xf]
      %v8977 = vld [vmem:[%s8972 + $0x10] sm:$0xf]
      %v8978 = vld [vmem:[%s8972 + $0x14] sm:$0xf]
      %v8979 = vunpack.c.l.b16 %v8863
      %v8980 = vunpack.c.l.b16 %v8866
      %v8981 = vunpack.c.l.b16 %v8870
      %v8982 = vunpack.c.l.b16 %v8873
      %v8983 = vunpack.c.l.b16 %v8877
      %v8984 = vunpack.c.l.b16 %v8880
      %v8985 = vunpack.c.l.b16 %v8884
      %v8986 = vunpack.c.l.b16 %v8887
      %v8987 = vunpack.c.l.b16 %v8891
      %v8988 = vunpack.c.l.b16 %v8894
      %v8989 = vunpack.c.l.b16 %v8898
      %v8990 = vunpack.c.l.b16 %v8901
      %v8991 = vunpack.c.l.b16 %v8905
      %v8992 = vunpack.c.l.b16 %v8908
      %v8993 = vunpack.c.l.b16 %v8912
      %v8994 = vunpack.c.l.b16 %v8915
      %v8995 = vunpack.c.l.b16 %v8919
      %v8996 = vunpack.c.l.b16 %v8922
      %v8997 = vunpack.c.l.b16 %v8926
      %v8998 = vunpack.c.l.b16 %v8929
      %v8999 = vunpack.c.l.b16 %v8933
      %v9000 = vunpack.c.l.b16 %v8936
      %v9001 = vunpack.c.l.b16 %v8940
      %v9002 = vunpack.c.l.b16 %v8943
      %v9003 = vunpack.c.l.b16 %v8947
      %v9004 = vunpack.c.l.b16 %v8950
      %v9005 = vunpack.c.l.b16 %v8954
      %v9006 = vunpack.c.l.b16 %v8957
      %v9007 = vunpack.c.l.b16 %v8961
      %v9008 = vunpack.c.l.b16 %v8964
      %v9009 = vunpack.c.l.b16 %v8968
      %v9010 = vunpack.c.l.b16 %v8971
      %v9011 = vpack.c.b16 %v8980, %v8979
      %v9012 = vpack.c.b16 %v8982, %v8981
      %v9013 = vpack.c.b16 %v8984, %v8983
      %v9014 = vpack.c.b16 %v8986, %v8985
      %v9015 = vpack.c.b16 %v8988, %v8987
      %v9016 = vpack.c.b16 %v8990, %v8989
      %v9017 = vpack.c.b16 %v8992, %v8991
      %v9018 = vpack.c.b16 %v8994, %v8993
      %v9019 = vpack.c.b16 %v8996, %v8995
      %v9020 = vpack.c.b16 %v8998, %v8997
      %v9021 = vpack.c.b16 %v9000, %v8999
      %v9022 = vpack.c.b16 %v9002, %v9001
      %v9023 = vpack.c.b16 %v9004, %v9003
      %v9024 = vpack.c.b16 %v9006, %v9005
      %v9025 = vpack.c.b16 %v9008, %v9007
      %v9026 = vpack.c.b16 %v9010, %v9009
      %v9033 = vunpack.c.l.b16 %v8973
      %v9034 = vunpack.c.l.b16 %v8974
      %v9035 = vunpack.c.l.b16 %v8975
      %v9036 = vunpack.c.l.b16 %v8976
      %v9037 = vunpack.c.l.b16 %v8977
      %v9038 = vunpack.c.l.b16 %v8978
      %v9039 = vpack.c.b16 %v9034, %v9033
      %v9040 = vpack.c.b16 %v9036, %v9035
      %v9041 = vpack.c.b16 %v9038, %v9037
      %v9046 = vsel %vm334, %v9011, 0
      %v9049 = vsel %vm334, %v9012, 0
      %v9052 = vsel %vm334, %v9013, 0
      %v9055 = vsel %vm334, %v9014, 0
      %v9058 = vsel %vm334, %v9015, 0
      %v9061 = vsel %vm334, %v9016, 0
      %v9064 = vsel %vm334, %v9017, 0
      %v9067 = vsel %vm334, %v9018, 0
      %v9070 = vsel %vm334, %v9019, 0
      %v9073 = vsel %vm334, %v9020, 0
      %v9076 = vsel %vm334, %v9021, 0
      %v9079 = vsel %vm334, %v9022, 0
      %v9082 = vsel %vm334, %v9023, 0
      %v9085 = vsel %vm334, %v9024, 0
      %v9088 = vsel %vm334, %v9025, 0
      %v9091 = vsel %vm334, %v9026, 0
      %9093 = vmatpush.bf16.msra.mxu0 0
      %9094 = vmatpush.bf16.msra.mxu0 0
      %9095 = vmatpush.bf16.msra.mxu0 0
      %9096 = vmatpush.bf16.msra.mxu0 0
      %9097 = vmatpush.bf16.msra.mxu0 0
      %9098 = vmatpush.bf16.msra.mxu0 %v9041
      %9099 = vmatpush.bf16.msra.mxu0 %v9040
      %9100 = vmatpush.bf16.msra.mxu0 %v9039
      %9101 = vmatmul.bf16.gmra.mxu0 %v9046
      %v9102 = vpop.f32.mrf.mxu0
      %v9103 = vadd.f32 0.0, %v9102
      %v9104 = vpop.f32.mrf.mxu0
      %v9105 = vadd.f32 0.0, %v9104
      %9106 = vmatmul.bf16.gmra.mxu0 %v9049
      %v9107 = vpop.f32.mrf.mxu0
      %v9108 = vadd.f32 0.0, %v9107
      %v9109 = vpop.f32.mrf.mxu0
      %v9110 = vadd.f32 0.0, %v9109
      %9111 = vmatmul.bf16.gmra.mxu0 %v9052
      %v9112 = vpop.f32.mrf.mxu0
      %v9113 = vadd.f32 0.0, %v9112
      %v9114 = vpop.f32.mrf.mxu0
      %v9115 = vadd.f32 0.0, %v9114
      %9116 = vmatmul.bf16.gmra.mxu0 %v9055
      %v9117 = vpop.f32.mrf.mxu0
      %v9118 = vadd.f32 0.0, %v9117
      %v9119 = vpop.f32.mrf.mxu0
      %v9120 = vadd.f32 0.0, %v9119
      %9121 = vmatmul.bf16.gmra.mxu0 %v9058
      %v9122 = vpop.f32.mrf.mxu0
      %v9123 = vadd.f32 0.0, %v9122
      %v9124 = vpop.f32.mrf.mxu0
      %v9125 = vadd.f32 0.0, %v9124
      %9126 = vmatmul.bf16.gmra.mxu0 %v9061
      %v9127 = vpop.f32.mrf.mxu0
      %v9128 = vadd.f32 0.0, %v9127
      %v9129 = vpop.f32.mrf.mxu0
      %v9130 = vadd.f32 0.0, %v9129
      %9131 = vmatmul.bf16.gmra.mxu0 %v9064
      %v9132 = vpop.f32.mrf.mxu0
      %v9133 = vadd.f32 0.0, %v9132
      %v9134 = vpop.f32.mrf.mxu0
      %v9135 = vadd.f32 0.0, %v9134
      %9136 = vmatmul.bf16.gmra.mxu0 %v9067
      %v9137 = vpop.f32.mrf.mxu0
      %v9138 = vadd.f32 0.0, %v9137
      %v9139 = vpop.f32.mrf.mxu0
      %v9140 = vadd.f32 0.0, %v9139
      %9141 = vmatmul.bf16.gmra.mxu0 %v9070
      %v9142 = vpop.f32.mrf.mxu0
      %v9143 = vadd.f32 0.0, %v9142
      %v9144 = vpop.f32.mrf.mxu0
      %v9145 = vadd.f32 0.0, %v9144
      %9146 = vmatmul.bf16.gmra.mxu0 %v9073
      %v9147 = vpop.f32.mrf.mxu0
      %v9148 = vadd.f32 0.0, %v9147
      %v9149 = vpop.f32.mrf.mxu0
      %v9150 = vadd.f32 0.0, %v9149
      %9151 = vmatmul.bf16.gmra.mxu0 %v9076
      %v9152 = vpop.f32.mrf.mxu0
      %v9153 = vadd.f32 0.0, %v9152
      %v9154 = vpop.f32.mrf.mxu0
      %v9155 = vadd.f32 0.0, %v9154
      %9156 = vmatmul.bf16.gmra.mxu0 %v9079
      %v9157 = vpop.f32.mrf.mxu0
      %v9158 = vadd.f32 0.0, %v9157
      %v9159 = vpop.f32.mrf.mxu0
      %v9160 = vadd.f32 0.0, %v9159
      %9161 = vmatmul.bf16.gmra.mxu0 %v9082
      %v9162 = vpop.f32.mrf.mxu0
      %v9163 = vadd.f32 0.0, %v9162
      %v9164 = vpop.f32.mrf.mxu0
      %v9165 = vadd.f32 0.0, %v9164
      %9166 = vmatmul.bf16.gmra.mxu0 %v9085
      %v9167 = vpop.f32.mrf.mxu0
      %v9168 = vadd.f32 0.0, %v9167
      %v9169 = vpop.f32.mrf.mxu0
      %v9170 = vadd.f32 0.0, %v9169
      %9171 = vmatmul.bf16.gmra.mxu0 %v9088
      %v9172 = vpop.f32.mrf.mxu0
      %v9173 = vadd.f32 0.0, %v9172
      %v9174 = vpop.f32.mrf.mxu0
      %v9175 = vadd.f32 0.0, %v9174
      %9176 = vmatmul.bf16.gmra.mxu0 %v9091
      %v9177 = vpop.f32.mrf.mxu0
      %v9178 = vadd.f32 0.0, %v9177
      %v9179 = vpop.f32.mrf.mxu0
      %v9180 = vadd.f32 0.0, %v9179
      %9181 = vdwg.mxu0
      %v9182 = vadd.f32 %v8812, %v9103
      %v9183 = vadd.f32 %v8813, %v9105
      %v9184 = vadd.f32 %v8814, %v9108
      %v9185 = vadd.f32 %v8815, %v9110
      %v9186 = vadd.f32 %v8816, %v9113
      %v9187 = vadd.f32 %v8817, %v9115
      %v9188 = vadd.f32 %v8818, %v9118
      %v9189 = vadd.f32 %v8819, %v9120
      %v9190 = vadd.f32 %v8820, %v9123
      %v9191 = vadd.f32 %v8821, %v9125
      %v9192 = vadd.f32 %v8822, %v9128
      %v9193 = vadd.f32 %v8823, %v9130
      %v9194 = vadd.f32 %v8824, %v9133
      %v9195 = vadd.f32 %v8825, %v9135
      %v9196 = vadd.f32 %v8826, %v9138
      %v9197 = vadd.f32 %v8827, %v9140
      %v9198 = vadd.f32 %v8828, %v9143
      %v9199 = vadd.f32 %v8829, %v9145
      %v9200 = vadd.f32 %v8830, %v9148
      %v9201 = vadd.f32 %v8831, %v9150
      %v9202 = vadd.f32 %v8832, %v9153
      %v9203 = vadd.f32 %v8833, %v9155
      %v9204 = vadd.f32 %v8834, %v9158
      %v9205 = vadd.f32 %v8835, %v9160
      %v9206 = vadd.f32 %v8836, %v9163
      %v9207 = vadd.f32 %v8837, %v9165
      %v9208 = vadd.f32 %v8838, %v9168
      %v9209 = vadd.f32 %v8839, %v9170
      %v9210 = vadd.f32 %v8840, %v9173
      %v9211 = vadd.f32 %v8841, %v9175
      %v9212 = vadd.f32 %v8842, %v9178
      %v9213 = vadd.f32 %v8843, %v9180
      %s9214 = scalar_lea.vmem %s7, 72
      %v9215 = vld [vmem:[%s9214] sm:$0xf]
      %v9216 = vld [vmem:[%s9214 + $0x4] sm:$0xf]
      %v9217 = vld [vmem:[%s9214 + $0x8] sm:$0xf]
      %v9218 = vld [vmem:[%s9214 + $0xc] sm:$0xf]
      %v9219 = vld [vmem:[%s9214 + $0x10] sm:$0xf]
      %v9220 = vld [vmem:[%s9214 + $0x14] sm:$0xf]
      %v9223 = vunpack.c.l.b16 %v7907
      %v9224 = vunpack.c.l.b16 %v7908
      %v9225 = vpack.c.b16 %v9224, %v9223
      %v9232 = vunpack.c.l.b16 %v9215
      %v9233 = vunpack.c.l.b16 %v9216
      %v9234 = vunpack.c.l.b16 %v9217
      %v9235 = vunpack.c.l.b16 %v9218
      %v9236 = vunpack.c.l.b16 %v9219
      %v9237 = vunpack.c.l.b16 %v9220
      %v9238 = vpack.c.b16 %v9233, %v9232
      %v9239 = vpack.c.b16 %v9235, %v9234
      %v9240 = vpack.c.b16 %v9237, %v9236
      %v9245 = vsel %vm334, %v9225, 0
      %9247 = vmatpush.bf16.msra.mxu0 0
      %9248 = vmatpush.bf16.msra.mxu0 0
      %9249 = vmatpush.bf16.msra.mxu0 0
      %9250 = vmatpush.bf16.msra.mxu0 0
      %9251 = vmatpush.bf16.msra.mxu0 0
      %9252 = vmatpush.bf16.msra.mxu0 %v9240
      %9253 = vmatpush.bf16.msra.mxu0 %v9239
      %9254 = vmatpush.bf16.msra.mxu0 %v9238
      %9255 = vmatmul.bf16.gmra.mxu0 %v8053
      %v9256 = vpop.f32.mrf.mxu0
      %v9257 = vadd.f32 0.0, %v9256
      %v9258 = vpop.f32.mrf.mxu0
      %v9259 = vadd.f32 0.0, %v9258
      %9260 = vmatmul.bf16.gmra.mxu0 %v8056
      %v9261 = vpop.f32.mrf.mxu0
      %v9262 = vadd.f32 0.0, %v9261
      %v9263 = vpop.f32.mrf.mxu0
      %v9264 = vadd.f32 0.0, %v9263
      %9265 = vmatmul.bf16.gmra.mxu0 %v8059
      %v9266 = vpop.f32.mrf.mxu0
      %v9267 = vadd.f32 0.0, %v9266
      %v9268 = vpop.f32.mrf.mxu0
      %v9269 = vadd.f32 0.0, %v9268
      %9270 = vmatmul.bf16.gmra.mxu0 %v8062
      %v9271 = vpop.f32.mrf.mxu0
      %v9272 = vadd.f32 0.0, %v9271
      %v9273 = vpop.f32.mrf.mxu0
      %v9274 = vadd.f32 0.0, %v9273
      %9275 = vmatmul.bf16.gmra.mxu0 %v8065
      %v9276 = vpop.f32.mrf.mxu0
      %v9277 = vadd.f32 0.0, %v9276
      %v9278 = vpop.f32.mrf.mxu0
      %v9279 = vadd.f32 0.0, %v9278
      %9280 = vmatmul.bf16.gmra.mxu0 %v8068
      %v9281 = vpop.f32.mrf.mxu0
      %v9282 = vadd.f32 0.0, %v9281
      %v9283 = vpop.f32.mrf.mxu0
      %v9284 = vadd.f32 0.0, %v9283
      %9285 = vmatmul.bf16.gmra.mxu0 %v8071
      %v9286 = vpop.f32.mrf.mxu0
      %v9287 = vadd.f32 0.0, %v9286
      %v9288 = vpop.f32.mrf.mxu0
      %v9289 = vadd.f32 0.0, %v9288
      %9290 = vmatmul.bf16.gmra.mxu0 %v8074
      %v9291 = vpop.f32.mrf.mxu0
      %v9292 = vadd.f32 0.0, %v9291
      %v9293 = vpop.f32.mrf.mxu0
      %v9294 = vadd.f32 0.0, %v9293
      %9295 = vmatmul.bf16.gmra.mxu0 %v8077
      %v9296 = vpop.f32.mrf.mxu0
      %v9297 = vadd.f32 0.0, %v9296
      %v9298 = vpop.f32.mrf.mxu0
      %v9299 = vadd.f32 0.0, %v9298
      %9300 = vmatmul.bf16.gmra.mxu0 %v8080
      %v9301 = vpop.f32.mrf.mxu0
      %v9302 = vadd.f32 0.0, %v9301
      %v9303 = vpop.f32.mrf.mxu0
      %v9304 = vadd.f32 0.0, %v9303
      %9305 = vmatmul.bf16.gmra.mxu0 %v8083
      %v9306 = vpop.f32.mrf.mxu0
      %v9307 = vadd.f32 0.0, %v9306
      %v9308 = vpop.f32.mrf.mxu0
      %v9309 = vadd.f32 0.0, %v9308
      %9310 = vmatmul.bf16.gmra.mxu0 %v8086
      %v9311 = vpop.f32.mrf.mxu0
      %v9312 = vadd.f32 0.0, %v9311
      %v9313 = vpop.f32.mrf.mxu0
      %v9314 = vadd.f32 0.0, %v9313
      %9315 = vmatmul.bf16.gmra.mxu0 %v8089
      %v9316 = vpop.f32.mrf.mxu0
      %v9317 = vadd.f32 0.0, %v9316
      %v9318 = vpop.f32.mrf.mxu0
      %v9319 = vadd.f32 0.0, %v9318
      %9320 = vmatmul.bf16.gmra.mxu0 %v8092
      %v9321 = vpop.f32.mrf.mxu0
      %v9322 = vadd.f32 0.0, %v9321
      %v9323 = vpop.f32.mrf.mxu0
      %v9324 = vadd.f32 0.0, %v9323
      %9325 = vmatmul.bf16.gmra.mxu0 %v8095
      %v9326 = vpop.f32.mrf.mxu0
      %v9327 = vadd.f32 0.0, %v9326
      %v9328 = vpop.f32.mrf.mxu0
      %v9329 = vadd.f32 0.0, %v9328
      %9330 = vmatmul.bf16.gmra.mxu0 %v9245
      %v9331 = vpop.f32.mrf.mxu0
      %v9332 = vadd.f32 0.0, %v9331
      %v9333 = vpop.f32.mrf.mxu0
      %v9334 = vadd.f32 0.0, %v9333
      %9335 = vdwg.mxu0
      %v9336 = vadd.f32 %v9182, %v9257
      %v9337 = vadd.f32 %v9183, %v9259
      %v9338 = vadd.f32 %v9184, %v9262
      %v9339 = vadd.f32 %v9185, %v9264
      %v9340 = vadd.f32 %v9186, %v9267
      %v9341 = vadd.f32 %v9187, %v9269
      %v9342 = vadd.f32 %v9188, %v9272
      %v9343 = vadd.f32 %v9189, %v9274
      %v9344 = vadd.f32 %v9190, %v9277
      %v9345 = vadd.f32 %v9191, %v9279
      %v9346 = vadd.f32 %v9192, %v9282
      %v9347 = vadd.f32 %v9193, %v9284
      %v9348 = vadd.f32 %v9194, %v9287
      %v9349 = vadd.f32 %v9195, %v9289
      %v9350 = vadd.f32 %v9196, %v9292
      %v9351 = vadd.f32 %v9197, %v9294
      %v9352 = vadd.f32 %v9198, %v9297
      %v9353 = vadd.f32 %v9199, %v9299
      %v9354 = vadd.f32 %v9200, %v9302
      %v9355 = vadd.f32 %v9201, %v9304
      %v9356 = vadd.f32 %v9202, %v9307
      %v9357 = vadd.f32 %v9203, %v9309
      %v9358 = vadd.f32 %v9204, %v9312
      %v9359 = vadd.f32 %v9205, %v9314
      %v9360 = vadd.f32 %v9206, %v9317
      %v9361 = vadd.f32 %v9207, %v9319
      %v9362 = vadd.f32 %v9208, %v9322
      %v9363 = vadd.f32 %v9209, %v9324
      %v9364 = vadd.f32 %v9210, %v9327
      %v9365 = vadd.f32 %v9211, %v9329
      %v9366 = vadd.f32 %v9212, %v9332
      %v9367 = vadd.f32 %v9213, %v9334
      %v9369 = vshrl.u32 %v7907, 16
      %v9371 = vrot.slane %v9369, 4
      %v9372 = vshll.u32 %v7907, 16
      %v9374 = vrot.slane %v9372, 5
      %v9375 = vor.u32 %v9371, %v9374
      %v9376 = vrot.slane %v9375, 4
      %v9378 = vshll.u32 %v7908, 16
      %v9380 = vrot.slane %v9378, 5
      %v9381 = vsel %vm842, %v9376, %v9380
      %v9382 = vshrl.u32 %v7908, 16
      %v9384 = vrot.slane %v9382, 4
      %v9385 = vor.u32 %v9384, %v9380
      %v9386 = vrot.slane %v9385, 4
      %v9388 = vshll.u32 %v7909, 16
      %v9390 = vrot.slane %v9388, 5
      %v9391 = vsel %vm842, %v9386, %v9390
      %s9392 = scalar_lea.vmem %s7, 96
      %v9393 = vld [vmem:[%s9392] sm:$0xf]
      %v9394 = vld [vmem:[%s9392 + $0x4] sm:$0xf]
      %v9395 = vld [vmem:[%s9392 + $0x8] sm:$0xf]
      %v9396 = vld [vmem:[%s9392 + $0xc] sm:$0xf]
      %v9397 = vld [vmem:[%s9392 + $0x10] sm:$0xf]
      %v9398 = vld [vmem:[%s9392 + $0x14] sm:$0xf]
      %v9399 = vunpack.c.l.b16 %v9381
      %v9400 = vunpack.c.l.b16 %v9391
      %v9401 = vpack.c.b16 %v9400, %v9399
      %v9408 = vunpack.c.l.b16 %v9393
      %v9409 = vunpack.c.l.b16 %v9394
      %v9410 = vunpack.c.l.b16 %v9395
      %v9411 = vunpack.c.l.b16 %v9396
      %v9412 = vunpack.c.l.b16 %v9397
      %v9413 = vunpack.c.l.b16 %v9398
      %v9414 = vpack.c.b16 %v9409, %v9408
      %v9415 = vpack.c.b16 %v9411, %v9410
      %v9416 = vpack.c.b16 %v9413, %v9412
      %v9421 = vsel %vm334, %v9401, 0
      %9423 = vmatpush.bf16.msra.mxu0 0
      %9424 = vmatpush.bf16.msra.mxu0 0
      %9425 = vmatpush.bf16.msra.mxu0 0
      %9426 = vmatpush.bf16.msra.mxu0 0
      %9427 = vmatpush.bf16.msra.mxu0 0
      %9428 = vmatpush.bf16.msra.mxu0 %v9416
      %9429 = vmatpush.bf16.msra.mxu0 %v9415
      %9430 = vmatpush.bf16.msra.mxu0 %v9414
      %9431 = vmatmul.bf16.gmra.mxu0 %v8679
      %v9432 = vpop.f32.mrf.mxu0
      %v9433 = vadd.f32 0.0, %v9432
      %v9434 = vpop.f32.mrf.mxu0
      %v9435 = vadd.f32 0.0, %v9434
      %9436 = vmatmul.bf16.gmra.mxu0 %v8682
      %v9437 = vpop.f32.mrf.mxu0
      %v9438 = vadd.f32 0.0, %v9437
      %v9439 = vpop.f32.mrf.mxu0
      %v9440 = vadd.f32 0.0, %v9439
      %9441 = vmatmul.bf16.gmra.mxu0 %v8685
      %v9442 = vpop.f32.mrf.mxu0
      %v9443 = vadd.f32 0.0, %v9442
      %v9444 = vpop.f32.mrf.mxu0
      %v9445 = vadd.f32 0.0, %v9444
      %9446 = vmatmul.bf16.gmra.mxu0 %v8688
      %v9447 = vpop.f32.mrf.mxu0
      %v9448 = vadd.f32 0.0, %v9447
      %v9449 = vpop.f32.mrf.mxu0
      %v9450 = vadd.f32 0.0, %v9449
      %9451 = vmatmul.bf16.gmra.mxu0 %v8691
      %v9452 = vpop.f32.mrf.mxu0
      %v9453 = vadd.f32 0.0, %v9452
      %v9454 = vpop.f32.mrf.mxu0
      %v9455 = vadd.f32 0.0, %v9454
      %9456 = vmatmul.bf16.gmra.mxu0 %v8694
      %v9457 = vpop.f32.mrf.mxu0
      %v9458 = vadd.f32 0.0, %v9457
      %v9459 = vpop.f32.mrf.mxu0
      %v9460 = vadd.f32 0.0, %v9459
      %9461 = vmatmul.bf16.gmra.mxu0 %v8697
      %v9462 = vpop.f32.mrf.mxu0
      %v9463 = vadd.f32 0.0, %v9462
      %v9464 = vpop.f32.mrf.mxu0
      %v9465 = vadd.f32 0.0, %v9464
      %9466 = vmatmul.bf16.gmra.mxu0 %v8700
      %v9467 = vpop.f32.mrf.mxu0
      %v9468 = vadd.f32 0.0, %v9467
      %v9469 = vpop.f32.mrf.mxu0
      %v9470 = vadd.f32 0.0, %v9469
      %9471 = vmatmul.bf16.gmra.mxu0 %v8703
      %v9472 = vpop.f32.mrf.mxu0
      %v9473 = vadd.f32 0.0, %v9472
      %v9474 = vpop.f32.mrf.mxu0
      %v9475 = vadd.f32 0.0, %v9474
      %9476 = vmatmul.bf16.gmra.mxu0 %v8706
      %v9477 = vpop.f32.mrf.mxu0
      %v9478 = vadd.f32 0.0, %v9477
      %v9479 = vpop.f32.mrf.mxu0
      %v9480 = vadd.f32 0.0, %v9479
      %9481 = vmatmul.bf16.gmra.mxu0 %v8709
      %v9482 = vpop.f32.mrf.mxu0
      %v9483 = vadd.f32 0.0, %v9482
      %v9484 = vpop.f32.mrf.mxu0
      %v9485 = vadd.f32 0.0, %v9484
      %9486 = vmatmul.bf16.gmra.mxu0 %v8712
      %v9487 = vpop.f32.mrf.mxu0
      %v9488 = vadd.f32 0.0, %v9487
      %v9489 = vpop.f32.mrf.mxu0
      %v9490 = vadd.f32 0.0, %v9489
      %9491 = vmatmul.bf16.gmra.mxu0 %v8715
      %v9492 = vpop.f32.mrf.mxu0
      %v9493 = vadd.f32 0.0, %v9492
      %v9494 = vpop.f32.mrf.mxu0
      %v9495 = vadd.f32 0.0, %v9494
      %9496 = vmatmul.bf16.gmra.mxu0 %v8718
      %v9497 = vpop.f32.mrf.mxu0
      %v9498 = vadd.f32 0.0, %v9497
      %v9499 = vpop.f32.mrf.mxu0
      %v9500 = vadd.f32 0.0, %v9499
      %9501 = vmatmul.bf16.gmra.mxu0 %v8721
      %v9502 = vpop.f32.mrf.mxu0
      %v9503 = vadd.f32 0.0, %v9502
      %v9504 = vpop.f32.mrf.mxu0
      %v9505 = vadd.f32 0.0, %v9504
      %9506 = vmatmul.bf16.gmra.mxu0 %v9421
      %v9507 = vpop.f32.mrf.mxu0
      %v9508 = vadd.f32 0.0, %v9507
      %v9509 = vpop.f32.mrf.mxu0
      %v9510 = vadd.f32 0.0, %v9509
      %9511 = vdwg.mxu0
      %v9512 = vadd.f32 %v9336, %v9433
      %v9513 = vadd.f32 %v9337, %v9435
      %v9514 = vadd.f32 %v9338, %v9438
      %v9515 = vadd.f32 %v9339, %v9440
      %v9516 = vadd.f32 %v9340, %v9443
      %v9517 = vadd.f32 %v9341, %v9445
      %v9518 = vadd.f32 %v9342, %v9448
      %v9519 = vadd.f32 %v9343, %v9450
      %v9520 = vadd.f32 %v9344, %v9453
      %v9521 = vadd.f32 %v9345, %v9455
      %v9522 = vadd.f32 %v9346, %v9458
      %v9523 = vadd.f32 %v9347, %v9460
      %v9524 = vadd.f32 %v9348, %v9463
      %v9525 = vadd.f32 %v9349, %v9465
      %v9526 = vadd.f32 %v9350, %v9468
      %v9527 = vadd.f32 %v9351, %v9470
      %v9528 = vadd.f32 %v9352, %v9473
      %v9529 = vadd.f32 %v9353, %v9475
      %v9530 = vadd.f32 %v9354, %v9478
      %v9531 = vadd.f32 %v9355, %v9480
      %v9532 = vadd.f32 %v9356, %v9483
      %v9533 = vadd.f32 %v9357, %v9485
      %v9534 = vadd.f32 %v9358, %v9488
      %v9535 = vadd.f32 %v9359, %v9490
      %v9536 = vadd.f32 %v9360, %v9493
      %v9537 = vadd.f32 %v9361, %v9495
      %v9538 = vadd.f32 %v9362, %v9498
      %v9539 = vadd.f32 %v9363, %v9500
      %v9540 = vadd.f32 %v9364, %v9503
      %v9541 = vadd.f32 %v9365, %v9505
      %v9542 = vadd.f32 %v9366, %v9508
      %v9543 = vadd.f32 %v9367, %v9510
      %v9545 = vrot.slane %v7907, 5
      %v9546 = vrot.slane %v9545, 4
      %v9547 = vrot.slane %v7908, 5
      %v9548 = vsel %vm1467, %v9546, %v9547
      %v9549 = vrot.slane %v9547, 4
      %v9550 = vrot.slane %v7909, 5
      %v9551 = vsel %vm1467, %v9549, %v9550
      %s9552 = scalar_lea.vmem %s7, 120
      %v9553 = vld [vmem:[%s9552] sm:$0xf]
      %v9554 = vld [vmem:[%s9552 + $0x4] sm:$0xf]
      %v9555 = vld [vmem:[%s9552 + $0x8] sm:$0xf]
      %v9556 = vld [vmem:[%s9552 + $0xc] sm:$0xf]
      %v9557 = vld [vmem:[%s9552 + $0x10] sm:$0xf]
      %v9558 = vld [vmem:[%s9552 + $0x14] sm:$0xf]
      %v9559 = vunpack.c.l.b16 %v9548
      %v9560 = vunpack.c.l.b16 %v9551
      %v9561 = vpack.c.b16 %v9560, %v9559
      %v9568 = vunpack.c.l.b16 %v9553
      %v9569 = vunpack.c.l.b16 %v9554
      %v9570 = vunpack.c.l.b16 %v9555
      %v9571 = vunpack.c.l.b16 %v9556
      %v9572 = vunpack.c.l.b16 %v9557
      %v9573 = vunpack.c.l.b16 %v9558
      %v9574 = vpack.c.b16 %v9569, %v9568
      %v9575 = vpack.c.b16 %v9571, %v9570
      %v9576 = vpack.c.b16 %v9573, %v9572
      %v9581 = vsel %vm334, %v9561, 0
      %9583 = vmatpush.bf16.msra.mxu0 0
      %9584 = vmatpush.bf16.msra.mxu0 0
      %9585 = vmatpush.bf16.msra.mxu0 0
      %9586 = vmatpush.bf16.msra.mxu0 0
      %9587 = vmatpush.bf16.msra.mxu0 0
      %9588 = vmatpush.bf16.msra.mxu0 %v9576
      %9589 = vmatpush.bf16.msra.mxu0 %v9575
      %9590 = vmatpush.bf16.msra.mxu0 %v9574
      %9591 = vmatmul.bf16.gmra.mxu0 %v9049
      %v9592 = vpop.f32.mrf.mxu0
      %v9593 = vadd.f32 0.0, %v9592
      %v9594 = vpop.f32.mrf.mxu0
      %v9595 = vadd.f32 0.0, %v9594
      %9596 = vmatmul.bf16.gmra.mxu0 %v9052
      %v9597 = vpop.f32.mrf.mxu0
      %v9598 = vadd.f32 0.0, %v9597
      %v9599 = vpop.f32.mrf.mxu0
      %v9600 = vadd.f32 0.0, %v9599
      %9601 = vmatmul.bf16.gmra.mxu0 %v9055
      %v9602 = vpop.f32.mrf.mxu0
      %v9603 = vadd.f32 0.0, %v9602
      %v9604 = vpop.f32.mrf.mxu0
      %v9605 = vadd.f32 0.0, %v9604
      %9606 = vmatmul.bf16.gmra.mxu0 %v9058
      %v9607 = vpop.f32.mrf.mxu0
      %v9608 = vadd.f32 0.0, %v9607
      %v9609 = vpop.f32.mrf.mxu0
      %v9610 = vadd.f32 0.0, %v9609
      %9611 = vmatmul.bf16.gmra.mxu0 %v9061
      %v9612 = vpop.f32.mrf.mxu0
      %v9613 = vadd.f32 0.0, %v9612
      %v9614 = vpop.f32.mrf.mxu0
      %v9615 = vadd.f32 0.0, %v9614
      %9616 = vmatmul.bf16.gmra.mxu0 %v9064
      %v9617 = vpop.f32.mrf.mxu0
      %v9618 = vadd.f32 0.0, %v9617
      %v9619 = vpop.f32.mrf.mxu0
      %v9620 = vadd.f32 0.0, %v9619
      %9621 = vmatmul.bf16.gmra.mxu0 %v9067
      %v9622 = vpop.f32.mrf.mxu0
      %v9623 = vadd.f32 0.0, %v9622
      %v9624 = vpop.f32.mrf.mxu0
      %v9625 = vadd.f32 0.0, %v9624
      %9626 = vmatmul.bf16.gmra.mxu0 %v9070
      %v9627 = vpop.f32.mrf.mxu0
      %v9628 = vadd.f32 0.0, %v9627
      %v9629 = vpop.f32.mrf.mxu0
      %v9630 = vadd.f32 0.0, %v9629
      %9631 = vmatmul.bf16.gmra.mxu0 %v9073
      %v9632 = vpop.f32.mrf.mxu0
      %v9633 = vadd.f32 0.0, %v9632
      %v9634 = vpop.f32.mrf.mxu0
      %v9635 = vadd.f32 0.0, %v9634
      %9636 = vmatmul.bf16.gmra.mxu0 %v9076
      %v9637 = vpop.f32.mrf.mxu0
      %v9638 = vadd.f32 0.0, %v9637
      %v9639 = vpop.f32.mrf.mxu0
      %v9640 = vadd.f32 0.0, %v9639
      %9641 = vmatmul.bf16.gmra.mxu0 %v9079
      %v9642 = vpop.f32.mrf.mxu0
      %v9643 = vadd.f32 0.0, %v9642
      %v9644 = vpop.f32.mrf.mxu0
      %v9645 = vadd.f32 0.0, %v9644
      %9646 = vmatmul.bf16.gmra.mxu0 %v9082
      %v9647 = vpop.f32.mrf.mxu0
      %v9648 = vadd.f32 0.0, %v9647
      %v9649 = vpop.f32.mrf.mxu0
      %v9650 = vadd.f32 0.0, %v9649
      %9651 = vmatmul.bf16.gmra.mxu0 %v9085
      %v9652 = vpop.f32.mrf.mxu0
      %v9653 = vadd.f32 0.0, %v9652
      %v9654 = vpop.f32.mrf.mxu0
      %v9655 = vadd.f32 0.0, %v9654
      %9656 = vmatmul.bf16.gmra.mxu0 %v9088
      %v9657 = vpop.f32.mrf.mxu0
      %v9658 = vadd.f32 0.0, %v9657
      %v9659 = vpop.f32.mrf.mxu0
      %v9660 = vadd.f32 0.0, %v9659
      %9661 = vmatmul.bf16.gmra.mxu0 %v9091
      %v9662 = vpop.f32.mrf.mxu0
      %v9663 = vadd.f32 0.0, %v9662
      %v9664 = vpop.f32.mrf.mxu0
      %v9665 = vadd.f32 0.0, %v9664
      %9666 = vmatmul.bf16.gmra.mxu0 %v9581
      %v9667 = vpop.f32.mrf.mxu0
      %v9668 = vadd.f32 0.0, %v9667
      %v9669 = vpop.f32.mrf.mxu0
      %v9670 = vadd.f32 0.0, %v9669
      %9671 = vdwg.mxu0
      %v9672 = vadd.f32 %v9512, %v9593
      %v9673 = vadd.f32 %v9513, %v9595
      %v9674 = vadd.f32 %v9514, %v9598
      %v9675 = vadd.f32 %v9515, %v9600
      %v9676 = vadd.f32 %v9516, %v9603
      %v9677 = vadd.f32 %v9517, %v9605
      %v9678 = vadd.f32 %v9518, %v9608
      %v9679 = vadd.f32 %v9519, %v9610
      %v9680 = vadd.f32 %v9520, %v9613
      %v9681 = vadd.f32 %v9521, %v9615
      %v9682 = vadd.f32 %v9522, %v9618
      %v9683 = vadd.f32 %v9523, %v9620
      %v9684 = vadd.f32 %v9524, %v9623
      %v9685 = vadd.f32 %v9525, %v9625
      %v9686 = vadd.f32 %v9526, %v9628
      %v9687 = vadd.f32 %v9527, %v9630
      %v9688 = vadd.f32 %v9528, %v9633
      %v9689 = vadd.f32 %v9529, %v9635
      %v9690 = vadd.f32 %v9530, %v9638
      %v9691 = vadd.f32 %v9531, %v9640
      %v9692 = vadd.f32 %v9532, %v9643
      %v9693 = vadd.f32 %v9533, %v9645
      %v9694 = vadd.f32 %v9534, %v9648
      %v9695 = vadd.f32 %v9535, %v9650
      %v9696 = vadd.f32 %v9536, %v9653
      %v9697 = vadd.f32 %v9537, %v9655
      %v9698 = vadd.f32 %v9538, %v9658
      %v9699 = vadd.f32 %v9539, %v9660
      %v9700 = vadd.f32 %v9540, %v9663
      %v9701 = vadd.f32 %v9541, %v9665
      %v9702 = vadd.f32 %v9542, %v9668
      %v9703 = vadd.f32 %v9543, %v9670
      %s9704 = scalar_lea.vmem %s7, 144
      %v9705 = vld [vmem:[%s9704] sm:$0xf]
      %v9706 = vld [vmem:[%s9704 + $0x4] sm:$0xf]
      %v9707 = vld [vmem:[%s9704 + $0x8] sm:$0xf]
      %v9708 = vld [vmem:[%s9704 + $0xc] sm:$0xf]
      %v9709 = vld [vmem:[%s9704 + $0x10] sm:$0xf]
      %v9710 = vld [vmem:[%s9704 + $0x14] sm:$0xf]
      %v9713 = vunpack.c.l.b16 %v7910
      %v9714 = vunpack.c.l.b16 %v7911
      %v9715 = vpack.c.b16 %v9714, %v9713
      %v9722 = vunpack.c.l.b16 %v9705
      %v9723 = vunpack.c.l.b16 %v9706
      %v9724 = vunpack.c.l.b16 %v9707
      %v9725 = vunpack.c.l.b16 %v9708
      %v9726 = vunpack.c.l.b16 %v9709
      %v9727 = vunpack.c.l.b16 %v9710
      %v9728 = vpack.c.b16 %v9723, %v9722
      %v9729 = vpack.c.b16 %v9725, %v9724
      %v9730 = vpack.c.b16 %v9727, %v9726
      %v9735 = vsel %vm334, %v9715, 0
      %9737 = vmatpush.bf16.msra.mxu0 0
      %9738 = vmatpush.bf16.msra.mxu0 0
      %9739 = vmatpush.bf16.msra.mxu0 0
      %9740 = vmatpush.bf16.msra.mxu0 0
      %9741 = vmatpush.bf16.msra.mxu0 0
      %9742 = vmatpush.bf16.msra.mxu0 %v9730
      %9743 = vmatpush.bf16.msra.mxu0 %v9729
      %9744 = vmatpush.bf16.msra.mxu0 %v9728
      %9745 = vmatmul.bf16.gmra.mxu0 %v8056
      %v9746 = vpop.f32.mrf.mxu0
      %v9747 = vadd.f32 0.0, %v9746
      %v9748 = vpop.f32.mrf.mxu0
      %v9749 = vadd.f32 0.0, %v9748
      %9750 = vmatmul.bf16.gmra.mxu0 %v8059
      %v9751 = vpop.f32.mrf.mxu0
      %v9752 = vadd.f32 0.0, %v9751
      %v9753 = vpop.f32.mrf.mxu0
      %v9754 = vadd.f32 0.0, %v9753
      %9755 = vmatmul.bf16.gmra.mxu0 %v8062
      %v9756 = vpop.f32.mrf.mxu0
      %v9757 = vadd.f32 0.0, %v9756
      %v9758 = vpop.f32.mrf.mxu0
      %v9759 = vadd.f32 0.0, %v9758
      %9760 = vmatmul.bf16.gmra.mxu0 %v8065
      %v9761 = vpop.f32.mrf.mxu0
      %v9762 = vadd.f32 0.0, %v9761
      %v9763 = vpop.f32.mrf.mxu0
      %v9764 = vadd.f32 0.0, %v9763
      %9765 = vmatmul.bf16.gmra.mxu0 %v8068
      %v9766 = vpop.f32.mrf.mxu0
      %v9767 = vadd.f32 0.0, %v9766
      %v9768 = vpop.f32.mrf.mxu0
      %v9769 = vadd.f32 0.0, %v9768
      %9770 = vmatmul.bf16.gmra.mxu0 %v8071
      %v9771 = vpop.f32.mrf.mxu0
      %v9772 = vadd.f32 0.0, %v9771
      %v9773 = vpop.f32.mrf.mxu0
      %v9774 = vadd.f32 0.0, %v9773
      %9775 = vmatmul.bf16.gmra.mxu0 %v8074
      %v9776 = vpop.f32.mrf.mxu0
      %v9777 = vadd.f32 0.0, %v9776
      %v9778 = vpop.f32.mrf.mxu0
      %v9779 = vadd.f32 0.0, %v9778
      %9780 = vmatmul.bf16.gmra.mxu0 %v8077
      %v9781 = vpop.f32.mrf.mxu0
      %v9782 = vadd.f32 0.0, %v9781
      %v9783 = vpop.f32.mrf.mxu0
      %v9784 = vadd.f32 0.0, %v9783
      %9785 = vmatmul.bf16.gmra.mxu0 %v8080
      %v9786 = vpop.f32.mrf.mxu0
      %v9787 = vadd.f32 0.0, %v9786
      %v9788 = vpop.f32.mrf.mxu0
      %v9789 = vadd.f32 0.0, %v9788
      %9790 = vmatmul.bf16.gmra.mxu0 %v8083
      %v9791 = vpop.f32.mrf.mxu0
      %v9792 = vadd.f32 0.0, %v9791
      %v9793 = vpop.f32.mrf.mxu0
      %v9794 = vadd.f32 0.0, %v9793
      %9795 = vmatmul.bf16.gmra.mxu0 %v8086
      %v9796 = vpop.f32.mrf.mxu0
      %v9797 = vadd.f32 0.0, %v9796
      %v9798 = vpop.f32.mrf.mxu0
      %v9799 = vadd.f32 0.0, %v9798
      %9800 = vmatmul.bf16.gmra.mxu0 %v8089
      %v9801 = vpop.f32.mrf.mxu0
      %v9802 = vadd.f32 0.0, %v9801
      %v9803 = vpop.f32.mrf.mxu0
      %v9804 = vadd.f32 0.0, %v9803
      %9805 = vmatmul.bf16.gmra.mxu0 %v8092
      %v9806 = vpop.f32.mrf.mxu0
      %v9807 = vadd.f32 0.0, %v9806
      %v9808 = vpop.f32.mrf.mxu0
      %v9809 = vadd.f32 0.0, %v9808
      %9810 = vmatmul.bf16.gmra.mxu0 %v8095
      %v9811 = vpop.f32.mrf.mxu0
      %v9812 = vadd.f32 0.0, %v9811
      %v9813 = vpop.f32.mrf.mxu0
      %v9814 = vadd.f32 0.0, %v9813
      %9815 = vmatmul.bf16.gmra.mxu0 %v9245
      %v9816 = vpop.f32.mrf.mxu0
      %v9817 = vadd.f32 0.0, %v9816
      %v9818 = vpop.f32.mrf.mxu0
      %v9819 = vadd.f32 0.0, %v9818
      %9820 = vmatmul.bf16.gmra.mxu0 %v9735
      %v9821 = vpop.f32.mrf.mxu0
      %v9822 = vadd.f32 0.0, %v9821
      %v9823 = vpop.f32.mrf.mxu0
      %v9824 = vadd.f32 0.0, %v9823
      %9825 = vdwg.mxu0
      %v9826 = vadd.f32 %v9672, %v9747
      %v9827 = vadd.f32 %v9673, %v9749
      %v9828 = vadd.f32 %v9674, %v9752
      %v9829 = vadd.f32 %v9675, %v9754
      %v9830 = vadd.f32 %v9676, %v9757
      %v9831 = vadd.f32 %v9677, %v9759
      %v9832 = vadd.f32 %v9678, %v9762
      %v9833 = vadd.f32 %v9679, %v9764
      %v9834 = vadd.f32 %v9680, %v9767
      %v9835 = vadd.f32 %v9681, %v9769
      %v9836 = vadd.f32 %v9682, %v9772
      %v9837 = vadd.f32 %v9683, %v9774
      %v9838 = vadd.f32 %v9684, %v9777
      %v9839 = vadd.f32 %v9685, %v9779
      %v9840 = vadd.f32 %v9686, %v9782
      %v9841 = vadd.f32 %v9687, %v9784
      %v9842 = vadd.f32 %v9688, %v9787
      %v9843 = vadd.f32 %v9689, %v9789
      %v9844 = vadd.f32 %v9690, %v9792
      %v9845 = vadd.f32 %v9691, %v9794
      %v9846 = vadd.f32 %v9692, %v9797
      %v9847 = vadd.f32 %v9693, %v9799
      %v9848 = vadd.f32 %v9694, %v9802
      %v9849 = vadd.f32 %v9695, %v9804
      %v9850 = vadd.f32 %v9696, %v9807
      %v9851 = vadd.f32 %v9697, %v9809
      %v9852 = vadd.f32 %v9698, %v9812
      %v9853 = vadd.f32 %v9699, %v9814
      %v9854 = vadd.f32 %v9700, %v9817
      %v9855 = vadd.f32 %v9701, %v9819
      %v9856 = vadd.f32 %v9702, %v9822
      %v9857 = vadd.f32 %v9703, %v9824
      %v9859 = vshrl.u32 %v7910, 16
      %v9861 = vrot.slane %v9859, 4
      %v9862 = vshll.u32 %v7910, 16
      %v9864 = vrot.slane %v9862, 5
      %v9865 = vor.u32 %v9861, %v9864
      %v9866 = vrot.slane %v9865, 4
      %v9868 = vshll.u32 %v7911, 16
      %v9870 = vrot.slane %v9868, 5
      %v9871 = vsel %vm842, %v9866, %v9870
      %v9872 = vshrl.u32 %v7911, 16
      %v9874 = vrot.slane %v9872, 4
      %v9875 = vor.u32 %v9874, %v9870
      %v9876 = vrot.slane %v9875, 4
      %v9878 = vshll.u32 %v7912, 16
      %v9880 = vrot.slane %v9878, 5
      %v9881 = vsel %vm842, %v9876, %v9880
      %s9882 = scalar_lea.vmem %s7, 168
      %v9883 = vld [vmem:[%s9882] sm:$0xf]
      %v9884 = vld [vmem:[%s9882 + $0x4] sm:$0xf]
      %v9885 = vld [vmem:[%s9882 + $0x8] sm:$0xf]
      %v9886 = vld [vmem:[%s9882 + $0xc] sm:$0xf]
      %v9887 = vld [vmem:[%s9882 + $0x10] sm:$0xf]
      %v9888 = vld [vmem:[%s9882 + $0x14] sm:$0xf]
      %v9889 = vunpack.c.l.b16 %v9871
      %v9890 = vunpack.c.l.b16 %v9881
      %v9891 = vpack.c.b16 %v9890, %v9889
      %v9898 = vunpack.c.l.b16 %v9883
      %v9899 = vunpack.c.l.b16 %v9884
      %v9900 = vunpack.c.l.b16 %v9885
      %v9901 = vunpack.c.l.b16 %v9886
      %v9902 = vunpack.c.l.b16 %v9887
      %v9903 = vunpack.c.l.b16 %v9888
      %v9904 = vpack.c.b16 %v9899, %v9898
      %v9905 = vpack.c.b16 %v9901, %v9900
      %v9906 = vpack.c.b16 %v9903, %v9902
      %v9911 = vsel %vm334, %v9891, 0
      %9913 = vmatpush.bf16.msra.mxu0 0
      %9914 = vmatpush.bf16.msra.mxu0 0
      %9915 = vmatpush.bf16.msra.mxu0 0
      %9916 = vmatpush.bf16.msra.mxu0 0
      %9917 = vmatpush.bf16.msra.mxu0 0
      %9918 = vmatpush.bf16.msra.mxu0 %v9906
      %9919 = vmatpush.bf16.msra.mxu0 %v9905
      %9920 = vmatpush.bf16.msra.mxu0 %v9904
      %9921 = vmatmul.bf16.gmra.mxu0 %v8682
      %v9922 = vpop.f32.mrf.mxu0
      %v9923 = vadd.f32 0.0, %v9922
      %v9924 = vpop.f32.mrf.mxu0
      %v9925 = vadd.f32 0.0, %v9924
      %9926 = vmatmul.bf16.gmra.mxu0 %v8685
      %v9927 = vpop.f32.mrf.mxu0
      %v9928 = vadd.f32 0.0, %v9927
      %v9929 = vpop.f32.mrf.mxu0
      %v9930 = vadd.f32 0.0, %v9929
      %9931 = vmatmul.bf16.gmra.mxu0 %v8688
      %v9932 = vpop.f32.mrf.mxu0
      %v9933 = vadd.f32 0.0, %v9932
      %v9934 = vpop.f32.mrf.mxu0
      %v9935 = vadd.f32 0.0, %v9934
      %9936 = vmatmul.bf16.gmra.mxu0 %v8691
      %v9937 = vpop.f32.mrf.mxu0
      %v9938 = vadd.f32 0.0, %v9937
      %v9939 = vpop.f32.mrf.mxu0
      %v9940 = vadd.f32 0.0, %v9939
      %9941 = vmatmul.bf16.gmra.mxu0 %v8694
      %v9942 = vpop.f32.mrf.mxu0
      %v9943 = vadd.f32 0.0, %v9942
      %v9944 = vpop.f32.mrf.mxu0
      %v9945 = vadd.f32 0.0, %v9944
      %9946 = vmatmul.bf16.gmra.mxu0 %v8697
      %v9947 = vpop.f32.mrf.mxu0
      %v9948 = vadd.f32 0.0, %v9947
      %v9949 = vpop.f32.mrf.mxu0
      %v9950 = vadd.f32 0.0, %v9949
      %9951 = vmatmul.bf16.gmra.mxu0 %v8700
      %v9952 = vpop.f32.mrf.mxu0
      %v9953 = vadd.f32 0.0, %v9952
      %v9954 = vpop.f32.mrf.mxu0
      %v9955 = vadd.f32 0.0, %v9954
      %9956 = vmatmul.bf16.gmra.mxu0 %v8703
      %v9957 = vpop.f32.mrf.mxu0
      %v9958 = vadd.f32 0.0, %v9957
      %v9959 = vpop.f32.mrf.mxu0
      %v9960 = vadd.f32 0.0, %v9959
      %9961 = vmatmul.bf16.gmra.mxu0 %v8706
      %v9962 = vpop.f32.mrf.mxu0
      %v9963 = vadd.f32 0.0, %v9962
      %v9964 = vpop.f32.mrf.mxu0
      %v9965 = vadd.f32 0.0, %v9964
      %9966 = vmatmul.bf16.gmra.mxu0 %v8709
      %v9967 = vpop.f32.mrf.mxu0
      %v9968 = vadd.f32 0.0, %v9967
      %v9969 = vpop.f32.mrf.mxu0
      %v9970 = vadd.f32 0.0, %v9969
      %9971 = vmatmul.bf16.gmra.mxu0 %v8712
      %v9972 = vpop.f32.mrf.mxu0
      %v9973 = vadd.f32 0.0, %v9972
      %v9974 = vpop.f32.mrf.mxu0
      %v9975 = vadd.f32 0.0, %v9974
      %9976 = vmatmul.bf16.gmra.mxu0 %v8715
      %v9977 = vpop.f32.mrf.mxu0
      %v9978 = vadd.f32 0.0, %v9977
      %v9979 = vpop.f32.mrf.mxu0
      %v9980 = vadd.f32 0.0, %v9979
      %9981 = vmatmul.bf16.gmra.mxu0 %v8718
      %v9982 = vpop.f32.mrf.mxu0
      %v9983 = vadd.f32 0.0, %v9982
      %v9984 = vpop.f32.mrf.mxu0
      %v9985 = vadd.f32 0.0, %v9984
      %9986 = vmatmul.bf16.gmra.mxu0 %v8721
      %v9987 = vpop.f32.mrf.mxu0
      %v9988 = vadd.f32 0.0, %v9987
      %v9989 = vpop.f32.mrf.mxu0
      %v9990 = vadd.f32 0.0, %v9989
      %9991 = vmatmul.bf16.gmra.mxu0 %v9421
      %v9992 = vpop.f32.mrf.mxu0
      %v9993 = vadd.f32 0.0, %v9992
      %v9994 = vpop.f32.mrf.mxu0
      %v9995 = vadd.f32 0.0, %v9994
      %9996 = vmatmul.bf16.gmra.mxu0 %v9911
      %v9997 = vpop.f32.mrf.mxu0
      %v9998 = vadd.f32 0.0, %v9997
      %v9999 = vpop.f32.mrf.mxu0
      %v10000 = vadd.f32 0.0, %v9999
      %10001 = vdwg.mxu0
      %v10002 = vadd.f32 %v9826, %v9923
      %v10003 = vadd.f32 %v9827, %v9925
      %v10004 = vadd.f32 %v9828, %v9928
      %v10005 = vadd.f32 %v9829, %v9930
      %v10006 = vadd.f32 %v9830, %v9933
      %v10007 = vadd.f32 %v9831, %v9935
      %v10008 = vadd.f32 %v9832, %v9938
      %v10009 = vadd.f32 %v9833, %v9940
      %v10010 = vadd.f32 %v9834, %v9943
      %v10011 = vadd.f32 %v9835, %v9945
      %v10012 = vadd.f32 %v9836, %v9948
      %v10013 = vadd.f32 %v9837, %v9950
      %v10014 = vadd.f32 %v9838, %v9953
      %v10015 = vadd.f32 %v9839, %v9955
      %v10016 = vadd.f32 %v9840, %v9958
      %v10017 = vadd.f32 %v9841, %v9960
      %v10018 = vadd.f32 %v9842, %v9963
      %v10019 = vadd.f32 %v9843, %v9965
      %v10020 = vadd.f32 %v9844, %v9968
      %v10021 = vadd.f32 %v9845, %v9970
      %v10022 = vadd.f32 %v9846, %v9973
      %v10023 = vadd.f32 %v9847, %v9975
      %v10024 = vadd.f32 %v9848, %v9978
      %v10025 = vadd.f32 %v9849, %v9980
      %v10026 = vadd.f32 %v9850, %v9983
      %v10027 = vadd.f32 %v9851, %v9985
      %v10028 = vadd.f32 %v9852, %v9988
      %v10029 = vadd.f32 %v9853, %v9990
      %v10030 = vadd.f32 %v9854, %v9993
      %v10031 = vadd.f32 %v9855, %v9995
      %v10032 = vadd.f32 %v9856, %v9998
      %v10033 = vadd.f32 %v9857, %v10000
      %v10035 = vrot.slane %v7910, 5
      %v10036 = vrot.slane %v10035, 4
      %v10037 = vrot.slane %v7911, 5
      %v10038 = vsel %vm1467, %v10036, %v10037
      %v10039 = vrot.slane %v10037, 4
      %v10040 = vrot.slane %v7912, 5
      %v10041 = vsel %vm1467, %v10039, %v10040
      %s10042 = scalar_lea.vmem %s7, 192
      %v10043 = vld [vmem:[%s10042] sm:$0xf]
      %v10044 = vld [vmem:[%s10042 + $0x4] sm:$0xf]
      %v10045 = vld [vmem:[%s10042 + $0x8] sm:$0xf]
      %v10046 = vld [vmem:[%s10042 + $0xc] sm:$0xf]
      %v10047 = vld [vmem:[%s10042 + $0x10] sm:$0xf]
      %v10048 = vld [vmem:[%s10042 + $0x14] sm:$0xf]
      %v10049 = vunpack.c.l.b16 %v10038
      %v10050 = vunpack.c.l.b16 %v10041
      %v10051 = vpack.c.b16 %v10050, %v10049
      %v10058 = vunpack.c.l.b16 %v10043
      %v10059 = vunpack.c.l.b16 %v10044
      %v10060 = vunpack.c.l.b16 %v10045
      %v10061 = vunpack.c.l.b16 %v10046
      %v10062 = vunpack.c.l.b16 %v10047
      %v10063 = vunpack.c.l.b16 %v10048
      %v10064 = vpack.c.b16 %v10059, %v10058
      %v10065 = vpack.c.b16 %v10061, %v10060
      %v10066 = vpack.c.b16 %v10063, %v10062
      %v10071 = vsel %vm334, %v10051, 0
      %10073 = vmatpush.bf16.msra.mxu0 0
      %10074 = vmatpush.bf16.msra.mxu0 0
      %10075 = vmatpush.bf16.msra.mxu0 0
      %10076 = vmatpush.bf16.msra.mxu0 0
      %10077 = vmatpush.bf16.msra.mxu0 0
      %10078 = vmatpush.bf16.msra.mxu0 %v10066
      %10079 = vmatpush.bf16.msra.mxu0 %v10065
      %10080 = vmatpush.bf16.msra.mxu0 %v10064
      %10081 = vmatmul.bf16.gmra.mxu0 %v9052
      %v10082 = vpop.f32.mrf.mxu0
      %v10083 = vadd.f32 0.0, %v10082
      %v10084 = vpop.f32.mrf.mxu0
      %v10085 = vadd.f32 0.0, %v10084
      %10086 = vmatmul.bf16.gmra.mxu0 %v9055
      %v10087 = vpop.f32.mrf.mxu0
      %v10088 = vadd.f32 0.0, %v10087
      %v10089 = vpop.f32.mrf.mxu0
      %v10090 = vadd.f32 0.0, %v10089
      %10091 = vmatmul.bf16.gmra.mxu0 %v9058
      %v10092 = vpop.f32.mrf.mxu0
      %v10093 = vadd.f32 0.0, %v10092
      %v10094 = vpop.f32.mrf.mxu0
      %v10095 = vadd.f32 0.0, %v10094
      %10096 = vmatmul.bf16.gmra.mxu0 %v9061
      %v10097 = vpop.f32.mrf.mxu0
      %v10098 = vadd.f32 0.0, %v10097
      %v10099 = vpop.f32.mrf.mxu0
      %v10100 = vadd.f32 0.0, %v10099
      %10101 = vmatmul.bf16.gmra.mxu0 %v9064
      %v10102 = vpop.f32.mrf.mxu0
      %v10103 = vadd.f32 0.0, %v10102
      %v10104 = vpop.f32.mrf.mxu0
      %v10105 = vadd.f32 0.0, %v10104
      %10106 = vmatmul.bf16.gmra.mxu0 %v9067
      %v10107 = vpop.f32.mrf.mxu0
      %v10108 = vadd.f32 0.0, %v10107
      %v10109 = vpop.f32.mrf.mxu0
      %v10110 = vadd.f32 0.0, %v10109
      %10111 = vmatmul.bf16.gmra.mxu0 %v9070
      %v10112 = vpop.f32.mrf.mxu0
      %v10113 = vadd.f32 0.0, %v10112
      %v10114 = vpop.f32.mrf.mxu0
      %v10115 = vadd.f32 0.0, %v10114
      %10116 = vmatmul.bf16.gmra.mxu0 %v9073
      %v10117 = vpop.f32.mrf.mxu0
      %v10118 = vadd.f32 0.0, %v10117
      %v10119 = vpop.f32.mrf.mxu0
      %v10120 = vadd.f32 0.0, %v10119
      %10121 = vmatmul.bf16.gmra.mxu0 %v9076
      %v10122 = vpop.f32.mrf.mxu0
      %v10123 = vadd.f32 0.0, %v10122
      %v10124 = vpop.f32.mrf.mxu0
      %v10125 = vadd.f32 0.0, %v10124
      %10126 = vmatmul.bf16.gmra.mxu0 %v9079
      %v10127 = vpop.f32.mrf.mxu0
      %v10128 = vadd.f32 0.0, %v10127
      %v10129 = vpop.f32.mrf.mxu0
      %v10130 = vadd.f32 0.0, %v10129
      %10131 = vmatmul.bf16.gmra.mxu0 %v9082
      %v10132 = vpop.f32.mrf.mxu0
      %v10133 = vadd.f32 0.0, %v10132
      %v10134 = vpop.f32.mrf.mxu0
      %v10135 = vadd.f32 0.0, %v10134
      %10136 = vmatmul.bf16.gmra.mxu0 %v9085
      %v10137 = vpop.f32.mrf.mxu0
      %v10138 = vadd.f32 0.0, %v10137
      %v10139 = vpop.f32.mrf.mxu0
      %v10140 = vadd.f32 0.0, %v10139
      %10141 = vmatmul.bf16.gmra.mxu0 %v9088
      %v10142 = vpop.f32.mrf.mxu0
      %v10143 = vadd.f32 0.0, %v10142
      %v10144 = vpop.f32.mrf.mxu0
      %v10145 = vadd.f32 0.0, %v10144
      %10146 = vmatmul.bf16.gmra.mxu0 %v9091
      %v10147 = vpop.f32.mrf.mxu0
      %v10148 = vadd.f32 0.0, %v10147
      %v10149 = vpop.f32.mrf.mxu0
      %v10150 = vadd.f32 0.0, %v10149
      %10151 = vmatmul.bf16.gmra.mxu0 %v9581
      %v10152 = vpop.f32.mrf.mxu0
      %v10153 = vadd.f32 0.0, %v10152
      %v10154 = vpop.f32.mrf.mxu0
      %v10155 = vadd.f32 0.0, %v10154
      %10156 = vmatmul.bf16.gmra.mxu0 %v10071
      %v10157 = vpop.f32.mrf.mxu0
      %v10158 = vadd.f32 0.0, %v10157
      %v10159 = vpop.f32.mrf.mxu0
      %v10160 = vadd.f32 0.0, %v10159
      %10161 = vdwg.mxu0
      %v10162 = vadd.f32 %v10002, %v10083
      %v10163 = vadd.f32 %v10003, %v10085
      %v10164 = vadd.f32 %v10004, %v10088
      %v10165 = vadd.f32 %v10005, %v10090
      %v10166 = vadd.f32 %v10006, %v10093
      %v10167 = vadd.f32 %v10007, %v10095
      %v10168 = vadd.f32 %v10008, %v10098
      %v10169 = vadd.f32 %v10009, %v10100
      %v10170 = vadd.f32 %v10010, %v10103
      %v10171 = vadd.f32 %v10011, %v10105
      %v10172 = vadd.f32 %v10012, %v10108
      %v10173 = vadd.f32 %v10013, %v10110
      %v10174 = vadd.f32 %v10014, %v10113
      %v10175 = vadd.f32 %v10015, %v10115
      %v10176 = vadd.f32 %v10016, %v10118
      %v10177 = vadd.f32 %v10017, %v10120
      %v10178 = vadd.f32 %v10018, %v10123
      %v10179 = vadd.f32 %v10019, %v10125
      %v10180 = vadd.f32 %v10020, %v10128
      %v10181 = vadd.f32 %v10021, %v10130
      %v10182 = vadd.f32 %v10022, %v10133
      %v10183 = vadd.f32 %v10023, %v10135
      %v10184 = vadd.f32 %v10024, %v10138
      %v10185 = vadd.f32 %v10025, %v10140
      %v10186 = vadd.f32 %v10026, %v10143
      %v10187 = vadd.f32 %v10027, %v10145
      %v10188 = vadd.f32 %v10028, %v10148
      %v10189 = vadd.f32 %v10029, %v10150
      %v10190 = vadd.f32 %v10030, %v10153
      %v10191 = vadd.f32 %v10031, %v10155
      %v10192 = vadd.f32 %v10032, %v10158
      %v10193 = vadd.f32 %v10033, %v10160
      %v10194 = vmax.f32 %v10162, 0.0
      %v10195 = vmax.f32 %v10163, 0.0
      %v10196 = vmax.f32 %v10164, 0.0
      %v10197 = vmax.f32 %v10165, 0.0
      %v10198 = vmax.f32 %v10166, 0.0
      %v10199 = vmax.f32 %v10167, 0.0
      %v10200 = vmax.f32 %v10168, 0.0
      %v10201 = vmax.f32 %v10169, 0.0
      %v10202 = vmax.f32 %v10170, 0.0
      %v10203 = vmax.f32 %v10171, 0.0
      %v10204 = vmax.f32 %v10172, 0.0
      %v10205 = vmax.f32 %v10173, 0.0
      %v10206 = vmax.f32 %v10174, 0.0
      %v10207 = vmax.f32 %v10175, 0.0
      %v10208 = vmax.f32 %v10176, 0.0
      %v10209 = vmax.f32 %v10177, 0.0
      %v10210 = vmax.f32 %v10178, 0.0
      %v10211 = vmax.f32 %v10179, 0.0
      %v10212 = vmax.f32 %v10180, 0.0
      %v10213 = vmax.f32 %v10181, 0.0
      %v10214 = vmax.f32 %v10182, 0.0
      %v10215 = vmax.f32 %v10183, 0.0
      %v10216 = vmax.f32 %v10184, 0.0
      %v10217 = vmax.f32 %v10185, 0.0
      %v10218 = vmax.f32 %v10186, 0.0
      %v10219 = vmax.f32 %v10187, 0.0
      %v10220 = vmax.f32 %v10188, 0.0
      %v10221 = vmax.f32 %v10189, 0.0
      %v10222 = vmax.f32 %v10190, 0.0
      %v10223 = vmax.f32 %v10191, 0.0
      %v10224 = vmax.f32 %v10192, 0.0
      %v10225 = vmax.f32 %v10193, 0.0
      %10226 = vst [vmem:[%s332] sm:$0xff] %v10194
      %10227 = vst [vmem:[%s332 + $0x8] sm:$0xff] %v10195
      %10228 = vst [vmem:[%s332 + $0x10] sm:$0xff] %v10196
      %10229 = vst [vmem:[%s332 + $0x18] sm:$0xff] %v10197
      %10230 = vst [vmem:[%s332 + $0x20] sm:$0xff] %v10198
      %10231 = vst [vmem:[%s332 + $0x28] sm:$0xff] %v10199
      %10232 = vst [vmem:[%s332 + $0x30] sm:$0xff] %v10200
      %10233 = vst [vmem:[%s332 + $0x38] sm:$0xff] %v10201
      %10234 = vst [vmem:[%s332 + $0x40] sm:$0xff] %v10202
      %10235 = vst [vmem:[%s332 + $0x48] sm:$0xff] %v10203
      %10236 = vst [vmem:[%s332 + $0x50] sm:$0xff] %v10204
      %10237 = vst [vmem:[%s332 + $0x58] sm:$0xff] %v10205
      %10238 = vst [vmem:[%s332 + $0x60] sm:$0xff] %v10206
      %10239 = vst [vmem:[%s332 + $0x68] sm:$0xff] %v10207
      %10240 = vst [vmem:[%s332 + $0x70] sm:$0xff] %v10208
      %10241 = vst [vmem:[%s332 + $0x78] sm:$0xff] %v10209
      %10242 = vst [vmem:[%s332 + $0x80] sm:$0xff] %v10210
      %10243 = vst [vmem:[%s332 + $0x88] sm:$0xff] %v10211
      %10244 = vst [vmem:[%s332 + $0x90] sm:$0xff] %v10212
      %10245 = vst [vmem:[%s332 + $0x98] sm:$0xff] %v10213
      %10246 = vst [vmem:[%s332 + $0xa0] sm:$0xff] %v10214
      %10247 = vst [vmem:[%s332 + $0xa8] sm:$0xff] %v10215
      %10248 = vst [vmem:[%s332 + $0xb0] sm:$0xff] %v10216
      %10249 = vst [vmem:[%s332 + $0xb8] sm:$0xff] %v10217
      %10250 = vst [vmem:[%s332 + $0xc0] sm:$0xff] %v10218
      %10251 = vst [vmem:[%s332 + $0xc8] sm:$0xff] %v10219
      %10252 = vst [vmem:[%s332 + $0xd0] sm:$0xff] %v10220
      %10253 = vst [vmem:[%s332 + $0xd8] sm:$0xff] %v10221
      %10254 = vst [vmem:[%s332 + $0xe0] sm:$0xff] %v10222
      %10255 = vst [vmem:[%s332 + $0xe8] sm:$0xff] %v10223
      %10256 = vst [vmem:[%s332 + $0xf0] sm:$0xff] %v10224
      %10257 = vst [vmem:[%s332 + $0xf8] sm:$0xff] %v10225
      %p10258 = scmp.lt.s32.totalorder %s20, 1
      %s10259 = scalar_select %p10258, %s20, 1
      %s10260 = smul.addr %s10259, 32
      %s10261 = smul.addr %s10260, 8
      %s10262 = scalar_lea.vmem %s9, %s10261
      // Predicated region
      $region57: #{dense_block_forward.1} parent=55 // pred_check
        %p10263 = pneg %p232
      $region58: #{dense_block_forward.1} parent=55 // pred_check_branch
        %10265 = sbr.rel (%p10263) target = $region60
      $region59: #{dense_block_forward.1} parent=55 // pred_region
        _
      $region60: #{dense_block_forward.1} parent=55 // pred_fallthru
        _
    $region56: #{dense_block_forward.1} parent=5 // pred_fallthru
      _
    %p10266 = scmp.le.s32.totalorder 2, %s15
    // Predicated region
    $region61: #{dense_block_forward.1} parent=5 // pred_check
      %p10267 = pneg %p10266
    $region62: #{dense_block_forward.1} parent=5 // pred_check_branch
      %10269 = sbr.rel (%p10267) target = $region64
    $region63: #{dense_block_forward.1} parent=5 // pred_region
      %s10270 = ssub.s32 %s15, 2
      // Predicated region
      $region65: #{dense_block_forward.1} parent=63 // pred_check
        %p10271 = pneg %p238
      $region66: #{dense_block_forward.1} parent=63 // pred_check_branch
        %10273 = sbr.rel (%p10271) target = $region68
      $region67: #{dense_block_forward.1} parent=63 // pred_region
        %p10274 = scmp.lt.s32.totalorder %s21, 1
        %s10275 = scalar_select %p10274, %s21, 1
        %s10276 = smul.addr %s10275, 32
        %s10277 = smul.addr %s10276, 8
        %s10278 = scalar_lea.vmem %s9, %s10277
      $region68: #{dense_block_forward.1} parent=63 // pred_fallthru
        _
    $region64: #{dense_block_forward.1} parent=5 // pred_fallthru
      _
  $region6: #{dense_block_forward.1} parent=0 // loop_footer
    %s19 = sadd.s32 1, %s15
  $region7: #{dense_block_forward.1} parent=0 // loop_footer_branch
    %14 = sbr.rel target = $region3
  $region8: #{dense_block_forward.1} parent=0 // loop_exit
    _

</llo_original>
